<compile_context>
chip_gen: v6e
topology: v6e:2x2x1
jax: 0.10.0
libtpu: 0.0.40
codegen_flags: <defaults>
</compile_context>

<pallas_src>
import functools

import jax
import jax.numpy as jnp
from jax import lax
from jax.experimental import pallas as pl
from jax.experimental.pallas import tpu as pltpu

LANES = 128


def _round_up(n, m):
    return ((n + m - 1) // m) * m


def _residual_block_kernel(*refs, H, W, projection):
    """Fused ResidualBlock forward for one image (stride=1).

    Spatial data is flattened as (row * (W+2) + col, C) with C on lanes.
    x_ref   : (1, (H+4)*(W+2), Cin_p)  bf16, zero pad: 2 rows top/bot, 1 col l/r
    w1_ref  : (3, 3*Cin_p, Cout_p)     bf16 conv1 taps (BN1 scale folded in)
    t1_ref  : (1, Cout_p)              f32  BN1 shift (conv1 bias folded in)
    w2_ref  : (3, 3*Cout_p, Cout_p)    bf16 conv2 taps (BN2 scale folded in)
    t2_ref  : (1, Cout_p)              f32  BN2 shift
    ws_ref  : (Cin_p, Cout_p)          bf16 1x1 projection   (projection only)
    ts_ref  : (1, Cout_p)              f32  projection shift  (projection only)
    o_ref   : (1, H*(W+2), Cout_p)     output in padded-width coords
    y1_ref  : ((H+4)*(W+2), Cout_p)    bf16 scratch: conv1 act, re-padded for conv2
    """
    if projection:
        (x_ref, w1_ref, t1_ref, w2_ref, t2_ref, ws_ref, ts_ref,
         o_ref, y1_ref) = refs
    else:
        (x_ref, w1_ref, t1_ref, w2_ref, t2_ref, o_ref, y1_ref) = refs
        ws_ref = ts_ref = None

    Wp = W + 2
    M = H * Wp                                   # work-slab rows (padded width)
    Cout = o_ref.shape[-1]

    # Column-validity mask in padded-width coords (cols 1..W are real pixels).
    col = lax.broadcasted_iota(jnp.int32, (M, Cout), 0) % Wp
    valid = jnp.logical_and(col >= 1, col <= W)

    def conv3x3(window, w_ref):
        """3x3 conv as 3 dots; the 3 width taps are fused into the K dim."""
        acc = jnp.zeros((M, w_ref.shape[-1]), jnp.float32)
        for dh in range(3):
            base = (dh + 1) * Wp - 1
            slab = jnp.concatenate(
                [window(base + dw) for dw in range(3)], axis=-1)  # (M, 3*C)
            acc = acc + jnp.dot(slab, w_ref[dh],
                                preferred_element_type=jnp.float32)
        return acc

    def x_window(start):                         # contiguous flat window of x
        return x_ref[0, start:start + M, :]

    def y1_window(start):                        # contiguous flat window of y1
        return y1_ref[start:start + M, :]

    # ---- conv1 + BN1 + SiLU ------------------------------------------------
    y1 = conv3x3(x_window, w1_ref) + t1_ref[...]
    y1 = y1 * jax.nn.sigmoid(y1)                 # SiLU
    y1 = jnp.where(valid, y1, 0.0).astype(y1_ref.dtype)

    # Stage the conv1 activation, zero-padded in H, for conv2.  Only the halo
    # rows are zeroed (the interior is fully overwritten every step), and each
    # step rewrites everything conv2 reads -> grid steps stay independent.
    zpad = jnp.zeros((2 * Wp, Cout), y1_ref.dtype)
    y1_ref[0:2 * Wp, :] = zpad
    y1_ref[(H + 2) * Wp:(H + 4) * Wp, :] = zpad
    y1_ref[2 * Wp:2 * Wp + M, :] = y1

    # ---- conv2 + BN2 ---------------------------------------------------------
    y2 = conv3x3(y1_window, w2_ref) + t2_ref[...]

    # ---- shortcut ------------------------------------------------------------
    x_center = x_ref[0, 2 * Wp:2 * Wp + M, :]    # center tap = original pixels
    if projection:
        sc = jnp.dot(x_center, ws_ref[...],
                     preferred_element_type=jnp.float32) + ts_ref[...]
    else:
        sc = x_center.astype(jnp.float32)        # identity: no eye-matmul

    # ---- residual add + final SiLU -------------------------------------------
    out = y2 + sc
    out = out * jax.nn.sigmoid(out)
    o_ref[0] = out.astype(o_ref.dtype)


def _fold_bn(conv_bias, gamma, beta, mean, var, eps=1e-5):
    """Fold eval-mode BatchNorm (+ preceding conv bias) into scale/shift."""
    scale = gamma / jnp.sqrt(var + eps)
    shift = (conv_bias - mean) * scale + beta
    return scale, shift


def _prep_conv3x3(w, scale, cin_p, cout_p):
    """(Cout, Cin, 3, 3) -> (3, 3*Cin_p, Cout_p) bf16 with the BN scale folded in."""
    cout, cin = w.shape[0], w.shape[1]
    wk = jnp.transpose(w, (2, 3, 1, 0)) * scale            # (kh, kw, Cin, Cout)
    wk = jnp.pad(wk, ((0, 0), (0, 0), (0, cin_p - cin), (0, cout_p - cout)))
    return wk.reshape(3, 3 * cin_p, cout_p).astype(jnp.bfloat16)


def _row(v, cout_p):
    return jnp.pad(v, (0, cout_p - v.shape[0])).reshape(1, cout_p).astype(jnp.float32)


def residual_block(x, params, *, stride=1):
    """x: (B, Cin, H, W) NCHW like the PyTorch module; returns (B, Cout, H, W)."""
    if stride != 1:
        # TODO(synk): stride > 1 downsampling path not implemented.
        raise NotImplementedError("stride > 1 not supported by this Pallas kernel")

    B, Cin, H, W = x.shape
    Cout = params["conv1_w"].shape[0]
    cin_p, cout_p = _round_up(Cin, LANES), _round_up(Cout, LANES)
    Wp, M, Np = W + 2, H * (W + 2), (H + 4) * (W + 2)
    projection = "sc_w" in params

    # Fold eval-mode BatchNorm into the conv weights (scale) + a shift vector.
    s1, t1 = _fold_bn(params["conv1_b"], params["bn1_gamma"], params["bn1_beta"],
                      params["bn1_mean"], params["bn1_var"])
    s2, t2 = _fold_bn(params["conv2_b"], params["bn2_gamma"], params["bn2_beta"],
                      params["bn2_mean"], params["bn2_var"])
    w1k = _prep_conv3x3(params["conv1_w"], s1, cin_p, cout_p)
    w2k = _prep_conv3x3(params["conv2_w"], s2, cout_p, cout_p)

    consts = [w1k, _row(t1, cout_p), w2k, _row(t2, cout_p)]
    if projection:
        ss, ts = _fold_bn(params["sc_b"], params["sc_gamma"], params["sc_beta"],
                          params["sc_mean"], params["sc_var"])
        ws = params["sc_w"].reshape(Cout, Cin).T * ss       # (Cin, Cout), scale folded
        ws = jnp.pad(ws, ((0, cin_p - Cin), (0, cout_p - Cout))).astype(jnp.bfloat16)
        consts += [ws, _row(ts, cout_p)]
    else:
        assert Cin == Cout, "identity shortcut requires in_channels == out_channels"

    # NCHW -> NHWC (channels on lanes), bf16, zero pad: 2 rows top/bottom
    # (flat-window halo), 1 column left/right, channels up to a 128 multiple.
    x_nhwc = jnp.transpose(x, (0, 2, 3, 1)).astype(jnp.bfloat16)
    x_pad = jnp.pad(x_nhwc, ((0, 0), (2, 2), (1, 1), (0, cin_p - Cin)))
    x_flat = x_pad.reshape(B, Np, cin_p)

    kernel = functools.partial(_residual_block_kernel, H=H, W=W,
                               projection=projection)
    const_spec = pl.BlockSpec(memory_space=pltpu.MemorySpace.VMEM)

    # Scoped-VMEM budget: double-buffered blocks + resident constants + scratch
    # + in-kernel im2col slabs / f32 accumulators, with 2x headroom.
    const_bytes = sum(int(c.size) * c.dtype.itemsize for c in consts)
    work_bytes = (2 * Np * cin_p * 2 + 2 * M * cout_p * 4        # x / out blocks
                  + Np * cout_p * 2                              # y1 scratch
                  + 3 * M * max(cin_p, cout_p) * 2 * 2           # im2col slabs
                  + 3 * M * cout_p * 4)                          # f32 accumulators
    vmem_limit = int(min(64 * 2**20, max(8 * 2**20, 2 * (const_bytes + work_bytes))))

    out_flat = pl.pallas_call(
        kernel,
        out_shape=jax.ShapeDtypeStruct((B, M, cout_p), x.dtype),
        grid_spec=pltpu.PrefetchScalarGridSpec(
            num_scalar_prefetch=0,
            grid=(B,),
            in_specs=[pl.BlockSpec((1, Np, cin_p), lambda b: (b, 0, 0))]
                     + [const_spec] * len(consts),
            out_specs=pl.BlockSpec((1, M, cout_p), lambda b: (b, 0, 0)),
            scratch_shapes=[pltpu.VMEM((Np, cout_p), jnp.bfloat16)],
        ),
        compiler_params=pltpu.CompilerParams(
            dimension_semantics=("parallel",),
            vmem_limit_bytes=vmem_limit),
    )(x_flat, *consts)

    # Padded-width / padded-channel output -> drop borders, back to NCHW.
    out = out_flat.reshape(B, H, Wp, cout_p)[:, :, 1:1 + W, :Cout]
    return jnp.transpose(out, (0, 3, 1, 2))


def residual_block_ref(x, params, *, stride=1, eps=1e-5):
    """Pure-JAX reference mirroring the PyTorch ResidualBlock forward (eval-mode BN)."""
    dn = ("NCHW", "OIHW", "NCHW")

    def conv(z, w, b, s=1, p=1):
        y = lax.conv_general_dilated(z, w, (s, s), [(p, p), (p, p)],
                                     dimension_numbers=dn)
        return y + b[None, :, None, None]

    def bn(y, g, bt, m, v):
        return (y - m[None, :, None, None]) / jnp.sqrt(v[None, :, None, None] + eps) \
               * g[None, :, None, None] + bt[None, :, None, None]

    silu = lambda z: z * jax.nn.sigmoid(z)

    out = silu(bn(conv(x, params["conv1_w"], params["conv1_b"], stride),
                  params["bn1_gamma"], params["bn1_beta"],
                  params["bn1_mean"], params["bn1_var"]))
    out = bn(conv(out, params["conv2_w"], params["conv2_b"], 1),
             params["bn2_gamma"], params["bn2_beta"],
             params["bn2_mean"], params["bn2_var"])
    if "sc_w" in params:
        sc = bn(conv(x, params["sc_w"], params["sc_b"], stride, p=0),
                params["sc_gamma"], params["sc_beta"],
                params["sc_mean"], params["sc_var"])
    else:
        sc = x
    return silu(out + sc)


def _make_params(key, cin, cout, projection):
    ks = jax.random.split(key, 18)
    p = {
        "conv1_w": 0.1 * jax.random.normal(ks[0], (cout, cin, 3, 3), jnp.float32),
        "conv1_b": 0.1 * jax.random.normal(ks[1], (cout,), jnp.float32),
        "bn1_gamma": 1.0 + 0.1 * jax.random.normal(ks[2], (cout,), jnp.float32),
        "bn1_beta": 0.1 * jax.random.normal(ks[3], (cout,), jnp.float32),
        "bn1_mean": 0.1 * jax.random.normal(ks[4], (cout,), jnp.float32),
        "bn1_var": jax.random.uniform(ks[5], (cout,), jnp.float32, 0.5, 1.5),
        "conv2_w": 0.1 * jax.random.normal(ks[6], (cout, cout, 3, 3), jnp.float32),
        "conv2_b": 0.1 * jax.random.normal(ks[7], (cout,), jnp.float32),
        "bn2_gamma": 1.0 + 0.1 * jax.random.normal(ks[8], (cout,), jnp.float32),
        "bn2_beta": 0.1 * jax.random.normal(ks[9], (cout,), jnp.float32),
        "bn2_mean": 0.1 * jax.random.normal(ks[10], (cout,), jnp.float32),
        "bn2_var": jax.random.uniform(ks[11], (cout,), jnp.float32, 0.5, 1.5),
    }
    if projection:
        p.update({
            "sc_w": 0.1 * jax.random.normal(ks[12], (cout, cin, 1, 1), jnp.float32),
            "sc_b": 0.1 * jax.random.normal(ks[13], (cout,), jnp.float32),
            "sc_gamma": 1.0 + 0.1 * jax.random.normal(ks[14], (cout,), jnp.float32),
            "sc_beta": 0.1 * jax.random.normal(ks[15], (cout,), jnp.float32),
            "sc_mean": 0.1 * jax.random.normal(ks[16], (cout,), jnp.float32),
            "sc_var": jax.random.uniform(ks[17], (cout,), jnp.float32, 0.5, 1.5),
        })
    return p


if __name__ == "__main__":
    key = jax.random.PRNGKey(0)
    k_x1, k_p1, k_x2, k_p2 = jax.random.split(key, 4)
    B, H, W = 2, 16, 16
    TOL = 3e-2  # matmul operands are bf16 (f32 accumulation)

    # Case 1: projection shortcut (in_channels != out_channels), stride=1.
    x1 = jax.random.normal(k_x1, (B, 4, H, W), jnp.float32)
    p1 = _make_params(k_p1, 4, 8, projection=True)
    out1 = jax.block_until_ready(residual_block(x1, p1))
    ref1 = residual_block_ref(x1, p1)
    assert out1.shape == (B, 8, H, W)
    assert jnp.allclose(out1, ref1, atol=TOL, rtol=TOL), \
        float(jnp.max(jnp.abs(out1 - ref1)))

    # Case 2: identity shortcut (in_channels == out_channels), stride=1.
    x2 = jax.random.normal(k_x2, (B, 8, H, W), jnp.float32)
    p2 = _make_params(k_p2, 8, 8, projection=False)
    out2 = jax.block_until_ready(residual_block(x2, p2))
    ref2 = residual_block_ref(x2, p2)
    assert out2.shape == (B, 8, H, W)
    assert jnp.allclose(out2, ref2, atol=TOL, rtol=TOL), \
        float(jnp.max(jnp.abs(out2 - ref2)))

    print("KERNEL_OK")
</pallas_src>

<mosaic_0001>
module attributes {stable_mosaic.version = 11 : i64} {
  func.func @_residual_block_kernel(%arg0: i32, %arg1: memref<1x360x128xbf16, #tpu.memory_space<vmem>>, %arg2: memref<3x384x128xbf16, #tpu.memory_space<vmem>>, %arg3: memref<1x128xf32, #tpu.memory_space<vmem>>, %arg4: memref<3x384x128xbf16, #tpu.memory_space<vmem>>, %arg5: memref<1x128xf32, #tpu.memory_space<vmem>>, %arg6: memref<128x128xbf16, #tpu.memory_space<vmem>>, %arg7: memref<1x128xf32, #tpu.memory_space<vmem>>, %arg8: memref<1x288x128xf32, #tpu.memory_space<vmem>>, %arg9: memref<360x128xbf16, #tpu.memory_space<vmem>>) attributes {dimension_semantics = [#tpu.dimension_semantics<parallel>], iteration_bounds = array<i64: 2>, scalar_prefetch = 0 : i64, scratch_operands = 1 : i64, tpu.core_type = #tpu.core_type<tc>, window_params = [{transform_indices = @transform_0, window_bounds = array<i64: 1, 360, 128>}, {pipeline_mode = #tpu.pipeline_mode<synchronous>, transform_indices = @transform_1, window_bounds = array<i64: 3, 384, 128>}, {pipeline_mode = #tpu.pipeline_mode<synchronous>, transform_indices = @transform_2, window_bounds = array<i64: 1, 128>}, {pipeline_mode = #tpu.pipeline_mode<synchronous>, transform_indices = @transform_3, window_bounds = array<i64: 3, 384, 128>}, {pipeline_mode = #tpu.pipeline_mode<synchronous>, transform_indices = @transform_4, window_bounds = array<i64: 1, 128>}, {pipeline_mode = #tpu.pipeline_mode<synchronous>, transform_indices = @transform_5, window_bounds = array<i64: 128, 128>}, {pipeline_mode = #tpu.pipeline_mode<synchronous>, transform_indices = @transform_6, window_bounds = array<i64: 1, 128>}, {transform_indices = @transform_7, window_bounds = array<i64: 1, 288, 128>}]} {
    %0 = tpu.iota {dimensions = array<i32: 0>} : vector<288x128xi32>
    %c18_i32 = arith.constant 18 : i32
    %c0_i32 = arith.constant 0 : i32
    %1 = arith.cmpi eq, %c18_i32, %c0_i32 : i32
    %c1_i32 = arith.constant 1 : i32
    %2 = arith.select %1, %c1_i32, %c18_i32 : i32
    %3 = vector.broadcast %2 : i32 to vector<288x128xi32>
    %4 = arith.remsi %0, %3 : vector<288x128xi32>
    %c0_i32_0 = arith.constant 0 : i32
    %5 = vector.broadcast %c0_i32_0 : i32 to vector<288x128xi32>
    %6 = arith.cmpi ne, %4, %5 : vector<288x128xi32>
    %c0_i32_1 = arith.constant 0 : i32
    %7 = vector.broadcast %c0_i32_1 : i32 to vector<288x128xi32>
    %8 = arith.cmpi slt, %4, %7 : vector<288x128xi32>
    %c0_i32_2 = arith.constant 0 : i32
    %9 = arith.cmpi slt, %2, %c0_i32_2 : i32
    %10 = vector.broadcast %9 : i1 to vector<288x128xi1>
    %11 = vector.broadcast %10 : vector<288x128xi1> to vector<288x128xi1>
    %12 = arith.xori %8, %11 : vector<288x128xi1>
    %13 = arith.andi %12, %6 : vector<288x128xi1>
    %14 = vector.broadcast %2 : i32 to vector<288x128xi32>
    %15 = arith.addi %4, %14 : vector<288x128xi32>
    %16 = arith.select %13, %15, %4 : vector<288x128xi1>, vector<288x128xi32>
    %c1_i32_3 = arith.constant 1 : i32
    %17 = vector.broadcast %c1_i32_3 : i32 to vector<288x128xi32>
    %18 = arith.cmpi sge, %16, %17 : vector<288x128xi32>
    %c16_i32 = arith.constant 16 : i32
    %19 = vector.broadcast %c16_i32 : i32 to vector<288x128xi32>
    %20 = arith.cmpi sle, %16, %19 : vector<288x128xi32>
    %21 = arith.andi %18, %20 : vector<288x128xi1>
    %cst = arith.constant 0.000000e+00 : f32
    %22 = vector.broadcast %cst : f32 to vector<288x128xf32>
    %c0 = arith.constant 0 : index
    %c17 = arith.constant 17 : index
    %c0_4 = arith.constant 0 : index
    %23 = vector.load %arg1[%c0, %c17, %c0_4] : memref<1x360x128xbf16, #tpu.memory_space<vmem>>, vector<1x288x128xbf16>
    %24 = vector.shape_cast %23 : vector<1x288x128xbf16> to vector<288x128xbf16>
    %c0_5 = arith.constant 0 : index
    %c18 = arith.constant 18 : index
    %c0_6 = arith.constant 0 : index
    %25 = vector.load %arg1[%c0_5, %c18, %c0_6] : memref<1x360x128xbf16, #tpu.memory_space<vmem>>, vector<1x288x128xbf16>
    %26 = vector.shape_cast %25 : vector<1x288x128xbf16> to vector<288x128xbf16>
    %c0_7 = arith.constant 0 : index
    %c19 = arith.constant 19 : index
    %c0_8 = arith.constant 0 : index
    %27 = vector.load %arg1[%c0_7, %c19, %c0_8] : memref<1x360x128xbf16, #tpu.memory_space<vmem>>, vector<1x288x128xbf16>
    %28 = vector.shape_cast %27 : vector<1x288x128xbf16> to vector<288x128xbf16>
    %29 = tpu.concatenate %24, %26, %28 in 1 : vector<288x128xbf16>, vector<288x128xbf16>, vector<288x128xbf16> -> vector<288x384xbf16>
    %c0_9 = arith.constant 0 : index
    %c0_10 = arith.constant 0 : index
    %c0_11 = arith.constant 0 : index
    %30 = vector.load %arg2[%c0_9, %c0_10, %c0_11] : memref<3x384x128xbf16, #tpu.memory_space<vmem>>, vector<1x384x128xbf16>
    %31 = vector.shape_cast %30 : vector<1x384x128xbf16> to vector<384x128xbf16>
    %cst_12 = arith.constant dense<0.000000e+00> : vector<288x128xf32>
    %32 = tpu.matmul %29, %31, %cst_12 {dimension_numbers = #tpu.dot_dimension_numbers<[1], [0], [0], [1], [0, 0, 1, 1], [], []>} : vector<288x384xbf16>, vector<384x128xbf16>, vector<288x128xf32> -> vector<288x128xf32>
    %33 = arith.addf %22, %32 : vector<288x128xf32>
    %c0_13 = arith.constant 0 : index
    %c35 = arith.constant 35 : index
    %c0_14 = arith.constant 0 : index
    %34 = vector.load %arg1[%c0_13, %c35, %c0_14] : memref<1x360x128xbf16, #tpu.memory_space<vmem>>, vector<1x288x128xbf16>
    %35 = vector.shape_cast %34 : vector<1x288x128xbf16> to vector<288x128xbf16>
    %c0_15 = arith.constant 0 : index
    %c36 = arith.constant 36 : index
    %c0_16 = arith.constant 0 : index
    %36 = vector.load %arg1[%c0_15, %c36, %c0_16] : memref<1x360x128xbf16, #tpu.memory_space<vmem>>, vector<1x288x128xbf16>
    %37 = vector.shape_cast %36 : vector<1x288x128xbf16> to vector<288x128xbf16>
    %c0_17 = arith.constant 0 : index
    %c37 = arith.constant 37 : index
    %c0_18 = arith.constant 0 : index
    %38 = vector.load %arg1[%c0_17, %c37, %c0_18] : memref<1x360x128xbf16, #tpu.memory_space<vmem>>, vector<1x288x128xbf16>
    %39 = vector.shape_cast %38 : vector<1x288x128xbf16> to vector<288x128xbf16>
    %40 = tpu.concatenate %35, %37, %39 in 1 : vector<288x128xbf16>, vector<288x128xbf16>, vector<288x128xbf16> -> vector<288x384xbf16>
    %c1 = arith.constant 1 : index
    %c0_19 = arith.constant 0 : index
    %c0_20 = arith.constant 0 : index
    %41 = vector.load %arg2[%c1, %c0_19, %c0_20] : memref<3x384x128xbf16, #tpu.memory_space<vmem>>, vector<1x384x128xbf16>
    %42 = vector.shape_cast %41 : vector<1x384x128xbf16> to vector<384x128xbf16>
    %cst_21 = arith.constant dense<0.000000e+00> : vector<288x128xf32>
    %43 = tpu.matmul %40, %42, %cst_21 {dimension_numbers = #tpu.dot_dimension_numbers<[1], [0], [0], [1], [0, 0, 1, 1], [], []>} : vector<288x384xbf16>, vector<384x128xbf16>, vector<288x128xf32> -> vector<288x128xf32>
    %44 = arith.addf %33, %43 : vector<288x128xf32>
    %c0_22 = arith.constant 0 : index
    %c53 = arith.constant 53 : index
    %c0_23 = arith.constant 0 : index
    %45 = vector.load %arg1[%c0_22, %c53, %c0_23] : memref<1x360x128xbf16, #tpu.memory_space<vmem>>, vector<1x288x128xbf16>
    %46 = vector.shape_cast %45 : vector<1x288x128xbf16> to vector<288x128xbf16>
    %c0_24 = arith.constant 0 : index
    %c54 = arith.constant 54 : index
    %c0_25 = arith.constant 0 : index
    %47 = vector.load %arg1[%c0_24, %c54, %c0_25] : memref<1x360x128xbf16, #tpu.memory_space<vmem>>, vector<1x288x128xbf16>
    %48 = vector.shape_cast %47 : vector<1x288x128xbf16> to vector<288x128xbf16>
    %c0_26 = arith.constant 0 : index
    %c55 = arith.constant 55 : index
    %c0_27 = arith.constant 0 : index
    %49 = vector.load %arg1[%c0_26, %c55, %c0_27] : memref<1x360x128xbf16, #tpu.memory_space<vmem>>, vector<1x288x128xbf16>
    %50 = vector.shape_cast %49 : vector<1x288x128xbf16> to vector<288x128xbf16>
    %51 = tpu.concatenate %46, %48, %50 in 1 : vector<288x128xbf16>, vector<288x128xbf16>, vector<288x128xbf16> -> vector<288x384xbf16>
    %c2 = arith.constant 2 : index
    %c0_28 = arith.constant 0 : index
    %c0_29 = arith.constant 0 : index
    %52 = vector.load %arg2[%c2, %c0_28, %c0_29] : memref<3x384x128xbf16, #tpu.memory_space<vmem>>, vector<1x384x128xbf16>
    %53 = vector.shape_cast %52 : vector<1x384x128xbf16> to vector<384x128xbf16>
    %cst_30 = arith.constant dense<0.000000e+00> : vector<288x128xf32>
    %54 = tpu.matmul %51, %53, %cst_30 {dimension_numbers = #tpu.dot_dimension_numbers<[1], [0], [0], [1], [0, 0, 1, 1], [], []>} : vector<288x384xbf16>, vector<384x128xbf16>, vector<288x128xf32> -> vector<288x128xf32>
    %55 = arith.addf %44, %54 : vector<288x128xf32>
    %c0_31 = arith.constant 0 : index
    %c0_32 = arith.constant 0 : index
    %56 = vector.load %arg3[%c0_31, %c0_32] : memref<1x128xf32, #tpu.memory_space<vmem>>, vector<1x128xf32>
    %57 = vector.broadcast %56 : vector<1x128xf32> to vector<288x128xf32>
    %58 = arith.addf %55, %57 : vector<288x128xf32>
    %59 = arith.negf %58 : vector<288x128xf32>
    %60 = math.exp %59 : vector<288x128xf32>
    %cst_33 = arith.constant 1.000000e+00 : f32
    %61 = vector.broadcast %cst_33 : f32 to vector<288x128xf32>
    %62 = arith.addf %61, %60 : vector<288x128xf32>
    %63 = arith.divf %61, %62 : vector<288x128xf32>
    %64 = arith.mulf %58, %63 : vector<288x128xf32>
    %cst_34 = arith.constant 0.000000e+00 : f32
    %65 = vector.broadcast %cst_34 : f32 to vector<288x128xf32>
    %66 = arith.select %21, %64, %65 : vector<288x128xi1>, vector<288x128xf32>
    %67 = arith.truncf %66 : vector<288x128xf32> to vector<288x128xbf16>
    %cst_35 = arith.constant 0.000000e+00 : bf16
    %68 = vector.broadcast %cst_35 : bf16 to vector<36x128xbf16>
    %c0_36 = arith.constant 0 : index
    %c0_37 = arith.constant 0 : index
    %69 = vector.load %arg9[%c0_36, %c0_37] : memref<360x128xbf16, #tpu.memory_space<vmem>>, vector<36x128xbf16>
    tpu.vector_store %arg9[%c0_36, %c0_37], %68 {strides = array<i32>} : memref<360x128xbf16, #tpu.memory_space<vmem>>, vector<36x128xbf16>,
    %c324 = arith.constant 324 : index
    %c0_38 = arith.constant 0 : index
    %70 = vector.load %arg9[%c324, %c0_38] : memref<360x128xbf16, #tpu.memory_space<vmem>>, vector<36x128xbf16>
    tpu.vector_store %arg9[%c324, %c0_38], %68 {strides = array<i32>} : memref<360x128xbf16, #tpu.memory_space<vmem>>, vector<36x128xbf16>,
    %c36_39 = arith.constant 36 : index
    %c0_40 = arith.constant 0 : index
    %71 = vector.load %arg9[%c36_39, %c0_40] : memref<360x128xbf16, #tpu.memory_space<vmem>>, vector<288x128xbf16>
    tpu.vector_store %arg9[%c36_39, %c0_40], %67 {strides = array<i32>} : memref<360x128xbf16, #tpu.memory_space<vmem>>, vector<288x128xbf16>,
    %cst_41 = arith.constant 0.000000e+00 : f32
    %72 = vector.broadcast %cst_41 : f32 to vector<288x128xf32>
    %c17_42 = arith.constant 17 : index
    %c0_43 = arith.constant 0 : index
    %73 = vector.load %arg9[%c17_42, %c0_43] : memref<360x128xbf16, #tpu.memory_space<vmem>>, vector<288x128xbf16>
    %c18_44 = arith.constant 18 : index
    %c0_45 = arith.constant 0 : index
    %74 = vector.load %arg9[%c18_44, %c0_45] : memref<360x128xbf16, #tpu.memory_space<vmem>>, vector<288x128xbf16>
    %c19_46 = arith.constant 19 : index
    %c0_47 = arith.constant 0 : index
    %75 = vector.load %arg9[%c19_46, %c0_47] : memref<360x128xbf16, #tpu.memory_space<vmem>>, vector<288x128xbf16>
    %76 = tpu.concatenate %73, %74, %75 in 1 : vector<288x128xbf16>, vector<288x128xbf16>, vector<288x128xbf16> -> vector<288x384xbf16>
    %c0_48 = arith.constant 0 : index
    %c0_49 = arith.constant 0 : index
    %c0_50 = arith.constant 0 : index
    %77 = vector.load %arg4[%c0_48, %c0_49, %c0_50] : memref<3x384x128xbf16, #tpu.memory_space<vmem>>, vector<1x384x128xbf16>
    %78 = vector.shape_cast %77 : vector<1x384x128xbf16> to vector<384x128xbf16>
    %cst_51 = arith.constant dense<0.000000e+00> : vector<288x128xf32>
    %79 = tpu.matmul %76, %78, %cst_51 {dimension_numbers = #tpu.dot_dimension_numbers<[1], [0], [0], [1], [0, 0, 1, 1], [], []>} : vector<288x384xbf16>, vector<384x128xbf16>, vector<288x128xf32> -> vector<288x128xf32>
    %80 = arith.addf %72, %79 : vector<288x128xf32>
    %c35_52 = arith.constant 35 : index
    %c0_53 = arith.constant 0 : index
    %81 = vector.load %arg9[%c35_52, %c0_53] : memref<360x128xbf16, #tpu.memory_space<vmem>>, vector<288x128xbf16>
    %c36_54 = arith.constant 36 : index
    %c0_55 = arith.constant 0 : index
    %82 = vector.load %arg9[%c36_54, %c0_55] : memref<360x128xbf16, #tpu.memory_space<vmem>>, vector<288x128xbf16>
    %c37_56 = arith.constant 37 : index
    %c0_57 = arith.constant 0 : index
    %83 = vector.load %arg9[%c37_56, %c0_57] : memref<360x128xbf16, #tpu.memory_space<vmem>>, vector<288x128xbf16>
    %84 = tpu.concatenate %81, %82, %83 in 1 : vector<288x128xbf16>, vector<288x128xbf16>, vector<288x128xbf16> -> vector<288x384xbf16>
    %c1_58 = arith.constant 1 : index
    %c0_59 = arith.constant 0 : index
    %c0_60 = arith.constant 0 : index
    %85 = vector.load %arg4[%c1_58, %c0_59, %c0_60] : memref<3x384x128xbf16, #tpu.memory_space<vmem>>, vector<1x384x128xbf16>
    %86 = vector.shape_cast %85 : vector<1x384x128xbf16> to vector<384x128xbf16>
    %cst_61 = arith.constant dense<0.000000e+00> : vector<288x128xf32>
    %87 = tpu.matmul %84, %86, %cst_61 {dimension_numbers = #tpu.dot_dimension_numbers<[1], [0], [0], [1], [0, 0, 1, 1], [], []>} : vector<288x384xbf16>, vector<384x128xbf16>, vector<288x128xf32> -> vector<288x128xf32>
    %88 = arith.addf %80, %87 : vector<288x128xf32>
    %c53_62 = arith.constant 53 : index
    %c0_63 = arith.constant 0 : index
    %89 = vector.load %arg9[%c53_62, %c0_63] : memref<360x128xbf16, #tpu.memory_space<vmem>>, vector<288x128xbf16>
    %c54_64 = arith.constant 54 : index
    %c0_65 = arith.constant 0 : index
    %90 = vector.load %arg9[%c54_64, %c0_65] : memref<360x128xbf16, #tpu.memory_space<vmem>>, vector<288x128xbf16>
    %c55_66 = arith.constant 55 : index
    %c0_67 = arith.constant 0 : index
    %91 = vector.load %arg9[%c55_66, %c0_67] : memref<360x128xbf16, #tpu.memory_space<vmem>>, vector<288x128xbf16>
    %92 = tpu.concatenate %89, %90, %91 in 1 : vector<288x128xbf16>, vector<288x128xbf16>, vector<288x128xbf16> -> vector<288x384xbf16>
    %c2_68 = arith.constant 2 : index
    %c0_69 = arith.constant 0 : index
    %c0_70 = arith.constant 0 : index
    %93 = vector.load %arg4[%c2_68, %c0_69, %c0_70] : memref<3x384x128xbf16, #tpu.memory_space<vmem>>, vector<1x384x128xbf16>
    %94 = vector.shape_cast %93 : vector<1x384x128xbf16> to vector<384x128xbf16>
    %cst_71 = arith.constant dense<0.000000e+00> : vector<288x128xf32>
    %95 = tpu.matmul %92, %94, %cst_71 {dimension_numbers = #tpu.dot_dimension_numbers<[1], [0], [0], [1], [0, 0, 1, 1], [], []>} : vector<288x384xbf16>, vector<384x128xbf16>, vector<288x128xf32> -> vector<288x128xf32>
    %96 = arith.addf %88, %95 : vector<288x128xf32>
    %c0_72 = arith.constant 0 : index
    %c0_73 = arith.constant 0 : index
    %97 = vector.load %arg5[%c0_72, %c0_73] : memref<1x128xf32, #tpu.memory_space<vmem>>, vector<1x128xf32>
    %98 = vector.broadcast %97 : vector<1x128xf32> to vector<288x128xf32>
    %99 = arith.addf %96, %98 : vector<288x128xf32>
    %c0_74 = arith.constant 0 : index
    %c36_75 = arith.constant 36 : index
    %c0_76 = arith.constant 0 : index
    %100 = vector.load %arg1[%c0_74, %c36_75, %c0_76] : memref<1x360x128xbf16, #tpu.memory_space<vmem>>, vector<1x288x128xbf16>
    %101 = vector.shape_cast %100 : vector<1x288x128xbf16> to vector<288x128xbf16>
    %c0_77 = arith.constant 0 : index
    %c0_78 = arith.constant 0 : index
    %102 = vector.load %arg6[%c0_77, %c0_78] : memref<128x128xbf16, #tpu.memory_space<vmem>>, vector<128x128xbf16>
    %cst_79 = arith.constant dense<0.000000e+00> : vector<288x128xf32>
    %103 = tpu.matmul %101, %102, %cst_79 {dimension_numbers = #tpu.dot_dimension_numbers<[1], [0], [0], [1], [0, 0, 1, 1], [], []>} : vector<288x128xbf16>, vector<128x128xbf16>, vector<288x128xf32> -> vector<288x128xf32>
    %c0_80 = arith.constant 0 : index
    %c0_81 = arith.constant 0 : index
    %104 = vector.load %arg7[%c0_80, %c0_81] : memref<1x128xf32, #tpu.memory_space<vmem>>, vector<1x128xf32>
    %105 = vector.broadcast %104 : vector<1x128xf32> to vector<288x128xf32>
    %106 = arith.addf %103, %105 : vector<288x128xf32>
    %107 = arith.addf %99, %106 : vector<288x128xf32>
    %108 = arith.negf %107 : vector<288x128xf32>
    %109 = math.exp %108 : vector<288x128xf32>
    %cst_82 = arith.constant 1.000000e+00 : f32
    %110 = vector.broadcast %cst_82 : f32 to vector<288x128xf32>
    %111 = arith.addf %110, %109 : vector<288x128xf32>
    %112 = arith.divf %110, %111 : vector<288x128xf32>
    %113 = arith.mulf %107, %112 : vector<288x128xf32>
    %c0_83 = arith.constant 0 : index
    %c0_84 = arith.constant 0 : index
    %c0_85 = arith.constant 0 : index
    %114 = vector.load %arg8[%c0_83, %c0_84, %c0_85] : memref<1x288x128xf32, #tpu.memory_space<vmem>>, vector<1x288x128xf32>
    %115 = vector.shape_cast %114 : vector<1x288x128xf32> to vector<288x128xf32>
    %116 = vector.shape_cast %113 : vector<288x128xf32> to vector<1x288x128xf32>
    tpu.vector_store %arg8[%c0_83, %c0_84, %c0_85], %116 {strides = array<i32>} : memref<1x288x128xf32, #tpu.memory_space<vmem>>, vector<1x288x128xf32>,
    return
  }
  func.func @transform_0(%arg0: i32) -> (i32, i32, i32) {
    %c0_i32 = arith.constant 0 : i32
    %c0_i32_0 = arith.constant 0 : i32
    %c0_i32_1 = arith.constant 0 : i32
    return %arg0, %c0_i32, %c0_i32_0 : i32, i32, i32
  }
  func.func @transform_1(%arg0: i32) -> (i32, i32, i32) {
    %c0_i32 = arith.constant 0 : i32
    %c0_i32_0 = arith.constant 0 : i32
    %c0_i32_1 = arith.constant 0 : i32
    %c0_i32_2 = arith.constant 0 : i32
    return %c0_i32, %c0_i32_0, %c0_i32_1 : i32, i32, i32
  }
  func.func @transform_2(%arg0: i32) -> (i32, i32) {
    %c0_i32 = arith.constant 0 : i32
    %c0_i32_0 = arith.constant 0 : i32
    %c0_i32_1 = arith.constant 0 : i32
    return %c0_i32, %c0_i32_0 : i32, i32
  }
  func.func @transform_3(%arg0: i32) -> (i32, i32, i32) {
    %c0_i32 = arith.constant 0 : i32
    %c0_i32_0 = arith.constant 0 : i32
    %c0_i32_1 = arith.constant 0 : i32
    %c0_i32_2 = arith.constant 0 : i32
    return %c0_i32, %c0_i32_0, %c0_i32_1 : i32, i32, i32
  }
  func.func @transform_4(%arg0: i32) -> (i32, i32) {
    %c0_i32 = arith.constant 0 : i32
    %c0_i32_0 = arith.constant 0 : i32
    %c0_i32_1 = arith.constant 0 : i32
    return %c0_i32, %c0_i32_0 : i32, i32
  }
  func.func @transform_5(%arg0: i32) -> (i32, i32) {
    %c0_i32 = arith.constant 0 : i32
    %c0_i32_0 = arith.constant 0 : i32
    %c0_i32_1 = arith.constant 0 : i32
    return %c0_i32, %c0_i32_0 : i32, i32
  }
  func.func @transform_6(%arg0: i32) -> (i32, i32) {
    %c0_i32 = arith.constant 0 : i32
    %c0_i32_0 = arith.constant 0 : i32
    %c0_i32_1 = arith.constant 0 : i32
    return %c0_i32, %c0_i32_0 : i32, i32
  }
  func.func @transform_7(%arg0: i32) -> (i32, i32, i32) {
    %c0_i32 = arith.constant 0 : i32
    %c0_i32_0 = arith.constant 0 : i32
    %c0_i32_1 = arith.constant 0 : i32
    return %arg0, %c0_i32, %c0_i32_0 : i32, i32, i32
  }
}

</mosaic_0001>

<llo_original>
// kernel: tpu_custom_call.1
$region0: #{tpu_custom_call.1}
  #allocation0 [shape = 'u32[]', space=smem, size = 0x4, offset = 0x4, fixed_abs, tag = 'smem constant byte address 0x4 - core index']
  #allocation1 [shape = 'u32[144,128]{1,0:T(1,128)}', space=vmem, size = 0x12000, scoped, tag = 'internal scratch']
  #allocation2 [shape = 'bf16[360,128]{1,0:T(8,128)(2,1)}', space=vmem, size = 0x16800, scoped, tag = 'scratch operand']
  %s0 = inlined_call_operand.hbm [shape: bf16[2,360,128], index: 0, kind: input, shape index: {}]
  %s1 = inlined_call_operand.hbm [shape: bf16[3,384,128], index: 1, kind: input, shape index: {}]
  %s2 = inlined_call_operand.vmem [shape: f32[1,128], index: 2, kind: input, shape index: {}]
  %s3 = inlined_call_operand.hbm [shape: bf16[3,384,128], index: 3, kind: input, shape index: {}]
  %s4 = inlined_call_operand.vmem [shape: f32[1,128], index: 4, kind: input, shape index: {}]
  %s5 = inlined_call_operand.hbm [shape: bf16[128,128], index: 5, kind: input, shape index: {}]
  %s6 = inlined_call_operand.vmem [shape: f32[1,128], index: 6, kind: input, shape index: {}]
  %s7 = inlined_call_operand.hbm [shape: f32[2,288,128], index: 7, kind: output, shape index: {}]
  %s8 = sld [smem:[#allocation0]]
  $region77: #{tpu_custom_call.1} parent=0
    _
  %s10 = ssub.s32 1, %s8
  %s11 = scalar_select 0, %s10, %s8
  $region1: #{tpu_custom_call.1} parent=0
    #allocation3 [shape = 'u8[184320]{0}', space=vmem, size = 0x2d000, scoped, tag = 'input window, operand 0']
    #allocation4 [shape = 's32[2]{0}', space=sflag, size = 0x8, scoped, tag = 'scoped memory for tpu_custom_call.1']
    #allocation5 [shape = 's32[2]{0}', space=sflag, size = 0x8, scoped, tag = 'scoped memory for tpu_custom_call.1']
    #allocation6 [shape = 'u8[294912]{0}', space=vmem, size = 0x48000, scoped, tag = 'input window, operand 1, single buffered']
    #allocation7 [shape = 's32[1]{0}', space=sflag, size = 0x4, scoped, tag = 'scoped memory for tpu_custom_call.1']
    #allocation8 [shape = 'u8[294912]{0}', space=vmem, size = 0x48000, scoped, tag = 'input window, operand 3, single buffered']
    #allocation9 [shape = 'u8[32768]{0}', space=vmem, size = 0x8000, scoped, tag = 'input window, operand 5, single buffered']
    #allocation10 [shape = 's32[1]{0}', space=sflag, size = 0x4, scoped, tag = 'scoped memory for tpu_custom_call.1']
    #allocation11 [shape = 'u8[294912]{0}', space=vmem, size = 0x48000, scoped, tag = 'output window, operand 0']
    %12 = vsyncpa [#allocation4], 0
    %s13 = scalar_lea.sflag [#allocation4], 1
    %14 = vsyncpa %s13, 0
    %15 = vsyncpa [#allocation7], 0
    %16 = vsyncpa [#allocation10], 0
    %17 = vsyncpa [#allocation5], 0
    %s18 = scalar_lea.sflag [#allocation5], 1
    %19 = vsyncpa %s18, 0
    loop: start=0, step=1, limit=4
    $region2: #{tpu_custom_call.1} parent=1 // loop_pre_header
      _
    $region3: #{tpu_custom_call.1} parent=1 // loop_header
      %s21 = sphi 0, %s25
      %p22 = scmp.ge.s32.totalorder %s21, 4
      %s31 = sphi 0, %s33
      %s34 = sphi 0, %s31
      %s35 = sphi 0, %s34
      %s51 = sphi 0, %s35
      %s55 = sphi 0, %s55
      %s57 = sphi 0, %s55
      %s58 = sphi 0, %s57
      %s72 = sphi 0, %s58
      %s76 = sphi 0, %s76
      %s78 = sphi 0, %s76
      %s79 = sphi 0, %s78
      %s93 = sphi 0, %s79
      %s97 = sphi 0, %s97
      %s99 = sphi 0, %s97
      %s100 = sphi 0, %s99
      %s114 = sphi 0, %s100
      %s118 = sphi 0, %s118
      %s120 = sphi 0, %s118
      %s121 = sphi 0, %s120
      %s135 = sphi 0, %s121
      %s139 = sphi 0, %s139
      %s141 = sphi 0, %s139
      %s142 = sphi 0, %s141
      %s156 = sphi 0, %s142
      %s160 = sphi 0, %s160
      %s162 = sphi 0, %s160
      %s163 = sphi 0, %s162
      %s177 = sphi 0, %s163
      %s183 = sphi 0, %s185
      %s186 = sphi 0, %s183
      %s187 = sphi 0, %s186
      %s203 = sphi 0, %s187
    $region4: #{tpu_custom_call.1} parent=1 // loop_header_branch
      %24 = sbr.rel (%p22) target = $region8
    $region5: #{tpu_custom_call.1} parent=1 // loop_body
      %s26 = ssub.s32 %s21, 1
      %s27 = ssub.s32 %s21, 2
      %s28 = sadd.s32 %s21, 1
      %s29 = ssub.s32 %s21, %s28
      %p30 = scmp.eq.s32.totalorder %s29, 0
      %s32 = sadd.s32 %s31, 1
      %s33 = scalar_select %p30, %s31, %s32
      %p36 = pneg %p30
      %p37 = scmp.eq.s32.totalorder %s21, 1
      %p38 = por %p36, %p37
      %p39 = scmp.ne.s32.totalorder %s31, %s34
      %p40 = scmp.eq.s32.totalorder %s21, 0
      %p41 = por %p39, %p40
      %p42 = scmp.ne.s32.totalorder %s31, %s34
      %p43 = scmp.eq.s32.totalorder %s26, 1
      %p44 = por %p42, %p43
      %p45 = scmp.ne.s32.totalorder %s34, %s35
      %p46 = scmp.eq.s32.totalorder %s26, 0
      %p47 = por %p45, %p46
      %p48 = scmp.ne.s32.totalorder %s34, %s35
      %p49 = scmp.eq.s32.totalorder %s27, 1
      %p50 = por %p48, %p49
      %p52 = scmp.ne.s32.totalorder %s35, %s51
      %p53 = scmp.eq.s32.totalorder %s27, 0
      %p54 = por %p52, %p53
      %s56 = sadd.s32 %s55, 1
      %p59 = scmp.eq.s32.totalorder %s21, 1
      %p60 = scmp.ne.s32.totalorder %s55, %s57
      %p61 = scmp.eq.s32.totalorder %s21, 0
      %p62 = por %p60, %p61
      %p63 = scmp.ne.s32.totalorder %s55, %s57
      %p64 = scmp.eq.s32.totalorder %s26, 1
      %p65 = por %p63, %p64
      %p66 = scmp.ne.s32.totalorder %s57, %s58
      %p67 = scmp.eq.s32.totalorder %s26, 0
      %p68 = por %p66, %p67
      %p69 = scmp.ne.s32.totalorder %s57, %s58
      %p70 = scmp.eq.s32.totalorder %s27, 1
      %p71 = por %p69, %p70
      %p73 = scmp.ne.s32.totalorder %s58, %s72
      %p74 = scmp.eq.s32.totalorder %s27, 0
      %p75 = por %p73, %p74
      %s77 = sadd.s32 %s76, 1
      %p80 = scmp.eq.s32.totalorder %s21, 1
      %p81 = scmp.ne.s32.totalorder %s76, %s78
      %p82 = scmp.eq.s32.totalorder %s21, 0
      %p83 = por %p81, %p82
      %p84 = scmp.ne.s32.totalorder %s76, %s78
      %p85 = scmp.eq.s32.totalorder %s26, 1
      %p86 = por %p84, %p85
      %p87 = scmp.ne.s32.totalorder %s78, %s79
      %p88 = scmp.eq.s32.totalorder %s26, 0
      %p89 = por %p87, %p88
      %p90 = scmp.ne.s32.totalorder %s78, %s79
      %p91 = scmp.eq.s32.totalorder %s27, 1
      %p92 = por %p90, %p91
      %p94 = scmp.ne.s32.totalorder %s79, %s93
      %p95 = scmp.eq.s32.totalorder %s27, 0
      %p96 = por %p94, %p95
      %s98 = sadd.s32 %s97, 1
      %p101 = scmp.eq.s32.totalorder %s21, 1
      %p102 = scmp.ne.s32.totalorder %s97, %s99
      %p103 = scmp.eq.s32.totalorder %s21, 0
      %p104 = por %p102, %p103
      %p105 = scmp.ne.s32.totalorder %s97, %s99
      %p106 = scmp.eq.s32.totalorder %s26, 1
      %p107 = por %p105, %p106
      %p108 = scmp.ne.s32.totalorder %s99, %s100
      %p109 = scmp.eq.s32.totalorder %s26, 0
      %p110 = por %p108, %p109
      %p111 = scmp.ne.s32.totalorder %s99, %s100
      %p112 = scmp.eq.s32.totalorder %s27, 1
      %p113 = por %p111, %p112
      %p115 = scmp.ne.s32.totalorder %s100, %s114
      %p116 = scmp.eq.s32.totalorder %s27, 0
      %p117 = por %p115, %p116
      %s119 = sadd.s32 %s118, 1
      %p122 = scmp.eq.s32.totalorder %s21, 1
      %p123 = scmp.ne.s32.totalorder %s118, %s120
      %p124 = scmp.eq.s32.totalorder %s21, 0
      %p125 = por %p123, %p124
      %p126 = scmp.ne.s32.totalorder %s118, %s120
      %p127 = scmp.eq.s32.totalorder %s26, 1
      %p128 = por %p126, %p127
      %p129 = scmp.ne.s32.totalorder %s120, %s121
      %p130 = scmp.eq.s32.totalorder %s26, 0
      %p131 = por %p129, %p130
      %p132 = scmp.ne.s32.totalorder %s120, %s121
      %p133 = scmp.eq.s32.totalorder %s27, 1
      %p134 = por %p132, %p133
      %p136 = scmp.ne.s32.totalorder %s121, %s135
      %p137 = scmp.eq.s32.totalorder %s27, 0
      %p138 = por %p136, %p137
      %s140 = sadd.s32 %s139, 1
      %p143 = scmp.eq.s32.totalorder %s21, 1
      %p144 = scmp.ne.s32.totalorder %s139, %s141
      %p145 = scmp.eq.s32.totalorder %s21, 0
      %p146 = por %p144, %p145
      %p147 = scmp.ne.s32.totalorder %s139, %s141
      %p148 = scmp.eq.s32.totalorder %s26, 1
      %p149 = por %p147, %p148
      %p150 = scmp.ne.s32.totalorder %s141, %s142
      %p151 = scmp.eq.s32.totalorder %s26, 0
      %p152 = por %p150, %p151
      %p153 = scmp.ne.s32.totalorder %s141, %s142
      %p154 = scmp.eq.s32.totalorder %s27, 1
      %p155 = por %p153, %p154
      %p157 = scmp.ne.s32.totalorder %s142, %s156
      %p158 = scmp.eq.s32.totalorder %s27, 0
      %p159 = por %p157, %p158
      %s161 = sadd.s32 %s160, 1
      %p164 = scmp.eq.s32.totalorder %s21, 1
      %p165 = scmp.ne.s32.totalorder %s160, %s162
      %p166 = scmp.eq.s32.totalorder %s21, 0
      %p167 = por %p165, %p166
      %p168 = scmp.ne.s32.totalorder %s160, %s162
      %p169 = scmp.eq.s32.totalorder %s26, 1
      %p170 = por %p168, %p169
      %p171 = scmp.ne.s32.totalorder %s162, %s163
      %p172 = scmp.eq.s32.totalorder %s26, 0
      %p173 = por %p171, %p172
      %p174 = scmp.ne.s32.totalorder %s162, %s163
      %p175 = scmp.eq.s32.totalorder %s27, 1
      %p176 = por %p174, %p175
      %p178 = scmp.ne.s32.totalorder %s163, %s177
      %p179 = scmp.eq.s32.totalorder %s27, 0
      %p180 = por %p178, %p179
      %s181 = ssub.s32 %s21, %s28
      %p182 = scmp.eq.s32.totalorder %s181, 0
      %s184 = sadd.s32 %s183, 1
      %s185 = scalar_select %p182, %s183, %s184
      %p188 = pneg %p182
      %p189 = scmp.eq.s32.totalorder %s21, 1
      %p190 = por %p188, %p189
      %p191 = scmp.ne.s32.totalorder %s183, %s186
      %p192 = scmp.eq.s32.totalorder %s21, 0
      %p193 = por %p191, %p192
      %p194 = scmp.ne.s32.totalorder %s183, %s186
      %p195 = scmp.eq.s32.totalorder %s26, 1
      %p196 = por %p194, %p195
      %p197 = scmp.ne.s32.totalorder %s186, %s187
      %p198 = scmp.eq.s32.totalorder %s26, 0
      %p199 = por %p197, %p198
      %p200 = scmp.ne.s32.totalorder %s186, %s187
      %p201 = scmp.eq.s32.totalorder %s27, 1
      %p202 = por %p200, %p201
      %p204 = scmp.ne.s32.totalorder %s187, %s203
      %p205 = scmp.eq.s32.totalorder %s27, 0
      %p206 = por %p204, %p205
      %p207 = scmp.le.s32.totalorder 1, %s21
      %p208 = scmp.lt.s32.totalorder %s21, 3
      %p209 = pnand %p207, %p208
      %p210 = pneg %p209
      // Predicated region
      $region9: #{tpu_custom_call.1} parent=5 // pred_check
        _
      $region10: #{tpu_custom_call.1} parent=5 // pred_check_branch
        %212 = sbr.rel (%p209) target = $region12
      $region11: #{tpu_custom_call.1} parent=5 // pred_region
        %s213 = ssub.s32 %s21, 1
        // Predicated region
        $region13: #{tpu_custom_call.1} parent=11 // pred_check
          %p214 = pneg %p68
        $region14: #{tpu_custom_call.1} parent=11 // pred_check_branch
          %216 = sbr.rel (%p214) target = $region16
        $region15: #{tpu_custom_call.1} parent=11 // pred_region
          %s218 = ssub.s32 9216, 9216
          %219 = vsyncadd [#allocation7], %s218
          %s220 = sshll.u32 [#allocation6], 4
          %s221 = int_to_ptr.vmem [resolvable:$true] %s220
          %226 = dma.hbm_to_vmem [thread:$0]  %s1, 9216, %s221, [#allocation7], 64, 64, 4
        $region16: #{tpu_custom_call.1} parent=11 // pred_fallthru
          _
        // Predicated region
        $region17: #{tpu_custom_call.1} parent=11 // pred_check
          %p227 = pneg %p89
        $region18: #{tpu_custom_call.1} parent=11 // pred_check_branch
          %229 = sbr.rel (%p227) target = $region20
        $region19: #{tpu_custom_call.1} parent=11 // pred_region
          _
        $region20: #{tpu_custom_call.1} parent=11 // pred_fallthru
          _
        // Predicated region
        $region21: #{tpu_custom_call.1} parent=11 // pred_check
          %p230 = pneg %p110
        $region22: #{tpu_custom_call.1} parent=11 // pred_check_branch
          %232 = sbr.rel (%p230) target = $region24
        $region23: #{tpu_custom_call.1} parent=11 // pred_region
          %s234 = ssub.s32 9216, 9216
          %235 = vsyncadd [#allocation7], %s234
          %s236 = sshll.u32 [#allocation8], 4
          %s237 = int_to_ptr.vmem [resolvable:$true] %s236
          %242 = dma.hbm_to_vmem [thread:$0]  %s3, 9216, %s237, [#allocation7], 64, 64, 4
        $region24: #{tpu_custom_call.1} parent=11 // pred_fallthru
          _
        // Predicated region
        $region25: #{tpu_custom_call.1} parent=11 // pred_check
          %p243 = pneg %p131
        $region26: #{tpu_custom_call.1} parent=11 // pred_check_branch
          %245 = sbr.rel (%p243) target = $region28
        $region27: #{tpu_custom_call.1} parent=11 // pred_region
          _
        $region28: #{tpu_custom_call.1} parent=11 // pred_fallthru
          _
        // Predicated region
        $region29: #{tpu_custom_call.1} parent=11 // pred_check
          %p246 = pneg %p152
        $region30: #{tpu_custom_call.1} parent=11 // pred_check_branch
          %248 = sbr.rel (%p246) target = $region32
        $region31: #{tpu_custom_call.1} parent=11 // pred_region
          %s250 = ssub.s32 1024, 1024
          %251 = vsyncadd [#allocation10], %s250
          %s252 = sshll.u32 [#allocation9], 4
          %s253 = int_to_ptr.vmem [resolvable:$true] %s252
          %258 = dma.hbm_to_vmem [thread:$0]  %s5, 1024, %s253, [#allocation10], 64, 64, 4
        $region32: #{tpu_custom_call.1} parent=11 // pred_fallthru
          _
        // Predicated region
        $region33: #{tpu_custom_call.1} parent=11 // pred_check
          %p259 = pneg %p173
        $region34: #{tpu_custom_call.1} parent=11 // pred_check_branch
          %261 = sbr.rel (%p259) target = $region36
        $region35: #{tpu_custom_call.1} parent=11 // pred_region
          _
        $region36: #{tpu_custom_call.1} parent=11 // pred_fallthru
          _
      $region12: #{tpu_custom_call.1} parent=5 // pred_fallthru
        _
      %p262 = scmp.lt.s32.totalorder %s21, 2
      // Predicated region
      $region37: #{tpu_custom_call.1} parent=5 // pred_check
        %p263 = pneg %p262
      $region38: #{tpu_custom_call.1} parent=5 // pred_check_branch
        %265 = sbr.rel (%p263) target = $region40
      $region39: #{tpu_custom_call.1} parent=5 // pred_region
        // Predicated region
        $region41: #{tpu_custom_call.1} parent=39 // pred_check
          %p266 = pneg %p41
        $region42: #{tpu_custom_call.1} parent=39 // pred_check_branch
          %268 = sbr.rel (%p266) target = $region44
        $region43: #{tpu_custom_call.1} parent=39 // pred_region
          %s269 = sand.u32 %s31, 1
          %s270 = scalar_lea.sflag [#allocation4], %s269
          %s271 = sand.u32 %s31, 1
          %s272 = smul.addr %s271, 180
          %s273 = scalar_lea.vmem [#allocation3], %s272
          %s275 = ssub.s32 2880, 2880
          %276 = vsyncadd %s270, %s275
          %s277 = smul.addr %s21, 45
          %s278 = smul.addr %s277, 64
          %s279 = scalar_lea.hbm %s0, %s278
          %s280 = sshll.u32 %s273, 4
          %s281 = int_to_ptr.vmem [resolvable:$true] %s280
          %286 = dma.hbm_to_vmem [thread:$0]  %s279, 2880, %s281, %s270, 64, 64, 4
        $region44: #{tpu_custom_call.1} parent=39 // pred_fallthru
          _
      $region40: #{tpu_custom_call.1} parent=5 // pred_fallthru
        _
      %p287 = scmp.le.s32.totalorder 1, %s21
      %p288 = scmp.lt.s32.totalorder %s21, 3
      %p289 = pnand %p287, %p288
      %p290 = pneg %p289
      // Predicated region
      $region45: #{tpu_custom_call.1} parent=5 // pred_check
        _
      $region46: #{tpu_custom_call.1} parent=5 // pred_check_branch
        %292 = sbr.rel (%p289) target = $region48
      $region47: #{tpu_custom_call.1} parent=5 // pred_region
        %s293 = ssub.s32 %s21, 1
        %s294 = sand.u32 %s34, 1
        %s295 = scalar_lea.sflag [#allocation4], %s294
        %s296 = sand.u32 %s34, 1
        %s297 = smul.addr %s296, 180
        %s298 = scalar_lea.vmem [#allocation3], %s297
        // Predicated region
        $region49: #{tpu_custom_call.1} parent=47 // pred_check
          %p299 = pneg %p47
        $region50: #{tpu_custom_call.1} parent=47 // pred_check_branch
          %301 = sbr.rel (%p299) target = $region52
        $region51: #{tpu_custom_call.1} parent=47 // pred_region
          %302 = dma.done %s295, 2880
        $region52: #{tpu_custom_call.1} parent=47 // pred_fallthru
          _
        // Predicated region
        $region53: #{tpu_custom_call.1} parent=47 // pred_check
          %p303 = pneg %p68
        $region54: #{tpu_custom_call.1} parent=47 // pred_check_branch
          %305 = sbr.rel (%p303) target = $region56
        $region55: #{tpu_custom_call.1} parent=47 // pred_region
          %306 = dma.done [#allocation7], 9216
        $region56: #{tpu_custom_call.1} parent=47 // pred_fallthru
          _
        // Predicated region
        $region57: #{tpu_custom_call.1} parent=47 // pred_check
          %p307 = pneg %p110
        $region58: #{tpu_custom_call.1} parent=47 // pred_check_branch
          %309 = sbr.rel (%p307) target = $region60
        $region59: #{tpu_custom_call.1} parent=47 // pred_region
          %310 = dma.done [#allocation7], 9216
        $region60: #{tpu_custom_call.1} parent=47 // pred_fallthru
          _
        // Predicated region
        $region61: #{tpu_custom_call.1} parent=47 // pred_check
          %p311 = pneg %p152
        $region62: #{tpu_custom_call.1} parent=47 // pred_check_branch
          %313 = sbr.rel (%p311) target = $region64
        $region63: #{tpu_custom_call.1} parent=47 // pred_region
          %314 = dma.done [#allocation10], 1024
        $region64: #{tpu_custom_call.1} parent=47 // pred_fallthru
          _
        %s315 = sand.u32 %s34, 1
        %s316 = scalar_lea.sflag [#allocation4], %s315
        %s317 = sand.u32 %s34, 1
        %s318 = smul.addr %s317, 180
        %s319 = scalar_lea.vmem [#allocation3], %s318
        %p320 = pneg %p47
        %p321 = pneg %p44
        %p322 = pneg %p68
        %p323 = pneg %p65
        %p324 = pneg %p89
        %p325 = pneg %p86
        %p326 = pneg %p110
        %p327 = pneg %p107
        %p328 = pneg %p131
        %p329 = pneg %p128
        %p330 = pneg %p152
        %p331 = pneg %p149
        %p332 = pneg %p173
        %p333 = pneg %p170
        %p334 = pneg %p199
        %p335 = pneg %p196
        %s336 = sand.u32 %s186, 1
        %s337 = scalar_lea.sflag [#allocation5], %s336
        %s338 = sand.u32 %s186, 1
        %s339 = smul.addr %s338, 288
        %s340 = scalar_lea.vmem [#allocation11], %s339
        %v342 = vlaneseq
        %v343 = vshrl.u32 %v342, 7
        %v344 = vadd.s32 %v343, 8
        %v345 = vadd.s32 %v343, 16
        %v346 = vadd.s32 %v343, 24
        %v347 = vadd.s32 %v343, 32
        %v348 = vadd.s32 %v343, 40
        %v349 = vadd.s32 %v343, 48
        %v350 = vadd.s32 %v343, 56
        %v351 = vadd.s32 %v343, 64
        %v352 = vadd.s32 %v343, 72
        %v353 = vadd.s32 %v343, 80
        %v354 = vadd.s32 %v343, 88
        %v355 = vadd.s32 %v343, 96
        %v356 = vadd.s32 %v343, 104
        %v357 = vadd.s32 %v343, 112
        %v358 = vadd.s32 %v343, 120
        %v359 = vadd.s32 %v343, 128
        %v360 = vadd.s32 %v343, 136
        %v361 = vadd.s32 %v343, 144
        %v362 = vadd.s32 %v343, 152
        %v363 = vadd.s32 %v343, 160
        %v364 = vadd.s32 %v343, 168
        %v365 = vadd.s32 %v343, 176
        %v366 = vadd.s32 %v343, 184
        %v367 = vadd.s32 %v343, 192
        %v368 = vadd.s32 %v343, 200
        %v369 = vadd.s32 %v343, 208
        %v370 = vadd.s32 %v343, 216
        %v371 = vadd.s32 %v343, 224
        %v372 = vadd.s32 %v343, 232
        %v373 = vadd.s32 %v343, 240
        %v374 = vadd.s32 %v343, 248
        %v375 = vadd.s32 %v343, 256
        %v376 = vadd.s32 %v343, 264
        %v377 = vadd.s32 %v343, 272
        %v378 = vadd.s32 %v343, 280
        %vm379 = vcmp.lt.s32.totalorder %v343, 0
        %v380 = vsub.s32 0, %v343
        %v381 = vsel %vm379, %v380, %v343
        %v382 = vmul.u32.u64.compose %v381, 3817748708
        %v383 = vextract.low.u32 %v382
        %v384 = vextract.high.u32 %v382
        %v385 = vshrl.u32 %v384, 4
        %v386 = vmul.u32 %v385, 18
        %v387 = vsub.s32 %v381, %v386
        %v388 = vsub.s32 0, %v387
        %v389 = vsel %vm379, %v388, %v387
        %vm390 = vcmp.lt.s32.totalorder %v344, 0
        %v391 = vsub.s32 0, %v344
        %v392 = vsel %vm390, %v391, %v344
        %v393 = vmul.u32.u64.compose %v392, 3817748708
        %v394 = vextract.low.u32 %v393
        %v395 = vextract.high.u32 %v393
        %v396 = vshrl.u32 %v395, 4
        %v397 = vmul.u32 %v396, 18
        %v398 = vsub.s32 %v392, %v397
        %v399 = vsub.s32 0, %v398
        %v400 = vsel %vm390, %v399, %v398
        %vm401 = vcmp.lt.s32.totalorder %v345, 0
        %v402 = vsub.s32 0, %v345
        %v403 = vsel %vm401, %v402, %v345
        %v404 = vmul.u32.u64.compose %v403, 3817748708
        %v405 = vextract.low.u32 %v404
        %v406 = vextract.high.u32 %v404
        %v407 = vshrl.u32 %v406, 4
        %v408 = vmul.u32 %v407, 18
        %v409 = vsub.s32 %v403, %v408
        %v410 = vsub.s32 0, %v409
        %v411 = vsel %vm401, %v410, %v409
        %vm412 = vcmp.lt.s32.totalorder %v346, 0
        %v413 = vsub.s32 0, %v346
        %v414 = vsel %vm412, %v413, %v346
        %v415 = vmul.u32.u64.compose %v414, 3817748708
        %v416 = vextract.low.u32 %v415
        %v417 = vextract.high.u32 %v415
        %v418 = vshrl.u32 %v417, 4
        %v419 = vmul.u32 %v418, 18
        %v420 = vsub.s32 %v414, %v419
        %v421 = vsub.s32 0, %v420
        %v422 = vsel %vm412, %v421, %v420
        %vm423 = vcmp.lt.s32.totalorder %v347, 0
        %v424 = vsub.s32 0, %v347
        %v425 = vsel %vm423, %v424, %v347
        %v426 = vmul.u32.u64.compose %v425, 3817748708
        %v427 = vextract.low.u32 %v426
        %v428 = vextract.high.u32 %v426
        %v429 = vshrl.u32 %v428, 4
        %v430 = vmul.u32 %v429, 18
        %v431 = vsub.s32 %v425, %v430
        %v432 = vsub.s32 0, %v431
        %v433 = vsel %vm423, %v432, %v431
        %vm434 = vcmp.lt.s32.totalorder %v348, 0
        %v435 = vsub.s32 0, %v348
        %v436 = vsel %vm434, %v435, %v348
        %v437 = vmul.u32.u64.compose %v436, 3817748708
        %v438 = vextract.low.u32 %v437
        %v439 = vextract.high.u32 %v437
        %v440 = vshrl.u32 %v439, 4
        %v441 = vmul.u32 %v440, 18
        %v442 = vsub.s32 %v436, %v441
        %v443 = vsub.s32 0, %v442
        %v444 = vsel %vm434, %v443, %v442
        %vm445 = vcmp.lt.s32.totalorder %v349, 0
        %v446 = vsub.s32 0, %v349
        %v447 = vsel %vm445, %v446, %v349
        %v448 = vmul.u32.u64.compose %v447, 3817748708
        %v449 = vextract.low.u32 %v448
        %v450 = vextract.high.u32 %v448
        %v451 = vshrl.u32 %v450, 4
        %v452 = vmul.u32 %v451, 18
        %v453 = vsub.s32 %v447, %v452
        %v454 = vsub.s32 0, %v453
        %v455 = vsel %vm445, %v454, %v453
        %vm456 = vcmp.lt.s32.totalorder %v350, 0
        %v457 = vsub.s32 0, %v350
        %v458 = vsel %vm456, %v457, %v350
        %v459 = vmul.u32.u64.compose %v458, 3817748708
        %v460 = vextract.low.u32 %v459
        %v461 = vextract.high.u32 %v459
        %v462 = vshrl.u32 %v461, 4
        %v463 = vmul.u32 %v462, 18
        %v464 = vsub.s32 %v458, %v463
        %v465 = vsub.s32 0, %v464
        %v466 = vsel %vm456, %v465, %v464
        %vm467 = vcmp.lt.s32.totalorder %v351, 0
        %v468 = vsub.s32 0, %v351
        %v469 = vsel %vm467, %v468, %v351
        %v470 = vmul.u32.u64.compose %v469, 3817748708
        %v471 = vextract.low.u32 %v470
        %v472 = vextract.high.u32 %v470
        %v473 = vshrl.u32 %v472, 4
        %v474 = vmul.u32 %v473, 18
        %v475 = vsub.s32 %v469, %v474
        %v476 = vsub.s32 0, %v475
        %v477 = vsel %vm467, %v476, %v475
        %vm478 = vcmp.lt.s32.totalorder %v352, 0
        %v479 = vsub.s32 0, %v352
        %v480 = vsel %vm478, %v479, %v352
        %v481 = vmul.u32.u64.compose %v480, 3817748708
        %v482 = vextract.low.u32 %v481
        %v483 = vextract.high.u32 %v481
        %v484 = vshrl.u32 %v483, 4
        %v485 = vmul.u32 %v484, 18
        %v486 = vsub.s32 %v480, %v485
        %v487 = vsub.s32 0, %v486
        %v488 = vsel %vm478, %v487, %v486
        %vm489 = vcmp.lt.s32.totalorder %v353, 0
        %v490 = vsub.s32 0, %v353
        %v491 = vsel %vm489, %v490, %v353
        %v492 = vmul.u32.u64.compose %v491, 3817748708
        %v493 = vextract.low.u32 %v492
        %v494 = vextract.high.u32 %v492
        %v495 = vshrl.u32 %v494, 4
        %v496 = vmul.u32 %v495, 18
        %v497 = vsub.s32 %v491, %v496
        %v498 = vsub.s32 0, %v497
        %v499 = vsel %vm489, %v498, %v497
        %vm500 = vcmp.lt.s32.totalorder %v354, 0
        %v501 = vsub.s32 0, %v354
        %v502 = vsel %vm500, %v501, %v354
        %v503 = vmul.u32.u64.compose %v502, 3817748708
        %v504 = vextract.low.u32 %v503
        %v505 = vextract.high.u32 %v503
        %v506 = vshrl.u32 %v505, 4
        %v507 = vmul.u32 %v506, 18
        %v508 = vsub.s32 %v502, %v507
        %v509 = vsub.s32 0, %v508
        %v510 = vsel %vm500, %v509, %v508
        %vm511 = vcmp.lt.s32.totalorder %v355, 0
        %v512 = vsub.s32 0, %v355
        %v513 = vsel %vm511, %v512, %v355
        %v514 = vmul.u32.u64.compose %v513, 3817748708
        %v515 = vextract.low.u32 %v514
        %v516 = vextract.high.u32 %v514
        %v517 = vshrl.u32 %v516, 4
        %v518 = vmul.u32 %v517, 18
        %v519 = vsub.s32 %v513, %v518
        %v520 = vsub.s32 0, %v519
        %v521 = vsel %vm511, %v520, %v519
        %vm522 = vcmp.lt.s32.totalorder %v356, 0
        %v523 = vsub.s32 0, %v356
        %v524 = vsel %vm522, %v523, %v356
        %v525 = vmul.u32.u64.compose %v524, 3817748708
        %v526 = vextract.low.u32 %v525
        %v527 = vextract.high.u32 %v525
        %v528 = vshrl.u32 %v527, 4
        %v529 = vmul.u32 %v528, 18
        %v530 = vsub.s32 %v524, %v529
        %v531 = vsub.s32 0, %v530
        %v532 = vsel %vm522, %v531, %v530
        %vm533 = vcmp.lt.s32.totalorder %v357, 0
        %v534 = vsub.s32 0, %v357
        %v535 = vsel %vm533, %v534, %v357
        %v536 = vmul.u32.u64.compose %v535, 3817748708
        %v537 = vextract.low.u32 %v536
        %v538 = vextract.high.u32 %v536
        %v539 = vshrl.u32 %v538, 4
        %v540 = vmul.u32 %v539, 18
        %v541 = vsub.s32 %v535, %v540
        %v542 = vsub.s32 0, %v541
        %v543 = vsel %vm533, %v542, %v541
        %vm544 = vcmp.lt.s32.totalorder %v358, 0
        %v545 = vsub.s32 0, %v358
        %v546 = vsel %vm544, %v545, %v358
        %v547 = vmul.u32.u64.compose %v546, 3817748708
        %v548 = vextract.low.u32 %v547
        %v549 = vextract.high.u32 %v547
        %v550 = vshrl.u32 %v549, 4
        %v551 = vmul.u32 %v550, 18
        %v552 = vsub.s32 %v546, %v551
        %v553 = vsub.s32 0, %v552
        %v554 = vsel %vm544, %v553, %v552
        %vm555 = vcmp.lt.s32.totalorder %v359, 0
        %v556 = vsub.s32 0, %v359
        %v557 = vsel %vm555, %v556, %v359
        %v558 = vmul.u32.u64.compose %v557, 3817748708
        %v559 = vextract.low.u32 %v558
        %v560 = vextract.high.u32 %v558
        %v561 = vshrl.u32 %v560, 4
        %v562 = vmul.u32 %v561, 18
        %v563 = vsub.s32 %v557, %v562
        %v564 = vsub.s32 0, %v563
        %v565 = vsel %vm555, %v564, %v563
        %vm566 = vcmp.lt.s32.totalorder %v360, 0
        %v567 = vsub.s32 0, %v360
        %v568 = vsel %vm566, %v567, %v360
        %v569 = vmul.u32.u64.compose %v568, 3817748708
        %v570 = vextract.low.u32 %v569
        %v571 = vextract.high.u32 %v569
        %v572 = vshrl.u32 %v571, 4
        %v573 = vmul.u32 %v572, 18
        %v574 = vsub.s32 %v568, %v573
        %v575 = vsub.s32 0, %v574
        %v576 = vsel %vm566, %v575, %v574
        %vm577 = vcmp.lt.s32.totalorder %v361, 0
        %v578 = vsub.s32 0, %v361
        %v579 = vsel %vm577, %v578, %v361
        %v580 = vmul.u32.u64.compose %v579, 3817748708
        %v581 = vextract.low.u32 %v580
        %v582 = vextract.high.u32 %v580
        %v583 = vshrl.u32 %v582, 4
        %v584 = vmul.u32 %v583, 18
        %v585 = vsub.s32 %v579, %v584
        %v586 = vsub.s32 0, %v585
        %v587 = vsel %vm577, %v586, %v585
        %vm588 = vcmp.lt.s32.totalorder %v362, 0
        %v589 = vsub.s32 0, %v362
        %v590 = vsel %vm588, %v589, %v362
        %v591 = vmul.u32.u64.compose %v590, 3817748708
        %v592 = vextract.low.u32 %v591
        %v593 = vextract.high.u32 %v591
        %v594 = vshrl.u32 %v593, 4
        %v595 = vmul.u32 %v594, 18
        %v596 = vsub.s32 %v590, %v595
        %v597 = vsub.s32 0, %v596
        %v598 = vsel %vm588, %v597, %v596
        %vm599 = vcmp.lt.s32.totalorder %v363, 0
        %v600 = vsub.s32 0, %v363
        %v601 = vsel %vm599, %v600, %v363
        %v602 = vmul.u32.u64.compose %v601, 3817748708
        %v603 = vextract.low.u32 %v602
        %v604 = vextract.high.u32 %v602
        %v605 = vshrl.u32 %v604, 4
        %v606 = vmul.u32 %v605, 18
        %v607 = vsub.s32 %v601, %v606
        %v608 = vsub.s32 0, %v607
        %v609 = vsel %vm599, %v608, %v607
        %vm610 = vcmp.lt.s32.totalorder %v364, 0
        %v611 = vsub.s32 0, %v364
        %v612 = vsel %vm610, %v611, %v364
        %v613 = vmul.u32.u64.compose %v612, 3817748708
        %v614 = vextract.low.u32 %v613
        %v615 = vextract.high.u32 %v613
        %v616 = vshrl.u32 %v615, 4
        %v617 = vmul.u32 %v616, 18
        %v618 = vsub.s32 %v612, %v617
        %v619 = vsub.s32 0, %v618
        %v620 = vsel %vm610, %v619, %v618
        %vm621 = vcmp.lt.s32.totalorder %v365, 0
        %v622 = vsub.s32 0, %v365
        %v623 = vsel %vm621, %v622, %v365
        %v624 = vmul.u32.u64.compose %v623, 3817748708
        %v625 = vextract.low.u32 %v624
        %v626 = vextract.high.u32 %v624
        %v627 = vshrl.u32 %v626, 4
        %v628 = vmul.u32 %v627, 18
        %v629 = vsub.s32 %v623, %v628
        %v630 = vsub.s32 0, %v629
        %v631 = vsel %vm621, %v630, %v629
        %vm632 = vcmp.lt.s32.totalorder %v366, 0
        %v633 = vsub.s32 0, %v366
        %v634 = vsel %vm632, %v633, %v366
        %v635 = vmul.u32.u64.compose %v634, 3817748708
        %v636 = vextract.low.u32 %v635
        %v637 = vextract.high.u32 %v635
        %v638 = vshrl.u32 %v637, 4
        %v639 = vmul.u32 %v638, 18
        %v640 = vsub.s32 %v634, %v639
        %v641 = vsub.s32 0, %v640
        %v642 = vsel %vm632, %v641, %v640
        %vm643 = vcmp.lt.s32.totalorder %v367, 0
        %v644 = vsub.s32 0, %v367
        %v645 = vsel %vm643, %v644, %v367
        %v646 = vmul.u32.u64.compose %v645, 3817748708
        %v647 = vextract.low.u32 %v646
        %v648 = vextract.high.u32 %v646
        %v649 = vshrl.u32 %v648, 4
        %v650 = vmul.u32 %v649, 18
        %v651 = vsub.s32 %v645, %v650
        %v652 = vsub.s32 0, %v651
        %v653 = vsel %vm643, %v652, %v651
        %vm654 = vcmp.lt.s32.totalorder %v368, 0
        %v655 = vsub.s32 0, %v368
        %v656 = vsel %vm654, %v655, %v368
        %v657 = vmul.u32.u64.compose %v656, 3817748708
        %v658 = vextract.low.u32 %v657
        %v659 = vextract.high.u32 %v657
        %v660 = vshrl.u32 %v659, 4
        %v661 = vmul.u32 %v660, 18
        %v662 = vsub.s32 %v656, %v661
        %v663 = vsub.s32 0, %v662
        %v664 = vsel %vm654, %v663, %v662
        %vm665 = vcmp.lt.s32.totalorder %v369, 0
        %v666 = vsub.s32 0, %v369
        %v667 = vsel %vm665, %v666, %v369
        %v668 = vmul.u32.u64.compose %v667, 3817748708
        %v669 = vextract.low.u32 %v668
        %v670 = vextract.high.u32 %v668
        %v671 = vshrl.u32 %v670, 4
        %v672 = vmul.u32 %v671, 18
        %v673 = vsub.s32 %v667, %v672
        %v674 = vsub.s32 0, %v673
        %v675 = vsel %vm665, %v674, %v673
        %vm676 = vcmp.lt.s32.totalorder %v370, 0
        %v677 = vsub.s32 0, %v370
        %v678 = vsel %vm676, %v677, %v370
        %v679 = vmul.u32.u64.compose %v678, 3817748708
        %v680 = vextract.low.u32 %v679
        %v681 = vextract.high.u32 %v679
        %v682 = vshrl.u32 %v681, 4
        %v683 = vmul.u32 %v682, 18
        %v684 = vsub.s32 %v678, %v683
        %v685 = vsub.s32 0, %v684
        %v686 = vsel %vm676, %v685, %v684
        %vm687 = vcmp.lt.s32.totalorder %v371, 0
        %v688 = vsub.s32 0, %v371
        %v689 = vsel %vm687, %v688, %v371
        %v690 = vmul.u32.u64.compose %v689, 3817748708
        %v691 = vextract.low.u32 %v690
        %v692 = vextract.high.u32 %v690
        %v693 = vshrl.u32 %v692, 4
        %v694 = vmul.u32 %v693, 18
        %v695 = vsub.s32 %v689, %v694
        %v696 = vsub.s32 0, %v695
        %v697 = vsel %vm687, %v696, %v695
        %vm698 = vcmp.lt.s32.totalorder %v372, 0
        %v699 = vsub.s32 0, %v372
        %v700 = vsel %vm698, %v699, %v372
        %v701 = vmul.u32.u64.compose %v700, 3817748708
        %v702 = vextract.low.u32 %v701
        %v703 = vextract.high.u32 %v701
        %v704 = vshrl.u32 %v703, 4
        %v705 = vmul.u32 %v704, 18
        %v706 = vsub.s32 %v700, %v705
        %v707 = vsub.s32 0, %v706
        %v708 = vsel %vm698, %v707, %v706
        %vm709 = vcmp.lt.s32.totalorder %v373, 0
        %v710 = vsub.s32 0, %v373
        %v711 = vsel %vm709, %v710, %v373
        %v712 = vmul.u32.u64.compose %v711, 3817748708
        %v713 = vextract.low.u32 %v712
        %v714 = vextract.high.u32 %v712
        %v715 = vshrl.u32 %v714, 4
        %v716 = vmul.u32 %v715, 18
        %v717 = vsub.s32 %v711, %v716
        %v718 = vsub.s32 0, %v717
        %v719 = vsel %vm709, %v718, %v717
        %vm720 = vcmp.lt.s32.totalorder %v374, 0
        %v721 = vsub.s32 0, %v374
        %v722 = vsel %vm720, %v721, %v374
        %v723 = vmul.u32.u64.compose %v722, 3817748708
        %v724 = vextract.low.u32 %v723
        %v725 = vextract.high.u32 %v723
        %v726 = vshrl.u32 %v725, 4
        %v727 = vmul.u32 %v726, 18
        %v728 = vsub.s32 %v722, %v727
        %v729 = vsub.s32 0, %v728
        %v730 = vsel %vm720, %v729, %v728
        %vm731 = vcmp.lt.s32.totalorder %v375, 0
        %v732 = vsub.s32 0, %v375
        %v733 = vsel %vm731, %v732, %v375
        %v734 = vmul.u32.u64.compose %v733, 3817748708
        %v735 = vextract.low.u32 %v734
        %v736 = vextract.high.u32 %v734
        %v737 = vshrl.u32 %v736, 4
        %v738 = vmul.u32 %v737, 18
        %v739 = vsub.s32 %v733, %v738
        %v740 = vsub.s32 0, %v739
        %v741 = vsel %vm731, %v740, %v739
        %vm742 = vcmp.lt.s32.totalorder %v376, 0
        %v743 = vsub.s32 0, %v376
        %v744 = vsel %vm742, %v743, %v376
        %v745 = vmul.u32.u64.compose %v744, 3817748708
        %v746 = vextract.low.u32 %v745
        %v747 = vextract.high.u32 %v745
        %v748 = vshrl.u32 %v747, 4
        %v749 = vmul.u32 %v748, 18
        %v750 = vsub.s32 %v744, %v749
        %v751 = vsub.s32 0, %v750
        %v752 = vsel %vm742, %v751, %v750
        %vm753 = vcmp.lt.s32.totalorder %v377, 0
        %v754 = vsub.s32 0, %v377
        %v755 = vsel %vm753, %v754, %v377
        %v756 = vmul.u32.u64.compose %v755, 3817748708
        %v757 = vextract.low.u32 %v756
        %v758 = vextract.high.u32 %v756
        %v759 = vshrl.u32 %v758, 4
        %v760 = vmul.u32 %v759, 18
        %v761 = vsub.s32 %v755, %v760
        %v762 = vsub.s32 0, %v761
        %v763 = vsel %vm753, %v762, %v761
        %vm764 = vcmp.lt.s32.totalorder %v378, 0
        %v765 = vsub.s32 0, %v378
        %v766 = vsel %vm764, %v765, %v378
        %v767 = vmul.u32.u64.compose %v766, 3817748708
        %v768 = vextract.low.u32 %v767
        %v769 = vextract.high.u32 %v767
        %v770 = vshrl.u32 %v769, 4
        %v771 = vmul.u32 %v770, 18
        %v772 = vsub.s32 %v766, %v771
        %v773 = vsub.s32 0, %v772
        %v774 = vsel %vm764, %v773, %v772
        %vm775 = vcmp.ne.s32.totalorder %v389, 0
        %vm776 = vcmp.ne.s32.totalorder %v400, 0
        %vm777 = vcmp.ne.s32.totalorder %v411, 0
        %vm778 = vcmp.ne.s32.totalorder %v422, 0
        %vm779 = vcmp.ne.s32.totalorder %v433, 0
        %vm780 = vcmp.ne.s32.totalorder %v444, 0
        %vm781 = vcmp.ne.s32.totalorder %v455, 0
        %vm782 = vcmp.ne.s32.totalorder %v466, 0
        %vm783 = vcmp.ne.s32.totalorder %v477, 0
        %vm784 = vcmp.ne.s32.totalorder %v488, 0
        %vm785 = vcmp.ne.s32.totalorder %v499, 0
        %vm786 = vcmp.ne.s32.totalorder %v510, 0
        %vm787 = vcmp.ne.s32.totalorder %v521, 0
        %vm788 = vcmp.ne.s32.totalorder %v532, 0
        %vm789 = vcmp.ne.s32.totalorder %v543, 0
        %vm790 = vcmp.ne.s32.totalorder %v554, 0
        %vm791 = vcmp.ne.s32.totalorder %v565, 0
        %vm792 = vcmp.ne.s32.totalorder %v576, 0
        %vm793 = vcmp.ne.s32.totalorder %v587, 0
        %vm794 = vcmp.ne.s32.totalorder %v598, 0
        %vm795 = vcmp.ne.s32.totalorder %v609, 0
        %vm796 = vcmp.ne.s32.totalorder %v620, 0
        %vm797 = vcmp.ne.s32.totalorder %v631, 0
        %vm798 = vcmp.ne.s32.totalorder %v642, 0
        %vm799 = vcmp.ne.s32.totalorder %v653, 0
        %vm800 = vcmp.ne.s32.totalorder %v664, 0
        %vm801 = vcmp.ne.s32.totalorder %v675, 0
        %vm802 = vcmp.ne.s32.totalorder %v686, 0
        %vm803 = vcmp.ne.s32.totalorder %v697, 0
        %vm804 = vcmp.ne.s32.totalorder %v708, 0
        %vm805 = vcmp.ne.s32.totalorder %v719, 0
        %vm806 = vcmp.ne.s32.totalorder %v730, 0
        %vm807 = vcmp.ne.s32.totalorder %v741, 0
        %vm808 = vcmp.ne.s32.totalorder %v752, 0
        %vm809 = vcmp.ne.s32.totalorder %v763, 0
        %vm810 = vcmp.ne.s32.totalorder %v774, 0
        %vm811 = vcmp.lt.s32.totalorder %v389, 0
        %vm812 = vcmp.lt.s32.totalorder %v400, 0
        %vm813 = vcmp.lt.s32.totalorder %v411, 0
        %vm814 = vcmp.lt.s32.totalorder %v422, 0
        %vm815 = vcmp.lt.s32.totalorder %v433, 0
        %vm816 = vcmp.lt.s32.totalorder %v444, 0
        %vm817 = vcmp.lt.s32.totalorder %v455, 0
        %vm818 = vcmp.lt.s32.totalorder %v466, 0
        %vm819 = vcmp.lt.s32.totalorder %v477, 0
        %vm820 = vcmp.lt.s32.totalorder %v488, 0
        %vm821 = vcmp.lt.s32.totalorder %v499, 0
        %vm822 = vcmp.lt.s32.totalorder %v510, 0
        %vm823 = vcmp.lt.s32.totalorder %v521, 0
        %vm824 = vcmp.lt.s32.totalorder %v532, 0
        %vm825 = vcmp.lt.s32.totalorder %v543, 0
        %vm826 = vcmp.lt.s32.totalorder %v554, 0
        %vm827 = vcmp.lt.s32.totalorder %v565, 0
        %vm828 = vcmp.lt.s32.totalorder %v576, 0
        %vm829 = vcmp.lt.s32.totalorder %v587, 0
        %vm830 = vcmp.lt.s32.totalorder %v598, 0
        %vm831 = vcmp.lt.s32.totalorder %v609, 0
        %vm832 = vcmp.lt.s32.totalorder %v620, 0
        %vm833 = vcmp.lt.s32.totalorder %v631, 0
        %vm834 = vcmp.lt.s32.totalorder %v642, 0
        %vm835 = vcmp.lt.s32.totalorder %v653, 0
        %vm836 = vcmp.lt.s32.totalorder %v664, 0
        %vm837 = vcmp.lt.s32.totalorder %v675, 0
        %vm838 = vcmp.lt.s32.totalorder %v686, 0
        %vm839 = vcmp.lt.s32.totalorder %v697, 0
        %vm840 = vcmp.lt.s32.totalorder %v708, 0
        %vm841 = vcmp.lt.s32.totalorder %v719, 0
        %vm842 = vcmp.lt.s32.totalorder %v730, 0
        %vm843 = vcmp.lt.s32.totalorder %v741, 0
        %vm844 = vcmp.lt.s32.totalorder %v752, 0
        %vm845 = vcmp.lt.s32.totalorder %v763, 0
        %vm846 = vcmp.lt.s32.totalorder %v774, 0
        %vm847 = vmand %vm811, %vm775
        %vm848 = vmand %vm812, %vm776
        %vm849 = vmand %vm813, %vm777
        %vm850 = vmand %vm814, %vm778
        %vm851 = vmand %vm815, %vm779
        %vm852 = vmand %vm816, %vm780
        %vm853 = vmand %vm817, %vm781
        %vm854 = vmand %vm818, %vm782
        %vm855 = vmand %vm819, %vm783
        %vm856 = vmand %vm820, %vm784
        %vm857 = vmand %vm821, %vm785
        %vm858 = vmand %vm822, %vm786
        %vm859 = vmand %vm823, %vm787
        %vm860 = vmand %vm824, %vm788
        %vm861 = vmand %vm825, %vm789
        %vm862 = vmand %vm826, %vm790
        %vm863 = vmand %vm827, %vm791
        %vm864 = vmand %vm828, %vm792
        %vm865 = vmand %vm829, %vm793
        %vm866 = vmand %vm830, %vm794
        %vm867 = vmand %vm831, %vm795
        %vm868 = vmand %vm832, %vm796
        %vm869 = vmand %vm833, %vm797
        %vm870 = vmand %vm834, %vm798
        %vm871 = vmand %vm835, %vm799
        %vm872 = vmand %vm836, %vm800
        %vm873 = vmand %vm837, %vm801
        %vm874 = vmand %vm838, %vm802
        %vm875 = vmand %vm839, %vm803
        %vm876 = vmand %vm840, %vm804
        %vm877 = vmand %vm841, %vm805
        %vm878 = vmand %vm842, %vm806
        %vm879 = vmand %vm843, %vm807
        %vm880 = vmand %vm844, %vm808
        %vm881 = vmand %vm845, %vm809
        %vm882 = vmand %vm846, %vm810
        %v883 = vadd.s32 %v389, 18
        %v884 = vadd.s32 %v400, 18
        %v885 = vadd.s32 %v411, 18
        %v886 = vadd.s32 %v422, 18
        %v887 = vadd.s32 %v433, 18
        %v888 = vadd.s32 %v444, 18
        %v889 = vadd.s32 %v455, 18
        %v890 = vadd.s32 %v466, 18
        %v891 = vadd.s32 %v477, 18
        %v892 = vadd.s32 %v488, 18
        %v893 = vadd.s32 %v499, 18
        %v894 = vadd.s32 %v510, 18
        %v895 = vadd.s32 %v521, 18
        %v896 = vadd.s32 %v532, 18
        %v897 = vadd.s32 %v543, 18
        %v898 = vadd.s32 %v554, 18
        %v899 = vadd.s32 %v565, 18
        %v900 = vadd.s32 %v576, 18
        %v901 = vadd.s32 %v587, 18
        %v902 = vadd.s32 %v598, 18
        %v903 = vadd.s32 %v609, 18
        %v904 = vadd.s32 %v620, 18
        %v905 = vadd.s32 %v631, 18
        %v906 = vadd.s32 %v642, 18
        %v907 = vadd.s32 %v653, 18
        %v908 = vadd.s32 %v664, 18
        %v909 = vadd.s32 %v675, 18
        %v910 = vadd.s32 %v686, 18
        %v911 = vadd.s32 %v697, 18
        %v912 = vadd.s32 %v708, 18
        %v913 = vadd.s32 %v719, 18
        %v914 = vadd.s32 %v730, 18
        %v915 = vadd.s32 %v741, 18
        %v916 = vadd.s32 %v752, 18
        %v917 = vadd.s32 %v763, 18
        %v918 = vadd.s32 %v774, 18
        %v919 = vsel %vm847, %v883, %v389
        %v920 = vsel %vm848, %v884, %v400
        %v921 = vsel %vm849, %v885, %v411
        %v922 = vsel %vm850, %v886, %v422
        %v923 = vsel %vm851, %v887, %v433
        %v924 = vsel %vm852, %v888, %v444
        %v925 = vsel %vm853, %v889, %v455
        %v926 = vsel %vm854, %v890, %v466
        %v927 = vsel %vm855, %v891, %v477
        %v928 = vsel %vm856, %v892, %v488
        %v929 = vsel %vm857, %v893, %v499
        %v930 = vsel %vm858, %v894, %v510
        %v931 = vsel %vm859, %v895, %v521
        %v932 = vsel %vm860, %v896, %v532
        %v933 = vsel %vm861, %v897, %v543
        %v934 = vsel %vm862, %v898, %v554
        %v935 = vsel %vm863, %v899, %v565
        %v936 = vsel %vm864, %v900, %v576
        %v937 = vsel %vm865, %v901, %v587
        %v938 = vsel %vm866, %v902, %v598
        %v939 = vsel %vm867, %v903, %v609
        %v940 = vsel %vm868, %v904, %v620
        %v941 = vsel %vm869, %v905, %v631
        %v942 = vsel %vm870, %v906, %v642
        %v943 = vsel %vm871, %v907, %v653
        %v944 = vsel %vm872, %v908, %v664
        %v945 = vsel %vm873, %v909, %v675
        %v946 = vsel %vm874, %v910, %v686
        %v947 = vsel %vm875, %v911, %v697
        %v948 = vsel %vm876, %v912, %v708
        %v949 = vsel %vm877, %v913, %v719
        %v950 = vsel %vm878, %v914, %v730
        %v951 = vsel %vm879, %v915, %v741
        %v952 = vsel %vm880, %v916, %v752
        %v953 = vsel %vm881, %v917, %v763
        %v954 = vsel %vm882, %v918, %v774
        %vm955 = vcmp.ge.s32.totalorder %v919, 1
        %vm956 = vcmp.ge.s32.totalorder %v920, 1
        %vm957 = vcmp.ge.s32.totalorder %v921, 1
        %vm958 = vcmp.ge.s32.totalorder %v922, 1
        %vm959 = vcmp.ge.s32.totalorder %v923, 1
        %vm960 = vcmp.ge.s32.totalorder %v924, 1
        %vm961 = vcmp.ge.s32.totalorder %v925, 1
        %vm962 = vcmp.ge.s32.totalorder %v926, 1
        %vm963 = vcmp.ge.s32.totalorder %v927, 1
        %vm964 = vcmp.ge.s32.totalorder %v928, 1
        %vm965 = vcmp.ge.s32.totalorder %v929, 1
        %vm966 = vcmp.ge.s32.totalorder %v930, 1
        %vm967 = vcmp.ge.s32.totalorder %v931, 1
        %vm968 = vcmp.ge.s32.totalorder %v932, 1
        %vm969 = vcmp.ge.s32.totalorder %v933, 1
        %vm970 = vcmp.ge.s32.totalorder %v934, 1
        %vm971 = vcmp.ge.s32.totalorder %v935, 1
        %vm972 = vcmp.ge.s32.totalorder %v936, 1
        %vm973 = vcmp.ge.s32.totalorder %v937, 1
        %vm974 = vcmp.ge.s32.totalorder %v938, 1
        %vm975 = vcmp.ge.s32.totalorder %v939, 1
        %vm976 = vcmp.ge.s32.totalorder %v940, 1
        %vm977 = vcmp.ge.s32.totalorder %v941, 1
        %vm978 = vcmp.ge.s32.totalorder %v942, 1
        %vm979 = vcmp.ge.s32.totalorder %v943, 1
        %vm980 = vcmp.ge.s32.totalorder %v944, 1
        %vm981 = vcmp.ge.s32.totalorder %v945, 1
        %vm982 = vcmp.ge.s32.totalorder %v946, 1
        %vm983 = vcmp.ge.s32.totalorder %v947, 1
        %vm984 = vcmp.ge.s32.totalorder %v948, 1
        %vm985 = vcmp.ge.s32.totalorder %v949, 1
        %vm986 = vcmp.ge.s32.totalorder %v950, 1
        %vm987 = vcmp.ge.s32.totalorder %v951, 1
        %vm988 = vcmp.ge.s32.totalorder %v952, 1
        %vm989 = vcmp.ge.s32.totalorder %v953, 1
        %vm990 = vcmp.ge.s32.totalorder %v954, 1
        %vm991 = vcmp.le.s32.totalorder %v919, 16
        %vm992 = vcmp.le.s32.totalorder %v920, 16
        %vm993 = vcmp.le.s32.totalorder %v921, 16
        %vm994 = vcmp.le.s32.totalorder %v922, 16
        %vm995 = vcmp.le.s32.totalorder %v923, 16
        %vm996 = vcmp.le.s32.totalorder %v924, 16
        %vm997 = vcmp.le.s32.totalorder %v925, 16
        %vm998 = vcmp.le.s32.totalorder %v926, 16
        %vm999 = vcmp.le.s32.totalorder %v927, 16
        %vm1000 = vcmp.le.s32.totalorder %v928, 16
        %vm1001 = vcmp.le.s32.totalorder %v929, 16
        %vm1002 = vcmp.le.s32.totalorder %v930, 16
        %vm1003 = vcmp.le.s32.totalorder %v931, 16
        %vm1004 = vcmp.le.s32.totalorder %v932, 16
        %vm1005 = vcmp.le.s32.totalorder %v933, 16
        %vm1006 = vcmp.le.s32.totalorder %v934, 16
        %vm1007 = vcmp.le.s32.totalorder %v935, 16
        %vm1008 = vcmp.le.s32.totalorder %v936, 16
        %vm1009 = vcmp.le.s32.totalorder %v937, 16
        %vm1010 = vcmp.le.s32.totalorder %v938, 16
        %vm1011 = vcmp.le.s32.totalorder %v939, 16
        %vm1012 = vcmp.le.s32.totalorder %v940, 16
        %vm1013 = vcmp.le.s32.totalorder %v941, 16
        %vm1014 = vcmp.le.s32.totalorder %v942, 16
        %vm1015 = vcmp.le.s32.totalorder %v943, 16
        %vm1016 = vcmp.le.s32.totalorder %v944, 16
        %vm1017 = vcmp.le.s32.totalorder %v945, 16
        %vm1018 = vcmp.le.s32.totalorder %v946, 16
        %vm1019 = vcmp.le.s32.totalorder %v947, 16
        %vm1020 = vcmp.le.s32.totalorder %v948, 16
        %vm1021 = vcmp.le.s32.totalorder %v949, 16
        %vm1022 = vcmp.le.s32.totalorder %v950, 16
        %vm1023 = vcmp.le.s32.totalorder %v951, 16
        %vm1024 = vcmp.le.s32.totalorder %v952, 16
        %vm1025 = vcmp.le.s32.totalorder %v953, 16
        %vm1026 = vcmp.le.s32.totalorder %v954, 16
        %vm1027 = vmand %vm955, %vm991
        %vm1028 = vmand %vm956, %vm992
        %vm1029 = vmand %vm957, %vm993
        %vm1030 = vmand %vm958, %vm994
        %vm1031 = vmand %vm959, %vm995
        %vm1032 = vmand %vm960, %vm996
        %vm1033 = vmand %vm961, %vm997
        %vm1034 = vmand %vm962, %vm998
        %vm1035 = vmand %vm963, %vm999
        %vm1036 = vmand %vm964, %vm1000
        %vm1037 = vmand %vm965, %vm1001
        %vm1038 = vmand %vm966, %vm1002
        %vm1039 = vmand %vm967, %vm1003
        %vm1040 = vmand %vm968, %vm1004
        %vm1041 = vmand %vm969, %vm1005
        %vm1042 = vmand %vm970, %vm1006
        %vm1043 = vmand %vm971, %vm1007
        %vm1044 = vmand %vm972, %vm1008
        %vm1045 = vmand %vm973, %vm1009
        %vm1046 = vmand %vm974, %vm1010
        %vm1047 = vmand %vm975, %vm1011
        %vm1048 = vmand %vm976, %vm1012
        %vm1049 = vmand %vm977, %vm1013
        %vm1050 = vmand %vm978, %vm1014
        %vm1051 = vmand %vm979, %vm1015
        %vm1052 = vmand %vm980, %vm1016
        %vm1053 = vmand %vm981, %vm1017
        %vm1054 = vmand %vm982, %vm1018
        %vm1055 = vmand %vm983, %vm1019
        %vm1056 = vmand %vm984, %vm1020
        %vm1057 = vmand %vm985, %vm1021
        %vm1058 = vmand %vm986, %vm1022
        %vm1059 = vmand %vm987, %vm1023
        %vm1060 = vmand %vm988, %vm1024
        %vm1061 = vmand %vm989, %vm1025
        %vm1062 = vmand %vm990, %vm1026
        %v1063 = vld [vmem:[%s298 + $0x8] sm:$0xf]
        %v1064 = vld [vmem:[%s298 + $0xc] sm:$0xf]
        %v1065 = vld [vmem:[%s298 + $0x10] sm:$0xf]
        %v1066 = vld [vmem:[%s298 + $0x14] sm:$0xf]
        %v1067 = vld [vmem:[%s298 + $0x18] sm:$0xf]
        %v1068 = vld [vmem:[%s298 + $0x1c] sm:$0xf]
        %v1069 = vld [vmem:[%s298 + $0x20] sm:$0xf]
        %v1070 = vld [vmem:[%s298 + $0x24] sm:$0xf]
        %v1071 = vld [vmem:[%s298 + $0x28] sm:$0xf]
        %v1072 = vld [vmem:[%s298 + $0x2c] sm:$0xf]
        %v1073 = vld [vmem:[%s298 + $0x30] sm:$0xf]
        %v1074 = vld [vmem:[%s298 + $0x34] sm:$0xf]
        %v1075 = vld [vmem:[%s298 + $0x38] sm:$0xf]
        %v1076 = vld [vmem:[%s298 + $0x3c] sm:$0xf]
        %v1077 = vld [vmem:[%s298 + $0x40] sm:$0xf]
        %v1078 = vld [vmem:[%s298 + $0x44] sm:$0xf]
        %v1079 = vld [vmem:[%s298 + $0x48] sm:$0xf]
        %v1080 = vld [vmem:[%s298 + $0x4c] sm:$0xf]
        %v1081 = vld [vmem:[%s298 + $0x50] sm:$0xf]
        %v1082 = vld [vmem:[%s298 + $0x54] sm:$0xf]
        %v1083 = vld [vmem:[%s298 + $0x58] sm:$0xf]
        %v1084 = vld [vmem:[%s298 + $0x5c] sm:$0xf]
        %v1085 = vld [vmem:[%s298 + $0x60] sm:$0xf]
        %v1086 = vld [vmem:[%s298 + $0x64] sm:$0xf]
        %v1087 = vld [vmem:[%s298 + $0x68] sm:$0xf]
        %v1088 = vld [vmem:[%s298 + $0x6c] sm:$0xf]
        %v1089 = vld [vmem:[%s298 + $0x70] sm:$0xf]
        %v1090 = vld [vmem:[%s298 + $0x74] sm:$0xf]
        %v1091 = vld [vmem:[%s298 + $0x78] sm:$0xf]
        %v1092 = vld [vmem:[%s298 + $0x7c] sm:$0xf]
        %v1093 = vld [vmem:[%s298 + $0x80] sm:$0xf]
        %v1094 = vld [vmem:[%s298 + $0x84] sm:$0xf]
        %v1095 = vld [vmem:[%s298 + $0x88] sm:$0xf]
        %v1096 = vld [vmem:[%s298 + $0x8c] sm:$0xf]
        %v1097 = vld [vmem:[%s298 + $0x90] sm:$0xf]
        %v1098 = vld [vmem:[%s298 + $0x94] sm:$0xf]
        %v1099 = vld [vmem:[%s298 + $0x98] sm:$0x1]
        %v1100 = vld [vmem:[%s298 + $0x8] sm:$0xe]
        %v1101 = vld [vmem:[%s298 + $0x98] sm:$0x3]
        %v1139 = vunpack.c.l.b16 %v1063
        %v1140 = vunpack.c.l.b16 %v1064
        %v1141 = vunpack.c.l.b16 %v1065
        %v1142 = vunpack.c.l.b16 %v1066
        %v1143 = vunpack.c.l.b16 %v1067
        %v1144 = vunpack.c.l.b16 %v1068
        %v1145 = vunpack.c.l.b16 %v1069
        %v1146 = vunpack.c.l.b16 %v1070
        %v1147 = vunpack.c.l.b16 %v1071
        %v1148 = vunpack.c.l.b16 %v1072
        %v1149 = vunpack.c.l.b16 %v1073
        %v1150 = vunpack.c.l.b16 %v1074
        %v1151 = vunpack.c.l.b16 %v1075
        %v1152 = vunpack.c.l.b16 %v1076
        %v1153 = vunpack.c.l.b16 %v1077
        %v1154 = vunpack.c.l.b16 %v1078
        %v1155 = vunpack.c.l.b16 %v1079
        %v1156 = vunpack.c.l.b16 %v1080
        %v1157 = vunpack.c.l.b16 %v1081
        %v1158 = vunpack.c.l.b16 %v1082
        %v1159 = vunpack.c.l.b16 %v1083
        %v1160 = vunpack.c.l.b16 %v1084
        %v1161 = vunpack.c.l.b16 %v1085
        %v1162 = vunpack.c.l.b16 %v1086
        %v1163 = vunpack.c.l.b16 %v1087
        %v1164 = vunpack.c.l.b16 %v1088
        %v1165 = vunpack.c.l.b16 %v1089
        %v1166 = vunpack.c.l.b16 %v1090
        %v1167 = vunpack.c.l.b16 %v1091
        %v1168 = vunpack.c.l.b16 %v1092
        %v1169 = vunpack.c.l.b16 %v1093
        %v1170 = vunpack.c.l.b16 %v1094
        %v1171 = vunpack.c.l.b16 %v1095
        %v1172 = vunpack.c.l.b16 %v1096
        %v1173 = vunpack.c.l.b16 %v1097
        %v1174 = vunpack.c.l.b16 %v1098
        %v1175 = vunpack.c.l.b16 %v1099
        %v1176 = vpack.c.b16 %v1140, %v1139
        %v1177 = vpack.c.b16 %v1142, %v1141
        %v1178 = vpack.c.b16 %v1144, %v1143
        %v1179 = vpack.c.b16 %v1146, %v1145
        %v1180 = vpack.c.b16 %v1148, %v1147
        %v1181 = vpack.c.b16 %v1150, %v1149
        %v1182 = vpack.c.b16 %v1152, %v1151
        %v1183 = vpack.c.b16 %v1154, %v1153
        %v1184 = vpack.c.b16 %v1156, %v1155
        %v1185 = vpack.c.b16 %v1158, %v1157
        %v1186 = vpack.c.b16 %v1160, %v1159
        %v1187 = vpack.c.b16 %v1162, %v1161
        %v1188 = vpack.c.b16 %v1164, %v1163
        %v1189 = vpack.c.b16 %v1166, %v1165
        %v1190 = vpack.c.b16 %v1168, %v1167
        %v1191 = vpack.c.b16 %v1170, %v1169
        %v1192 = vpack.c.b16 %v1172, %v1171
        %v1193 = vpack.c.b16 %v1174, %v1173
        %v1194 = vpack.c.b16 %v1175, %v1175
        %v1196 = vunpack.c.l.b16 %v1100
        %v1197 = vpack.c.b16 %v1140, %v1196
        %vm1198 = vsmask.f32 7424
        %v1200 = vshrl.u32 %v1197, 16
        %v1202 = vshll.u32 %v1197, 16
        %v1204 = vrot.slane %v1202, 1
        %v1205 = vor.u32 %v1200, %v1204
        %v1207 = vshll.u32 %v1177, 16
        %v1209 = vrot.slane %v1207, 1
        %v1210 = vsel %vm1198, %v1205, %v1209
        %v1211 = vshrl.u32 %v1177, 16
        %v1213 = vor.u32 %v1211, %v1209
        %v1215 = vshll.u32 %v1178, 16
        %v1217 = vrot.slane %v1215, 1
        %v1218 = vsel %vm1198, %v1213, %v1217
        %v1219 = vshrl.u32 %v1178, 16
        %v1221 = vor.u32 %v1219, %v1217
        %v1223 = vshll.u32 %v1179, 16
        %v1225 = vrot.slane %v1223, 1
        %v1226 = vsel %vm1198, %v1221, %v1225
        %v1227 = vshrl.u32 %v1179, 16
        %v1229 = vor.u32 %v1227, %v1225
        %v1231 = vshll.u32 %v1180, 16
        %v1233 = vrot.slane %v1231, 1
        %v1234 = vsel %vm1198, %v1229, %v1233
        %v1235 = vshrl.u32 %v1180, 16
        %v1237 = vor.u32 %v1235, %v1233
        %v1239 = vshll.u32 %v1181, 16
        %v1241 = vrot.slane %v1239, 1
        %v1242 = vsel %vm1198, %v1237, %v1241
        %v1243 = vshrl.u32 %v1181, 16
        %v1245 = vor.u32 %v1243, %v1241
        %v1247 = vshll.u32 %v1182, 16
        %v1249 = vrot.slane %v1247, 1
        %v1250 = vsel %vm1198, %v1245, %v1249
        %v1251 = vshrl.u32 %v1182, 16
        %v1253 = vor.u32 %v1251, %v1249
        %v1255 = vshll.u32 %v1183, 16
        %v1257 = vrot.slane %v1255, 1
        %v1258 = vsel %vm1198, %v1253, %v1257
        %v1259 = vshrl.u32 %v1183, 16
        %v1261 = vor.u32 %v1259, %v1257
        %v1263 = vshll.u32 %v1184, 16
        %v1265 = vrot.slane %v1263, 1
        %v1266 = vsel %vm1198, %v1261, %v1265
        %v1267 = vshrl.u32 %v1184, 16
        %v1269 = vor.u32 %v1267, %v1265
        %v1271 = vshll.u32 %v1185, 16
        %v1273 = vrot.slane %v1271, 1
        %v1274 = vsel %vm1198, %v1269, %v1273
        %v1275 = vshrl.u32 %v1185, 16
        %v1277 = vor.u32 %v1275, %v1273
        %v1279 = vshll.u32 %v1186, 16
        %v1281 = vrot.slane %v1279, 1
        %v1282 = vsel %vm1198, %v1277, %v1281
        %v1283 = vshrl.u32 %v1186, 16
        %v1285 = vor.u32 %v1283, %v1281
        %v1287 = vshll.u32 %v1187, 16
        %v1289 = vrot.slane %v1287, 1
        %v1290 = vsel %vm1198, %v1285, %v1289
        %v1291 = vshrl.u32 %v1187, 16
        %v1293 = vor.u32 %v1291, %v1289
        %v1295 = vshll.u32 %v1188, 16
        %v1297 = vrot.slane %v1295, 1
        %v1298 = vsel %vm1198, %v1293, %v1297
        %v1299 = vshrl.u32 %v1188, 16
        %v1301 = vor.u32 %v1299, %v1297
        %v1303 = vshll.u32 %v1189, 16
        %v1305 = vrot.slane %v1303, 1
        %v1306 = vsel %vm1198, %v1301, %v1305
        %v1307 = vshrl.u32 %v1189, 16
        %v1309 = vor.u32 %v1307, %v1305
        %v1311 = vshll.u32 %v1190, 16
        %v1313 = vrot.slane %v1311, 1
        %v1314 = vsel %vm1198, %v1309, %v1313
        %v1315 = vshrl.u32 %v1190, 16
        %v1317 = vor.u32 %v1315, %v1313
        %v1319 = vshll.u32 %v1191, 16
        %v1321 = vrot.slane %v1319, 1
        %v1322 = vsel %vm1198, %v1317, %v1321
        %v1323 = vshrl.u32 %v1191, 16
        %v1325 = vor.u32 %v1323, %v1321
        %v1327 = vshll.u32 %v1192, 16
        %v1329 = vrot.slane %v1327, 1
        %v1330 = vsel %vm1198, %v1325, %v1329
        %v1331 = vshrl.u32 %v1192, 16
        %v1333 = vor.u32 %v1331, %v1329
        %v1335 = vshll.u32 %v1193, 16
        %v1337 = vrot.slane %v1335, 1
        %v1338 = vsel %vm1198, %v1333, %v1337
        %v1339 = vshrl.u32 %v1193, 16
        %v1341 = vor.u32 %v1339, %v1337
        %v1343 = vshll.u32 %v1194, 16
        %v1345 = vrot.slane %v1343, 1
        %v1346 = vsel %vm1198, %v1341, %v1345
        %v1347 = vshrl.u32 %v1194, 16
        %v1350 = vunpack.c.l.b16 %v1101
        %v1351 = vpack.c.b16 %v1350, %v1350
        %vm1352 = vcmask 1046528
        %v1353 = vrot.slane %v1197, 1
        %v1354 = vrot.slane %v1177, 1
        %v1355 = vsel %vm1352, %v1353, %v1354
        %v1356 = vrot.slane %v1178, 1
        %v1357 = vsel %vm1352, %v1354, %v1356
        %v1358 = vrot.slane %v1179, 1
        %v1359 = vsel %vm1352, %v1356, %v1358
        %v1360 = vrot.slane %v1180, 1
        %v1361 = vsel %vm1352, %v1358, %v1360
        %v1362 = vrot.slane %v1181, 1
        %v1363 = vsel %vm1352, %v1360, %v1362
        %v1364 = vrot.slane %v1182, 1
        %v1365 = vsel %vm1352, %v1362, %v1364
        %v1366 = vrot.slane %v1183, 1
        %v1367 = vsel %vm1352, %v1364, %v1366
        %v1368 = vrot.slane %v1184, 1
        %v1369 = vsel %vm1352, %v1366, %v1368
        %v1370 = vrot.slane %v1185, 1
        %v1371 = vsel %vm1352, %v1368, %v1370
        %v1372 = vrot.slane %v1186, 1
        %v1373 = vsel %vm1352, %v1370, %v1372
        %v1374 = vrot.slane %v1187, 1
        %v1375 = vsel %vm1352, %v1372, %v1374
        %v1376 = vrot.slane %v1188, 1
        %v1377 = vsel %vm1352, %v1374, %v1376
        %v1378 = vrot.slane %v1189, 1
        %v1379 = vsel %vm1352, %v1376, %v1378
        %v1380 = vrot.slane %v1190, 1
        %v1381 = vsel %vm1352, %v1378, %v1380
        %v1382 = vrot.slane %v1191, 1
        %v1383 = vsel %vm1352, %v1380, %v1382
        %v1384 = vrot.slane %v1192, 1
        %v1385 = vsel %vm1352, %v1382, %v1384
        %v1386 = vrot.slane %v1193, 1
        %v1387 = vsel %vm1352, %v1384, %v1386
        %v1388 = vrot.slane %v1351, 1
        %v1389 = vsel %vm1352, %v1386, %v1388
        %v1390 = vld [vmem:[#allocation6] sm:$0xf]
        %v1391 = vld [vmem:[#allocation6 + $0x4] sm:$0xf]
        %v1392 = vld [vmem:[#allocation6 + $0x8] sm:$0xf]
        %v1393 = vld [vmem:[#allocation6 + $0xc] sm:$0xf]
        %v1394 = vld [vmem:[#allocation6 + $0x10] sm:$0xf]
        %v1395 = vld [vmem:[#allocation6 + $0x14] sm:$0xf]
        %v1396 = vld [vmem:[#allocation6 + $0x18] sm:$0xf]
        %v1397 = vld [vmem:[#allocation6 + $0x1c] sm:$0xf]
        %v1398 = vld [vmem:[#allocation6 + $0x20] sm:$0xf]
        %v1399 = vld [vmem:[#allocation6 + $0x24] sm:$0xf]
        %v1400 = vld [vmem:[#allocation6 + $0x28] sm:$0xf]
        %v1401 = vld [vmem:[#allocation6 + $0x2c] sm:$0xf]
        %v1402 = vld [vmem:[#allocation6 + $0x30] sm:$0xf]
        %v1403 = vld [vmem:[#allocation6 + $0x34] sm:$0xf]
        %v1404 = vld [vmem:[#allocation6 + $0x38] sm:$0xf]
        %v1405 = vld [vmem:[#allocation6 + $0x3c] sm:$0xf]
        %v1406 = vld [vmem:[#allocation6 + $0x40] sm:$0xf]
        %v1407 = vld [vmem:[#allocation6 + $0x44] sm:$0xf]
        %v1408 = vld [vmem:[#allocation6 + $0x48] sm:$0xf]
        %v1409 = vld [vmem:[#allocation6 + $0x4c] sm:$0xf]
        %v1410 = vld [vmem:[#allocation6 + $0x50] sm:$0xf]
        %v1411 = vld [vmem:[#allocation6 + $0x54] sm:$0xf]
        %v1412 = vld [vmem:[#allocation6 + $0x58] sm:$0xf]
        %v1413 = vld [vmem:[#allocation6 + $0x5c] sm:$0xf]
        %v1414 = vld [vmem:[#allocation6 + $0x60] sm:$0xf]
        %v1415 = vld [vmem:[#allocation6 + $0x64] sm:$0xf]
        %v1416 = vld [vmem:[#allocation6 + $0x68] sm:$0xf]
        %v1417 = vld [vmem:[#allocation6 + $0x6c] sm:$0xf]
        %v1418 = vld [vmem:[#allocation6 + $0x70] sm:$0xf]
        %v1419 = vld [vmem:[#allocation6 + $0x74] sm:$0xf]
        %v1420 = vld [vmem:[#allocation6 + $0x78] sm:$0xf]
        %v1421 = vld [vmem:[#allocation6 + $0x7c] sm:$0xf]
        %v1422 = vld [vmem:[#allocation6 + $0x80] sm:$0xf]
        %v1423 = vld [vmem:[#allocation6 + $0x84] sm:$0xf]
        %v1424 = vld [vmem:[#allocation6 + $0x88] sm:$0xf]
        %v1425 = vld [vmem:[#allocation6 + $0x8c] sm:$0xf]
        %v1426 = vld [vmem:[#allocation6 + $0x90] sm:$0xf]
        %v1427 = vld [vmem:[#allocation6 + $0x94] sm:$0xf]
        %v1428 = vld [vmem:[#allocation6 + $0x98] sm:$0xf]
        %v1429 = vld [vmem:[#allocation6 + $0x9c] sm:$0xf]
        %v1430 = vld [vmem:[#allocation6 + $0xa0] sm:$0xf]
        %v1431 = vld [vmem:[#allocation6 + $0xa4] sm:$0xf]
        %v1432 = vld [vmem:[#allocation6 + $0xa8] sm:$0xf]
        %v1433 = vld [vmem:[#allocation6 + $0xac] sm:$0xf]
        %v1434 = vld [vmem:[#allocation6 + $0xb0] sm:$0xf]
        %v1435 = vld [vmem:[#allocation6 + $0xb4] sm:$0xf]
        %v1436 = vld [vmem:[#allocation6 + $0xb8] sm:$0xf]
        %v1437 = vld [vmem:[#allocation6 + $0xbc] sm:$0xf]
        %v1438 = vld [vmem:[%s298 + $0x10] sm:$0xe]
        %v1439 = vld [vmem:[%s298 + $0x98] sm:$0xf]
        %v1440 = vld [vmem:[%s298 + $0x9c] sm:$0xf]
        %v1441 = vld [vmem:[%s298 + $0xa0] sm:$0x3]
        %v1442 = vld [vmem:[%s298 + $0x10] sm:$0xc]
        %v1443 = vld [vmem:[%s298 + $0xa0] sm:$0x7]
        %v1448 = vunpack.c.l.b16 %v1438
        %v1449 = vunpack.c.l.b16 %v1439
        %v1450 = vunpack.c.l.b16 %v1440
        %v1451 = vunpack.c.l.b16 %v1441
        %v1452 = vpack.c.b16 %v1142, %v1448
        %v1453 = vpack.c.b16 %v1450, %v1449
        %v1454 = vpack.c.b16 %v1451, %v1451
        %v1456 = vunpack.c.l.b16 %v1442
        %v1457 = vpack.c.b16 %v1142, %v1456
        %v1459 = vshrl.u32 %v1457, 16
        %v1461 = vshll.u32 %v1457, 16
        %v1463 = vrot.slane %v1461, 1
        %v1464 = vor.u32 %v1459, %v1463
        %v1465 = vsel %vm1198, %v1464, %v1217
        %v1467 = vshll.u32 %v1453, 16
        %v1469 = vrot.slane %v1467, 1
        %v1470 = vsel %vm1198, %v1341, %v1469
        %v1471 = vshrl.u32 %v1453, 16
        %v1473 = vor.u32 %v1471, %v1469
        %v1475 = vshll.u32 %v1454, 16
        %v1477 = vrot.slane %v1475, 1
        %v1478 = vsel %vm1198, %v1473, %v1477
        %v1479 = vshrl.u32 %v1454, 16
        %v1481 = vor.u32 %v1479, %v1477
        %v1483 = vunpack.c.l.b16 %v1443
        %v1484 = vpack.c.b16 %v1483, %v1483
        %v1485 = vrot.slane %v1457, 1
        %v1486 = vsel %vm1352, %v1485, %v1356
        %v1487 = vrot.slane %v1453, 1
        %v1488 = vsel %vm1352, %v1386, %v1487
        %v1489 = vrot.slane %v1484, 1
        %v1490 = vsel %vm1352, %v1487, %v1489
        %s1491 = scalar_lea.vmem [#allocation6], 192
        %v1492 = vld [vmem:[%s1491] sm:$0xf]
        %v1493 = vld [vmem:[%s1491 + $0x4] sm:$0xf]
        %v1494 = vld [vmem:[%s1491 + $0x8] sm:$0xf]
        %v1495 = vld [vmem:[%s1491 + $0xc] sm:$0xf]
        %v1496 = vld [vmem:[%s1491 + $0x10] sm:$0xf]
        %v1497 = vld [vmem:[%s1491 + $0x14] sm:$0xf]
        %v1498 = vld [vmem:[%s1491 + $0x18] sm:$0xf]
        %v1499 = vld [vmem:[%s1491 + $0x1c] sm:$0xf]
        %v1500 = vld [vmem:[%s1491 + $0x20] sm:$0xf]
        %v1501 = vld [vmem:[%s1491 + $0x24] sm:$0xf]
        %v1502 = vld [vmem:[%s1491 + $0x28] sm:$0xf]
        %v1503 = vld [vmem:[%s1491 + $0x2c] sm:$0xf]
        %v1504 = vld [vmem:[%s1491 + $0x30] sm:$0xf]
        %v1505 = vld [vmem:[%s1491 + $0x34] sm:$0xf]
        %v1506 = vld [vmem:[%s1491 + $0x38] sm:$0xf]
        %v1507 = vld [vmem:[%s1491 + $0x3c] sm:$0xf]
        %v1508 = vld [vmem:[%s1491 + $0x40] sm:$0xf]
        %v1509 = vld [vmem:[%s1491 + $0x44] sm:$0xf]
        %v1510 = vld [vmem:[%s1491 + $0x48] sm:$0xf]
        %v1511 = vld [vmem:[%s1491 + $0x4c] sm:$0xf]
        %v1512 = vld [vmem:[%s1491 + $0x50] sm:$0xf]
        %v1513 = vld [vmem:[%s1491 + $0x54] sm:$0xf]
        %v1514 = vld [vmem:[%s1491 + $0x58] sm:$0xf]
        %v1515 = vld [vmem:[%s1491 + $0x5c] sm:$0xf]
        %v1516 = vld [vmem:[%s1491 + $0x60] sm:$0xf]
        %v1517 = vld [vmem:[%s1491 + $0x64] sm:$0xf]
        %v1518 = vld [vmem:[%s1491 + $0x68] sm:$0xf]
        %v1519 = vld [vmem:[%s1491 + $0x6c] sm:$0xf]
        %v1520 = vld [vmem:[%s1491 + $0x70] sm:$0xf]
        %v1521 = vld [vmem:[%s1491 + $0x74] sm:$0xf]
        %v1522 = vld [vmem:[%s1491 + $0x78] sm:$0xf]
        %v1523 = vld [vmem:[%s1491 + $0x7c] sm:$0xf]
        %v1524 = vld [vmem:[%s1491 + $0x80] sm:$0xf]
        %v1525 = vld [vmem:[%s1491 + $0x84] sm:$0xf]
        %v1526 = vld [vmem:[%s1491 + $0x88] sm:$0xf]
        %v1527 = vld [vmem:[%s1491 + $0x8c] sm:$0xf]
        %v1528 = vld [vmem:[%s1491 + $0x90] sm:$0xf]
        %v1529 = vld [vmem:[%s1491 + $0x94] sm:$0xf]
        %v1530 = vld [vmem:[%s1491 + $0x98] sm:$0xf]
        %v1531 = vld [vmem:[%s1491 + $0x9c] sm:$0xf]
        %v1532 = vld [vmem:[%s1491 + $0xa0] sm:$0xf]
        %v1533 = vld [vmem:[%s1491 + $0xa4] sm:$0xf]
        %v1534 = vld [vmem:[%s1491 + $0xa8] sm:$0xf]
        %v1535 = vld [vmem:[%s1491 + $0xac] sm:$0xf]
        %v1536 = vld [vmem:[%s1491 + $0xb0] sm:$0xf]
        %v1537 = vld [vmem:[%s1491 + $0xb4] sm:$0xf]
        %v1538 = vld [vmem:[%s1491 + $0xb8] sm:$0xf]
        %v1539 = vld [vmem:[%s1491 + $0xbc] sm:$0xf]
        %vm1540 = vsmask.f32 6400
        %v1542 = vshrl.u32 %v1452, 16
        %v1544 = vrot.slane %v1542, 1
        %v1545 = vshll.u32 %v1452, 16
        %v1547 = vrot.slane %v1545, 2
        %v1548 = vor.u32 %v1544, %v1547
        %v1549 = vrot.slane %v1219, 1
        %v1550 = vrot.slane %v1215, 2
        %v1551 = vor.u32 %v1549, %v1550
        %v1552 = vsel %vm1540, %v1548, %v1551
        %v1554 = vshrl.u32 %v1465, 16
        %v1556 = vrot.slane %v1554, 1
        %v1557 = vshll.u32 %v1465, 16
        %v1559 = vrot.slane %v1557, 2
        %v1560 = vor.u32 %v1556, %v1559
        %v1562 = vshrl.u32 %v1226, 16
        %v1564 = vrot.slane %v1562, 1
        %v1565 = vshll.u32 %v1226, 16
        %v1567 = vrot.slane %v1565, 2
        %v1568 = vor.u32 %v1564, %v1567
        %v1569 = vsel %vm1540, %v1560, %v1568
        %v1571 = vshrl.u32 %v1486, 16
        %v1573 = vrot.slane %v1571, 1
        %v1574 = vshll.u32 %v1486, 16
        %v1576 = vrot.slane %v1574, 2
        %v1577 = vor.u32 %v1573, %v1576
        %v1579 = vshrl.u32 %v1359, 16
        %v1581 = vrot.slane %v1579, 1
        %v1582 = vshll.u32 %v1359, 16
        %v1584 = vrot.slane %v1582, 2
        %v1585 = vor.u32 %v1581, %v1584
        %v1586 = vsel %vm1540, %v1577, %v1585
        %v1587 = vrot.slane %v1227, 1
        %v1588 = vrot.slane %v1223, 2
        %v1589 = vor.u32 %v1587, %v1588
        %v1590 = vsel %vm1540, %v1551, %v1589
        %v1592 = vshrl.u32 %v1234, 16
        %v1594 = vrot.slane %v1592, 1
        %v1595 = vshll.u32 %v1234, 16
        %v1597 = vrot.slane %v1595, 2
        %v1598 = vor.u32 %v1594, %v1597
        %v1599 = vsel %vm1540, %v1568, %v1598
        %v1601 = vshrl.u32 %v1361, 16
        %v1603 = vrot.slane %v1601, 1
        %v1604 = vshll.u32 %v1361, 16
        %v1606 = vrot.slane %v1604, 2
        %v1607 = vor.u32 %v1603, %v1606
        %v1608 = vsel %vm1540, %v1585, %v1607
        %v1609 = vrot.slane %v1235, 1
        %v1610 = vrot.slane %v1231, 2
        %v1611 = vor.u32 %v1609, %v1610
        %v1612 = vsel %vm1540, %v1589, %v1611
        %v1614 = vshrl.u32 %v1242, 16
        %v1616 = vrot.slane %v1614, 1
        %v1617 = vshll.u32 %v1242, 16
        %v1619 = vrot.slane %v1617, 2
        %v1620 = vor.u32 %v1616, %v1619
        %v1621 = vsel %vm1540, %v1598, %v1620
        %v1623 = vshrl.u32 %v1363, 16
        %v1625 = vrot.slane %v1623, 1
        %v1626 = vshll.u32 %v1363, 16
        %v1628 = vrot.slane %v1626, 2
        %v1629 = vor.u32 %v1625, %v1628
        %v1630 = vsel %vm1540, %v1607, %v1629
        %v1631 = vrot.slane %v1243, 1
        %v1632 = vrot.slane %v1239, 2
        %v1633 = vor.u32 %v1631, %v1632
        %v1634 = vsel %vm1540, %v1611, %v1633
        %v1636 = vshrl.u32 %v1250, 16
        %v1638 = vrot.slane %v1636, 1
        %v1639 = vshll.u32 %v1250, 16
        %v1641 = vrot.slane %v1639, 2
        %v1642 = vor.u32 %v1638, %v1641
        %v1643 = vsel %vm1540, %v1620, %v1642
        %v1645 = vshrl.u32 %v1365, 16
        %v1647 = vrot.slane %v1645, 1
        %v1648 = vshll.u32 %v1365, 16
        %v1650 = vrot.slane %v1648, 2
        %v1651 = vor.u32 %v1647, %v1650
        %v1652 = vsel %vm1540, %v1629, %v1651
        %v1653 = vrot.slane %v1251, 1
        %v1654 = vrot.slane %v1247, 2
        %v1655 = vor.u32 %v1653, %v1654
        %v1656 = vsel %vm1540, %v1633, %v1655
        %v1658 = vshrl.u32 %v1258, 16
        %v1660 = vrot.slane %v1658, 1
        %v1661 = vshll.u32 %v1258, 16
        %v1663 = vrot.slane %v1661, 2
        %v1664 = vor.u32 %v1660, %v1663
        %v1665 = vsel %vm1540, %v1642, %v1664
        %v1667 = vshrl.u32 %v1367, 16
        %v1669 = vrot.slane %v1667, 1
        %v1670 = vshll.u32 %v1367, 16
        %v1672 = vrot.slane %v1670, 2
        %v1673 = vor.u32 %v1669, %v1672
        %v1674 = vsel %vm1540, %v1651, %v1673
        %v1675 = vrot.slane %v1259, 1
        %v1676 = vrot.slane %v1255, 2
        %v1677 = vor.u32 %v1675, %v1676
        %v1678 = vsel %vm1540, %v1655, %v1677
        %v1680 = vshrl.u32 %v1266, 16
        %v1682 = vrot.slane %v1680, 1
        %v1683 = vshll.u32 %v1266, 16
        %v1685 = vrot.slane %v1683, 2
        %v1686 = vor.u32 %v1682, %v1685
        %v1687 = vsel %vm1540, %v1664, %v1686
        %v1689 = vshrl.u32 %v1369, 16
        %v1691 = vrot.slane %v1689, 1
        %v1692 = vshll.u32 %v1369, 16
        %v1694 = vrot.slane %v1692, 2
        %v1695 = vor.u32 %v1691, %v1694
        %v1696 = vsel %vm1540, %v1673, %v1695
        %v1697 = vrot.slane %v1267, 1
        %v1698 = vrot.slane %v1263, 2
        %v1699 = vor.u32 %v1697, %v1698
        %v1700 = vsel %vm1540, %v1677, %v1699
        %v1702 = vshrl.u32 %v1274, 16
        %v1704 = vrot.slane %v1702, 1
        %v1705 = vshll.u32 %v1274, 16
        %v1707 = vrot.slane %v1705, 2
        %v1708 = vor.u32 %v1704, %v1707
        %v1709 = vsel %vm1540, %v1686, %v1708
        %v1711 = vshrl.u32 %v1371, 16
        %v1713 = vrot.slane %v1711, 1
        %v1714 = vshll.u32 %v1371, 16
        %v1716 = vrot.slane %v1714, 2
        %v1717 = vor.u32 %v1713, %v1716
        %v1718 = vsel %vm1540, %v1695, %v1717
        %v1719 = vrot.slane %v1275, 1
        %v1720 = vrot.slane %v1271, 2
        %v1721 = vor.u32 %v1719, %v1720
        %v1722 = vsel %vm1540, %v1699, %v1721
        %v1724 = vshrl.u32 %v1282, 16
        %v1726 = vrot.slane %v1724, 1
        %v1727 = vshll.u32 %v1282, 16
        %v1729 = vrot.slane %v1727, 2
        %v1730 = vor.u32 %v1726, %v1729
        %v1731 = vsel %vm1540, %v1708, %v1730
        %v1733 = vshrl.u32 %v1373, 16
        %v1735 = vrot.slane %v1733, 1
        %v1736 = vshll.u32 %v1373, 16
        %v1738 = vrot.slane %v1736, 2
        %v1739 = vor.u32 %v1735, %v1738
        %v1740 = vsel %vm1540, %v1717, %v1739
        %v1741 = vrot.slane %v1283, 1
        %v1742 = vrot.slane %v1279, 2
        %v1743 = vor.u32 %v1741, %v1742
        %v1744 = vsel %vm1540, %v1721, %v1743
        %v1746 = vshrl.u32 %v1290, 16
        %v1748 = vrot.slane %v1746, 1
        %v1749 = vshll.u32 %v1290, 16
        %v1751 = vrot.slane %v1749, 2
        %v1752 = vor.u32 %v1748, %v1751
        %v1753 = vsel %vm1540, %v1730, %v1752
        %v1755 = vshrl.u32 %v1375, 16
        %v1757 = vrot.slane %v1755, 1
        %v1758 = vshll.u32 %v1375, 16
        %v1760 = vrot.slane %v1758, 2
        %v1761 = vor.u32 %v1757, %v1760
        %v1762 = vsel %vm1540, %v1739, %v1761
        %v1763 = vrot.slane %v1291, 1
        %v1764 = vrot.slane %v1287, 2
        %v1765 = vor.u32 %v1763, %v1764
        %v1766 = vsel %vm1540, %v1743, %v1765
        %v1768 = vshrl.u32 %v1298, 16
        %v1770 = vrot.slane %v1768, 1
        %v1771 = vshll.u32 %v1298, 16
        %v1773 = vrot.slane %v1771, 2
        %v1774 = vor.u32 %v1770, %v1773
        %v1775 = vsel %vm1540, %v1752, %v1774
        %v1777 = vshrl.u32 %v1377, 16
        %v1779 = vrot.slane %v1777, 1
        %v1780 = vshll.u32 %v1377, 16
        %v1782 = vrot.slane %v1780, 2
        %v1783 = vor.u32 %v1779, %v1782
        %v1784 = vsel %vm1540, %v1761, %v1783
        %v1785 = vrot.slane %v1299, 1
        %v1786 = vrot.slane %v1295, 2
        %v1787 = vor.u32 %v1785, %v1786
        %v1788 = vsel %vm1540, %v1765, %v1787
        %v1790 = vshrl.u32 %v1306, 16
        %v1792 = vrot.slane %v1790, 1
        %v1793 = vshll.u32 %v1306, 16
        %v1795 = vrot.slane %v1793, 2
        %v1796 = vor.u32 %v1792, %v1795
        %v1797 = vsel %vm1540, %v1774, %v1796
        %v1799 = vshrl.u32 %v1379, 16
        %v1801 = vrot.slane %v1799, 1
        %v1802 = vshll.u32 %v1379, 16
        %v1804 = vrot.slane %v1802, 2
        %v1805 = vor.u32 %v1801, %v1804
        %v1806 = vsel %vm1540, %v1783, %v1805
        %v1807 = vrot.slane %v1307, 1
        %v1808 = vrot.slane %v1303, 2
        %v1809 = vor.u32 %v1807, %v1808
        %v1810 = vsel %vm1540, %v1787, %v1809
        %v1812 = vshrl.u32 %v1314, 16
        %v1814 = vrot.slane %v1812, 1
        %v1815 = vshll.u32 %v1314, 16
        %v1817 = vrot.slane %v1815, 2
        %v1818 = vor.u32 %v1814, %v1817
        %v1819 = vsel %vm1540, %v1796, %v1818
        %v1821 = vshrl.u32 %v1381, 16
        %v1823 = vrot.slane %v1821, 1
        %v1824 = vshll.u32 %v1381, 16
        %v1826 = vrot.slane %v1824, 2
        %v1827 = vor.u32 %v1823, %v1826
        %v1828 = vsel %vm1540, %v1805, %v1827
        %v1829 = vrot.slane %v1315, 1
        %v1830 = vrot.slane %v1311, 2
        %v1831 = vor.u32 %v1829, %v1830
        %v1832 = vsel %vm1540, %v1809, %v1831
        %v1834 = vshrl.u32 %v1322, 16
        %v1836 = vrot.slane %v1834, 1
        %v1837 = vshll.u32 %v1322, 16
        %v1839 = vrot.slane %v1837, 2
        %v1840 = vor.u32 %v1836, %v1839
        %v1841 = vsel %vm1540, %v1818, %v1840
        %v1843 = vshrl.u32 %v1383, 16
        %v1845 = vrot.slane %v1843, 1
        %v1846 = vshll.u32 %v1383, 16
        %v1848 = vrot.slane %v1846, 2
        %v1849 = vor.u32 %v1845, %v1848
        %v1850 = vsel %vm1540, %v1827, %v1849
        %v1851 = vrot.slane %v1323, 1
        %v1852 = vrot.slane %v1319, 2
        %v1853 = vor.u32 %v1851, %v1852
        %v1854 = vsel %vm1540, %v1831, %v1853
        %v1856 = vshrl.u32 %v1330, 16
        %v1858 = vrot.slane %v1856, 1
        %v1859 = vshll.u32 %v1330, 16
        %v1861 = vrot.slane %v1859, 2
        %v1862 = vor.u32 %v1858, %v1861
        %v1863 = vsel %vm1540, %v1840, %v1862
        %v1865 = vshrl.u32 %v1385, 16
        %v1867 = vrot.slane %v1865, 1
        %v1868 = vshll.u32 %v1385, 16
        %v1870 = vrot.slane %v1868, 2
        %v1871 = vor.u32 %v1867, %v1870
        %v1872 = vsel %vm1540, %v1849, %v1871
        %v1873 = vrot.slane %v1331, 1
        %v1874 = vrot.slane %v1327, 2
        %v1875 = vor.u32 %v1873, %v1874
        %v1876 = vsel %vm1540, %v1853, %v1875
        %v1878 = vshrl.u32 %v1338, 16
        %v1880 = vrot.slane %v1878, 1
        %v1881 = vshll.u32 %v1338, 16
        %v1883 = vrot.slane %v1881, 2
        %v1884 = vor.u32 %v1880, %v1883
        %v1885 = vsel %vm1540, %v1862, %v1884
        %v1887 = vshrl.u32 %v1387, 16
        %v1889 = vrot.slane %v1887, 1
        %v1890 = vshll.u32 %v1387, 16
        %v1892 = vrot.slane %v1890, 2
        %v1893 = vor.u32 %v1889, %v1892
        %v1894 = vsel %vm1540, %v1871, %v1893
        %v1895 = vrot.slane %v1339, 1
        %v1896 = vrot.slane %v1335, 2
        %v1897 = vor.u32 %v1895, %v1896
        %v1898 = vsel %vm1540, %v1875, %v1897
        %v1900 = vshrl.u32 %v1470, 16
        %v1902 = vrot.slane %v1900, 1
        %v1903 = vshll.u32 %v1470, 16
        %v1905 = vrot.slane %v1903, 2
        %v1906 = vor.u32 %v1902, %v1905
        %v1907 = vsel %vm1540, %v1884, %v1906
        %v1909 = vshrl.u32 %v1488, 16
        %v1911 = vrot.slane %v1909, 1
        %v1912 = vshll.u32 %v1488, 16
        %v1914 = vrot.slane %v1912, 2
        %v1915 = vor.u32 %v1911, %v1914
        %v1916 = vsel %vm1540, %v1893, %v1915
        %v1917 = vrot.slane %v1471, 1
        %v1918 = vrot.slane %v1467, 2
        %v1919 = vor.u32 %v1917, %v1918
        %v1920 = vsel %vm1540, %v1897, %v1919
        %v1922 = vshrl.u32 %v1478, 16
        %v1924 = vrot.slane %v1922, 1
        %v1925 = vshll.u32 %v1478, 16
        %v1927 = vrot.slane %v1925, 2
        %v1928 = vor.u32 %v1924, %v1927
        %v1929 = vsel %vm1540, %v1906, %v1928
        %v1931 = vshrl.u32 %v1490, 16
        %v1933 = vrot.slane %v1931, 1
        %v1934 = vshll.u32 %v1490, 16
        %v1936 = vrot.slane %v1934, 2
        %v1937 = vor.u32 %v1933, %v1936
        %v1938 = vsel %vm1540, %v1915, %v1937
        %v1939 = vrot.slane %v1479, 1
        %v1940 = vrot.slane %v1475, 2
        %v1941 = vor.u32 %v1939, %v1940
        %v1942 = vsel %vm1540, %v1919, %v1941
        %v1944 = vshrl.u32 %v1481, 16
        %v1946 = vrot.slane %v1944, 1
        %v1947 = vshll.u32 %v1481, 16
        %v1949 = vrot.slane %v1947, 2
        %v1950 = vor.u32 %v1946, %v1949
        %v1951 = vsel %vm1540, %v1928, %v1950
        %v1953 = vshrl.u32 %v1489, 16
        %v1955 = vrot.slane %v1953, 1
        %v1956 = vshll.u32 %v1489, 16
        %v1958 = vrot.slane %v1956, 2
        %v1959 = vor.u32 %v1955, %v1958
        %v1960 = vsel %vm1540, %v1937, %v1959
        %v2063 = vunpack.c.l.b16 %v1492
        %v2064 = vunpack.c.l.b16 %v1493
        %v2065 = vunpack.c.l.b16 %v1494
        %v2066 = vunpack.c.l.b16 %v1495
        %v2067 = vunpack.c.l.b16 %v1496
        %v2068 = vunpack.c.l.b16 %v1497
        %v2069 = vunpack.c.l.b16 %v1498
        %v2070 = vunpack.c.l.b16 %v1499
        %v2071 = vunpack.c.l.b16 %v1500
        %v2072 = vunpack.c.l.b16 %v1501
        %v2073 = vunpack.c.l.b16 %v1502
        %v2074 = vunpack.c.l.b16 %v1503
        %v2075 = vunpack.c.l.b16 %v1504
        %v2076 = vunpack.c.l.b16 %v1505
        %v2077 = vunpack.c.l.b16 %v1506
        %v2078 = vunpack.c.l.b16 %v1507
        %v2079 = vunpack.c.l.b16 %v1508
        %v2080 = vunpack.c.l.b16 %v1509
        %v2081 = vunpack.c.l.b16 %v1510
        %v2082 = vunpack.c.l.b16 %v1511
        %v2083 = vunpack.c.l.b16 %v1512
        %v2084 = vunpack.c.l.b16 %v1513
        %v2085 = vunpack.c.l.b16 %v1514
        %v2086 = vunpack.c.l.b16 %v1515
        %v2087 = vunpack.c.l.b16 %v1516
        %v2088 = vunpack.c.l.b16 %v1517
        %v2089 = vunpack.c.l.b16 %v1518
        %v2090 = vunpack.c.l.b16 %v1519
        %v2091 = vunpack.c.l.b16 %v1520
        %v2092 = vunpack.c.l.b16 %v1521
        %v2093 = vunpack.c.l.b16 %v1522
        %v2094 = vunpack.c.l.b16 %v1523
        %v2095 = vunpack.c.l.b16 %v1524
        %v2096 = vunpack.c.l.b16 %v1525
        %v2097 = vunpack.c.l.b16 %v1526
        %v2098 = vunpack.c.l.b16 %v1527
        %v2099 = vunpack.c.l.b16 %v1528
        %v2100 = vunpack.c.l.b16 %v1529
        %v2101 = vunpack.c.l.b16 %v1530
        %v2102 = vunpack.c.l.b16 %v1531
        %v2103 = vunpack.c.l.b16 %v1532
        %v2104 = vunpack.c.l.b16 %v1533
        %v2105 = vunpack.c.l.b16 %v1534
        %v2106 = vunpack.c.l.b16 %v1535
        %v2107 = vunpack.c.l.b16 %v1536
        %v2108 = vunpack.c.l.b16 %v1537
        %v2109 = vunpack.c.l.b16 %v1538
        %v2110 = vunpack.c.l.b16 %v1539
        %v2111 = vpack.c.b16 %v2064, %v2063
        %v2112 = vpack.c.b16 %v2066, %v2065
        %v2113 = vpack.c.b16 %v2068, %v2067
        %v2114 = vpack.c.b16 %v2070, %v2069
        %v2115 = vpack.c.b16 %v2072, %v2071
        %v2116 = vpack.c.b16 %v2074, %v2073
        %v2117 = vpack.c.b16 %v2076, %v2075
        %v2118 = vpack.c.b16 %v2078, %v2077
        %v2119 = vpack.c.b16 %v2080, %v2079
        %v2120 = vpack.c.b16 %v2082, %v2081
        %v2121 = vpack.c.b16 %v2084, %v2083
        %v2122 = vpack.c.b16 %v2086, %v2085
        %v2123 = vpack.c.b16 %v2088, %v2087
        %v2124 = vpack.c.b16 %v2090, %v2089
        %v2125 = vpack.c.b16 %v2092, %v2091
        %v2126 = vpack.c.b16 %v2094, %v2093
        %v2127 = vpack.c.b16 %v2096, %v2095
        %v2128 = vpack.c.b16 %v2098, %v2097
        %v2129 = vpack.c.b16 %v2100, %v2099
        %v2130 = vpack.c.b16 %v2102, %v2101
        %v2131 = vpack.c.b16 %v2104, %v2103
        %v2132 = vpack.c.b16 %v2106, %v2105
        %v2133 = vpack.c.b16 %v2108, %v2107
        %v2134 = vpack.c.b16 %v2110, %v2109
        %2159 = vmatprep.subr.bf16.mxu0 0
        %2160 = vmatpush1.bf16.msra.mxu0 %v2118
        %2161 = vmatprep.subr.bf16.mxu0 0
        %2162 = vmatpush1.bf16.msra.mxu0 %v2117
        %2163 = vmatprep.subr.bf16.mxu0 0
        %2164 = vmatpush1.bf16.msra.mxu0 %v2116
        %2165 = vmatprep.subr.bf16.mxu0 0
        %2166 = vmatpush1.bf16.msra.mxu0 %v2115
        %2167 = vmatprep.subr.bf16.mxu0 0
        %2168 = vmatpush1.bf16.msra.mxu0 %v2114
        %2169 = vmatprep.subr.bf16.mxu0 0
        %2170 = vmatpush1.bf16.msra.mxu0 %v2113
        %2171 = vmatprep.subr.bf16.mxu0 0
        %2172 = vmatpush1.bf16.msra.mxu0 %v2112
        %2173 = vmatprep.subr.bf16.mxu0 0
        %2174 = vmatpush1.bf16.msra.mxu0 %v2111
        %2175 = vmatprep.subr.bf16.mxu0 0
        %2176 = vmatpush2.bf16.msra.mxu0 %v2126
        %2177 = vmatprep.subr.bf16.mxu0 0
        %2178 = vmatpush2.bf16.msra.mxu0 %v2125
        %2179 = vmatprep.subr.bf16.mxu0 0
        %2180 = vmatpush2.bf16.msra.mxu0 %v2124
        %2181 = vmatprep.subr.bf16.mxu0 0
        %2182 = vmatpush2.bf16.msra.mxu0 %v2123
        %2183 = vmatprep.subr.bf16.mxu0 0
        %2184 = vmatpush2.bf16.msra.mxu0 %v2122
        %2185 = vmatprep.subr.bf16.mxu0 0
        %2186 = vmatpush2.bf16.msra.mxu0 %v2121
        %2187 = vmatprep.subr.bf16.mxu0 0
        %2188 = vmatpush2.bf16.msra.mxu0 %v2120
        %2189 = vmatprep.subr.bf16.mxu0 0
        %2190 = vmatpush2.bf16.msra.mxu0 %v2119
        %2191 = vmatprep.mubr.bf16.mxu0 %v1569
        %2192 = vmatmul.mubr.bf16.gmra.mxu0 %v1552
        %v2193 = vpop.f32.mrf.mxu0
        %v2194 = vadd.f32 0.0, %v2193
        %v2195 = vpop.f32.mrf.mxu0
        %v2196 = vpop.f32.mrf.mxu0
        %v2197 = vadd.f32 0.0, %v2196
        %v2198 = vpop.f32.mrf.mxu0
        %2199 = vmatprep.mubr.bf16.mxu0 %v1599
        %2200 = vmatmul.mubr.bf16.gmra.mxu0 %v1590
        %v2201 = vpop.f32.mrf.mxu0
        %v2202 = vadd.f32 0.0, %v2201
        %v2203 = vpop.f32.mrf.mxu0
        %v2204 = vpop.f32.mrf.mxu0
        %v2205 = vadd.f32 0.0, %v2204
        %v2206 = vpop.f32.mrf.mxu0
        %2207 = vmatprep.mubr.bf16.mxu0 %v1621
        %2208 = vmatmul.mubr.bf16.gmra.mxu0 %v1612
        %v2209 = vpop.f32.mrf.mxu0
        %v2210 = vadd.f32 0.0, %v2209
        %v2211 = vpop.f32.mrf.mxu0
        %v2212 = vpop.f32.mrf.mxu0
        %v2213 = vadd.f32 0.0, %v2212
        %v2214 = vpop.f32.mrf.mxu0
        %2215 = vmatprep.mubr.bf16.mxu0 %v1643
        %2216 = vmatmul.mubr.bf16.gmra.mxu0 %v1634
        %v2217 = vpop.f32.mrf.mxu0
        %v2218 = vadd.f32 0.0, %v2217
        %v2219 = vpop.f32.mrf.mxu0
        %v2220 = vpop.f32.mrf.mxu0
        %v2221 = vadd.f32 0.0, %v2220
        %v2222 = vpop.f32.mrf.mxu0
        %2223 = vmatprep.mubr.bf16.mxu0 %v1665
        %2224 = vmatmul.mubr.bf16.gmra.mxu0 %v1656
        %v2225 = vpop.f32.mrf.mxu0
        %v2226 = vadd.f32 0.0, %v2225
        %v2227 = vpop.f32.mrf.mxu0
        %v2228 = vpop.f32.mrf.mxu0
        %v2229 = vadd.f32 0.0, %v2228
        %v2230 = vpop.f32.mrf.mxu0
        %2231 = vmatprep.mubr.bf16.mxu0 %v1687
        %2232 = vmatmul.mubr.bf16.gmra.mxu0 %v1678
        %v2233 = vpop.f32.mrf.mxu0
        %v2234 = vadd.f32 0.0, %v2233
        %v2235 = vpop.f32.mrf.mxu0
        %v2236 = vpop.f32.mrf.mxu0
        %v2237 = vadd.f32 0.0, %v2236
        %v2238 = vpop.f32.mrf.mxu0
        %2239 = vmatprep.mubr.bf16.mxu0 %v1709
        %2240 = vmatmul.mubr.bf16.gmra.mxu0 %v1700
        %v2241 = vpop.f32.mrf.mxu0
        %v2242 = vadd.f32 0.0, %v2241
        %v2243 = vpop.f32.mrf.mxu0
        %v2244 = vpop.f32.mrf.mxu0
        %v2245 = vadd.f32 0.0, %v2244
        %v2246 = vpop.f32.mrf.mxu0
        %2247 = vmatprep.mubr.bf16.mxu0 %v1731
        %2248 = vmatmul.mubr.bf16.gmra.mxu0 %v1722
        %v2249 = vpop.f32.mrf.mxu0
        %v2250 = vadd.f32 0.0, %v2249
        %v2251 = vpop.f32.mrf.mxu0
        %v2252 = vpop.f32.mrf.mxu0
        %v2253 = vadd.f32 0.0, %v2252
        %v2254 = vpop.f32.mrf.mxu0
        %2255 = vmatprep.mubr.bf16.mxu0 %v1753
        %2256 = vmatmul.mubr.bf16.gmra.mxu0 %v1744
        %v2257 = vpop.f32.mrf.mxu0
        %v2258 = vadd.f32 0.0, %v2257
        %v2259 = vpop.f32.mrf.mxu0
        %v2260 = vpop.f32.mrf.mxu0
        %v2261 = vadd.f32 0.0, %v2260
        %v2262 = vpop.f32.mrf.mxu0
        %2263 = vmatprep.mubr.bf16.mxu0 %v1775
        %2264 = vmatmul.mubr.bf16.gmra.mxu0 %v1766
        %v2265 = vpop.f32.mrf.mxu0
        %v2266 = vadd.f32 0.0, %v2265
        %v2267 = vpop.f32.mrf.mxu0
        %v2268 = vpop.f32.mrf.mxu0
        %v2269 = vadd.f32 0.0, %v2268
        %v2270 = vpop.f32.mrf.mxu0
        %2271 = vmatprep.mubr.bf16.mxu0 %v1797
        %2272 = vmatmul.mubr.bf16.gmra.mxu0 %v1788
        %v2273 = vpop.f32.mrf.mxu0
        %v2274 = vadd.f32 0.0, %v2273
        %v2275 = vpop.f32.mrf.mxu0
        %v2276 = vpop.f32.mrf.mxu0
        %v2277 = vadd.f32 0.0, %v2276
        %v2278 = vpop.f32.mrf.mxu0
        %2279 = vmatprep.mubr.bf16.mxu0 %v1819
        %2280 = vmatmul.mubr.bf16.gmra.mxu0 %v1810
        %v2281 = vpop.f32.mrf.mxu0
        %v2282 = vadd.f32 0.0, %v2281
        %v2283 = vpop.f32.mrf.mxu0
        %v2284 = vpop.f32.mrf.mxu0
        %v2285 = vadd.f32 0.0, %v2284
        %v2286 = vpop.f32.mrf.mxu0
        %2287 = vmatprep.mubr.bf16.mxu0 %v1841
        %2288 = vmatmul.mubr.bf16.gmra.mxu0 %v1832
        %v2289 = vpop.f32.mrf.mxu0
        %v2290 = vadd.f32 0.0, %v2289
        %v2291 = vpop.f32.mrf.mxu0
        %v2292 = vpop.f32.mrf.mxu0
        %v2293 = vadd.f32 0.0, %v2292
        %v2294 = vpop.f32.mrf.mxu0
        %2295 = vmatprep.mubr.bf16.mxu0 %v1863
        %2296 = vmatmul.mubr.bf16.gmra.mxu0 %v1854
        %v2297 = vpop.f32.mrf.mxu0
        %v2298 = vadd.f32 0.0, %v2297
        %v2299 = vpop.f32.mrf.mxu0
        %v2300 = vpop.f32.mrf.mxu0
        %v2301 = vadd.f32 0.0, %v2300
        %v2302 = vpop.f32.mrf.mxu0
        %2303 = vmatprep.mubr.bf16.mxu0 %v1885
        %2304 = vmatmul.mubr.bf16.gmra.mxu0 %v1876
        %v2305 = vpop.f32.mrf.mxu0
        %v2306 = vadd.f32 0.0, %v2305
        %v2307 = vpop.f32.mrf.mxu0
        %v2308 = vpop.f32.mrf.mxu0
        %v2309 = vadd.f32 0.0, %v2308
        %v2310 = vpop.f32.mrf.mxu0
        %2311 = vmatprep.mubr.bf16.mxu0 %v1907
        %2312 = vmatmul.mubr.bf16.gmra.mxu0 %v1898
        %v2313 = vpop.f32.mrf.mxu0
        %v2314 = vadd.f32 0.0, %v2313
        %v2315 = vpop.f32.mrf.mxu0
        %v2316 = vpop.f32.mrf.mxu0
        %v2317 = vadd.f32 0.0, %v2316
        %v2318 = vpop.f32.mrf.mxu0
        %2319 = vmatprep.mubr.bf16.mxu0 %v1929
        %2320 = vmatmul.mubr.bf16.gmra.mxu0 %v1920
        %v2321 = vpop.f32.mrf.mxu0
        %v2322 = vadd.f32 0.0, %v2321
        %v2323 = vpop.f32.mrf.mxu0
        %v2324 = vpop.f32.mrf.mxu0
        %v2325 = vadd.f32 0.0, %v2324
        %v2326 = vpop.f32.mrf.mxu0
        %2327 = vmatprep.mubr.bf16.mxu0 %v1951
        %2328 = vmatmul.mubr.bf16.gmra.mxu0 %v1942
        %v2329 = vpop.f32.mrf.mxu0
        %v2330 = vadd.f32 0.0, %v2329
        %v2331 = vpop.f32.mrf.mxu0
        %v2332 = vpop.f32.mrf.mxu0
        %v2333 = vadd.f32 0.0, %v2332
        %v2334 = vpop.f32.mrf.mxu0
        %2335 = vdwg.mxu0
        %2336 = vmatprep.subr.bf16.mxu0 0
        %2337 = vmatpush1.bf16.msra.mxu0 %v2134
        %2338 = vmatprep.subr.bf16.mxu0 0
        %2339 = vmatpush1.bf16.msra.mxu0 %v2133
        %2340 = vmatprep.subr.bf16.mxu0 0
        %2341 = vmatpush1.bf16.msra.mxu0 %v2132
        %2342 = vmatprep.subr.bf16.mxu0 0
        %2343 = vmatpush1.bf16.msra.mxu0 %v2131
        %2344 = vmatprep.subr.bf16.mxu0 0
        %2345 = vmatpush1.bf16.msra.mxu0 %v2130
        %2346 = vmatprep.subr.bf16.mxu0 0
        %2347 = vmatpush1.bf16.msra.mxu0 %v2129
        %2348 = vmatprep.subr.bf16.mxu0 0
        %2349 = vmatpush1.bf16.msra.mxu0 %v2128
        %2350 = vmatprep.subr.bf16.mxu0 0
        %2351 = vmatpush1.bf16.msra.mxu0 %v2127
        %2352 = vmatprep.subr.bf16.mxu0 0
        %2353 = vmatpush2.bf16.msra.mxu0 0
        %2354 = vmatprep.subr.bf16.mxu0 0
        %2355 = vmatpush2.bf16.msra.mxu0 0
        %2356 = vmatprep.subr.bf16.mxu0 0
        %2357 = vmatpush2.bf16.msra.mxu0 0
        %2358 = vmatprep.subr.bf16.mxu0 0
        %2359 = vmatpush2.bf16.msra.mxu0 0
        %2360 = vmatprep.subr.bf16.mxu0 0
        %2361 = vmatpush2.bf16.msra.mxu0 0
        %2362 = vmatprep.subr.bf16.mxu0 0
        %2363 = vmatpush2.bf16.msra.mxu0 0
        %2364 = vmatprep.subr.bf16.mxu0 0
        %2365 = vmatpush2.bf16.msra.mxu0 0
        %2366 = vmatprep.subr.bf16.mxu0 0
        %2367 = vmatpush2.bf16.msra.mxu0 0
        %2368 = vmatprep.mubr.bf16.mxu0 0
        %2369 = vmatmul.mubr.bf16.gmra.mxu0 %v1586
        %v2370 = vpop.f32.mrf.mxu0
        %v2371 = vadd.f32 %v2194, %v2370
        %v2372 = vpop.f32.mrf.mxu0
        %v2373 = vpop.f32.mrf.mxu0
        %v2374 = vadd.f32 %v2197, %v2373
        %v2375 = vpop.f32.mrf.mxu0
        %2376 = vmatprep.mubr.bf16.mxu0 0
        %2377 = vmatmul.mubr.bf16.gmra.mxu0 %v1608
        %v2378 = vpop.f32.mrf.mxu0
        %v2379 = vadd.f32 %v2202, %v2378
        %v2380 = vpop.f32.mrf.mxu0
        %v2381 = vpop.f32.mrf.mxu0
        %v2382 = vadd.f32 %v2205, %v2381
        %v2383 = vpop.f32.mrf.mxu0
        %2384 = vmatprep.mubr.bf16.mxu0 0
        %2385 = vmatmul.mubr.bf16.gmra.mxu0 %v1630
        %v2386 = vpop.f32.mrf.mxu0
        %v2387 = vadd.f32 %v2210, %v2386
        %v2388 = vpop.f32.mrf.mxu0
        %v2389 = vpop.f32.mrf.mxu0
        %v2390 = vadd.f32 %v2213, %v2389
        %v2391 = vpop.f32.mrf.mxu0
        %2392 = vmatprep.mubr.bf16.mxu0 0
        %2393 = vmatmul.mubr.bf16.gmra.mxu0 %v1652
        %v2394 = vpop.f32.mrf.mxu0
        %v2395 = vadd.f32 %v2218, %v2394
        %v2396 = vpop.f32.mrf.mxu0
        %v2397 = vpop.f32.mrf.mxu0
        %v2398 = vadd.f32 %v2221, %v2397
        %v2399 = vpop.f32.mrf.mxu0
        %2400 = vmatprep.mubr.bf16.mxu0 0
        %2401 = vmatmul.mubr.bf16.gmra.mxu0 %v1674
        %v2402 = vpop.f32.mrf.mxu0
        %v2403 = vadd.f32 %v2226, %v2402
        %v2404 = vpop.f32.mrf.mxu0
        %v2405 = vpop.f32.mrf.mxu0
        %v2406 = vadd.f32 %v2229, %v2405
        %v2407 = vpop.f32.mrf.mxu0
        %2408 = vmatprep.mubr.bf16.mxu0 0
        %2409 = vmatmul.mubr.bf16.gmra.mxu0 %v1696
        %v2410 = vpop.f32.mrf.mxu0
        %v2411 = vadd.f32 %v2234, %v2410
        %v2412 = vpop.f32.mrf.mxu0
        %v2413 = vpop.f32.mrf.mxu0
        %v2414 = vadd.f32 %v2237, %v2413
        %v2415 = vpop.f32.mrf.mxu0
        %2416 = vmatprep.mubr.bf16.mxu0 0
        %2417 = vmatmul.mubr.bf16.gmra.mxu0 %v1718
        %v2418 = vpop.f32.mrf.mxu0
        %v2419 = vadd.f32 %v2242, %v2418
        %v2420 = vpop.f32.mrf.mxu0
        %v2421 = vpop.f32.mrf.mxu0
        %v2422 = vadd.f32 %v2245, %v2421
        %v2423 = vpop.f32.mrf.mxu0
        %2424 = vmatprep.mubr.bf16.mxu0 0
        %2425 = vmatmul.mubr.bf16.gmra.mxu0 %v1740
        %v2426 = vpop.f32.mrf.mxu0
        %v2427 = vadd.f32 %v2250, %v2426
        %v2428 = vpop.f32.mrf.mxu0
        %v2429 = vpop.f32.mrf.mxu0
        %v2430 = vadd.f32 %v2253, %v2429
        %v2431 = vpop.f32.mrf.mxu0
        %2432 = vmatprep.mubr.bf16.mxu0 0
        %2433 = vmatmul.mubr.bf16.gmra.mxu0 %v1762
        %v2434 = vpop.f32.mrf.mxu0
        %v2435 = vadd.f32 %v2258, %v2434
        %v2436 = vpop.f32.mrf.mxu0
        %v2437 = vpop.f32.mrf.mxu0
        %v2438 = vadd.f32 %v2261, %v2437
        %v2439 = vpop.f32.mrf.mxu0
        %2440 = vmatprep.mubr.bf16.mxu0 0
        %2441 = vmatmul.mubr.bf16.gmra.mxu0 %v1784
        %v2442 = vpop.f32.mrf.mxu0
        %v2443 = vadd.f32 %v2266, %v2442
        %v2444 = vpop.f32.mrf.mxu0
        %v2445 = vpop.f32.mrf.mxu0
        %v2446 = vadd.f32 %v2269, %v2445
        %v2447 = vpop.f32.mrf.mxu0
        %2448 = vmatprep.mubr.bf16.mxu0 0
        %2449 = vmatmul.mubr.bf16.gmra.mxu0 %v1806
        %v2450 = vpop.f32.mrf.mxu0
        %v2451 = vadd.f32 %v2274, %v2450
        %v2452 = vpop.f32.mrf.mxu0
        %v2453 = vpop.f32.mrf.mxu0
        %v2454 = vadd.f32 %v2277, %v2453
        %v2455 = vpop.f32.mrf.mxu0
        %2456 = vmatprep.mubr.bf16.mxu0 0
        %2457 = vmatmul.mubr.bf16.gmra.mxu0 %v1828
        %v2458 = vpop.f32.mrf.mxu0
        %v2459 = vadd.f32 %v2282, %v2458
        %v2460 = vpop.f32.mrf.mxu0
        %v2461 = vpop.f32.mrf.mxu0
        %v2462 = vadd.f32 %v2285, %v2461
        %v2463 = vpop.f32.mrf.mxu0
        %2464 = vmatprep.mubr.bf16.mxu0 0
        %2465 = vmatmul.mubr.bf16.gmra.mxu0 %v1850
        %v2466 = vpop.f32.mrf.mxu0
        %v2467 = vadd.f32 %v2290, %v2466
        %v2468 = vpop.f32.mrf.mxu0
        %v2469 = vpop.f32.mrf.mxu0
        %v2470 = vadd.f32 %v2293, %v2469
        %v2471 = vpop.f32.mrf.mxu0
        %2472 = vmatprep.mubr.bf16.mxu0 0
        %2473 = vmatmul.mubr.bf16.gmra.mxu0 %v1872
        %v2474 = vpop.f32.mrf.mxu0
        %v2475 = vadd.f32 %v2298, %v2474
        %v2476 = vpop.f32.mrf.mxu0
        %v2477 = vpop.f32.mrf.mxu0
        %v2478 = vadd.f32 %v2301, %v2477
        %v2479 = vpop.f32.mrf.mxu0
        %2480 = vmatprep.mubr.bf16.mxu0 0
        %2481 = vmatmul.mubr.bf16.gmra.mxu0 %v1894
        %v2482 = vpop.f32.mrf.mxu0
        %v2483 = vadd.f32 %v2306, %v2482
        %v2484 = vpop.f32.mrf.mxu0
        %v2485 = vpop.f32.mrf.mxu0
        %v2486 = vadd.f32 %v2309, %v2485
        %v2487 = vpop.f32.mrf.mxu0
        %2488 = vmatprep.mubr.bf16.mxu0 0
        %2489 = vmatmul.mubr.bf16.gmra.mxu0 %v1916
        %v2490 = vpop.f32.mrf.mxu0
        %v2491 = vadd.f32 %v2314, %v2490
        %v2492 = vpop.f32.mrf.mxu0
        %v2493 = vpop.f32.mrf.mxu0
        %v2494 = vadd.f32 %v2317, %v2493
        %v2495 = vpop.f32.mrf.mxu0
        %2496 = vmatprep.mubr.bf16.mxu0 0
        %2497 = vmatmul.mubr.bf16.gmra.mxu0 %v1938
        %v2498 = vpop.f32.mrf.mxu0
        %v2499 = vadd.f32 %v2322, %v2498
        %v2500 = vpop.f32.mrf.mxu0
        %v2501 = vpop.f32.mrf.mxu0
        %v2502 = vadd.f32 %v2325, %v2501
        %v2503 = vpop.f32.mrf.mxu0
        %2504 = vmatprep.mubr.bf16.mxu0 0
        %2505 = vmatmul.mubr.bf16.gmra.mxu0 %v1960
        %v2506 = vpop.f32.mrf.mxu0
        %v2507 = vadd.f32 %v2330, %v2506
        %v2508 = vpop.f32.mrf.mxu0
        %v2509 = vpop.f32.mrf.mxu0
        %v2510 = vadd.f32 %v2333, %v2509
        %v2511 = vpop.f32.mrf.mxu0
        %2512 = vdwg.mxu0
        %v2514 = vshrl.u32 %v1176, 16
        %v2516 = vshll.u32 %v1176, 16
        %v2518 = vrot.slane %v2516, 1
        %v2519 = vor.u32 %v2514, %v2518
        %v2520 = vsel %vm1198, %v2519, %v1209
        %v2522 = vshrl.u32 %v1210, 16
        %v2524 = vshll.u32 %v1210, 16
        %v2526 = vrot.slane %v2524, 1
        %v2527 = vor.u32 %v2522, %v2526
        %v2529 = vshll.u32 %v1218, 16
        %v2531 = vrot.slane %v2529, 1
        %v2532 = vsel %vm1198, %v2527, %v2531
        %v2534 = vshrl.u32 %v1355, 16
        %v2536 = vshll.u32 %v1355, 16
        %v2538 = vrot.slane %v2536, 1
        %v2539 = vor.u32 %v2534, %v2538
        %v2541 = vshll.u32 %v1357, 16
        %v2543 = vrot.slane %v2541, 1
        %v2544 = vsel %vm1198, %v2539, %v2543
        %v2545 = vshrl.u32 %v1218, 16
        %v2547 = vor.u32 %v2545, %v2531
        %v2548 = vrot.slane %v1565, 1
        %v2549 = vsel %vm1198, %v2547, %v2548
        %v2550 = vshrl.u32 %v1357, 16
        %v2552 = vor.u32 %v2550, %v2543
        %v2553 = vrot.slane %v1582, 1
        %v2554 = vsel %vm1198, %v2552, %v2553
        %v2555 = vor.u32 %v1562, %v2548
        %v2556 = vrot.slane %v1595, 1
        %v2557 = vsel %vm1198, %v2555, %v2556
        %v2558 = vor.u32 %v1579, %v2553
        %v2559 = vrot.slane %v1604, 1
        %v2560 = vsel %vm1198, %v2558, %v2559
        %v2561 = vor.u32 %v1592, %v2556
        %v2562 = vrot.slane %v1617, 1
        %v2563 = vsel %vm1198, %v2561, %v2562
        %v2564 = vor.u32 %v1601, %v2559
        %v2565 = vrot.slane %v1626, 1
        %v2566 = vsel %vm1198, %v2564, %v2565
        %v2567 = vor.u32 %v1614, %v2562
        %v2568 = vrot.slane %v1639, 1
        %v2569 = vsel %vm1198, %v2567, %v2568
        %v2570 = vor.u32 %v1623, %v2565
        %v2571 = vrot.slane %v1648, 1
        %v2572 = vsel %vm1198, %v2570, %v2571
        %v2573 = vor.u32 %v1636, %v2568
        %v2574 = vrot.slane %v1661, 1
        %v2575 = vsel %vm1198, %v2573, %v2574
        %v2576 = vor.u32 %v1645, %v2571
        %v2577 = vrot.slane %v1670, 1
        %v2578 = vsel %vm1198, %v2576, %v2577
        %v2579 = vor.u32 %v1658, %v2574
        %v2580 = vrot.slane %v1683, 1
        %v2581 = vsel %vm1198, %v2579, %v2580
        %v2582 = vor.u32 %v1667, %v2577
        %v2583 = vrot.slane %v1692, 1
        %v2584 = vsel %vm1198, %v2582, %v2583
        %v2585 = vor.u32 %v1680, %v2580
        %v2586 = vrot.slane %v1705, 1
        %v2587 = vsel %vm1198, %v2585, %v2586
        %v2588 = vor.u32 %v1689, %v2583
        %v2589 = vrot.slane %v1714, 1
        %v2590 = vsel %vm1198, %v2588, %v2589
        %v2591 = vor.u32 %v1702, %v2586
        %v2592 = vrot.slane %v1727, 1
        %v2593 = vsel %vm1198, %v2591, %v2592
        %v2594 = vor.u32 %v1711, %v2589
        %v2595 = vrot.slane %v1736, 1
        %v2596 = vsel %vm1198, %v2594, %v2595
        %v2597 = vor.u32 %v1724, %v2592
        %v2598 = vrot.slane %v1749, 1
        %v2599 = vsel %vm1198, %v2597, %v2598
        %v2600 = vor.u32 %v1733, %v2595
        %v2601 = vrot.slane %v1758, 1
        %v2602 = vsel %vm1198, %v2600, %v2601
        %v2603 = vor.u32 %v1746, %v2598
        %v2604 = vrot.slane %v1771, 1
        %v2605 = vsel %vm1198, %v2603, %v2604
        %v2606 = vor.u32 %v1755, %v2601
        %v2607 = vrot.slane %v1780, 1
        %v2608 = vsel %vm1198, %v2606, %v2607
        %v2609 = vor.u32 %v1768, %v2604
        %v2610 = vrot.slane %v1793, 1
        %v2611 = vsel %vm1198, %v2609, %v2610
        %v2612 = vor.u32 %v1777, %v2607
        %v2613 = vrot.slane %v1802, 1
        %v2614 = vsel %vm1198, %v2612, %v2613
        %v2615 = vor.u32 %v1790, %v2610
        %v2616 = vrot.slane %v1815, 1
        %v2617 = vsel %vm1198, %v2615, %v2616
        %v2618 = vor.u32 %v1799, %v2613
        %v2619 = vrot.slane %v1824, 1
        %v2620 = vsel %vm1198, %v2618, %v2619
        %v2621 = vor.u32 %v1812, %v2616
        %v2622 = vrot.slane %v1837, 1
        %v2623 = vsel %vm1198, %v2621, %v2622
        %v2624 = vor.u32 %v1821, %v2619
        %v2625 = vrot.slane %v1846, 1
        %v2626 = vsel %vm1198, %v2624, %v2625
        %v2627 = vor.u32 %v1834, %v2622
        %v2628 = vrot.slane %v1859, 1
        %v2629 = vsel %vm1198, %v2627, %v2628
        %v2630 = vor.u32 %v1843, %v2625
        %v2631 = vrot.slane %v1868, 1
        %v2632 = vsel %vm1198, %v2630, %v2631
        %v2633 = vor.u32 %v1856, %v2628
        %v2634 = vrot.slane %v1881, 1
        %v2635 = vsel %vm1198, %v2633, %v2634
        %v2636 = vor.u32 %v1865, %v2631
        %v2637 = vrot.slane %v1890, 1
        %v2638 = vsel %vm1198, %v2636, %v2637
        %v2639 = vor.u32 %v1878, %v2634
        %v2641 = vshll.u32 %v1346, 16
        %v2643 = vrot.slane %v2641, 1
        %v2644 = vsel %vm1198, %v2639, %v2643
        %v2645 = vor.u32 %v1887, %v2637
        %v2647 = vshll.u32 %v1389, 16
        %v2649 = vrot.slane %v2647, 1
        %v2650 = vsel %vm1198, %v2645, %v2649
        %v2651 = vshrl.u32 %v1346, 16
        %v2653 = vor.u32 %v2651, %v2643
        %v2655 = vshll.u32 %v1347, 16
        %v2657 = vrot.slane %v2655, 1
        %v2658 = vsel %vm1198, %v2653, %v2657
        %v2659 = vshrl.u32 %v1389, 16
        %v2661 = vor.u32 %v2659, %v2649
        %v2663 = vshll.u32 %v1388, 16
        %v2665 = vrot.slane %v2663, 1
        %v2666 = vsel %vm1198, %v2661, %v2665
        %v2769 = vunpack.c.l.b16 %v1390
        %v2770 = vunpack.c.l.b16 %v1391
        %v2771 = vunpack.c.l.b16 %v1392
        %v2772 = vunpack.c.l.b16 %v1393
        %v2773 = vunpack.c.l.b16 %v1394
        %v2774 = vunpack.c.l.b16 %v1395
        %v2775 = vunpack.c.l.b16 %v1396
        %v2776 = vunpack.c.l.b16 %v1397
        %v2777 = vunpack.c.l.b16 %v1398
        %v2778 = vunpack.c.l.b16 %v1399
        %v2779 = vunpack.c.l.b16 %v1400
        %v2780 = vunpack.c.l.b16 %v1401
        %v2781 = vunpack.c.l.b16 %v1402
        %v2782 = vunpack.c.l.b16 %v1403
        %v2783 = vunpack.c.l.b16 %v1404
        %v2784 = vunpack.c.l.b16 %v1405
        %v2785 = vunpack.c.l.b16 %v1406
        %v2786 = vunpack.c.l.b16 %v1407
        %v2787 = vunpack.c.l.b16 %v1408
        %v2788 = vunpack.c.l.b16 %v1409
        %v2789 = vunpack.c.l.b16 %v1410
        %v2790 = vunpack.c.l.b16 %v1411
        %v2791 = vunpack.c.l.b16 %v1412
        %v2792 = vunpack.c.l.b16 %v1413
        %v2793 = vunpack.c.l.b16 %v1414
        %v2794 = vunpack.c.l.b16 %v1415
        %v2795 = vunpack.c.l.b16 %v1416
        %v2796 = vunpack.c.l.b16 %v1417
        %v2797 = vunpack.c.l.b16 %v1418
        %v2798 = vunpack.c.l.b16 %v1419
        %v2799 = vunpack.c.l.b16 %v1420
        %v2800 = vunpack.c.l.b16 %v1421
        %v2801 = vunpack.c.l.b16 %v1422
        %v2802 = vunpack.c.l.b16 %v1423
        %v2803 = vunpack.c.l.b16 %v1424
        %v2804 = vunpack.c.l.b16 %v1425
        %v2805 = vunpack.c.l.b16 %v1426
        %v2806 = vunpack.c.l.b16 %v1427
        %v2807 = vunpack.c.l.b16 %v1428
        %v2808 = vunpack.c.l.b16 %v1429
        %v2809 = vunpack.c.l.b16 %v1430
        %v2810 = vunpack.c.l.b16 %v1431
        %v2811 = vunpack.c.l.b16 %v1432
        %v2812 = vunpack.c.l.b16 %v1433
        %v2813 = vunpack.c.l.b16 %v1434
        %v2814 = vunpack.c.l.b16 %v1435
        %v2815 = vunpack.c.l.b16 %v1436
        %v2816 = vunpack.c.l.b16 %v1437
        %v2817 = vpack.c.b16 %v2770, %v2769
        %v2818 = vpack.c.b16 %v2772, %v2771
        %v2819 = vpack.c.b16 %v2774, %v2773
        %v2820 = vpack.c.b16 %v2776, %v2775
        %v2821 = vpack.c.b16 %v2778, %v2777
        %v2822 = vpack.c.b16 %v2780, %v2779
        %v2823 = vpack.c.b16 %v2782, %v2781
        %v2824 = vpack.c.b16 %v2784, %v2783
        %v2825 = vpack.c.b16 %v2786, %v2785
        %v2826 = vpack.c.b16 %v2788, %v2787
        %v2827 = vpack.c.b16 %v2790, %v2789
        %v2828 = vpack.c.b16 %v2792, %v2791
        %v2829 = vpack.c.b16 %v2794, %v2793
        %v2830 = vpack.c.b16 %v2796, %v2795
        %v2831 = vpack.c.b16 %v2798, %v2797
        %v2832 = vpack.c.b16 %v2800, %v2799
        %v2833 = vpack.c.b16 %v2802, %v2801
        %v2834 = vpack.c.b16 %v2804, %v2803
        %v2835 = vpack.c.b16 %v2806, %v2805
        %v2836 = vpack.c.b16 %v2808, %v2807
        %v2837 = vpack.c.b16 %v2810, %v2809
        %v2838 = vpack.c.b16 %v2812, %v2811
        %v2839 = vpack.c.b16 %v2814, %v2813
        %v2840 = vpack.c.b16 %v2816, %v2815
        %2865 = vmatprep.subr.bf16.mxu0 0
        %2866 = vmatpush1.bf16.msra.mxu0 %v2824
        %2867 = vmatprep.subr.bf16.mxu0 0
        %2868 = vmatpush1.bf16.msra.mxu0 %v2823
        %2869 = vmatprep.subr.bf16.mxu0 0
        %2870 = vmatpush1.bf16.msra.mxu0 %v2822
        %2871 = vmatprep.subr.bf16.mxu0 0
        %2872 = vmatpush1.bf16.msra.mxu0 %v2821
        %2873 = vmatprep.subr.bf16.mxu0 0
        %2874 = vmatpush1.bf16.msra.mxu0 %v2820
        %2875 = vmatprep.subr.bf16.mxu0 0
        %2876 = vmatpush1.bf16.msra.mxu0 %v2819
        %2877 = vmatprep.subr.bf16.mxu0 0
        %2878 = vmatpush1.bf16.msra.mxu0 %v2818
        %2879 = vmatprep.subr.bf16.mxu0 0
        %2880 = vmatpush1.bf16.msra.mxu0 %v2817
        %2881 = vmatprep.subr.bf16.mxu0 0
        %2882 = vmatpush2.bf16.msra.mxu0 %v2832
        %2883 = vmatprep.subr.bf16.mxu0 0
        %2884 = vmatpush2.bf16.msra.mxu0 %v2831
        %2885 = vmatprep.subr.bf16.mxu0 0
        %2886 = vmatpush2.bf16.msra.mxu0 %v2830
        %2887 = vmatprep.subr.bf16.mxu0 0
        %2888 = vmatpush2.bf16.msra.mxu0 %v2829
        %2889 = vmatprep.subr.bf16.mxu0 0
        %2890 = vmatpush2.bf16.msra.mxu0 %v2828
        %2891 = vmatprep.subr.bf16.mxu0 0
        %2892 = vmatpush2.bf16.msra.mxu0 %v2827
        %2893 = vmatprep.subr.bf16.mxu0 0
        %2894 = vmatpush2.bf16.msra.mxu0 %v2826
        %2895 = vmatprep.subr.bf16.mxu0 0
        %2896 = vmatpush2.bf16.msra.mxu0 %v2825
        %2897 = vmatprep.mubr.bf16.mxu0 %v2532
        %2898 = vmatmul.mubr.bf16.gmra.mxu0 %v2520
        %v2899 = vpop.f32.mrf.mxu0
        %v2900 = vadd.f32 %v2371, %v2899
        %v2901 = vpop.f32.mrf.mxu0
        %v2902 = vpop.f32.mrf.mxu0
        %v2903 = vadd.f32 %v2374, %v2902
        %v2904 = vpop.f32.mrf.mxu0
        %2905 = vmatprep.mubr.bf16.mxu0 %v2549
        %2906 = vmatmul.mubr.bf16.gmra.mxu0 %v1218
        %v2907 = vpop.f32.mrf.mxu0
        %v2908 = vadd.f32 %v2379, %v2907
        %v2909 = vpop.f32.mrf.mxu0
        %v2910 = vpop.f32.mrf.mxu0
        %v2911 = vadd.f32 %v2382, %v2910
        %v2912 = vpop.f32.mrf.mxu0
        %2913 = vmatprep.mubr.bf16.mxu0 %v2557
        %2914 = vmatmul.mubr.bf16.gmra.mxu0 %v1226
        %v2915 = vpop.f32.mrf.mxu0
        %v2916 = vadd.f32 %v2387, %v2915
        %v2917 = vpop.f32.mrf.mxu0
        %v2918 = vpop.f32.mrf.mxu0
        %v2919 = vadd.f32 %v2390, %v2918
        %v2920 = vpop.f32.mrf.mxu0
        %2921 = vmatprep.mubr.bf16.mxu0 %v2563
        %2922 = vmatmul.mubr.bf16.gmra.mxu0 %v1234
        %v2923 = vpop.f32.mrf.mxu0
        %v2924 = vadd.f32 %v2395, %v2923
        %v2925 = vpop.f32.mrf.mxu0
        %v2926 = vpop.f32.mrf.mxu0
        %v2927 = vadd.f32 %v2398, %v2926
        %v2928 = vpop.f32.mrf.mxu0
        %2929 = vmatprep.mubr.bf16.mxu0 %v2569
        %2930 = vmatmul.mubr.bf16.gmra.mxu0 %v1242
        %v2931 = vpop.f32.mrf.mxu0
        %v2932 = vadd.f32 %v2403, %v2931
        %v2933 = vpop.f32.mrf.mxu0
        %v2934 = vpop.f32.mrf.mxu0
        %v2935 = vadd.f32 %v2406, %v2934
        %v2936 = vpop.f32.mrf.mxu0
        %2937 = vmatprep.mubr.bf16.mxu0 %v2575
        %2938 = vmatmul.mubr.bf16.gmra.mxu0 %v1250
        %v2939 = vpop.f32.mrf.mxu0
        %v2940 = vadd.f32 %v2411, %v2939
        %v2941 = vpop.f32.mrf.mxu0
        %v2942 = vpop.f32.mrf.mxu0
        %v2943 = vadd.f32 %v2414, %v2942
        %v2944 = vpop.f32.mrf.mxu0
        %2945 = vmatprep.mubr.bf16.mxu0 %v2581
        %2946 = vmatmul.mubr.bf16.gmra.mxu0 %v1258
        %v2947 = vpop.f32.mrf.mxu0
        %v2948 = vadd.f32 %v2419, %v2947
        %v2949 = vpop.f32.mrf.mxu0
        %v2950 = vpop.f32.mrf.mxu0
        %v2951 = vadd.f32 %v2422, %v2950
        %v2952 = vpop.f32.mrf.mxu0
        %2953 = vmatprep.mubr.bf16.mxu0 %v2587
        %2954 = vmatmul.mubr.bf16.gmra.mxu0 %v1266
        %v2955 = vpop.f32.mrf.mxu0
        %v2956 = vadd.f32 %v2427, %v2955
        %v2957 = vpop.f32.mrf.mxu0
        %v2958 = vpop.f32.mrf.mxu0
        %v2959 = vadd.f32 %v2430, %v2958
        %v2960 = vpop.f32.mrf.mxu0
        %2961 = vmatprep.mubr.bf16.mxu0 %v2593
        %2962 = vmatmul.mubr.bf16.gmra.mxu0 %v1274
        %v2963 = vpop.f32.mrf.mxu0
        %v2964 = vadd.f32 %v2435, %v2963
        %v2965 = vpop.f32.mrf.mxu0
        %v2966 = vpop.f32.mrf.mxu0
        %v2967 = vadd.f32 %v2438, %v2966
        %v2968 = vpop.f32.mrf.mxu0
        %2969 = vmatprep.mubr.bf16.mxu0 %v2599
        %2970 = vmatmul.mubr.bf16.gmra.mxu0 %v1282
        %v2971 = vpop.f32.mrf.mxu0
        %v2972 = vadd.f32 %v2443, %v2971
        %v2973 = vpop.f32.mrf.mxu0
        %v2974 = vpop.f32.mrf.mxu0
        %v2975 = vadd.f32 %v2446, %v2974
        %v2976 = vpop.f32.mrf.mxu0
        %2977 = vmatprep.mubr.bf16.mxu0 %v2605
        %2978 = vmatmul.mubr.bf16.gmra.mxu0 %v1290
        %v2979 = vpop.f32.mrf.mxu0
        %v2980 = vadd.f32 %v2451, %v2979
        %v2981 = vpop.f32.mrf.mxu0
        %v2982 = vpop.f32.mrf.mxu0
        %v2983 = vadd.f32 %v2454, %v2982
        %v2984 = vpop.f32.mrf.mxu0
        %2985 = vmatprep.mubr.bf16.mxu0 %v2611
        %2986 = vmatmul.mubr.bf16.gmra.mxu0 %v1298
        %v2987 = vpop.f32.mrf.mxu0
        %v2988 = vadd.f32 %v2459, %v2987
        %v2989 = vpop.f32.mrf.mxu0
        %v2990 = vpop.f32.mrf.mxu0
        %v2991 = vadd.f32 %v2462, %v2990
        %v2992 = vpop.f32.mrf.mxu0
        %2993 = vmatprep.mubr.bf16.mxu0 %v2617
        %2994 = vmatmul.mubr.bf16.gmra.mxu0 %v1306
        %v2995 = vpop.f32.mrf.mxu0
        %v2996 = vadd.f32 %v2467, %v2995
        %v2997 = vpop.f32.mrf.mxu0
        %v2998 = vpop.f32.mrf.mxu0
        %v2999 = vadd.f32 %v2470, %v2998
        %v3000 = vpop.f32.mrf.mxu0
        %3001 = vmatprep.mubr.bf16.mxu0 %v2623
        %3002 = vmatmul.mubr.bf16.gmra.mxu0 %v1314
        %v3003 = vpop.f32.mrf.mxu0
        %v3004 = vadd.f32 %v2475, %v3003
        %v3005 = vpop.f32.mrf.mxu0
        %v3006 = vpop.f32.mrf.mxu0
        %v3007 = vadd.f32 %v2478, %v3006
        %v3008 = vpop.f32.mrf.mxu0
        %3009 = vmatprep.mubr.bf16.mxu0 %v2629
        %3010 = vmatmul.mubr.bf16.gmra.mxu0 %v1322
        %v3011 = vpop.f32.mrf.mxu0
        %v3012 = vadd.f32 %v2483, %v3011
        %v3013 = vpop.f32.mrf.mxu0
        %v3014 = vpop.f32.mrf.mxu0
        %v3015 = vadd.f32 %v2486, %v3014
        %v3016 = vpop.f32.mrf.mxu0
        %3017 = vmatprep.mubr.bf16.mxu0 %v2635
        %3018 = vmatmul.mubr.bf16.gmra.mxu0 %v1330
        %v3019 = vpop.f32.mrf.mxu0
        %v3020 = vadd.f32 %v2491, %v3019
        %v3021 = vpop.f32.mrf.mxu0
        %v3022 = vpop.f32.mrf.mxu0
        %v3023 = vadd.f32 %v2494, %v3022
        %v3024 = vpop.f32.mrf.mxu0
        %3025 = vmatprep.mubr.bf16.mxu0 %v2644
        %3026 = vmatmul.mubr.bf16.gmra.mxu0 %v1338
        %v3027 = vpop.f32.mrf.mxu0
        %v3028 = vadd.f32 %v2499, %v3027
        %v3029 = vpop.f32.mrf.mxu0
        %v3030 = vpop.f32.mrf.mxu0
        %v3031 = vadd.f32 %v2502, %v3030
        %v3032 = vpop.f32.mrf.mxu0
        %3033 = vmatprep.mubr.bf16.mxu0 %v2658
        %3034 = vmatmul.mubr.bf16.gmra.mxu0 %v1346
        %v3035 = vpop.f32.mrf.mxu0
        %v3036 = vadd.f32 %v2507, %v3035
        %v3037 = vpop.f32.mrf.mxu0
        %v3038 = vpop.f32.mrf.mxu0
        %v3039 = vadd.f32 %v2510, %v3038
        %v3040 = vpop.f32.mrf.mxu0
        %3041 = vdwg.mxu0
        %3042 = vmatprep.subr.bf16.mxu0 0
        %3043 = vmatpush1.bf16.msra.mxu0 %v2840
        %3044 = vmatprep.subr.bf16.mxu0 0
        %3045 = vmatpush1.bf16.msra.mxu0 %v2839
        %3046 = vmatprep.subr.bf16.mxu0 0
        %3047 = vmatpush1.bf16.msra.mxu0 %v2838
        %3048 = vmatprep.subr.bf16.mxu0 0
        %3049 = vmatpush1.bf16.msra.mxu0 %v2837
        %3050 = vmatprep.subr.bf16.mxu0 0
        %3051 = vmatpush1.bf16.msra.mxu0 %v2836
        %3052 = vmatprep.subr.bf16.mxu0 0
        %3053 = vmatpush1.bf16.msra.mxu0 %v2835
        %3054 = vmatprep.subr.bf16.mxu0 0
        %3055 = vmatpush1.bf16.msra.mxu0 %v2834
        %3056 = vmatprep.subr.bf16.mxu0 0
        %3057 = vmatpush1.bf16.msra.mxu0 %v2833
        %3058 = vmatprep.subr.bf16.mxu0 0
        %3059 = vmatpush2.bf16.msra.mxu0 0
        %3060 = vmatprep.subr.bf16.mxu0 0
        %3061 = vmatpush2.bf16.msra.mxu0 0
        %3062 = vmatprep.subr.bf16.mxu0 0
        %3063 = vmatpush2.bf16.msra.mxu0 0
        %3064 = vmatprep.subr.bf16.mxu0 0
        %3065 = vmatpush2.bf16.msra.mxu0 0
        %3066 = vmatprep.subr.bf16.mxu0 0
        %3067 = vmatpush2.bf16.msra.mxu0 0
        %3068 = vmatprep.subr.bf16.mxu0 0
        %3069 = vmatpush2.bf16.msra.mxu0 0
        %3070 = vmatprep.subr.bf16.mxu0 0
        %3071 = vmatpush2.bf16.msra.mxu0 0
        %3072 = vmatprep.subr.bf16.mxu0 0
        %3073 = vmatpush2.bf16.msra.mxu0 0
        %3074 = vmatprep.mubr.bf16.mxu0 0
        %3075 = vmatmul.mubr.bf16.gmra.mxu0 %v2544
        %v3076 = vpop.f32.mrf.mxu0
        %v3077 = vadd.f32 %v2900, %v3076
        %v3078 = vpop.f32.mrf.mxu0
        %v3079 = vpop.f32.mrf.mxu0
        %v3080 = vadd.f32 %v2903, %v3079
        %v3081 = vpop.f32.mrf.mxu0
        %3082 = vmatprep.mubr.bf16.mxu0 0
        %3083 = vmatmul.mubr.bf16.gmra.mxu0 %v2554
        %v3084 = vpop.f32.mrf.mxu0
        %v3085 = vadd.f32 %v2908, %v3084
        %v3086 = vpop.f32.mrf.mxu0
        %v3087 = vpop.f32.mrf.mxu0
        %v3088 = vadd.f32 %v2911, %v3087
        %v3089 = vpop.f32.mrf.mxu0
        %3090 = vmatprep.mubr.bf16.mxu0 0
        %3091 = vmatmul.mubr.bf16.gmra.mxu0 %v2560
        %v3092 = vpop.f32.mrf.mxu0
        %v3093 = vadd.f32 %v2916, %v3092
        %v3094 = vpop.f32.mrf.mxu0
        %v3095 = vpop.f32.mrf.mxu0
        %v3096 = vadd.f32 %v2919, %v3095
        %v3097 = vpop.f32.mrf.mxu0
        %3098 = vmatprep.mubr.bf16.mxu0 0
        %3099 = vmatmul.mubr.bf16.gmra.mxu0 %v2566
        %v3100 = vpop.f32.mrf.mxu0
        %v3101 = vadd.f32 %v2924, %v3100
        %v3102 = vpop.f32.mrf.mxu0
        %v3103 = vpop.f32.mrf.mxu0
        %v3104 = vadd.f32 %v2927, %v3103
        %v3105 = vpop.f32.mrf.mxu0
        %3106 = vmatprep.mubr.bf16.mxu0 0
        %3107 = vmatmul.mubr.bf16.gmra.mxu0 %v2572
        %v3108 = vpop.f32.mrf.mxu0
        %v3109 = vadd.f32 %v2932, %v3108
        %v3110 = vpop.f32.mrf.mxu0
        %v3111 = vpop.f32.mrf.mxu0
        %v3112 = vadd.f32 %v2935, %v3111
        %v3113 = vpop.f32.mrf.mxu0
        %3114 = vmatprep.mubr.bf16.mxu0 0
        %3115 = vmatmul.mubr.bf16.gmra.mxu0 %v2578
        %v3116 = vpop.f32.mrf.mxu0
        %v3117 = vadd.f32 %v2940, %v3116
        %v3118 = vpop.f32.mrf.mxu0
        %v3119 = vpop.f32.mrf.mxu0
        %v3120 = vadd.f32 %v2943, %v3119
        %v3121 = vpop.f32.mrf.mxu0
        %3122 = vmatprep.mubr.bf16.mxu0 0
        %3123 = vmatmul.mubr.bf16.gmra.mxu0 %v2584
        %v3124 = vpop.f32.mrf.mxu0
        %v3125 = vadd.f32 %v2948, %v3124
        %v3126 = vpop.f32.mrf.mxu0
        %v3127 = vpop.f32.mrf.mxu0
        %v3128 = vadd.f32 %v2951, %v3127
        %v3129 = vpop.f32.mrf.mxu0
        %3130 = vmatprep.mubr.bf16.mxu0 0
        %3131 = vmatmul.mubr.bf16.gmra.mxu0 %v2590
        %v3132 = vpop.f32.mrf.mxu0
        %v3133 = vadd.f32 %v2956, %v3132
        %v3134 = vpop.f32.mrf.mxu0
        %v3135 = vpop.f32.mrf.mxu0
        %v3136 = vadd.f32 %v2959, %v3135
        %v3137 = vpop.f32.mrf.mxu0
        %3138 = vmatprep.mubr.bf16.mxu0 0
        %3139 = vmatmul.mubr.bf16.gmra.mxu0 %v2596
        %v3140 = vpop.f32.mrf.mxu0
        %v3141 = vadd.f32 %v2964, %v3140
        %v3142 = vpop.f32.mrf.mxu0
        %v3143 = vpop.f32.mrf.mxu0
        %v3144 = vadd.f32 %v2967, %v3143
        %v3145 = vpop.f32.mrf.mxu0
        %3146 = vmatprep.mubr.bf16.mxu0 0
        %3147 = vmatmul.mubr.bf16.gmra.mxu0 %v2602
        %v3148 = vpop.f32.mrf.mxu0
        %v3149 = vadd.f32 %v2972, %v3148
        %v3150 = vpop.f32.mrf.mxu0
        %v3151 = vpop.f32.mrf.mxu0
        %v3152 = vadd.f32 %v2975, %v3151
        %v3153 = vpop.f32.mrf.mxu0
        %3154 = vmatprep.mubr.bf16.mxu0 0
        %3155 = vmatmul.mubr.bf16.gmra.mxu0 %v2608
        %v3156 = vpop.f32.mrf.mxu0
        %v3157 = vadd.f32 %v2980, %v3156
        %v3158 = vpop.f32.mrf.mxu0
        %v3159 = vpop.f32.mrf.mxu0
        %v3160 = vadd.f32 %v2983, %v3159
        %v3161 = vpop.f32.mrf.mxu0
        %3162 = vmatprep.mubr.bf16.mxu0 0
        %3163 = vmatmul.mubr.bf16.gmra.mxu0 %v2614
        %v3164 = vpop.f32.mrf.mxu0
        %v3165 = vadd.f32 %v2988, %v3164
        %v3166 = vpop.f32.mrf.mxu0
        %v3167 = vpop.f32.mrf.mxu0
        %v3168 = vadd.f32 %v2991, %v3167
        %v3169 = vpop.f32.mrf.mxu0
        %3170 = vmatprep.mubr.bf16.mxu0 0
        %3171 = vmatmul.mubr.bf16.gmra.mxu0 %v2620
        %v3172 = vpop.f32.mrf.mxu0
        %v3173 = vadd.f32 %v2996, %v3172
        %v3174 = vpop.f32.mrf.mxu0
        %v3175 = vpop.f32.mrf.mxu0
        %v3176 = vadd.f32 %v2999, %v3175
        %v3177 = vpop.f32.mrf.mxu0
        %3178 = vmatprep.mubr.bf16.mxu0 0
        %3179 = vmatmul.mubr.bf16.gmra.mxu0 %v2626
        %v3180 = vpop.f32.mrf.mxu0
        %v3181 = vadd.f32 %v3004, %v3180
        %v3182 = vpop.f32.mrf.mxu0
        %v3183 = vpop.f32.mrf.mxu0
        %v3184 = vadd.f32 %v3007, %v3183
        %v3185 = vpop.f32.mrf.mxu0
        %3186 = vmatprep.mubr.bf16.mxu0 0
        %3187 = vmatmul.mubr.bf16.gmra.mxu0 %v2632
        %v3188 = vpop.f32.mrf.mxu0
        %v3189 = vadd.f32 %v3012, %v3188
        %v3190 = vpop.f32.mrf.mxu0
        %v3191 = vpop.f32.mrf.mxu0
        %v3192 = vadd.f32 %v3015, %v3191
        %v3193 = vpop.f32.mrf.mxu0
        %3194 = vmatprep.mubr.bf16.mxu0 0
        %3195 = vmatmul.mubr.bf16.gmra.mxu0 %v2638
        %v3196 = vpop.f32.mrf.mxu0
        %v3197 = vadd.f32 %v3020, %v3196
        %v3198 = vpop.f32.mrf.mxu0
        %v3199 = vpop.f32.mrf.mxu0
        %v3200 = vadd.f32 %v3023, %v3199
        %v3201 = vpop.f32.mrf.mxu0
        %3202 = vmatprep.mubr.bf16.mxu0 0
        %3203 = vmatmul.mubr.bf16.gmra.mxu0 %v2650
        %v3204 = vpop.f32.mrf.mxu0
        %v3205 = vadd.f32 %v3028, %v3204
        %v3206 = vpop.f32.mrf.mxu0
        %v3207 = vpop.f32.mrf.mxu0
        %v3208 = vadd.f32 %v3031, %v3207
        %v3209 = vpop.f32.mrf.mxu0
        %3210 = vmatprep.mubr.bf16.mxu0 0
        %3211 = vmatmul.mubr.bf16.gmra.mxu0 %v2666
        %v3212 = vpop.f32.mrf.mxu0
        %v3213 = vadd.f32 %v3036, %v3212
        %v3214 = vpop.f32.mrf.mxu0
        %v3215 = vpop.f32.mrf.mxu0
        %v3216 = vadd.f32 %v3039, %v3215
        %v3217 = vpop.f32.mrf.mxu0
        %3218 = vdwg.mxu0
        %v3219 = vld [vmem:[%s298 + $0x18] sm:$0xc]
        %v3220 = vld [vmem:[%s298 + $0x1c] sm:$0xf]
        %v3221 = vld [vmem:[%s298 + $0x20] sm:$0xf]
        %v3222 = vld [vmem:[%s298 + $0x24] sm:$0xf]
        %v3223 = vld [vmem:[%s298 + $0x28] sm:$0xf]
        %v3224 = vld [vmem:[%s298 + $0x2c] sm:$0xf]
        %v3225 = vld [vmem:[%s298 + $0x30] sm:$0xf]
        %v3226 = vld [vmem:[%s298 + $0x34] sm:$0xf]
        %v3227 = vld [vmem:[%s298 + $0x38] sm:$0xf]
        %v3228 = vld [vmem:[%s298 + $0x3c] sm:$0xf]
        %v3229 = vld [vmem:[%s298 + $0x40] sm:$0xf]
        %v3230 = vld [vmem:[%s298 + $0x44] sm:$0xf]
        %v3231 = vld [vmem:[%s298 + $0x48] sm:$0xf]
        %v3232 = vld [vmem:[%s298 + $0x4c] sm:$0xf]
        %v3233 = vld [vmem:[%s298 + $0x50] sm:$0xf]
        %v3234 = vld [vmem:[%s298 + $0x54] sm:$0xf]
        %v3235 = vld [vmem:[%s298 + $0x58] sm:$0xf]
        %v3236 = vld [vmem:[%s298 + $0x5c] sm:$0xf]
        %v3237 = vld [vmem:[%s298 + $0x60] sm:$0xf]
        %v3238 = vld [vmem:[%s298 + $0x64] sm:$0xf]
        %v3239 = vld [vmem:[%s298 + $0x68] sm:$0xf]
        %v3240 = vld [vmem:[%s298 + $0x6c] sm:$0xf]
        %v3241 = vld [vmem:[%s298 + $0x70] sm:$0xf]
        %v3242 = vld [vmem:[%s298 + $0x74] sm:$0xf]
        %v3243 = vld [vmem:[%s298 + $0x78] sm:$0xf]
        %v3244 = vld [vmem:[%s298 + $0x7c] sm:$0xf]
        %v3245 = vld [vmem:[%s298 + $0x80] sm:$0xf]
        %v3246 = vld [vmem:[%s298 + $0x84] sm:$0xf]
        %v3247 = vld [vmem:[%s298 + $0x88] sm:$0xf]
        %v3248 = vld [vmem:[%s298 + $0x8c] sm:$0xf]
        %v3249 = vld [vmem:[%s298 + $0x90] sm:$0xf]
        %v3250 = vld [vmem:[%s298 + $0x94] sm:$0xf]
        %v3251 = vld [vmem:[%s298 + $0x98] sm:$0xf]
        %v3252 = vld [vmem:[%s298 + $0x9c] sm:$0xf]
        %v3253 = vld [vmem:[%s298 + $0xa0] sm:$0xf]
        %v3254 = vld [vmem:[%s298 + $0xa4] sm:$0xf]
        %v3255 = vld [vmem:[%s298 + $0xa8] sm:$0x7]
        %v3256 = vld [vmem:[%s298 + $0x18] sm:$0x8]
        %v3257 = vld [vmem:[%s298 + $0xa8] sm:$0xf]
        %v3295 = vunpack.c.l.b16 %v3219
        %v3296 = vunpack.c.l.b16 %v3220
        %v3297 = vunpack.c.l.b16 %v3221
        %v3298 = vunpack.c.l.b16 %v3222
        %v3299 = vunpack.c.l.b16 %v3223
        %v3300 = vunpack.c.l.b16 %v3224
        %v3301 = vunpack.c.l.b16 %v3225
        %v3302 = vunpack.c.l.b16 %v3226
        %v3303 = vunpack.c.l.b16 %v3227
        %v3304 = vunpack.c.l.b16 %v3228
        %v3305 = vunpack.c.l.b16 %v3229
        %v3306 = vunpack.c.l.b16 %v3230
        %v3307 = vunpack.c.l.b16 %v3231
        %v3308 = vunpack.c.l.b16 %v3232
        %v3309 = vunpack.c.l.b16 %v3233
        %v3310 = vunpack.c.l.b16 %v3234
        %v3311 = vunpack.c.l.b16 %v3235
        %v3312 = vunpack.c.l.b16 %v3236
        %v3313 = vunpack.c.l.b16 %v3237
        %v3314 = vunpack.c.l.b16 %v3238
        %v3315 = vunpack.c.l.b16 %v3239
        %v3316 = vunpack.c.l.b16 %v3240
        %v3317 = vunpack.c.l.b16 %v3241
        %v3318 = vunpack.c.l.b16 %v3242
        %v3319 = vunpack.c.l.b16 %v3243
        %v3320 = vunpack.c.l.b16 %v3244
        %v3321 = vunpack.c.l.b16 %v3245
        %v3322 = vunpack.c.l.b16 %v3246
        %v3323 = vunpack.c.l.b16 %v3247
        %v3324 = vunpack.c.l.b16 %v3248
        %v3325 = vunpack.c.l.b16 %v3249
        %v3326 = vunpack.c.l.b16 %v3250
        %v3327 = vunpack.c.l.b16 %v3251
        %v3328 = vunpack.c.l.b16 %v3252
        %v3329 = vunpack.c.l.b16 %v3253
        %v3330 = vunpack.c.l.b16 %v3254
        %v3331 = vunpack.c.l.b16 %v3255
        %v3332 = vpack.c.b16 %v3296, %v3295
        %v3333 = vpack.c.b16 %v3298, %v3297
        %v3334 = vpack.c.b16 %v3300, %v3299
        %v3335 = vpack.c.b16 %v3302, %v3301
        %v3336 = vpack.c.b16 %v3304, %v3303
        %v3337 = vpack.c.b16 %v3306, %v3305
        %v3338 = vpack.c.b16 %v3308, %v3307
        %v3339 = vpack.c.b16 %v3310, %v3309
        %v3340 = vpack.c.b16 %v3312, %v3311
        %v3341 = vpack.c.b16 %v3314, %v3313
        %v3342 = vpack.c.b16 %v3316, %v3315
        %v3343 = vpack.c.b16 %v3318, %v3317
        %v3344 = vpack.c.b16 %v3320, %v3319
        %v3345 = vpack.c.b16 %v3322, %v3321
        %v3346 = vpack.c.b16 %v3324, %v3323
        %v3347 = vpack.c.b16 %v3326, %v3325
        %v3348 = vpack.c.b16 %v3328, %v3327
        %v3349 = vpack.c.b16 %v3330, %v3329
        %v3350 = vpack.c.b16 %v3331, %v3331
        %v3352 = vunpack.c.l.b16 %v3256
        %v3353 = vpack.c.b16 %v3296, %v3352
        %v3355 = vshrl.u32 %v3353, 16
        %v3357 = vshll.u32 %v3353, 16
        %v3359 = vrot.slane %v3357, 1
        %v3360 = vor.u32 %v3355, %v3359
        %v3362 = vshll.u32 %v3333, 16
        %v3364 = vrot.slane %v3362, 1
        %v3365 = vsel %vm1198, %v3360, %v3364
        %v3366 = vshrl.u32 %v3333, 16
        %v3368 = vor.u32 %v3366, %v3364
        %v3370 = vshll.u32 %v3334, 16
        %v3372 = vrot.slane %v3370, 1
        %v3373 = vsel %vm1198, %v3368, %v3372
        %v3374 = vshrl.u32 %v3334, 16
        %v3376 = vor.u32 %v3374, %v3372
        %v3378 = vshll.u32 %v3335, 16
        %v3380 = vrot.slane %v3378, 1
        %v3381 = vsel %vm1198, %v3376, %v3380
        %v3382 = vshrl.u32 %v3335, 16
        %v3384 = vor.u32 %v3382, %v3380
        %v3386 = vshll.u32 %v3336, 16
        %v3388 = vrot.slane %v3386, 1
        %v3389 = vsel %vm1198, %v3384, %v3388
        %v3390 = vshrl.u32 %v3336, 16
        %v3392 = vor.u32 %v3390, %v3388
        %v3394 = vshll.u32 %v3337, 16
        %v3396 = vrot.slane %v3394, 1
        %v3397 = vsel %vm1198, %v3392, %v3396
        %v3398 = vshrl.u32 %v3337, 16
        %v3400 = vor.u32 %v3398, %v3396
        %v3402 = vshll.u32 %v3338, 16
        %v3404 = vrot.slane %v3402, 1
        %v3405 = vsel %vm1198, %v3400, %v3404
        %v3406 = vshrl.u32 %v3338, 16
        %v3408 = vor.u32 %v3406, %v3404
        %v3410 = vshll.u32 %v3339, 16
        %v3412 = vrot.slane %v3410, 1
        %v3413 = vsel %vm1198, %v3408, %v3412
        %v3414 = vshrl.u32 %v3339, 16
        %v3416 = vor.u32 %v3414, %v3412
        %v3418 = vshll.u32 %v3340, 16
        %v3420 = vrot.slane %v3418, 1
        %v3421 = vsel %vm1198, %v3416, %v3420
        %v3422 = vshrl.u32 %v3340, 16
        %v3424 = vor.u32 %v3422, %v3420
        %v3426 = vshll.u32 %v3341, 16
        %v3428 = vrot.slane %v3426, 1
        %v3429 = vsel %vm1198, %v3424, %v3428
        %v3430 = vshrl.u32 %v3341, 16
        %v3432 = vor.u32 %v3430, %v3428
        %v3434 = vshll.u32 %v3342, 16
        %v3436 = vrot.slane %v3434, 1
        %v3437 = vsel %vm1198, %v3432, %v3436
        %v3438 = vshrl.u32 %v3342, 16
        %v3440 = vor.u32 %v3438, %v3436
        %v3442 = vshll.u32 %v3343, 16
        %v3444 = vrot.slane %v3442, 1
        %v3445 = vsel %vm1198, %v3440, %v3444
        %v3446 = vshrl.u32 %v3343, 16
        %v3448 = vor.u32 %v3446, %v3444
        %v3450 = vshll.u32 %v3344, 16
        %v3452 = vrot.slane %v3450, 1
        %v3453 = vsel %vm1198, %v3448, %v3452
        %v3454 = vshrl.u32 %v3344, 16
        %v3456 = vor.u32 %v3454, %v3452
        %v3458 = vshll.u32 %v3345, 16
        %v3460 = vrot.slane %v3458, 1
        %v3461 = vsel %vm1198, %v3456, %v3460
        %v3462 = vshrl.u32 %v3345, 16
        %v3464 = vor.u32 %v3462, %v3460
        %v3466 = vshll.u32 %v3346, 16
        %v3468 = vrot.slane %v3466, 1
        %v3469 = vsel %vm1198, %v3464, %v3468
        %v3470 = vshrl.u32 %v3346, 16
        %v3472 = vor.u32 %v3470, %v3468
        %v3474 = vshll.u32 %v3347, 16
        %v3476 = vrot.slane %v3474, 1
        %v3477 = vsel %vm1198, %v3472, %v3476
        %v3478 = vshrl.u32 %v3347, 16
        %v3480 = vor.u32 %v3478, %v3476
        %v3482 = vshll.u32 %v3348, 16
        %v3484 = vrot.slane %v3482, 1
        %v3485 = vsel %vm1198, %v3480, %v3484
        %v3486 = vshrl.u32 %v3348, 16
        %v3488 = vor.u32 %v3486, %v3484
        %v3490 = vshll.u32 %v3349, 16
        %v3492 = vrot.slane %v3490, 1
        %v3493 = vsel %vm1198, %v3488, %v3492
        %v3494 = vshrl.u32 %v3349, 16
        %v3496 = vor.u32 %v3494, %v3492
        %v3498 = vshll.u32 %v3350, 16
        %v3500 = vrot.slane %v3498, 1
        %v3501 = vsel %vm1198, %v3496, %v3500
        %v3502 = vshrl.u32 %v3350, 16
        %v3504 = vor.u32 %v3502, %v3500
        %v3506 = vunpack.c.l.b16 %v3257
        %v3507 = vpack.c.b16 %v3506, %v3506
        %v3508 = vrot.slane %v3353, 1
        %v3509 = vrot.slane %v3333, 1
        %v3510 = vsel %vm1352, %v3508, %v3509
        %v3511 = vrot.slane %v3334, 1
        %v3512 = vsel %vm1352, %v3509, %v3511
        %v3513 = vrot.slane %v3335, 1
        %v3514 = vsel %vm1352, %v3511, %v3513
        %v3515 = vrot.slane %v3336, 1
        %v3516 = vsel %vm1352, %v3513, %v3515
        %v3517 = vrot.slane %v3337, 1
        %v3518 = vsel %vm1352, %v3515, %v3517
        %v3519 = vrot.slane %v3338, 1
        %v3520 = vsel %vm1352, %v3517, %v3519
        %v3521 = vrot.slane %v3339, 1
        %v3522 = vsel %vm1352, %v3519, %v3521
        %v3523 = vrot.slane %v3340, 1
        %v3524 = vsel %vm1352, %v3521, %v3523
        %v3525 = vrot.slane %v3341, 1
        %v3526 = vsel %vm1352, %v3523, %v3525
        %v3527 = vrot.slane %v3342, 1
        %v3528 = vsel %vm1352, %v3525, %v3527
        %v3529 = vrot.slane %v3343, 1
        %v3530 = vsel %vm1352, %v3527, %v3529
        %v3531 = vrot.slane %v3344, 1
        %v3532 = vsel %vm1352, %v3529, %v3531
        %v3533 = vrot.slane %v3345, 1
        %v3534 = vsel %vm1352, %v3531, %v3533
        %v3535 = vrot.slane %v3346, 1
        %v3536 = vsel %vm1352, %v3533, %v3535
        %v3537 = vrot.slane %v3347, 1
        %v3538 = vsel %vm1352, %v3535, %v3537
        %v3539 = vrot.slane %v3348, 1
        %v3540 = vsel %vm1352, %v3537, %v3539
        %v3541 = vrot.slane %v3349, 1
        %v3542 = vsel %vm1352, %v3539, %v3541
        %v3543 = vrot.slane %v3507, 1
        %v3544 = vsel %vm1352, %v3541, %v3543
        %s3545 = scalar_lea.vmem [#allocation6], 384
        %v3546 = vld [vmem:[%s3545] sm:$0xf]
        %v3547 = vld [vmem:[%s3545 + $0x4] sm:$0xf]
        %v3548 = vld [vmem:[%s3545 + $0x8] sm:$0xf]
        %v3549 = vld [vmem:[%s3545 + $0xc] sm:$0xf]
        %v3550 = vld [vmem:[%s3545 + $0x10] sm:$0xf]
        %v3551 = vld [vmem:[%s3545 + $0x14] sm:$0xf]
        %v3552 = vld [vmem:[%s3545 + $0x18] sm:$0xf]
        %v3553 = vld [vmem:[%s3545 + $0x1c] sm:$0xf]
        %v3554 = vld [vmem:[%s3545 + $0x20] sm:$0xf]
        %v3555 = vld [vmem:[%s3545 + $0x24] sm:$0xf]
        %v3556 = vld [vmem:[%s3545 + $0x28] sm:$0xf]
        %v3557 = vld [vmem:[%s3545 + $0x2c] sm:$0xf]
        %v3558 = vld [vmem:[%s3545 + $0x30] sm:$0xf]
        %v3559 = vld [vmem:[%s3545 + $0x34] sm:$0xf]
        %v3560 = vld [vmem:[%s3545 + $0x38] sm:$0xf]
        %v3561 = vld [vmem:[%s3545 + $0x3c] sm:$0xf]
        %v3562 = vld [vmem:[%s3545 + $0x40] sm:$0xf]
        %v3563 = vld [vmem:[%s3545 + $0x44] sm:$0xf]
        %v3564 = vld [vmem:[%s3545 + $0x48] sm:$0xf]
        %v3565 = vld [vmem:[%s3545 + $0x4c] sm:$0xf]
        %v3566 = vld [vmem:[%s3545 + $0x50] sm:$0xf]
        %v3567 = vld [vmem:[%s3545 + $0x54] sm:$0xf]
        %v3568 = vld [vmem:[%s3545 + $0x58] sm:$0xf]
        %v3569 = vld [vmem:[%s3545 + $0x5c] sm:$0xf]
        %v3570 = vld [vmem:[%s3545 + $0x60] sm:$0xf]
        %v3571 = vld [vmem:[%s3545 + $0x64] sm:$0xf]
        %v3572 = vld [vmem:[%s3545 + $0x68] sm:$0xf]
        %v3573 = vld [vmem:[%s3545 + $0x6c] sm:$0xf]
        %v3574 = vld [vmem:[%s3545 + $0x70] sm:$0xf]
        %v3575 = vld [vmem:[%s3545 + $0x74] sm:$0xf]
        %v3576 = vld [vmem:[%s3545 + $0x78] sm:$0xf]
        %v3577 = vld [vmem:[%s3545 + $0x7c] sm:$0xf]
        %v3578 = vld [vmem:[%s3545 + $0x80] sm:$0xf]
        %v3579 = vld [vmem:[%s3545 + $0x84] sm:$0xf]
        %v3580 = vld [vmem:[%s3545 + $0x88] sm:$0xf]
        %v3581 = vld [vmem:[%s3545 + $0x8c] sm:$0xf]
        %v3582 = vld [vmem:[%s3545 + $0x90] sm:$0xf]
        %v3583 = vld [vmem:[%s3545 + $0x94] sm:$0xf]
        %v3584 = vld [vmem:[%s3545 + $0x98] sm:$0xf]
        %v3585 = vld [vmem:[%s3545 + $0x9c] sm:$0xf]
        %v3586 = vld [vmem:[%s3545 + $0xa0] sm:$0xf]
        %v3587 = vld [vmem:[%s3545 + $0xa4] sm:$0xf]
        %v3588 = vld [vmem:[%s3545 + $0xa8] sm:$0xf]
        %v3589 = vld [vmem:[%s3545 + $0xac] sm:$0xf]
        %v3590 = vld [vmem:[%s3545 + $0xb0] sm:$0xf]
        %v3591 = vld [vmem:[%s3545 + $0xb4] sm:$0xf]
        %v3592 = vld [vmem:[%s3545 + $0xb8] sm:$0xf]
        %v3593 = vld [vmem:[%s3545 + $0xbc] sm:$0xf]
        %vm3594 = vsmask.f32 5376
        %v3596 = vshrl.u32 %v3332, 16
        %v3598 = vrot.slane %v3596, 2
        %v3599 = vshll.u32 %v3332, 16
        %v3601 = vrot.slane %v3599, 3
        %v3602 = vor.u32 %v3598, %v3601
        %v3603 = vrot.slane %v3366, 2
        %v3604 = vrot.slane %v3362, 3
        %v3605 = vor.u32 %v3603, %v3604
        %v3606 = vsel %vm3594, %v3602, %v3605
        %v3608 = vshrl.u32 %v3365, 16
        %v3610 = vrot.slane %v3608, 2
        %v3611 = vshll.u32 %v3365, 16
        %v3613 = vrot.slane %v3611, 3
        %v3614 = vor.u32 %v3610, %v3613
        %v3616 = vshrl.u32 %v3373, 16
        %v3618 = vrot.slane %v3616, 2
        %v3619 = vshll.u32 %v3373, 16
        %v3621 = vrot.slane %v3619, 3
        %v3622 = vor.u32 %v3618, %v3621
        %v3623 = vsel %vm3594, %v3614, %v3622
        %v3625 = vshrl.u32 %v3510, 16
        %v3627 = vrot.slane %v3625, 2
        %v3628 = vshll.u32 %v3510, 16
        %v3630 = vrot.slane %v3628, 3
        %v3631 = vor.u32 %v3627, %v3630
        %v3633 = vshrl.u32 %v3512, 16
        %v3635 = vrot.slane %v3633, 2
        %v3636 = vshll.u32 %v3512, 16
        %v3638 = vrot.slane %v3636, 3
        %v3639 = vor.u32 %v3635, %v3638
        %v3640 = vsel %vm3594, %v3631, %v3639
        %v3641 = vrot.slane %v3374, 2
        %v3642 = vrot.slane %v3370, 3
        %v3643 = vor.u32 %v3641, %v3642
        %v3644 = vsel %vm3594, %v3605, %v3643
        %v3646 = vshrl.u32 %v3381, 16
        %v3648 = vrot.slane %v3646, 2
        %v3649 = vshll.u32 %v3381, 16
        %v3651 = vrot.slane %v3649, 3
        %v3652 = vor.u32 %v3648, %v3651
        %v3653 = vsel %vm3594, %v3622, %v3652
        %v3655 = vshrl.u32 %v3514, 16
        %v3657 = vrot.slane %v3655, 2
        %v3658 = vshll.u32 %v3514, 16
        %v3660 = vrot.slane %v3658, 3
        %v3661 = vor.u32 %v3657, %v3660
        %v3662 = vsel %vm3594, %v3639, %v3661
        %v3663 = vrot.slane %v3382, 2
        %v3664 = vrot.slane %v3378, 3
        %v3665 = vor.u32 %v3663, %v3664
        %v3666 = vsel %vm3594, %v3643, %v3665
        %v3668 = vshrl.u32 %v3389, 16
        %v3670 = vrot.slane %v3668, 2
        %v3671 = vshll.u32 %v3389, 16
        %v3673 = vrot.slane %v3671, 3
        %v3674 = vor.u32 %v3670, %v3673
        %v3675 = vsel %vm3594, %v3652, %v3674
        %v3677 = vshrl.u32 %v3516, 16
        %v3679 = vrot.slane %v3677, 2
        %v3680 = vshll.u32 %v3516, 16
        %v3682 = vrot.slane %v3680, 3
        %v3683 = vor.u32 %v3679, %v3682
        %v3684 = vsel %vm3594, %v3661, %v3683
        %v3685 = vrot.slane %v3390, 2
        %v3686 = vrot.slane %v3386, 3
        %v3687 = vor.u32 %v3685, %v3686
        %v3688 = vsel %vm3594, %v3665, %v3687
        %v3690 = vshrl.u32 %v3397, 16
        %v3692 = vrot.slane %v3690, 2
        %v3693 = vshll.u32 %v3397, 16
        %v3695 = vrot.slane %v3693, 3
        %v3696 = vor.u32 %v3692, %v3695
        %v3697 = vsel %vm3594, %v3674, %v3696
        %v3699 = vshrl.u32 %v3518, 16
        %v3701 = vrot.slane %v3699, 2
        %v3702 = vshll.u32 %v3518, 16
        %v3704 = vrot.slane %v3702, 3
        %v3705 = vor.u32 %v3701, %v3704
        %v3706 = vsel %vm3594, %v3683, %v3705
        %v3707 = vrot.slane %v3398, 2
        %v3708 = vrot.slane %v3394, 3
        %v3709 = vor.u32 %v3707, %v3708
        %v3710 = vsel %vm3594, %v3687, %v3709
        %v3712 = vshrl.u32 %v3405, 16
        %v3714 = vrot.slane %v3712, 2
        %v3715 = vshll.u32 %v3405, 16
        %v3717 = vrot.slane %v3715, 3
        %v3718 = vor.u32 %v3714, %v3717
        %v3719 = vsel %vm3594, %v3696, %v3718
        %v3721 = vshrl.u32 %v3520, 16
        %v3723 = vrot.slane %v3721, 2
        %v3724 = vshll.u32 %v3520, 16
        %v3726 = vrot.slane %v3724, 3
        %v3727 = vor.u32 %v3723, %v3726
        %v3728 = vsel %vm3594, %v3705, %v3727
        %v3729 = vrot.slane %v3406, 2
        %v3730 = vrot.slane %v3402, 3
        %v3731 = vor.u32 %v3729, %v3730
        %v3732 = vsel %vm3594, %v3709, %v3731
        %v3734 = vshrl.u32 %v3413, 16
        %v3736 = vrot.slane %v3734, 2
        %v3737 = vshll.u32 %v3413, 16
        %v3739 = vrot.slane %v3737, 3
        %v3740 = vor.u32 %v3736, %v3739
        %v3741 = vsel %vm3594, %v3718, %v3740
        %v3743 = vshrl.u32 %v3522, 16
        %v3745 = vrot.slane %v3743, 2
        %v3746 = vshll.u32 %v3522, 16
        %v3748 = vrot.slane %v3746, 3
        %v3749 = vor.u32 %v3745, %v3748
        %v3750 = vsel %vm3594, %v3727, %v3749
        %v3751 = vrot.slane %v3414, 2
        %v3752 = vrot.slane %v3410, 3
        %v3753 = vor.u32 %v3751, %v3752
        %v3754 = vsel %vm3594, %v3731, %v3753
        %v3756 = vshrl.u32 %v3421, 16
        %v3758 = vrot.slane %v3756, 2
        %v3759 = vshll.u32 %v3421, 16
        %v3761 = vrot.slane %v3759, 3
        %v3762 = vor.u32 %v3758, %v3761
        %v3763 = vsel %vm3594, %v3740, %v3762
        %v3765 = vshrl.u32 %v3524, 16
        %v3767 = vrot.slane %v3765, 2
        %v3768 = vshll.u32 %v3524, 16
        %v3770 = vrot.slane %v3768, 3
        %v3771 = vor.u32 %v3767, %v3770
        %v3772 = vsel %vm3594, %v3749, %v3771
        %v3773 = vrot.slane %v3422, 2
        %v3774 = vrot.slane %v3418, 3
        %v3775 = vor.u32 %v3773, %v3774
        %v3776 = vsel %vm3594, %v3753, %v3775
        %v3778 = vshrl.u32 %v3429, 16
        %v3780 = vrot.slane %v3778, 2
        %v3781 = vshll.u32 %v3429, 16
        %v3783 = vrot.slane %v3781, 3
        %v3784 = vor.u32 %v3780, %v3783
        %v3785 = vsel %vm3594, %v3762, %v3784
        %v3787 = vshrl.u32 %v3526, 16
        %v3789 = vrot.slane %v3787, 2
        %v3790 = vshll.u32 %v3526, 16
        %v3792 = vrot.slane %v3790, 3
        %v3793 = vor.u32 %v3789, %v3792
        %v3794 = vsel %vm3594, %v3771, %v3793
        %v3795 = vrot.slane %v3430, 2
        %v3796 = vrot.slane %v3426, 3
        %v3797 = vor.u32 %v3795, %v3796
        %v3798 = vsel %vm3594, %v3775, %v3797
        %v3800 = vshrl.u32 %v3437, 16
        %v3802 = vrot.slane %v3800, 2
        %v3803 = vshll.u32 %v3437, 16
        %v3805 = vrot.slane %v3803, 3
        %v3806 = vor.u32 %v3802, %v3805
        %v3807 = vsel %vm3594, %v3784, %v3806
        %v3809 = vshrl.u32 %v3528, 16
        %v3811 = vrot.slane %v3809, 2
        %v3812 = vshll.u32 %v3528, 16
        %v3814 = vrot.slane %v3812, 3
        %v3815 = vor.u32 %v3811, %v3814
        %v3816 = vsel %vm3594, %v3793, %v3815
        %v3817 = vrot.slane %v3438, 2
        %v3818 = vrot.slane %v3434, 3
        %v3819 = vor.u32 %v3817, %v3818
        %v3820 = vsel %vm3594, %v3797, %v3819
        %v3822 = vshrl.u32 %v3445, 16
        %v3824 = vrot.slane %v3822, 2
        %v3825 = vshll.u32 %v3445, 16
        %v3827 = vrot.slane %v3825, 3
        %v3828 = vor.u32 %v3824, %v3827
        %v3829 = vsel %vm3594, %v3806, %v3828
        %v3831 = vshrl.u32 %v3530, 16
        %v3833 = vrot.slane %v3831, 2
        %v3834 = vshll.u32 %v3530, 16
        %v3836 = vrot.slane %v3834, 3
        %v3837 = vor.u32 %v3833, %v3836
        %v3838 = vsel %vm3594, %v3815, %v3837
        %v3839 = vrot.slane %v3446, 2
        %v3840 = vrot.slane %v3442, 3
        %v3841 = vor.u32 %v3839, %v3840
        %v3842 = vsel %vm3594, %v3819, %v3841
        %v3844 = vshrl.u32 %v3453, 16
        %v3846 = vrot.slane %v3844, 2
        %v3847 = vshll.u32 %v3453, 16
        %v3849 = vrot.slane %v3847, 3
        %v3850 = vor.u32 %v3846, %v3849
        %v3851 = vsel %vm3594, %v3828, %v3850
        %v3853 = vshrl.u32 %v3532, 16
        %v3855 = vrot.slane %v3853, 2
        %v3856 = vshll.u32 %v3532, 16
        %v3858 = vrot.slane %v3856, 3
        %v3859 = vor.u32 %v3855, %v3858
        %v3860 = vsel %vm3594, %v3837, %v3859
        %v3861 = vrot.slane %v3454, 2
        %v3862 = vrot.slane %v3450, 3
        %v3863 = vor.u32 %v3861, %v3862
        %v3864 = vsel %vm3594, %v3841, %v3863
        %v3866 = vshrl.u32 %v3461, 16
        %v3868 = vrot.slane %v3866, 2
        %v3869 = vshll.u32 %v3461, 16
        %v3871 = vrot.slane %v3869, 3
        %v3872 = vor.u32 %v3868, %v3871
        %v3873 = vsel %vm3594, %v3850, %v3872
        %v3875 = vshrl.u32 %v3534, 16
        %v3877 = vrot.slane %v3875, 2
        %v3878 = vshll.u32 %v3534, 16
        %v3880 = vrot.slane %v3878, 3
        %v3881 = vor.u32 %v3877, %v3880
        %v3882 = vsel %vm3594, %v3859, %v3881
        %v3883 = vrot.slane %v3462, 2
        %v3884 = vrot.slane %v3458, 3
        %v3885 = vor.u32 %v3883, %v3884
        %v3886 = vsel %vm3594, %v3863, %v3885
        %v3888 = vshrl.u32 %v3469, 16
        %v3890 = vrot.slane %v3888, 2
        %v3891 = vshll.u32 %v3469, 16
        %v3893 = vrot.slane %v3891, 3
        %v3894 = vor.u32 %v3890, %v3893
        %v3895 = vsel %vm3594, %v3872, %v3894
        %v3897 = vshrl.u32 %v3536, 16
        %v3899 = vrot.slane %v3897, 2
        %v3900 = vshll.u32 %v3536, 16
        %v3902 = vrot.slane %v3900, 3
        %v3903 = vor.u32 %v3899, %v3902
        %v3904 = vsel %vm3594, %v3881, %v3903
        %v3905 = vrot.slane %v3470, 2
        %v3906 = vrot.slane %v3466, 3
        %v3907 = vor.u32 %v3905, %v3906
        %v3908 = vsel %vm3594, %v3885, %v3907
        %v3910 = vshrl.u32 %v3477, 16
        %v3912 = vrot.slane %v3910, 2
        %v3913 = vshll.u32 %v3477, 16
        %v3915 = vrot.slane %v3913, 3
        %v3916 = vor.u32 %v3912, %v3915
        %v3917 = vsel %vm3594, %v3894, %v3916
        %v3919 = vshrl.u32 %v3538, 16
        %v3921 = vrot.slane %v3919, 2
        %v3922 = vshll.u32 %v3538, 16
        %v3924 = vrot.slane %v3922, 3
        %v3925 = vor.u32 %v3921, %v3924
        %v3926 = vsel %vm3594, %v3903, %v3925
        %v3927 = vrot.slane %v3478, 2
        %v3928 = vrot.slane %v3474, 3
        %v3929 = vor.u32 %v3927, %v3928
        %v3930 = vsel %vm3594, %v3907, %v3929
        %v3932 = vshrl.u32 %v3485, 16
        %v3934 = vrot.slane %v3932, 2
        %v3935 = vshll.u32 %v3485, 16
        %v3937 = vrot.slane %v3935, 3
        %v3938 = vor.u32 %v3934, %v3937
        %v3939 = vsel %vm3594, %v3916, %v3938
        %v3941 = vshrl.u32 %v3540, 16
        %v3943 = vrot.slane %v3941, 2
        %v3944 = vshll.u32 %v3540, 16
        %v3946 = vrot.slane %v3944, 3
        %v3947 = vor.u32 %v3943, %v3946
        %v3948 = vsel %vm3594, %v3925, %v3947
        %v3949 = vrot.slane %v3486, 2
        %v3950 = vrot.slane %v3482, 3
        %v3951 = vor.u32 %v3949, %v3950
        %v3952 = vsel %vm3594, %v3929, %v3951
        %v3954 = vshrl.u32 %v3493, 16
        %v3956 = vrot.slane %v3954, 2
        %v3957 = vshll.u32 %v3493, 16
        %v3959 = vrot.slane %v3957, 3
        %v3960 = vor.u32 %v3956, %v3959
        %v3961 = vsel %vm3594, %v3938, %v3960
        %v3963 = vshrl.u32 %v3542, 16
        %v3965 = vrot.slane %v3963, 2
        %v3966 = vshll.u32 %v3542, 16
        %v3968 = vrot.slane %v3966, 3
        %v3969 = vor.u32 %v3965, %v3968
        %v3970 = vsel %vm3594, %v3947, %v3969
        %v3971 = vrot.slane %v3494, 2
        %v3972 = vrot.slane %v3490, 3
        %v3973 = vor.u32 %v3971, %v3972
        %v3974 = vsel %vm3594, %v3951, %v3973
        %v3976 = vshrl.u32 %v3501, 16
        %v3978 = vrot.slane %v3976, 2
        %v3979 = vshll.u32 %v3501, 16
        %v3981 = vrot.slane %v3979, 3
        %v3982 = vor.u32 %v3978, %v3981
        %v3983 = vsel %vm3594, %v3960, %v3982
        %v3985 = vshrl.u32 %v3544, 16
        %v3987 = vrot.slane %v3985, 2
        %v3988 = vshll.u32 %v3544, 16
        %v3990 = vrot.slane %v3988, 3
        %v3991 = vor.u32 %v3987, %v3990
        %v3992 = vsel %vm3594, %v3969, %v3991
        %v3993 = vrot.slane %v3502, 2
        %v3994 = vrot.slane %v3498, 3
        %v3995 = vor.u32 %v3993, %v3994
        %v3996 = vsel %vm3594, %v3973, %v3995
        %v3998 = vshrl.u32 %v3504, 16
        %v4000 = vrot.slane %v3998, 2
        %v4001 = vshll.u32 %v3504, 16
        %v4003 = vrot.slane %v4001, 3
        %v4004 = vor.u32 %v4000, %v4003
        %v4005 = vsel %vm3594, %v3982, %v4004
        %v4007 = vshrl.u32 %v3543, 16
        %v4009 = vrot.slane %v4007, 2
        %v4010 = vshll.u32 %v3543, 16
        %v4012 = vrot.slane %v4010, 3
        %v4013 = vor.u32 %v4009, %v4012
        %v4014 = vsel %vm3594, %v3991, %v4013
        %v4117 = vunpack.c.l.b16 %v3546
        %v4118 = vunpack.c.l.b16 %v3547
        %v4119 = vunpack.c.l.b16 %v3548
        %v4120 = vunpack.c.l.b16 %v3549
        %v4121 = vunpack.c.l.b16 %v3550
        %v4122 = vunpack.c.l.b16 %v3551
        %v4123 = vunpack.c.l.b16 %v3552
        %v4124 = vunpack.c.l.b16 %v3553
        %v4125 = vunpack.c.l.b16 %v3554
        %v4126 = vunpack.c.l.b16 %v3555
        %v4127 = vunpack.c.l.b16 %v3556
        %v4128 = vunpack.c.l.b16 %v3557
        %v4129 = vunpack.c.l.b16 %v3558
        %v4130 = vunpack.c.l.b16 %v3559
        %v4131 = vunpack.c.l.b16 %v3560
        %v4132 = vunpack.c.l.b16 %v3561
        %v4133 = vunpack.c.l.b16 %v3562
        %v4134 = vunpack.c.l.b16 %v3563
        %v4135 = vunpack.c.l.b16 %v3564
        %v4136 = vunpack.c.l.b16 %v3565
        %v4137 = vunpack.c.l.b16 %v3566
        %v4138 = vunpack.c.l.b16 %v3567
        %v4139 = vunpack.c.l.b16 %v3568
        %v4140 = vunpack.c.l.b16 %v3569
        %v4141 = vunpack.c.l.b16 %v3570
        %v4142 = vunpack.c.l.b16 %v3571
        %v4143 = vunpack.c.l.b16 %v3572
        %v4144 = vunpack.c.l.b16 %v3573
        %v4145 = vunpack.c.l.b16 %v3574
        %v4146 = vunpack.c.l.b16 %v3575
        %v4147 = vunpack.c.l.b16 %v3576
        %v4148 = vunpack.c.l.b16 %v3577
        %v4149 = vunpack.c.l.b16 %v3578
        %v4150 = vunpack.c.l.b16 %v3579
        %v4151 = vunpack.c.l.b16 %v3580
        %v4152 = vunpack.c.l.b16 %v3581
        %v4153 = vunpack.c.l.b16 %v3582
        %v4154 = vunpack.c.l.b16 %v3583
        %v4155 = vunpack.c.l.b16 %v3584
        %v4156 = vunpack.c.l.b16 %v3585
        %v4157 = vunpack.c.l.b16 %v3586
        %v4158 = vunpack.c.l.b16 %v3587
        %v4159 = vunpack.c.l.b16 %v3588
        %v4160 = vunpack.c.l.b16 %v3589
        %v4161 = vunpack.c.l.b16 %v3590
        %v4162 = vunpack.c.l.b16 %v3591
        %v4163 = vunpack.c.l.b16 %v3592
        %v4164 = vunpack.c.l.b16 %v3593
        %v4165 = vpack.c.b16 %v4118, %v4117
        %v4166 = vpack.c.b16 %v4120, %v4119
        %v4167 = vpack.c.b16 %v4122, %v4121
        %v4168 = vpack.c.b16 %v4124, %v4123
        %v4169 = vpack.c.b16 %v4126, %v4125
        %v4170 = vpack.c.b16 %v4128, %v4127
        %v4171 = vpack.c.b16 %v4130, %v4129
        %v4172 = vpack.c.b16 %v4132, %v4131
        %v4173 = vpack.c.b16 %v4134, %v4133
        %v4174 = vpack.c.b16 %v4136, %v4135
        %v4175 = vpack.c.b16 %v4138, %v4137
        %v4176 = vpack.c.b16 %v4140, %v4139
        %v4177 = vpack.c.b16 %v4142, %v4141
        %v4178 = vpack.c.b16 %v4144, %v4143
        %v4179 = vpack.c.b16 %v4146, %v4145
        %v4180 = vpack.c.b16 %v4148, %v4147
        %v4181 = vpack.c.b16 %v4150, %v4149
        %v4182 = vpack.c.b16 %v4152, %v4151
        %v4183 = vpack.c.b16 %v4154, %v4153
        %v4184 = vpack.c.b16 %v4156, %v4155
        %v4185 = vpack.c.b16 %v4158, %v4157
        %v4186 = vpack.c.b16 %v4160, %v4159
        %v4187 = vpack.c.b16 %v4162, %v4161
        %v4188 = vpack.c.b16 %v4164, %v4163
        %4213 = vmatprep.subr.bf16.mxu0 0
        %4214 = vmatpush1.bf16.msra.mxu0 %v4172
        %4215 = vmatprep.subr.bf16.mxu0 0
        %4216 = vmatpush1.bf16.msra.mxu0 %v4171
        %4217 = vmatprep.subr.bf16.mxu0 0
        %4218 = vmatpush1.bf16.msra.mxu0 %v4170
        %4219 = vmatprep.subr.bf16.mxu0 0
        %4220 = vmatpush1.bf16.msra.mxu0 %v4169
        %4221 = vmatprep.subr.bf16.mxu0 0
        %4222 = vmatpush1.bf16.msra.mxu0 %v4168
        %4223 = vmatprep.subr.bf16.mxu0 0
        %4224 = vmatpush1.bf16.msra.mxu0 %v4167
        %4225 = vmatprep.subr.bf16.mxu0 0
        %4226 = vmatpush1.bf16.msra.mxu0 %v4166
        %4227 = vmatprep.subr.bf16.mxu0 0
        %4228 = vmatpush1.bf16.msra.mxu0 %v4165
        %4229 = vmatprep.subr.bf16.mxu0 0
        %4230 = vmatpush2.bf16.msra.mxu0 %v4180
        %4231 = vmatprep.subr.bf16.mxu0 0
        %4232 = vmatpush2.bf16.msra.mxu0 %v4179
        %4233 = vmatprep.subr.bf16.mxu0 0
        %4234 = vmatpush2.bf16.msra.mxu0 %v4178
        %4235 = vmatprep.subr.bf16.mxu0 0
        %4236 = vmatpush2.bf16.msra.mxu0 %v4177
        %4237 = vmatprep.subr.bf16.mxu0 0
        %4238 = vmatpush2.bf16.msra.mxu0 %v4176
        %4239 = vmatprep.subr.bf16.mxu0 0
        %4240 = vmatpush2.bf16.msra.mxu0 %v4175
        %4241 = vmatprep.subr.bf16.mxu0 0
        %4242 = vmatpush2.bf16.msra.mxu0 %v4174
        %4243 = vmatprep.subr.bf16.mxu0 0
        %4244 = vmatpush2.bf16.msra.mxu0 %v4173
        %4245 = vmatprep.mubr.bf16.mxu0 %v3623
        %4246 = vmatmul.mubr.bf16.gmra.mxu0 %v3606
        %v4247 = vpop.f32.mrf.mxu0
        %v4248 = vadd.f32 0.0, %v4247
        %v4249 = vpop.f32.mrf.mxu0
        %v4250 = vpop.f32.mrf.mxu0
        %v4251 = vadd.f32 0.0, %v4250
        %v4252 = vpop.f32.mrf.mxu0
        %4253 = vmatprep.mubr.bf16.mxu0 %v3653
        %4254 = vmatmul.mubr.bf16.gmra.mxu0 %v3644
        %v4255 = vpop.f32.mrf.mxu0
        %v4256 = vadd.f32 0.0, %v4255
        %v4257 = vpop.f32.mrf.mxu0
        %v4258 = vpop.f32.mrf.mxu0
        %v4259 = vadd.f32 0.0, %v4258
        %v4260 = vpop.f32.mrf.mxu0
        %4261 = vmatprep.mubr.bf16.mxu0 %v3675
        %4262 = vmatmul.mubr.bf16.gmra.mxu0 %v3666
        %v4263 = vpop.f32.mrf.mxu0
        %v4264 = vadd.f32 0.0, %v4263
        %v4265 = vpop.f32.mrf.mxu0
        %v4266 = vpop.f32.mrf.mxu0
        %v4267 = vadd.f32 0.0, %v4266
        %v4268 = vpop.f32.mrf.mxu0
        %4269 = vmatprep.mubr.bf16.mxu0 %v3697
        %4270 = vmatmul.mubr.bf16.gmra.mxu0 %v3688
        %v4271 = vpop.f32.mrf.mxu0
        %v4272 = vadd.f32 0.0, %v4271
        %v4273 = vpop.f32.mrf.mxu0
        %v4274 = vpop.f32.mrf.mxu0
        %v4275 = vadd.f32 0.0, %v4274
        %v4276 = vpop.f32.mrf.mxu0
        %4277 = vmatprep.mubr.bf16.mxu0 %v3719
        %4278 = vmatmul.mubr.bf16.gmra.mxu0 %v3710
        %v4279 = vpop.f32.mrf.mxu0
        %v4280 = vadd.f32 0.0, %v4279
        %v4281 = vpop.f32.mrf.mxu0
        %v4282 = vpop.f32.mrf.mxu0
        %v4283 = vadd.f32 0.0, %v4282
        %v4284 = vpop.f32.mrf.mxu0
        %4285 = vmatprep.mubr.bf16.mxu0 %v3741
        %4286 = vmatmul.mubr.bf16.gmra.mxu0 %v3732
        %v4287 = vpop.f32.mrf.mxu0
        %v4288 = vadd.f32 0.0, %v4287
        %v4289 = vpop.f32.mrf.mxu0
        %v4290 = vpop.f32.mrf.mxu0
        %v4291 = vadd.f32 0.0, %v4290
        %v4292 = vpop.f32.mrf.mxu0
        %4293 = vmatprep.mubr.bf16.mxu0 %v3763
        %4294 = vmatmul.mubr.bf16.gmra.mxu0 %v3754
        %v4295 = vpop.f32.mrf.mxu0
        %v4296 = vadd.f32 0.0, %v4295
        %v4297 = vpop.f32.mrf.mxu0
        %v4298 = vpop.f32.mrf.mxu0
        %v4299 = vadd.f32 0.0, %v4298
        %v4300 = vpop.f32.mrf.mxu0
        %4301 = vmatprep.mubr.bf16.mxu0 %v3785
        %4302 = vmatmul.mubr.bf16.gmra.mxu0 %v3776
        %v4303 = vpop.f32.mrf.mxu0
        %v4304 = vadd.f32 0.0, %v4303
        %v4305 = vpop.f32.mrf.mxu0
        %v4306 = vpop.f32.mrf.mxu0
        %v4307 = vadd.f32 0.0, %v4306
        %v4308 = vpop.f32.mrf.mxu0
        %4309 = vmatprep.mubr.bf16.mxu0 %v3807
        %4310 = vmatmul.mubr.bf16.gmra.mxu0 %v3798
        %v4311 = vpop.f32.mrf.mxu0
        %v4312 = vadd.f32 0.0, %v4311
        %v4313 = vpop.f32.mrf.mxu0
        %v4314 = vpop.f32.mrf.mxu0
        %v4315 = vadd.f32 0.0, %v4314
        %v4316 = vpop.f32.mrf.mxu0
        %4317 = vmatprep.mubr.bf16.mxu0 %v3829
        %4318 = vmatmul.mubr.bf16.gmra.mxu0 %v3820
        %v4319 = vpop.f32.mrf.mxu0
        %v4320 = vadd.f32 0.0, %v4319
        %v4321 = vpop.f32.mrf.mxu0
        %v4322 = vpop.f32.mrf.mxu0
        %v4323 = vadd.f32 0.0, %v4322
        %v4324 = vpop.f32.mrf.mxu0
        %4325 = vmatprep.mubr.bf16.mxu0 %v3851
        %4326 = vmatmul.mubr.bf16.gmra.mxu0 %v3842
        %v4327 = vpop.f32.mrf.mxu0
        %v4328 = vadd.f32 0.0, %v4327
        %v4329 = vpop.f32.mrf.mxu0
        %v4330 = vpop.f32.mrf.mxu0
        %v4331 = vadd.f32 0.0, %v4330
        %v4332 = vpop.f32.mrf.mxu0
        %4333 = vmatprep.mubr.bf16.mxu0 %v3873
        %4334 = vmatmul.mubr.bf16.gmra.mxu0 %v3864
        %v4335 = vpop.f32.mrf.mxu0
        %v4336 = vadd.f32 0.0, %v4335
        %v4337 = vpop.f32.mrf.mxu0
        %v4338 = vpop.f32.mrf.mxu0
        %v4339 = vadd.f32 0.0, %v4338
        %v4340 = vpop.f32.mrf.mxu0
        %4341 = vmatprep.mubr.bf16.mxu0 %v3895
        %4342 = vmatmul.mubr.bf16.gmra.mxu0 %v3886
        %v4343 = vpop.f32.mrf.mxu0
        %v4344 = vadd.f32 0.0, %v4343
        %v4345 = vpop.f32.mrf.mxu0
        %v4346 = vpop.f32.mrf.mxu0
        %v4347 = vadd.f32 0.0, %v4346
        %v4348 = vpop.f32.mrf.mxu0
        %4349 = vmatprep.mubr.bf16.mxu0 %v3917
        %4350 = vmatmul.mubr.bf16.gmra.mxu0 %v3908
        %v4351 = vpop.f32.mrf.mxu0
        %v4352 = vadd.f32 0.0, %v4351
        %v4353 = vpop.f32.mrf.mxu0
        %v4354 = vpop.f32.mrf.mxu0
        %v4355 = vadd.f32 0.0, %v4354
        %v4356 = vpop.f32.mrf.mxu0
        %4357 = vmatprep.mubr.bf16.mxu0 %v3939
        %4358 = vmatmul.mubr.bf16.gmra.mxu0 %v3930
        %v4359 = vpop.f32.mrf.mxu0
        %v4360 = vadd.f32 0.0, %v4359
        %v4361 = vpop.f32.mrf.mxu0
        %v4362 = vpop.f32.mrf.mxu0
        %v4363 = vadd.f32 0.0, %v4362
        %v4364 = vpop.f32.mrf.mxu0
        %4365 = vmatprep.mubr.bf16.mxu0 %v3961
        %4366 = vmatmul.mubr.bf16.gmra.mxu0 %v3952
        %v4367 = vpop.f32.mrf.mxu0
        %v4368 = vadd.f32 0.0, %v4367
        %v4369 = vpop.f32.mrf.mxu0
        %v4370 = vpop.f32.mrf.mxu0
        %v4371 = vadd.f32 0.0, %v4370
        %v4372 = vpop.f32.mrf.mxu0
        %4373 = vmatprep.mubr.bf16.mxu0 %v3983
        %4374 = vmatmul.mubr.bf16.gmra.mxu0 %v3974
        %v4375 = vpop.f32.mrf.mxu0
        %v4376 = vadd.f32 0.0, %v4375
        %v4377 = vpop.f32.mrf.mxu0
        %v4378 = vpop.f32.mrf.mxu0
        %v4379 = vadd.f32 0.0, %v4378
        %v4380 = vpop.f32.mrf.mxu0
        %4381 = vmatprep.mubr.bf16.mxu0 %v4005
        %4382 = vmatmul.mubr.bf16.gmra.mxu0 %v3996
        %v4383 = vpop.f32.mrf.mxu0
        %v4384 = vadd.f32 0.0, %v4383
        %v4385 = vpop.f32.mrf.mxu0
        %v4386 = vpop.f32.mrf.mxu0
        %v4387 = vadd.f32 0.0, %v4386
        %v4388 = vpop.f32.mrf.mxu0
        %4389 = vdwg.mxu0
        %4390 = vmatprep.subr.bf16.mxu0 0
        %4391 = vmatpush1.bf16.msra.mxu0 %v4188
        %4392 = vmatprep.subr.bf16.mxu0 0
        %4393 = vmatpush1.bf16.msra.mxu0 %v4187
        %4394 = vmatprep.subr.bf16.mxu0 0
        %4395 = vmatpush1.bf16.msra.mxu0 %v4186
        %4396 = vmatprep.subr.bf16.mxu0 0
        %4397 = vmatpush1.bf16.msra.mxu0 %v4185
        %4398 = vmatprep.subr.bf16.mxu0 0
        %4399 = vmatpush1.bf16.msra.mxu0 %v4184
        %4400 = vmatprep.subr.bf16.mxu0 0
        %4401 = vmatpush1.bf16.msra.mxu0 %v4183
        %4402 = vmatprep.subr.bf16.mxu0 0
        %4403 = vmatpush1.bf16.msra.mxu0 %v4182
        %4404 = vmatprep.subr.bf16.mxu0 0
        %4405 = vmatpush1.bf16.msra.mxu0 %v4181
        %4406 = vmatprep.subr.bf16.mxu0 0
        %4407 = vmatpush2.bf16.msra.mxu0 0
        %4408 = vmatprep.subr.bf16.mxu0 0
        %4409 = vmatpush2.bf16.msra.mxu0 0
        %4410 = vmatprep.subr.bf16.mxu0 0
        %4411 = vmatpush2.bf16.msra.mxu0 0
        %4412 = vmatprep.subr.bf16.mxu0 0
        %4413 = vmatpush2.bf16.msra.mxu0 0
        %4414 = vmatprep.subr.bf16.mxu0 0
        %4415 = vmatpush2.bf16.msra.mxu0 0
        %4416 = vmatprep.subr.bf16.mxu0 0
        %4417 = vmatpush2.bf16.msra.mxu0 0
        %4418 = vmatprep.subr.bf16.mxu0 0
        %4419 = vmatpush2.bf16.msra.mxu0 0
        %4420 = vmatprep.subr.bf16.mxu0 0
        %4421 = vmatpush2.bf16.msra.mxu0 0
        %4422 = vmatprep.mubr.bf16.mxu0 0
        %4423 = vmatmul.mubr.bf16.gmra.mxu0 %v3640
        %v4424 = vpop.f32.mrf.mxu0
        %v4425 = vadd.f32 %v4248, %v4424
        %v4426 = vpop.f32.mrf.mxu0
        %v4427 = vpop.f32.mrf.mxu0
        %v4428 = vadd.f32 %v4251, %v4427
        %v4429 = vpop.f32.mrf.mxu0
        %4430 = vmatprep.mubr.bf16.mxu0 0
        %4431 = vmatmul.mubr.bf16.gmra.mxu0 %v3662
        %v4432 = vpop.f32.mrf.mxu0
        %v4433 = vadd.f32 %v4256, %v4432
        %v4434 = vpop.f32.mrf.mxu0
        %v4435 = vpop.f32.mrf.mxu0
        %v4436 = vadd.f32 %v4259, %v4435
        %v4437 = vpop.f32.mrf.mxu0
        %4438 = vmatprep.mubr.bf16.mxu0 0
        %4439 = vmatmul.mubr.bf16.gmra.mxu0 %v3684
        %v4440 = vpop.f32.mrf.mxu0
        %v4441 = vadd.f32 %v4264, %v4440
        %v4442 = vpop.f32.mrf.mxu0
        %v4443 = vpop.f32.mrf.mxu0
        %v4444 = vadd.f32 %v4267, %v4443
        %v4445 = vpop.f32.mrf.mxu0
        %4446 = vmatprep.mubr.bf16.mxu0 0
        %4447 = vmatmul.mubr.bf16.gmra.mxu0 %v3706
        %v4448 = vpop.f32.mrf.mxu0
        %v4449 = vadd.f32 %v4272, %v4448
        %v4450 = vpop.f32.mrf.mxu0
        %v4451 = vpop.f32.mrf.mxu0
        %v4452 = vadd.f32 %v4275, %v4451
        %v4453 = vpop.f32.mrf.mxu0
        %4454 = vmatprep.mubr.bf16.mxu0 0
        %4455 = vmatmul.mubr.bf16.gmra.mxu0 %v3728
        %v4456 = vpop.f32.mrf.mxu0
        %v4457 = vadd.f32 %v4280, %v4456
        %v4458 = vpop.f32.mrf.mxu0
        %v4459 = vpop.f32.mrf.mxu0
        %v4460 = vadd.f32 %v4283, %v4459
        %v4461 = vpop.f32.mrf.mxu0
        %4462 = vmatprep.mubr.bf16.mxu0 0
        %4463 = vmatmul.mubr.bf16.gmra.mxu0 %v3750
        %v4464 = vpop.f32.mrf.mxu0
        %v4465 = vadd.f32 %v4288, %v4464
        %v4466 = vpop.f32.mrf.mxu0
        %v4467 = vpop.f32.mrf.mxu0
        %v4468 = vadd.f32 %v4291, %v4467
        %v4469 = vpop.f32.mrf.mxu0
        %4470 = vmatprep.mubr.bf16.mxu0 0
        %4471 = vmatmul.mubr.bf16.gmra.mxu0 %v3772
        %v4472 = vpop.f32.mrf.mxu0
        %v4473 = vadd.f32 %v4296, %v4472
        %v4474 = vpop.f32.mrf.mxu0
        %v4475 = vpop.f32.mrf.mxu0
        %v4476 = vadd.f32 %v4299, %v4475
        %v4477 = vpop.f32.mrf.mxu0
        %4478 = vmatprep.mubr.bf16.mxu0 0
        %4479 = vmatmul.mubr.bf16.gmra.mxu0 %v3794
        %v4480 = vpop.f32.mrf.mxu0
        %v4481 = vadd.f32 %v4304, %v4480
        %v4482 = vpop.f32.mrf.mxu0
        %v4483 = vpop.f32.mrf.mxu0
        %v4484 = vadd.f32 %v4307, %v4483
        %v4485 = vpop.f32.mrf.mxu0
        %4486 = vmatprep.mubr.bf16.mxu0 0
        %4487 = vmatmul.mubr.bf16.gmra.mxu0 %v3816
        %v4488 = vpop.f32.mrf.mxu0
        %v4489 = vadd.f32 %v4312, %v4488
        %v4490 = vpop.f32.mrf.mxu0
        %v4491 = vpop.f32.mrf.mxu0
        %v4492 = vadd.f32 %v4315, %v4491
        %v4493 = vpop.f32.mrf.mxu0
        %4494 = vmatprep.mubr.bf16.mxu0 0
        %4495 = vmatmul.mubr.bf16.gmra.mxu0 %v3838
        %v4496 = vpop.f32.mrf.mxu0
        %v4497 = vadd.f32 %v4320, %v4496
        %v4498 = vpop.f32.mrf.mxu0
        %v4499 = vpop.f32.mrf.mxu0
        %v4500 = vadd.f32 %v4323, %v4499
        %v4501 = vpop.f32.mrf.mxu0
        %4502 = vmatprep.mubr.bf16.mxu0 0
        %4503 = vmatmul.mubr.bf16.gmra.mxu0 %v3860
        %v4504 = vpop.f32.mrf.mxu0
        %v4505 = vadd.f32 %v4328, %v4504
        %v4506 = vpop.f32.mrf.mxu0
        %v4507 = vpop.f32.mrf.mxu0
        %v4508 = vadd.f32 %v4331, %v4507
        %v4509 = vpop.f32.mrf.mxu0
        %4510 = vmatprep.mubr.bf16.mxu0 0
        %4511 = vmatmul.mubr.bf16.gmra.mxu0 %v3882
        %v4512 = vpop.f32.mrf.mxu0
        %v4513 = vadd.f32 %v4336, %v4512
        %v4514 = vpop.f32.mrf.mxu0
        %v4515 = vpop.f32.mrf.mxu0
        %v4516 = vadd.f32 %v4339, %v4515
        %v4517 = vpop.f32.mrf.mxu0
        %4518 = vmatprep.mubr.bf16.mxu0 0
        %4519 = vmatmul.mubr.bf16.gmra.mxu0 %v3904
        %v4520 = vpop.f32.mrf.mxu0
        %v4521 = vadd.f32 %v4344, %v4520
        %v4522 = vpop.f32.mrf.mxu0
        %v4523 = vpop.f32.mrf.mxu0
        %v4524 = vadd.f32 %v4347, %v4523
        %v4525 = vpop.f32.mrf.mxu0
        %4526 = vmatprep.mubr.bf16.mxu0 0
        %4527 = vmatmul.mubr.bf16.gmra.mxu0 %v3926
        %v4528 = vpop.f32.mrf.mxu0
        %v4529 = vadd.f32 %v4352, %v4528
        %v4530 = vpop.f32.mrf.mxu0
        %v4531 = vpop.f32.mrf.mxu0
        %v4532 = vadd.f32 %v4355, %v4531
        %v4533 = vpop.f32.mrf.mxu0
        %4534 = vmatprep.mubr.bf16.mxu0 0
        %4535 = vmatmul.mubr.bf16.gmra.mxu0 %v3948
        %v4536 = vpop.f32.mrf.mxu0
        %v4537 = vadd.f32 %v4360, %v4536
        %v4538 = vpop.f32.mrf.mxu0
        %v4539 = vpop.f32.mrf.mxu0
        %v4540 = vadd.f32 %v4363, %v4539
        %v4541 = vpop.f32.mrf.mxu0
        %4542 = vmatprep.mubr.bf16.mxu0 0
        %4543 = vmatmul.mubr.bf16.gmra.mxu0 %v3970
        %v4544 = vpop.f32.mrf.mxu0
        %v4545 = vadd.f32 %v4368, %v4544
        %v4546 = vpop.f32.mrf.mxu0
        %v4547 = vpop.f32.mrf.mxu0
        %v4548 = vadd.f32 %v4371, %v4547
        %v4549 = vpop.f32.mrf.mxu0
        %4550 = vmatprep.mubr.bf16.mxu0 0
        %4551 = vmatmul.mubr.bf16.gmra.mxu0 %v3992
        %v4552 = vpop.f32.mrf.mxu0
        %v4553 = vadd.f32 %v4376, %v4552
        %v4554 = vpop.f32.mrf.mxu0
        %v4555 = vpop.f32.mrf.mxu0
        %v4556 = vadd.f32 %v4379, %v4555
        %v4557 = vpop.f32.mrf.mxu0
        %4558 = vmatprep.mubr.bf16.mxu0 0
        %4559 = vmatmul.mubr.bf16.gmra.mxu0 %v4014
        %v4560 = vpop.f32.mrf.mxu0
        %v4561 = vadd.f32 %v4384, %v4560
        %v4562 = vpop.f32.mrf.mxu0
        %v4563 = vpop.f32.mrf.mxu0
        %v4564 = vadd.f32 %v4387, %v4563
        %v4565 = vpop.f32.mrf.mxu0
        %4566 = vdwg.mxu0
        %v4567 = vadd.f32 %v3077, %v4425
        %v4568 = vadd.f32 %v3080, %v4428
        %v4569 = vadd.f32 %v3085, %v4433
        %v4570 = vadd.f32 %v3088, %v4436
        %v4571 = vadd.f32 %v3093, %v4441
        %v4572 = vadd.f32 %v3096, %v4444
        %v4573 = vadd.f32 %v3101, %v4449
        %v4574 = vadd.f32 %v3104, %v4452
        %v4575 = vadd.f32 %v3109, %v4457
        %v4576 = vadd.f32 %v3112, %v4460
        %v4577 = vadd.f32 %v3117, %v4465
        %v4578 = vadd.f32 %v3120, %v4468
        %v4579 = vadd.f32 %v3125, %v4473
        %v4580 = vadd.f32 %v3128, %v4476
        %v4581 = vadd.f32 %v3133, %v4481
        %v4582 = vadd.f32 %v3136, %v4484
        %v4583 = vadd.f32 %v3141, %v4489
        %v4584 = vadd.f32 %v3144, %v4492
        %v4585 = vadd.f32 %v3149, %v4497
        %v4586 = vadd.f32 %v3152, %v4500
        %v4587 = vadd.f32 %v3157, %v4505
        %v4588 = vadd.f32 %v3160, %v4508
        %v4589 = vadd.f32 %v3165, %v4513
        %v4590 = vadd.f32 %v3168, %v4516
        %v4591 = vadd.f32 %v3173, %v4521
        %v4592 = vadd.f32 %v3176, %v4524
        %v4593 = vadd.f32 %v3181, %v4529
        %v4594 = vadd.f32 %v3184, %v4532
        %v4595 = vadd.f32 %v3189, %v4537
        %v4596 = vadd.f32 %v3192, %v4540
        %v4597 = vadd.f32 %v3197, %v4545
        %v4598 = vadd.f32 %v3200, %v4548
        %v4599 = vadd.f32 %v3205, %v4553
        %v4600 = vadd.f32 %v3208, %v4556
        %v4601 = vadd.f32 %v3213, %v4561
        %v4602 = vadd.f32 %v3216, %v4564
        %v4603 = vld [vmem:[%s2] sm:$0x1]
        %v4605 = vlaneseq
        %v4606 = vshrl.u32 %v4605, 7
        %v4607 = vsub.s32 0, %v4606
        %v4608 = vrot.slane %v4603, %v4607
        %v4610 = vadd.f32 %v4567, %v4608
        %v4611 = vadd.f32 %v4568, %v4608
        %v4612 = vadd.f32 %v4569, %v4608
        %v4613 = vadd.f32 %v4570, %v4608
        %v4614 = vadd.f32 %v4571, %v4608
        %v4615 = vadd.f32 %v4572, %v4608
        %v4616 = vadd.f32 %v4573, %v4608
        %v4617 = vadd.f32 %v4574, %v4608
        %v4618 = vadd.f32 %v4575, %v4608
        %v4619 = vadd.f32 %v4576, %v4608
        %v4620 = vadd.f32 %v4577, %v4608
        %v4621 = vadd.f32 %v4578, %v4608
        %v4622 = vadd.f32 %v4579, %v4608
        %v4623 = vadd.f32 %v4580, %v4608
        %v4624 = vadd.f32 %v4581, %v4608
        %v4625 = vadd.f32 %v4582, %v4608
        %v4626 = vadd.f32 %v4583, %v4608
        %v4627 = vadd.f32 %v4584, %v4608
        %v4628 = vadd.f32 %v4585, %v4608
        %v4629 = vadd.f32 %v4586, %v4608
        %v4630 = vadd.f32 %v4587, %v4608
        %v4631 = vadd.f32 %v4588, %v4608
        %v4632 = vadd.f32 %v4589, %v4608
        %v4633 = vadd.f32 %v4590, %v4608
        %v4634 = vadd.f32 %v4591, %v4608
        %v4635 = vadd.f32 %v4592, %v4608
        %v4636 = vadd.f32 %v4593, %v4608
        %v4637 = vadd.f32 %v4594, %v4608
        %v4638 = vadd.f32 %v4595, %v4608
        %v4639 = vadd.f32 %v4596, %v4608
        %v4640 = vadd.f32 %v4597, %v4608
        %v4641 = vadd.f32 %v4598, %v4608
        %v4642 = vadd.f32 %v4599, %v4608
        %v4643 = vadd.f32 %v4600, %v4608
        %v4644 = vadd.f32 %v4601, %v4608
        %v4645 = vadd.f32 %v4602, %v4608
        %v4646 = vxor.u32 %v4610, 2147483648
        %v4647 = vxor.u32 %v4611, 2147483648
        %v4648 = vxor.u32 %v4612, 2147483648
        %v4649 = vxor.u32 %v4613, 2147483648
        %v4650 = vxor.u32 %v4614, 2147483648
        %v4651 = vxor.u32 %v4615, 2147483648
        %v4652 = vxor.u32 %v4616, 2147483648
        %v4653 = vxor.u32 %v4617, 2147483648
        %v4654 = vxor.u32 %v4618, 2147483648
        %v4655 = vxor.u32 %v4619, 2147483648
        %v4656 = vxor.u32 %v4620, 2147483648
        %v4657 = vxor.u32 %v4621, 2147483648
        %v4658 = vxor.u32 %v4622, 2147483648
        %v4659 = vxor.u32 %v4623, 2147483648
        %v4660 = vxor.u32 %v4624, 2147483648
        %v4661 = vxor.u32 %v4625, 2147483648
        %v4662 = vxor.u32 %v4626, 2147483648
        %v4663 = vxor.u32 %v4627, 2147483648
        %v4664 = vxor.u32 %v4628, 2147483648
        %v4665 = vxor.u32 %v4629, 2147483648
        %v4666 = vxor.u32 %v4630, 2147483648
        %v4667 = vxor.u32 %v4631, 2147483648
        %v4668 = vxor.u32 %v4632, 2147483648
        %v4669 = vxor.u32 %v4633, 2147483648
        %v4670 = vxor.u32 %v4634, 2147483648
        %v4671 = vxor.u32 %v4635, 2147483648
        %v4672 = vxor.u32 %v4636, 2147483648
        %v4673 = vxor.u32 %v4637, 2147483648
        %v4674 = vxor.u32 %v4638, 2147483648
        %v4675 = vxor.u32 %v4639, 2147483648
        %v4676 = vxor.u32 %v4640, 2147483648
        %v4677 = vxor.u32 %v4641, 2147483648
        %v4678 = vxor.u32 %v4642, 2147483648
        %v4679 = vxor.u32 %v4643, 2147483648
        %v4680 = vxor.u32 %v4644, 2147483648
        %v4681 = vxor.u32 %v4645, 2147483648
        %v4682 = vmul.f32 %v4646, 1.442695
        %v4683 = vpow.pop %v4682
        %v4684 = vmul.f32 %v4647, 1.442695
        %v4685 = vpow.pop %v4684
        %v4686 = vmul.f32 %v4648, 1.442695
        %v4687 = vpow.pop %v4686
        %v4688 = vmul.f32 %v4649, 1.442695
        %v4689 = vpow.pop %v4688
        %v4690 = vmul.f32 %v4650, 1.442695
        %v4691 = vpow.pop %v4690
        %v4692 = vmul.f32 %v4651, 1.442695
        %v4693 = vpow.pop %v4692
        %v4694 = vmul.f32 %v4652, 1.442695
        %v4695 = vpow.pop %v4694
        %v4696 = vmul.f32 %v4653, 1.442695
        %v4697 = vpow.pop %v4696
        %v4698 = vmul.f32 %v4654, 1.442695
        %v4699 = vpow.pop %v4698
        %v4700 = vmul.f32 %v4655, 1.442695
        %v4701 = vpow.pop %v4700
        %v4702 = vmul.f32 %v4656, 1.442695
        %v4703 = vpow.pop %v4702
        %v4704 = vmul.f32 %v4657, 1.442695
        %v4705 = vpow.pop %v4704
        %v4706 = vmul.f32 %v4658, 1.442695
        %v4707 = vpow.pop %v4706
        %v4708 = vmul.f32 %v4659, 1.442695
        %v4709 = vpow.pop %v4708
        %v4710 = vmul.f32 %v4660, 1.442695
        %v4711 = vpow.pop %v4710
        %v4712 = vmul.f32 %v4661, 1.442695
        %v4713 = vpow.pop %v4712
        %v4714 = vmul.f32 %v4662, 1.442695
        %v4715 = vpow.pop %v4714
        %v4716 = vmul.f32 %v4663, 1.442695
        %v4717 = vpow.pop %v4716
        %v4718 = vmul.f32 %v4664, 1.442695
        %v4719 = vpow.pop %v4718
        %v4720 = vmul.f32 %v4665, 1.442695
        %v4721 = vpow.pop %v4720
        %v4722 = vmul.f32 %v4666, 1.442695
        %v4723 = vpow.pop %v4722
        %v4724 = vmul.f32 %v4667, 1.442695
        %v4725 = vpow.pop %v4724
        %v4726 = vmul.f32 %v4668, 1.442695
        %v4727 = vpow.pop %v4726
        %v4728 = vmul.f32 %v4669, 1.442695
        %v4729 = vpow.pop %v4728
        %v4730 = vmul.f32 %v4670, 1.442695
        %v4731 = vpow.pop %v4730
        %v4732 = vmul.f32 %v4671, 1.442695
        %v4733 = vpow.pop %v4732
        %v4734 = vmul.f32 %v4672, 1.442695
        %v4735 = vpow.pop %v4734
        %v4736 = vmul.f32 %v4673, 1.442695
        %v4737 = vpow.pop %v4736
        %v4738 = vmul.f32 %v4674, 1.442695
        %v4739 = vpow.pop %v4738
        %v4740 = vmul.f32 %v4675, 1.442695
        %v4741 = vpow.pop %v4740
        %v4742 = vmul.f32 %v4676, 1.442695
        %v4743 = vpow.pop %v4742
        %v4744 = vmul.f32 %v4677, 1.442695
        %v4745 = vpow.pop %v4744
        %v4746 = vmul.f32 %v4678, 1.442695
        %v4747 = vpow.pop %v4746
        %v4748 = vmul.f32 %v4679, 1.442695
        %v4749 = vpow.pop %v4748
        %v4750 = vmul.f32 %v4680, 1.442695
        %v4751 = vpow.pop %v4750
        %v4752 = vmul.f32 %v4681, 1.442695
        %v4753 = vpow.pop %v4752
        %v4754 = vadd.f32 %v4683, 1.0
        %v4755 = vadd.f32 %v4685, 1.0
        %v4756 = vadd.f32 %v4687, 1.0
        %v4757 = vadd.f32 %v4689, 1.0
        %v4758 = vadd.f32 %v4691, 1.0
        %v4759 = vadd.f32 %v4693, 1.0
        %v4760 = vadd.f32 %v4695, 1.0
        %v4761 = vadd.f32 %v4697, 1.0
        %v4762 = vadd.f32 %v4699, 1.0
        %v4763 = vadd.f32 %v4701, 1.0
        %v4764 = vadd.f32 %v4703, 1.0
        %v4765 = vadd.f32 %v4705, 1.0
        %v4766 = vadd.f32 %v4707, 1.0
        %v4767 = vadd.f32 %v4709, 1.0
        %v4768 = vadd.f32 %v4711, 1.0
        %v4769 = vadd.f32 %v4713, 1.0
        %v4770 = vadd.f32 %v4715, 1.0
        %v4771 = vadd.f32 %v4717, 1.0
        %v4772 = vadd.f32 %v4719, 1.0
        %v4773 = vadd.f32 %v4721, 1.0
        %v4774 = vadd.f32 %v4723, 1.0
        %v4775 = vadd.f32 %v4725, 1.0
        %v4776 = vadd.f32 %v4727, 1.0
        %v4777 = vadd.f32 %v4729, 1.0
        %v4778 = vadd.f32 %v4731, 1.0
        %v4779 = vadd.f32 %v4733, 1.0
        %v4780 = vadd.f32 %v4735, 1.0
        %v4781 = vadd.f32 %v4737, 1.0
        %v4782 = vadd.f32 %v4739, 1.0
        %v4783 = vadd.f32 %v4741, 1.0
        %v4784 = vadd.f32 %v4743, 1.0
        %v4785 = vadd.f32 %v4745, 1.0
        %v4786 = vadd.f32 %v4747, 1.0
        %v4787 = vadd.f32 %v4749, 1.0
        %v4788 = vadd.f32 %v4751, 1.0
        %v4789 = vadd.f32 %v4753, 1.0
        %v4790 = vrcp.pop %v4754
        %v4791 = vmul.f32 1.0, %v4790
        %v4792 = vrcp.pop %v4755
        %v4793 = vmul.f32 1.0, %v4792
        %v4794 = vrcp.pop %v4756
        %v4795 = vmul.f32 1.0, %v4794
        %v4796 = vrcp.pop %v4757
        %v4797 = vmul.f32 1.0, %v4796
        %v4798 = vrcp.pop %v4758
        %v4799 = vmul.f32 1.0, %v4798
        %v4800 = vrcp.pop %v4759
        %v4801 = vmul.f32 1.0, %v4800
        %v4802 = vrcp.pop %v4760
        %v4803 = vmul.f32 1.0, %v4802
        %v4804 = vrcp.pop %v4761
        %v4805 = vmul.f32 1.0, %v4804
        %v4806 = vrcp.pop %v4762
        %v4807 = vmul.f32 1.0, %v4806
        %v4808 = vrcp.pop %v4763
        %v4809 = vmul.f32 1.0, %v4808
        %v4810 = vrcp.pop %v4764
        %v4811 = vmul.f32 1.0, %v4810
        %v4812 = vrcp.pop %v4765
        %v4813 = vmul.f32 1.0, %v4812
        %v4814 = vrcp.pop %v4766
        %v4815 = vmul.f32 1.0, %v4814
        %v4816 = vrcp.pop %v4767
        %v4817 = vmul.f32 1.0, %v4816
        %v4818 = vrcp.pop %v4768
        %v4819 = vmul.f32 1.0, %v4818
        %v4820 = vrcp.pop %v4769
        %v4821 = vmul.f32 1.0, %v4820
        %v4822 = vrcp.pop %v4770
        %v4823 = vmul.f32 1.0, %v4822
        %v4824 = vrcp.pop %v4771
        %v4825 = vmul.f32 1.0, %v4824
        %v4826 = vrcp.pop %v4772
        %v4827 = vmul.f32 1.0, %v4826
        %v4828 = vrcp.pop %v4773
        %v4829 = vmul.f32 1.0, %v4828
        %v4830 = vrcp.pop %v4774
        %v4831 = vmul.f32 1.0, %v4830
        %v4832 = vrcp.pop %v4775
        %v4833 = vmul.f32 1.0, %v4832
        %v4834 = vrcp.pop %v4776
        %v4835 = vmul.f32 1.0, %v4834
        %v4836 = vrcp.pop %v4777
        %v4837 = vmul.f32 1.0, %v4836
        %v4838 = vrcp.pop %v4778
        %v4839 = vmul.f32 1.0, %v4838
        %v4840 = vrcp.pop %v4779
        %v4841 = vmul.f32 1.0, %v4840
        %v4842 = vrcp.pop %v4780
        %v4843 = vmul.f32 1.0, %v4842
        %v4844 = vrcp.pop %v4781
        %v4845 = vmul.f32 1.0, %v4844
        %v4846 = vrcp.pop %v4782
        %v4847 = vmul.f32 1.0, %v4846
        %v4848 = vrcp.pop %v4783
        %v4849 = vmul.f32 1.0, %v4848
        %v4850 = vrcp.pop %v4784
        %v4851 = vmul.f32 1.0, %v4850
        %v4852 = vrcp.pop %v4785
        %v4853 = vmul.f32 1.0, %v4852
        %v4854 = vrcp.pop %v4786
        %v4855 = vmul.f32 1.0, %v4854
        %v4856 = vrcp.pop %v4787
        %v4857 = vmul.f32 1.0, %v4856
        %v4858 = vrcp.pop %v4788
        %v4859 = vmul.f32 1.0, %v4858
        %v4860 = vrcp.pop %v4789
        %v4861 = vmul.f32 1.0, %v4860
        %v4862 = vmul.f32 %v4610, %v4791
        %v4863 = vmul.f32 %v4611, %v4793
        %v4864 = vmul.f32 %v4612, %v4795
        %v4865 = vmul.f32 %v4613, %v4797
        %v4866 = vmul.f32 %v4614, %v4799
        %v4867 = vmul.f32 %v4615, %v4801
        %v4868 = vmul.f32 %v4616, %v4803
        %v4869 = vmul.f32 %v4617, %v4805
        %v4870 = vmul.f32 %v4618, %v4807
        %v4871 = vmul.f32 %v4619, %v4809
        %v4872 = vmul.f32 %v4620, %v4811
        %v4873 = vmul.f32 %v4621, %v4813
        %v4874 = vmul.f32 %v4622, %v4815
        %v4875 = vmul.f32 %v4623, %v4817
        %v4876 = vmul.f32 %v4624, %v4819
        %v4877 = vmul.f32 %v4625, %v4821
        %v4878 = vmul.f32 %v4626, %v4823
        %v4879 = vmul.f32 %v4627, %v4825
        %v4880 = vmul.f32 %v4628, %v4827
        %v4881 = vmul.f32 %v4629, %v4829
        %v4882 = vmul.f32 %v4630, %v4831
        %v4883 = vmul.f32 %v4631, %v4833
        %v4884 = vmul.f32 %v4632, %v4835
        %v4885 = vmul.f32 %v4633, %v4837
        %v4886 = vmul.f32 %v4634, %v4839
        %v4887 = vmul.f32 %v4635, %v4841
        %v4888 = vmul.f32 %v4636, %v4843
        %v4889 = vmul.f32 %v4637, %v4845
        %v4890 = vmul.f32 %v4638, %v4847
        %v4891 = vmul.f32 %v4639, %v4849
        %v4892 = vmul.f32 %v4640, %v4851
        %v4893 = vmul.f32 %v4641, %v4853
        %v4894 = vmul.f32 %v4642, %v4855
        %v4895 = vmul.f32 %v4643, %v4857
        %v4896 = vmul.f32 %v4644, %v4859
        %v4897 = vmul.f32 %v4645, %v4861
        %v4898 = vsel %vm1027, %v4862, 0.0
        %v4899 = vsel %vm1028, %v4863, 0.0
        %v4900 = vsel %vm1029, %v4864, 0.0
        %v4901 = vsel %vm1030, %v4865, 0.0
        %v4902 = vsel %vm1031, %v4866, 0.0
        %v4903 = vsel %vm1032, %v4867, 0.0
        %v4904 = vsel %vm1033, %v4868, 0.0
        %v4905 = vsel %vm1034, %v4869, 0.0
        %v4906 = vsel %vm1035, %v4870, 0.0
        %v4907 = vsel %vm1036, %v4871, 0.0
        %v4908 = vsel %vm1037, %v4872, 0.0
        %v4909 = vsel %vm1038, %v4873, 0.0
        %v4910 = vsel %vm1039, %v4874, 0.0
        %v4911 = vsel %vm1040, %v4875, 0.0
        %v4912 = vsel %vm1041, %v4876, 0.0
        %v4913 = vsel %vm1042, %v4877, 0.0
        %v4914 = vsel %vm1043, %v4878, 0.0
        %v4915 = vsel %vm1044, %v4879, 0.0
        %v4916 = vsel %vm1045, %v4880, 0.0
        %v4917 = vsel %vm1046, %v4881, 0.0
        %v4918 = vsel %vm1047, %v4882, 0.0
        %v4919 = vsel %vm1048, %v4883, 0.0
        %v4920 = vsel %vm1049, %v4884, 0.0
        %v4921 = vsel %vm1050, %v4885, 0.0
        %v4922 = vsel %vm1051, %v4886, 0.0
        %v4923 = vsel %vm1052, %v4887, 0.0
        %v4924 = vsel %vm1053, %v4888, 0.0
        %v4925 = vsel %vm1054, %v4889, 0.0
        %v4926 = vsel %vm1055, %v4890, 0.0
        %v4927 = vsel %vm1056, %v4891, 0.0
        %v4928 = vsel %vm1057, %v4892, 0.0
        %v4929 = vsel %vm1058, %v4893, 0.0
        %v4930 = vsel %vm1059, %v4894, 0.0
        %v4931 = vsel %vm1060, %v4895, 0.0
        %v4932 = vsel %vm1061, %v4896, 0.0
        %v4933 = vsel %vm1062, %v4897, 0.0
        %v4934 = vpack.c.bf16 %v4899, %v4898
        %v4935 = vpack.c.bf16 %v4901, %v4900
        %v4936 = vpack.c.bf16 %v4903, %v4902
        %v4937 = vpack.c.bf16 %v4905, %v4904
        %v4938 = vpack.c.bf16 %v4907, %v4906
        %v4939 = vpack.c.bf16 %v4909, %v4908
        %v4940 = vpack.c.bf16 %v4911, %v4910
        %v4941 = vpack.c.bf16 %v4913, %v4912
        %v4942 = vpack.c.bf16 %v4915, %v4914
        %v4943 = vpack.c.bf16 %v4917, %v4916
        %v4944 = vpack.c.bf16 %v4919, %v4918
        %v4945 = vpack.c.bf16 %v4921, %v4920
        %v4946 = vpack.c.bf16 %v4923, %v4922
        %v4947 = vpack.c.bf16 %v4925, %v4924
        %v4948 = vpack.c.bf16 %v4927, %v4926
        %v4949 = vpack.c.bf16 %v4929, %v4928
        %v4950 = vpack.c.bf16 %v4931, %v4930
        %v4951 = vpack.c.bf16 %v4933, %v4932
        %4952 = vst [vmem:[#allocation2] sm:$0xf] 0
        %4953 = vst [vmem:[#allocation2 + $0x4] sm:$0xf] 0
        %4954 = vst [vmem:[#allocation2 + $0x8] sm:$0xf] 0
        %4955 = vst [vmem:[#allocation2 + $0xc] sm:$0xf] 0
        %4956 = vst [vmem:[#allocation2 + $0x10] sm:$0x3] 0
        %4957 = vst [vmem:[#allocation2 + $0xa0] sm:$0xc] 0
        %4958 = vst [vmem:[#allocation2 + $0xa4] sm:$0xf] 0
        %4959 = vst [vmem:[#allocation2 + $0xa8] sm:$0xf] 0
        %4960 = vst [vmem:[#allocation2 + $0xac] sm:$0xf] 0
        %4961 = vst [vmem:[#allocation2 + $0xb0] sm:$0xf] 0
        %v4980 = vunpack.c.l.b16 %v4934
        %v4981 = vunpack.c.h.b16 %v4934
        %v4982 = vunpack.c.l.b16 %v4935
        %v4983 = vunpack.c.h.b16 %v4935
        %v4984 = vunpack.c.l.b16 %v4936
        %v4985 = vunpack.c.h.b16 %v4936
        %v4986 = vunpack.c.l.b16 %v4937
        %v4987 = vunpack.c.h.b16 %v4937
        %v4988 = vunpack.c.l.b16 %v4938
        %v4989 = vunpack.c.h.b16 %v4938
        %v4990 = vunpack.c.l.b16 %v4939
        %v4991 = vunpack.c.h.b16 %v4939
        %v4992 = vunpack.c.l.b16 %v4940
        %v4993 = vunpack.c.h.b16 %v4940
        %v4994 = vunpack.c.l.b16 %v4941
        %v4995 = vunpack.c.h.b16 %v4941
        %v4996 = vunpack.c.l.b16 %v4942
        %v4997 = vunpack.c.h.b16 %v4942
        %v4998 = vunpack.c.l.b16 %v4943
        %v4999 = vunpack.c.h.b16 %v4943
        %v5000 = vunpack.c.l.b16 %v4944
        %v5001 = vunpack.c.h.b16 %v4944
        %v5002 = vunpack.c.l.b16 %v4945
        %v5003 = vunpack.c.h.b16 %v4945
        %v5004 = vunpack.c.l.b16 %v4946
        %v5005 = vunpack.c.h.b16 %v4946
        %v5006 = vunpack.c.l.b16 %v4947
        %v5007 = vunpack.c.h.b16 %v4947
        %v5008 = vunpack.c.l.b16 %v4948
        %v5009 = vunpack.c.h.b16 %v4948
        %v5010 = vunpack.c.l.b16 %v4949
        %v5011 = vunpack.c.h.b16 %v4949
        %v5012 = vunpack.c.l.b16 %v4950
        %v5013 = vunpack.c.h.b16 %v4950
        %v5014 = vunpack.c.l.b16 %v4951
        %v5015 = vunpack.c.h.b16 %v4951
        %v5016 = vpack.c.b16 %v4980, %v4980
        %v5017 = vpack.c.b16 %v4981, %v4981
        %v5018 = vpack.c.b16 %v4982, %v4982
        %v5019 = vpack.c.b16 %v4983, %v4983
        %v5020 = vpack.c.b16 %v4984, %v4984
        %v5021 = vpack.c.b16 %v4985, %v4985
        %v5022 = vpack.c.b16 %v4986, %v4986
        %v5023 = vpack.c.b16 %v4987, %v4987
        %v5024 = vpack.c.b16 %v4988, %v4988
        %v5025 = vpack.c.b16 %v4989, %v4989
        %v5026 = vpack.c.b16 %v4990, %v4990
        %v5027 = vpack.c.b16 %v4991, %v4991
        %v5028 = vpack.c.b16 %v4992, %v4992
        %v5029 = vpack.c.b16 %v4993, %v4993
        %v5030 = vpack.c.b16 %v4994, %v4994
        %v5031 = vpack.c.b16 %v4995, %v4995
        %v5032 = vpack.c.b16 %v4996, %v4996
        %v5033 = vpack.c.b16 %v4997, %v4997
        %v5034 = vpack.c.b16 %v4998, %v4998
        %v5035 = vpack.c.b16 %v4999, %v4999
        %v5036 = vpack.c.b16 %v5000, %v5000
        %v5037 = vpack.c.b16 %v5001, %v5001
        %v5038 = vpack.c.b16 %v5002, %v5002
        %v5039 = vpack.c.b16 %v5003, %v5003
        %v5040 = vpack.c.b16 %v5004, %v5004
        %v5041 = vpack.c.b16 %v5005, %v5005
        %v5042 = vpack.c.b16 %v5006, %v5006
        %v5043 = vpack.c.b16 %v5007, %v5007
        %v5044 = vpack.c.b16 %v5008, %v5008
        %v5045 = vpack.c.b16 %v5009, %v5009
        %v5046 = vpack.c.b16 %v5010, %v5010
        %v5047 = vpack.c.b16 %v5011, %v5011
        %v5048 = vpack.c.b16 %v5012, %v5012
        %v5049 = vpack.c.b16 %v5013, %v5013
        %v5050 = vpack.c.b16 %v5014, %v5014
        %v5051 = vpack.c.b16 %v5015, %v5015
        %vm5052 = vcmask 1041408
        %vm5053 = vcmask 1045508
        %vm5054 = vmor %vm5052, %vm5053
        %v5055 = vrot.slane %v5016, 6
        %v5056 = vrot.slane %v5055, 4
        %v5057 = vrot.slane %v5017, 6
        %v5058 = vsel %vm5054, %v5056, %v5057
        %v5059 = vrot.slane %v5057, 4
        %v5060 = vrot.slane %v5018, 6
        %v5061 = vsel %vm5054, %v5059, %v5060
        %v5062 = vrot.slane %v5060, 4
        %v5063 = vrot.slane %v5019, 6
        %v5064 = vsel %vm5054, %v5062, %v5063
        %v5065 = vrot.slane %v5063, 4
        %v5066 = vrot.slane %v5020, 6
        %v5067 = vsel %vm5054, %v5065, %v5066
        %v5068 = vrot.slane %v5066, 4
        %v5069 = vrot.slane %v5021, 6
        %v5070 = vsel %vm5054, %v5068, %v5069
        %v5071 = vrot.slane %v5069, 4
        %v5072 = vrot.slane %v5022, 6
        %v5073 = vsel %vm5054, %v5071, %v5072
        %v5074 = vrot.slane %v5072, 4
        %v5075 = vrot.slane %v5023, 6
        %v5076 = vsel %vm5054, %v5074, %v5075
        %v5077 = vrot.slane %v5075, 4
        %v5078 = vrot.slane %v5024, 6
        %v5079 = vsel %vm5054, %v5077, %v5078
        %v5080 = vrot.slane %v5078, 4
        %v5081 = vrot.slane %v5025, 6
        %v5082 = vsel %vm5054, %v5080, %v5081
        %v5083 = vrot.slane %v5081, 4
        %v5084 = vrot.slane %v5026, 6
        %v5085 = vsel %vm5054, %v5083, %v5084
        %v5086 = vrot.slane %v5084, 4
        %v5087 = vrot.slane %v5027, 6
        %v5088 = vsel %vm5054, %v5086, %v5087
        %v5089 = vrot.slane %v5087, 4
        %v5090 = vrot.slane %v5028, 6
        %v5091 = vsel %vm5054, %v5089, %v5090
        %v5092 = vrot.slane %v5090, 4
        %v5093 = vrot.slane %v5029, 6
        %v5094 = vsel %vm5054, %v5092, %v5093
        %v5095 = vrot.slane %v5093, 4
        %v5096 = vrot.slane %v5030, 6
        %v5097 = vsel %vm5054, %v5095, %v5096
        %v5098 = vrot.slane %v5096, 4
        %v5099 = vrot.slane %v5031, 6
        %v5100 = vsel %vm5054, %v5098, %v5099
        %v5101 = vrot.slane %v5099, 4
        %v5102 = vrot.slane %v5032, 6
        %v5103 = vsel %vm5054, %v5101, %v5102
        %v5104 = vrot.slane %v5102, 4
        %v5105 = vrot.slane %v5033, 6
        %v5106 = vsel %vm5054, %v5104, %v5105
        %v5107 = vrot.slane %v5105, 4
        %v5108 = vrot.slane %v5034, 6
        %v5109 = vsel %vm5054, %v5107, %v5108
        %v5110 = vrot.slane %v5108, 4
        %v5111 = vrot.slane %v5035, 6
        %v5112 = vsel %vm5054, %v5110, %v5111
        %v5113 = vrot.slane %v5111, 4
        %v5114 = vrot.slane %v5036, 6
        %v5115 = vsel %vm5054, %v5113, %v5114
        %v5116 = vrot.slane %v5114, 4
        %v5117 = vrot.slane %v5037, 6
        %v5118 = vsel %vm5054, %v5116, %v5117
        %v5119 = vrot.slane %v5117, 4
        %v5120 = vrot.slane %v5038, 6
        %v5121 = vsel %vm5054, %v5119, %v5120
        %v5122 = vrot.slane %v5120, 4
        %v5123 = vrot.slane %v5039, 6
        %v5124 = vsel %vm5054, %v5122, %v5123
        %v5125 = vrot.slane %v5123, 4
        %v5126 = vrot.slane %v5040, 6
        %v5127 = vsel %vm5054, %v5125, %v5126
        %v5128 = vrot.slane %v5126, 4
        %v5129 = vrot.slane %v5041, 6
        %v5130 = vsel %vm5054, %v5128, %v5129
        %v5131 = vrot.slane %v5129, 4
        %v5132 = vrot.slane %v5042, 6
        %v5133 = vsel %vm5054, %v5131, %v5132
        %v5134 = vrot.slane %v5132, 4
        %v5135 = vrot.slane %v5043, 6
        %v5136 = vsel %vm5054, %v5134, %v5135
        %v5137 = vrot.slane %v5135, 4
        %v5138 = vrot.slane %v5044, 6
        %v5139 = vsel %vm5054, %v5137, %v5138
        %v5140 = vrot.slane %v5138, 4
        %v5141 = vrot.slane %v5045, 6
        %v5142 = vsel %vm5054, %v5140, %v5141
        %v5143 = vrot.slane %v5141, 4
        %v5144 = vrot.slane %v5046, 6
        %v5145 = vsel %vm5054, %v5143, %v5144
        %v5146 = vrot.slane %v5144, 4
        %v5147 = vrot.slane %v5047, 6
        %v5148 = vsel %vm5054, %v5146, %v5147
        %v5149 = vrot.slane %v5147, 4
        %v5150 = vrot.slane %v5048, 6
        %v5151 = vsel %vm5054, %v5149, %v5150
        %v5152 = vrot.slane %v5150, 4
        %v5153 = vrot.slane %v5049, 6
        %v5154 = vsel %vm5054, %v5152, %v5153
        %v5155 = vrot.slane %v5153, 4
        %v5156 = vrot.slane %v5050, 6
        %v5157 = vsel %vm5054, %v5155, %v5156
        %v5158 = vrot.slane %v5156, 4
        %v5159 = vrot.slane %v5051, 6
        %v5160 = vsel %vm5054, %v5158, %v5159
        %v5161 = vrot.slane %v5159, 4
        %5199 = vst [vmem:[#allocation2 + $0x10] sm:$0xc] %v5055
        %5200 = vst [vmem:[#allocation2 + $0x14] sm:$0xf] %v5058
        %5201 = vst [vmem:[#allocation2 + $0x18] sm:$0xf] %v5061
        %5202 = vst [vmem:[#allocation2 + $0x1c] sm:$0xf] %v5064
        %5203 = vst [vmem:[#allocation2 + $0x20] sm:$0xf] %v5067
        %5204 = vst [vmem:[#allocation2 + $0x24] sm:$0xf] %v5070
        %5205 = vst [vmem:[#allocation2 + $0x28] sm:$0xf] %v5073
        %5206 = vst [vmem:[#allocation2 + $0x2c] sm:$0xf] %v5076
        %5207 = vst [vmem:[#allocation2 + $0x30] sm:$0xf] %v5079
        %5208 = vst [vmem:[#allocation2 + $0x34] sm:$0xf] %v5082
        %5209 = vst [vmem:[#allocation2 + $0x38] sm:$0xf] %v5085
        %5210 = vst [vmem:[#allocation2 + $0x3c] sm:$0xf] %v5088
        %5211 = vst [vmem:[#allocation2 + $0x40] sm:$0xf] %v5091
        %5212 = vst [vmem:[#allocation2 + $0x44] sm:$0xf] %v5094
        %5213 = vst [vmem:[#allocation2 + $0x48] sm:$0xf] %v5097
        %5214 = vst [vmem:[#allocation2 + $0x4c] sm:$0xf] %v5100
        %5215 = vst [vmem:[#allocation2 + $0x50] sm:$0xf] %v5103
        %5216 = vst [vmem:[#allocation2 + $0x54] sm:$0xf] %v5106
        %5217 = vst [vmem:[#allocation2 + $0x58] sm:$0xf] %v5109
        %5218 = vst [vmem:[#allocation2 + $0x5c] sm:$0xf] %v5112
        %5219 = vst [vmem:[#allocation2 + $0x60] sm:$0xf] %v5115
        %5220 = vst [vmem:[#allocation2 + $0x64] sm:$0xf] %v5118
        %5221 = vst [vmem:[#allocation2 + $0x68] sm:$0xf] %v5121
        %5222 = vst [vmem:[#allocation2 + $0x6c] sm:$0xf] %v5124
        %5223 = vst [vmem:[#allocation2 + $0x70] sm:$0xf] %v5127
        %5224 = vst [vmem:[#allocation2 + $0x74] sm:$0xf] %v5130
        %5225 = vst [vmem:[#allocation2 + $0x78] sm:$0xf] %v5133
        %5226 = vst [vmem:[#allocation2 + $0x7c] sm:$0xf] %v5136
        %5227 = vst [vmem:[#allocation2 + $0x80] sm:$0xf] %v5139
        %5228 = vst [vmem:[#allocation2 + $0x84] sm:$0xf] %v5142
        %5229 = vst [vmem:[#allocation2 + $0x88] sm:$0xf] %v5145
        %5230 = vst [vmem:[#allocation2 + $0x8c] sm:$0xf] %v5148
        %5231 = vst [vmem:[#allocation2 + $0x90] sm:$0xf] %v5151
        %5232 = vst [vmem:[#allocation2 + $0x94] sm:$0xf] %v5154
        %5233 = vst [vmem:[#allocation2 + $0x98] sm:$0xf] %v5157
        %5234 = vst [vmem:[#allocation2 + $0x9c] sm:$0xf] %v5160
        %5235 = vst [vmem:[#allocation2 + $0xa0] sm:$0x3] %v5161
        %v5236 = vld [vmem:[#allocation2 + $0x8] sm:$0xf]
        %v5237 = vld [vmem:[#allocation2 + $0xc] sm:$0xf]
        %v5238 = vld [vmem:[#allocation2 + $0x10] sm:$0xf]
        %v5239 = vld [vmem:[#allocation2 + $0x14] sm:$0xf]
        %v5240 = vld [vmem:[#allocation2 + $0x18] sm:$0xf]
        %v5241 = vld [vmem:[#allocation2 + $0x1c] sm:$0xf]
        %v5242 = vld [vmem:[#allocation2 + $0x20] sm:$0xf]
        %v5243 = vld [vmem:[#allocation2 + $0x24] sm:$0xf]
        %v5244 = vld [vmem:[#allocation2 + $0x28] sm:$0xf]
        %v5245 = vld [vmem:[#allocation2 + $0x2c] sm:$0xf]
        %v5246 = vld [vmem:[#allocation2 + $0x30] sm:$0xf]
        %v5247 = vld [vmem:[#allocation2 + $0x34] sm:$0xf]
        %v5248 = vld [vmem:[#allocation2 + $0x38] sm:$0xf]
        %v5249 = vld [vmem:[#allocation2 + $0x3c] sm:$0xf]
        %v5250 = vld [vmem:[#allocation2 + $0x40] sm:$0xf]
        %v5251 = vld [vmem:[#allocation2 + $0x44] sm:$0xf]
        %v5252 = vld [vmem:[#allocation2 + $0x48] sm:$0xf]
        %v5253 = vld [vmem:[#allocation2 + $0x4c] sm:$0xf]
        %v5254 = vld [vmem:[#allocation2 + $0x50] sm:$0xf]
        %v5255 = vld [vmem:[#allocation2 + $0x54] sm:$0xf]
        %v5256 = vld [vmem:[#allocation2 + $0x58] sm:$0xf]
        %v5257 = vld [vmem:[#allocation2 + $0x5c] sm:$0xf]
        %v5258 = vld [vmem:[#allocation2 + $0x60] sm:$0xf]
        %v5259 = vld [vmem:[#allocation2 + $0x64] sm:$0xf]
        %v5260 = vld [vmem:[#allocation2 + $0x68] sm:$0xf]
        %v5261 = vld [vmem:[#allocation2 + $0x6c] sm:$0xf]
        %v5262 = vld [vmem:[#allocation2 + $0x70] sm:$0xf]
        %v5263 = vld [vmem:[#allocation2 + $0x74] sm:$0xf]
        %v5264 = vld [vmem:[#allocation2 + $0x78] sm:$0xf]
        %v5265 = vld [vmem:[#allocation2 + $0x7c] sm:$0xf]
        %v5266 = vld [vmem:[#allocation2 + $0x80] sm:$0xf]
        %v5267 = vld [vmem:[#allocation2 + $0x84] sm:$0xf]
        %v5268 = vld [vmem:[#allocation2 + $0x88] sm:$0xf]
        %v5269 = vld [vmem:[#allocation2 + $0x8c] sm:$0xf]
        %v5270 = vld [vmem:[#allocation2 + $0x90] sm:$0xf]
        %v5271 = vld [vmem:[#allocation2 + $0x94] sm:$0xf]
        %v5272 = vld [vmem:[#allocation2 + $0x98] sm:$0x1]
        %v5273 = vld [vmem:[#allocation2 + $0x8] sm:$0xe]
        %v5274 = vld [vmem:[#allocation2 + $0x98] sm:$0x3]
        %v5312 = vunpack.c.l.b16 %v5236
        %v5313 = vunpack.c.l.b16 %v5237
        %v5314 = vunpack.c.l.b16 %v5238
        %v5315 = vunpack.c.l.b16 %v5239
        %v5316 = vunpack.c.l.b16 %v5240
        %v5317 = vunpack.c.l.b16 %v5241
        %v5318 = vunpack.c.l.b16 %v5242
        %v5319 = vunpack.c.l.b16 %v5243
        %v5320 = vunpack.c.l.b16 %v5244
        %v5321 = vunpack.c.l.b16 %v5245
        %v5322 = vunpack.c.l.b16 %v5246
        %v5323 = vunpack.c.l.b16 %v5247
        %v5324 = vunpack.c.l.b16 %v5248
        %v5325 = vunpack.c.l.b16 %v5249
        %v5326 = vunpack.c.l.b16 %v5250
        %v5327 = vunpack.c.l.b16 %v5251
        %v5328 = vunpack.c.l.b16 %v5252
        %v5329 = vunpack.c.l.b16 %v5253
        %v5330 = vunpack.c.l.b16 %v5254
        %v5331 = vunpack.c.l.b16 %v5255
        %v5332 = vunpack.c.l.b16 %v5256
        %v5333 = vunpack.c.l.b16 %v5257
        %v5334 = vunpack.c.l.b16 %v5258
        %v5335 = vunpack.c.l.b16 %v5259
        %v5336 = vunpack.c.l.b16 %v5260
        %v5337 = vunpack.c.l.b16 %v5261
        %v5338 = vunpack.c.l.b16 %v5262
        %v5339 = vunpack.c.l.b16 %v5263
        %v5340 = vunpack.c.l.b16 %v5264
        %v5341 = vunpack.c.l.b16 %v5265
        %v5342 = vunpack.c.l.b16 %v5266
        %v5343 = vunpack.c.l.b16 %v5267
        %v5344 = vunpack.c.l.b16 %v5268
        %v5345 = vunpack.c.l.b16 %v5269
        %v5346 = vunpack.c.l.b16 %v5270
        %v5347 = vunpack.c.l.b16 %v5271
        %v5348 = vunpack.c.l.b16 %v5272
        %v5349 = vpack.c.b16 %v5313, %v5312
        %v5350 = vpack.c.b16 %v5315, %v5314
        %v5351 = vpack.c.b16 %v5317, %v5316
        %v5352 = vpack.c.b16 %v5319, %v5318
        %v5353 = vpack.c.b16 %v5321, %v5320
        %v5354 = vpack.c.b16 %v5323, %v5322
        %v5355 = vpack.c.b16 %v5325, %v5324
        %v5356 = vpack.c.b16 %v5327, %v5326
        %v5357 = vpack.c.b16 %v5329, %v5328
        %v5358 = vpack.c.b16 %v5331, %v5330
        %v5359 = vpack.c.b16 %v5333, %v5332
        %v5360 = vpack.c.b16 %v5335, %v5334
        %v5361 = vpack.c.b16 %v5337, %v5336
        %v5362 = vpack.c.b16 %v5339, %v5338
        %v5363 = vpack.c.b16 %v5341, %v5340
        %v5364 = vpack.c.b16 %v5343, %v5342
        %v5365 = vpack.c.b16 %v5345, %v5344
        %v5366 = vpack.c.b16 %v5347, %v5346
        %v5367 = vpack.c.b16 %v5348, %v5348
        %v5369 = vunpack.c.l.b16 %v5273
        %v5370 = vpack.c.b16 %v5313, %v5369
        %v5372 = vshrl.u32 %v5370, 16
        %v5374 = vshll.u32 %v5370, 16
        %v5376 = vrot.slane %v5374, 1
        %v5377 = vor.u32 %v5372, %v5376
        %v5379 = vshll.u32 %v5350, 16
        %v5381 = vrot.slane %v5379, 1
        %v5382 = vsel %vm1198, %v5377, %v5381
        %v5383 = vshrl.u32 %v5350, 16
        %v5385 = vor.u32 %v5383, %v5381
        %v5387 = vshll.u32 %v5351, 16
        %v5389 = vrot.slane %v5387, 1
        %v5390 = vsel %vm1198, %v5385, %v5389
        %v5391 = vshrl.u32 %v5351, 16
        %v5393 = vor.u32 %v5391, %v5389
        %v5395 = vshll.u32 %v5352, 16
        %v5397 = vrot.slane %v5395, 1
        %v5398 = vsel %vm1198, %v5393, %v5397
        %v5399 = vshrl.u32 %v5352, 16
        %v5401 = vor.u32 %v5399, %v5397
        %v5403 = vshll.u32 %v5353, 16
        %v5405 = vrot.slane %v5403, 1
        %v5406 = vsel %vm1198, %v5401, %v5405
        %v5407 = vshrl.u32 %v5353, 16
        %v5409 = vor.u32 %v5407, %v5405
        %v5411 = vshll.u32 %v5354, 16
        %v5413 = vrot.slane %v5411, 1
        %v5414 = vsel %vm1198, %v5409, %v5413
        %v5415 = vshrl.u32 %v5354, 16
        %v5417 = vor.u32 %v5415, %v5413
        %v5419 = vshll.u32 %v5355, 16
        %v5421 = vrot.slane %v5419, 1
        %v5422 = vsel %vm1198, %v5417, %v5421
        %v5423 = vshrl.u32 %v5355, 16
        %v5425 = vor.u32 %v5423, %v5421
        %v5427 = vshll.u32 %v5356, 16
        %v5429 = vrot.slane %v5427, 1
        %v5430 = vsel %vm1198, %v5425, %v5429
        %v5431 = vshrl.u32 %v5356, 16
        %v5433 = vor.u32 %v5431, %v5429
        %v5435 = vshll.u32 %v5357, 16
        %v5437 = vrot.slane %v5435, 1
        %v5438 = vsel %vm1198, %v5433, %v5437
        %v5439 = vshrl.u32 %v5357, 16
        %v5441 = vor.u32 %v5439, %v5437
        %v5443 = vshll.u32 %v5358, 16
        %v5445 = vrot.slane %v5443, 1
        %v5446 = vsel %vm1198, %v5441, %v5445
        %v5447 = vshrl.u32 %v5358, 16
        %v5449 = vor.u32 %v5447, %v5445
        %v5451 = vshll.u32 %v5359, 16
        %v5453 = vrot.slane %v5451, 1
        %v5454 = vsel %vm1198, %v5449, %v5453
        %v5455 = vshrl.u32 %v5359, 16
        %v5457 = vor.u32 %v5455, %v5453
        %v5459 = vshll.u32 %v5360, 16
        %v5461 = vrot.slane %v5459, 1
        %v5462 = vsel %vm1198, %v5457, %v5461
        %v5463 = vshrl.u32 %v5360, 16
        %v5465 = vor.u32 %v5463, %v5461
        %v5467 = vshll.u32 %v5361, 16
        %v5469 = vrot.slane %v5467, 1
        %v5470 = vsel %vm1198, %v5465, %v5469
        %v5471 = vshrl.u32 %v5361, 16
        %v5473 = vor.u32 %v5471, %v5469
        %v5475 = vshll.u32 %v5362, 16
        %v5477 = vrot.slane %v5475, 1
        %v5478 = vsel %vm1198, %v5473, %v5477
        %v5479 = vshrl.u32 %v5362, 16
        %v5481 = vor.u32 %v5479, %v5477
        %v5483 = vshll.u32 %v5363, 16
        %v5485 = vrot.slane %v5483, 1
        %v5486 = vsel %vm1198, %v5481, %v5485
        %v5487 = vshrl.u32 %v5363, 16
        %v5489 = vor.u32 %v5487, %v5485
        %v5491 = vshll.u32 %v5364, 16
        %v5493 = vrot.slane %v5491, 1
        %v5494 = vsel %vm1198, %v5489, %v5493
        %v5495 = vshrl.u32 %v5364, 16
        %v5497 = vor.u32 %v5495, %v5493
        %v5499 = vshll.u32 %v5365, 16
        %v5501 = vrot.slane %v5499, 1
        %v5502 = vsel %vm1198, %v5497, %v5501
        %v5503 = vshrl.u32 %v5365, 16
        %v5505 = vor.u32 %v5503, %v5501
        %v5507 = vshll.u32 %v5366, 16
        %v5509 = vrot.slane %v5507, 1
        %v5510 = vsel %vm1198, %v5505, %v5509
        %v5511 = vshrl.u32 %v5366, 16
        %v5513 = vor.u32 %v5511, %v5509
        %v5515 = vshll.u32 %v5367, 16
        %v5517 = vrot.slane %v5515, 1
        %v5518 = vsel %vm1198, %v5513, %v5517
        %v5519 = vshrl.u32 %v5367, 16
        %v5522 = vunpack.c.l.b16 %v5274
        %v5523 = vpack.c.b16 %v5522, %v5522
        %v5524 = vrot.slane %v5370, 1
        %v5525 = vrot.slane %v5350, 1
        %v5526 = vsel %vm1352, %v5524, %v5525
        %v5527 = vrot.slane %v5351, 1
        %v5528 = vsel %vm1352, %v5525, %v5527
        %v5529 = vrot.slane %v5352, 1
        %v5530 = vsel %vm1352, %v5527, %v5529
        %v5531 = vrot.slane %v5353, 1
        %v5532 = vsel %vm1352, %v5529, %v5531
        %v5533 = vrot.slane %v5354, 1
        %v5534 = vsel %vm1352, %v5531, %v5533
        %v5535 = vrot.slane %v5355, 1
        %v5536 = vsel %vm1352, %v5533, %v5535
        %v5537 = vrot.slane %v5356, 1
        %v5538 = vsel %vm1352, %v5535, %v5537
        %v5539 = vrot.slane %v5357, 1
        %v5540 = vsel %vm1352, %v5537, %v5539
        %v5541 = vrot.slane %v5358, 1
        %v5542 = vsel %vm1352, %v5539, %v5541
        %v5543 = vrot.slane %v5359, 1
        %v5544 = vsel %vm1352, %v5541, %v5543
        %v5545 = vrot.slane %v5360, 1
        %v5546 = vsel %vm1352, %v5543, %v5545
        %v5547 = vrot.slane %v5361, 1
        %v5548 = vsel %vm1352, %v5545, %v5547
        %v5549 = vrot.slane %v5362, 1
        %v5550 = vsel %vm1352, %v5547, %v5549
        %v5551 = vrot.slane %v5363, 1
        %v5552 = vsel %vm1352, %v5549, %v5551
        %v5553 = vrot.slane %v5364, 1
        %v5554 = vsel %vm1352, %v5551, %v5553
        %v5555 = vrot.slane %v5365, 1
        %v5556 = vsel %vm1352, %v5553, %v5555
        %v5557 = vrot.slane %v5366, 1
        %v5558 = vsel %vm1352, %v5555, %v5557
        %v5559 = vrot.slane %v5523, 1
        %v5560 = vsel %vm1352, %v5557, %v5559
        %v5561 = vld [vmem:[#allocation8] sm:$0xf]
        %v5562 = vld [vmem:[#allocation8 + $0x4] sm:$0xf]
        %v5563 = vld [vmem:[#allocation8 + $0x8] sm:$0xf]
        %v5564 = vld [vmem:[#allocation8 + $0xc] sm:$0xf]
        %v5565 = vld [vmem:[#allocation8 + $0x10] sm:$0xf]
        %v5566 = vld [vmem:[#allocation8 + $0x14] sm:$0xf]
        %v5567 = vld [vmem:[#allocation8 + $0x18] sm:$0xf]
        %v5568 = vld [vmem:[#allocation8 + $0x1c] sm:$0xf]
        %v5569 = vld [vmem:[#allocation8 + $0x20] sm:$0xf]
        %v5570 = vld [vmem:[#allocation8 + $0x24] sm:$0xf]
        %v5571 = vld [vmem:[#allocation8 + $0x28] sm:$0xf]
        %v5572 = vld [vmem:[#allocation8 + $0x2c] sm:$0xf]
        %v5573 = vld [vmem:[#allocation8 + $0x30] sm:$0xf]
        %v5574 = vld [vmem:[#allocation8 + $0x34] sm:$0xf]
        %v5575 = vld [vmem:[#allocation8 + $0x38] sm:$0xf]
        %v5576 = vld [vmem:[#allocation8 + $0x3c] sm:$0xf]
        %v5577 = vld [vmem:[#allocation8 + $0x40] sm:$0xf]
        %v5578 = vld [vmem:[#allocation8 + $0x44] sm:$0xf]
        %v5579 = vld [vmem:[#allocation8 + $0x48] sm:$0xf]
        %v5580 = vld [vmem:[#allocation8 + $0x4c] sm:$0xf]
        %v5581 = vld [vmem:[#allocation8 + $0x50] sm:$0xf]
        %v5582 = vld [vmem:[#allocation8 + $0x54] sm:$0xf]
        %v5583 = vld [vmem:[#allocation8 + $0x58] sm:$0xf]
        %v5584 = vld [vmem:[#allocation8 + $0x5c] sm:$0xf]
        %v5585 = vld [vmem:[#allocation8 + $0x60] sm:$0xf]
        %v5586 = vld [vmem:[#allocation8 + $0x64] sm:$0xf]
        %v5587 = vld [vmem:[#allocation8 + $0x68] sm:$0xf]
        %v5588 = vld [vmem:[#allocation8 + $0x6c] sm:$0xf]
        %v5589 = vld [vmem:[#allocation8 + $0x70] sm:$0xf]
        %v5590 = vld [vmem:[#allocation8 + $0x74] sm:$0xf]
        %v5591 = vld [vmem:[#allocation8 + $0x78] sm:$0xf]
        %v5592 = vld [vmem:[#allocation8 + $0x7c] sm:$0xf]
        %v5593 = vld [vmem:[#allocation8 + $0x80] sm:$0xf]
        %v5594 = vld [vmem:[#allocation8 + $0x84] sm:$0xf]
        %v5595 = vld [vmem:[#allocation8 + $0x88] sm:$0xf]
        %v5596 = vld [vmem:[#allocation8 + $0x8c] sm:$0xf]
        %v5597 = vld [vmem:[#allocation8 + $0x90] sm:$0xf]
        %v5598 = vld [vmem:[#allocation8 + $0x94] sm:$0xf]
        %v5599 = vld [vmem:[#allocation8 + $0x98] sm:$0xf]
        %v5600 = vld [vmem:[#allocation8 + $0x9c] sm:$0xf]
        %v5601 = vld [vmem:[#allocation8 + $0xa0] sm:$0xf]
        %v5602 = vld [vmem:[#allocation8 + $0xa4] sm:$0xf]
        %v5603 = vld [vmem:[#allocation8 + $0xa8] sm:$0xf]
        %v5604 = vld [vmem:[#allocation8 + $0xac] sm:$0xf]
        %v5605 = vld [vmem:[#allocation8 + $0xb0] sm:$0xf]
        %v5606 = vld [vmem:[#allocation8 + $0xb4] sm:$0xf]
        %v5607 = vld [vmem:[#allocation8 + $0xb8] sm:$0xf]
        %v5608 = vld [vmem:[#allocation8 + $0xbc] sm:$0xf]
        %v5609 = vld [vmem:[#allocation2 + $0x10] sm:$0xe]
        %v5610 = vld [vmem:[#allocation2 + $0x98] sm:$0xf]
        %v5611 = vld [vmem:[#allocation2 + $0x9c] sm:$0xf]
        %v5612 = vld [vmem:[#allocation2 + $0xa0] sm:$0x3]
        %v5613 = vld [vmem:[#allocation2 + $0x10] sm:$0xc]
        %v5614 = vld [vmem:[#allocation2 + $0xa0] sm:$0x7]
        %v5619 = vunpack.c.l.b16 %v5609
        %v5620 = vunpack.c.l.b16 %v5610
        %v5621 = vunpack.c.l.b16 %v5611
        %v5622 = vunpack.c.l.b16 %v5612
        %v5623 = vpack.c.b16 %v5315, %v5619
        %v5624 = vpack.c.b16 %v5621, %v5620
        %v5625 = vpack.c.b16 %v5622, %v5622
        %v5627 = vunpack.c.l.b16 %v5613
        %v5628 = vpack.c.b16 %v5315, %v5627
        %v5630 = vshrl.u32 %v5628, 16
        %v5632 = vshll.u32 %v5628, 16
        %v5634 = vrot.slane %v5632, 1
        %v5635 = vor.u32 %v5630, %v5634
        %v5636 = vsel %vm1198, %v5635, %v5389
        %v5638 = vshll.u32 %v5624, 16
        %v5640 = vrot.slane %v5638, 1
        %v5641 = vsel %vm1198, %v5513, %v5640
        %v5642 = vshrl.u32 %v5624, 16
        %v5644 = vor.u32 %v5642, %v5640
        %v5646 = vshll.u32 %v5625, 16
        %v5648 = vrot.slane %v5646, 1
        %v5649 = vsel %vm1198, %v5644, %v5648
        %v5650 = vshrl.u32 %v5625, 16
        %v5652 = vor.u32 %v5650, %v5648
        %v5654 = vunpack.c.l.b16 %v5614
        %v5655 = vpack.c.b16 %v5654, %v5654
        %v5656 = vrot.slane %v5628, 1
        %v5657 = vsel %vm1352, %v5656, %v5527
        %v5658 = vrot.slane %v5624, 1
        %v5659 = vsel %vm1352, %v5557, %v5658
        %v5660 = vrot.slane %v5655, 1
        %v5661 = vsel %vm1352, %v5658, %v5660
        %s5662 = scalar_lea.vmem [#allocation8], 192
        %v5663 = vld [vmem:[%s5662] sm:$0xf]
        %v5664 = vld [vmem:[%s5662 + $0x4] sm:$0xf]
        %v5665 = vld [vmem:[%s5662 + $0x8] sm:$0xf]
        %v5666 = vld [vmem:[%s5662 + $0xc] sm:$0xf]
        %v5667 = vld [vmem:[%s5662 + $0x10] sm:$0xf]
        %v5668 = vld [vmem:[%s5662 + $0x14] sm:$0xf]
        %v5669 = vld [vmem:[%s5662 + $0x18] sm:$0xf]
        %v5670 = vld [vmem:[%s5662 + $0x1c] sm:$0xf]
        %v5671 = vld [vmem:[%s5662 + $0x20] sm:$0xf]
        %v5672 = vld [vmem:[%s5662 + $0x24] sm:$0xf]
        %v5673 = vld [vmem:[%s5662 + $0x28] sm:$0xf]
        %v5674 = vld [vmem:[%s5662 + $0x2c] sm:$0xf]
        %v5675 = vld [vmem:[%s5662 + $0x30] sm:$0xf]
        %v5676 = vld [vmem:[%s5662 + $0x34] sm:$0xf]
        %v5677 = vld [vmem:[%s5662 + $0x38] sm:$0xf]
        %v5678 = vld [vmem:[%s5662 + $0x3c] sm:$0xf]
        %v5679 = vld [vmem:[%s5662 + $0x40] sm:$0xf]
        %v5680 = vld [vmem:[%s5662 + $0x44] sm:$0xf]
        %v5681 = vld [vmem:[%s5662 + $0x48] sm:$0xf]
        %v5682 = vld [vmem:[%s5662 + $0x4c] sm:$0xf]
        %v5683 = vld [vmem:[%s5662 + $0x50] sm:$0xf]
        %v5684 = vld [vmem:[%s5662 + $0x54] sm:$0xf]
        %v5685 = vld [vmem:[%s5662 + $0x58] sm:$0xf]
        %v5686 = vld [vmem:[%s5662 + $0x5c] sm:$0xf]
        %v5687 = vld [vmem:[%s5662 + $0x60] sm:$0xf]
        %v5688 = vld [vmem:[%s5662 + $0x64] sm:$0xf]
        %v5689 = vld [vmem:[%s5662 + $0x68] sm:$0xf]
        %v5690 = vld [vmem:[%s5662 + $0x6c] sm:$0xf]
        %v5691 = vld [vmem:[%s5662 + $0x70] sm:$0xf]
        %v5692 = vld [vmem:[%s5662 + $0x74] sm:$0xf]
        %v5693 = vld [vmem:[%s5662 + $0x78] sm:$0xf]
        %v5694 = vld [vmem:[%s5662 + $0x7c] sm:$0xf]
        %v5695 = vld [vmem:[%s5662 + $0x80] sm:$0xf]
        %v5696 = vld [vmem:[%s5662 + $0x84] sm:$0xf]
        %v5697 = vld [vmem:[%s5662 + $0x88] sm:$0xf]
        %v5698 = vld [vmem:[%s5662 + $0x8c] sm:$0xf]
        %v5699 = vld [vmem:[%s5662 + $0x90] sm:$0xf]
        %v5700 = vld [vmem:[%s5662 + $0x94] sm:$0xf]
        %v5701 = vld [vmem:[%s5662 + $0x98] sm:$0xf]
        %v5702 = vld [vmem:[%s5662 + $0x9c] sm:$0xf]
        %v5703 = vld [vmem:[%s5662 + $0xa0] sm:$0xf]
        %v5704 = vld [vmem:[%s5662 + $0xa4] sm:$0xf]
        %v5705 = vld [vmem:[%s5662 + $0xa8] sm:$0xf]
        %v5706 = vld [vmem:[%s5662 + $0xac] sm:$0xf]
        %v5707 = vld [vmem:[%s5662 + $0xb0] sm:$0xf]
        %v5708 = vld [vmem:[%s5662 + $0xb4] sm:$0xf]
        %v5709 = vld [vmem:[%s5662 + $0xb8] sm:$0xf]
        %v5710 = vld [vmem:[%s5662 + $0xbc] sm:$0xf]
        %v5712 = vshrl.u32 %v5623, 16
        %v5714 = vrot.slane %v5712, 1
        %v5715 = vshll.u32 %v5623, 16
        %v5717 = vrot.slane %v5715, 2
        %v5718 = vor.u32 %v5714, %v5717
        %v5719 = vrot.slane %v5391, 1
        %v5720 = vrot.slane %v5387, 2
        %v5721 = vor.u32 %v5719, %v5720
        %v5722 = vsel %vm1540, %v5718, %v5721
        %v5724 = vshrl.u32 %v5636, 16
        %v5726 = vrot.slane %v5724, 1
        %v5727 = vshll.u32 %v5636, 16
        %v5729 = vrot.slane %v5727, 2
        %v5730 = vor.u32 %v5726, %v5729
        %v5732 = vshrl.u32 %v5398, 16
        %v5734 = vrot.slane %v5732, 1
        %v5735 = vshll.u32 %v5398, 16
        %v5737 = vrot.slane %v5735, 2
        %v5738 = vor.u32 %v5734, %v5737
        %v5739 = vsel %vm1540, %v5730, %v5738
        %v5741 = vshrl.u32 %v5657, 16
        %v5743 = vrot.slane %v5741, 1
        %v5744 = vshll.u32 %v5657, 16
        %v5746 = vrot.slane %v5744, 2
        %v5747 = vor.u32 %v5743, %v5746
        %v5749 = vshrl.u32 %v5530, 16
        %v5751 = vrot.slane %v5749, 1
        %v5752 = vshll.u32 %v5530, 16
        %v5754 = vrot.slane %v5752, 2
        %v5755 = vor.u32 %v5751, %v5754
        %v5756 = vsel %vm1540, %v5747, %v5755
        %v5757 = vrot.slane %v5399, 1
        %v5758 = vrot.slane %v5395, 2
        %v5759 = vor.u32 %v5757, %v5758
        %v5760 = vsel %vm1540, %v5721, %v5759
        %v5762 = vshrl.u32 %v5406, 16
        %v5764 = vrot.slane %v5762, 1
        %v5765 = vshll.u32 %v5406, 16
        %v5767 = vrot.slane %v5765, 2
        %v5768 = vor.u32 %v5764, %v5767
        %v5769 = vsel %vm1540, %v5738, %v5768
        %v5771 = vshrl.u32 %v5532, 16
        %v5773 = vrot.slane %v5771, 1
        %v5774 = vshll.u32 %v5532, 16
        %v5776 = vrot.slane %v5774, 2
        %v5777 = vor.u32 %v5773, %v5776
        %v5778 = vsel %vm1540, %v5755, %v5777
        %v5779 = vrot.slane %v5407, 1
        %v5780 = vrot.slane %v5403, 2
        %v5781 = vor.u32 %v5779, %v5780
        %v5782 = vsel %vm1540, %v5759, %v5781
        %v5784 = vshrl.u32 %v5414, 16
        %v5786 = vrot.slane %v5784, 1
        %v5787 = vshll.u32 %v5414, 16
        %v5789 = vrot.slane %v5787, 2
        %v5790 = vor.u32 %v5786, %v5789
        %v5791 = vsel %vm1540, %v5768, %v5790
        %v5793 = vshrl.u32 %v5534, 16
        %v5795 = vrot.slane %v5793, 1
        %v5796 = vshll.u32 %v5534, 16
        %v5798 = vrot.slane %v5796, 2
        %v5799 = vor.u32 %v5795, %v5798
        %v5800 = vsel %vm1540, %v5777, %v5799
        %v5801 = vrot.slane %v5415, 1
        %v5802 = vrot.slane %v5411, 2
        %v5803 = vor.u32 %v5801, %v5802
        %v5804 = vsel %vm1540, %v5781, %v5803
        %v5806 = vshrl.u32 %v5422, 16
        %v5808 = vrot.slane %v5806, 1
        %v5809 = vshll.u32 %v5422, 16
        %v5811 = vrot.slane %v5809, 2
        %v5812 = vor.u32 %v5808, %v5811
        %v5813 = vsel %vm1540, %v5790, %v5812
        %v5815 = vshrl.u32 %v5536, 16
        %v5817 = vrot.slane %v5815, 1
        %v5818 = vshll.u32 %v5536, 16
        %v5820 = vrot.slane %v5818, 2
        %v5821 = vor.u32 %v5817, %v5820
        %v5822 = vsel %vm1540, %v5799, %v5821
        %v5823 = vrot.slane %v5423, 1
        %v5824 = vrot.slane %v5419, 2
        %v5825 = vor.u32 %v5823, %v5824
        %v5826 = vsel %vm1540, %v5803, %v5825
        %v5828 = vshrl.u32 %v5430, 16
        %v5830 = vrot.slane %v5828, 1
        %v5831 = vshll.u32 %v5430, 16
        %v5833 = vrot.slane %v5831, 2
        %v5834 = vor.u32 %v5830, %v5833
        %v5835 = vsel %vm1540, %v5812, %v5834
        %v5837 = vshrl.u32 %v5538, 16
        %v5839 = vrot.slane %v5837, 1
        %v5840 = vshll.u32 %v5538, 16
        %v5842 = vrot.slane %v5840, 2
        %v5843 = vor.u32 %v5839, %v5842
        %v5844 = vsel %vm1540, %v5821, %v5843
        %v5845 = vrot.slane %v5431, 1
        %v5846 = vrot.slane %v5427, 2
        %v5847 = vor.u32 %v5845, %v5846
        %v5848 = vsel %vm1540, %v5825, %v5847
        %v5850 = vshrl.u32 %v5438, 16
        %v5852 = vrot.slane %v5850, 1
        %v5853 = vshll.u32 %v5438, 16
        %v5855 = vrot.slane %v5853, 2
        %v5856 = vor.u32 %v5852, %v5855
        %v5857 = vsel %vm1540, %v5834, %v5856
        %v5859 = vshrl.u32 %v5540, 16
        %v5861 = vrot.slane %v5859, 1
        %v5862 = vshll.u32 %v5540, 16
        %v5864 = vrot.slane %v5862, 2
        %v5865 = vor.u32 %v5861, %v5864
        %v5866 = vsel %vm1540, %v5843, %v5865
        %v5867 = vrot.slane %v5439, 1
        %v5868 = vrot.slane %v5435, 2
        %v5869 = vor.u32 %v5867, %v5868
        %v5870 = vsel %vm1540, %v5847, %v5869
        %v5872 = vshrl.u32 %v5446, 16
        %v5874 = vrot.slane %v5872, 1
        %v5875 = vshll.u32 %v5446, 16
        %v5877 = vrot.slane %v5875, 2
        %v5878 = vor.u32 %v5874, %v5877
        %v5879 = vsel %vm1540, %v5856, %v5878
        %v5881 = vshrl.u32 %v5542, 16
        %v5883 = vrot.slane %v5881, 1
        %v5884 = vshll.u32 %v5542, 16
        %v5886 = vrot.slane %v5884, 2
        %v5887 = vor.u32 %v5883, %v5886
        %v5888 = vsel %vm1540, %v5865, %v5887
        %v5889 = vrot.slane %v5447, 1
        %v5890 = vrot.slane %v5443, 2
        %v5891 = vor.u32 %v5889, %v5890
        %v5892 = vsel %vm1540, %v5869, %v5891
        %v5894 = vshrl.u32 %v5454, 16
        %v5896 = vrot.slane %v5894, 1
        %v5897 = vshll.u32 %v5454, 16
        %v5899 = vrot.slane %v5897, 2
        %v5900 = vor.u32 %v5896, %v5899
        %v5901 = vsel %vm1540, %v5878, %v5900
        %v5903 = vshrl.u32 %v5544, 16
        %v5905 = vrot.slane %v5903, 1
        %v5906 = vshll.u32 %v5544, 16
        %v5908 = vrot.slane %v5906, 2
        %v5909 = vor.u32 %v5905, %v5908
        %v5910 = vsel %vm1540, %v5887, %v5909
        %v5911 = vrot.slane %v5455, 1
        %v5912 = vrot.slane %v5451, 2
        %v5913 = vor.u32 %v5911, %v5912
        %v5914 = vsel %vm1540, %v5891, %v5913
        %v5916 = vshrl.u32 %v5462, 16
        %v5918 = vrot.slane %v5916, 1
        %v5919 = vshll.u32 %v5462, 16
        %v5921 = vrot.slane %v5919, 2
        %v5922 = vor.u32 %v5918, %v5921
        %v5923 = vsel %vm1540, %v5900, %v5922
        %v5925 = vshrl.u32 %v5546, 16
        %v5927 = vrot.slane %v5925, 1
        %v5928 = vshll.u32 %v5546, 16
        %v5930 = vrot.slane %v5928, 2
        %v5931 = vor.u32 %v5927, %v5930
        %v5932 = vsel %vm1540, %v5909, %v5931
        %v5933 = vrot.slane %v5463, 1
        %v5934 = vrot.slane %v5459, 2
        %v5935 = vor.u32 %v5933, %v5934
        %v5936 = vsel %vm1540, %v5913, %v5935
        %v5938 = vshrl.u32 %v5470, 16
        %v5940 = vrot.slane %v5938, 1
        %v5941 = vshll.u32 %v5470, 16
        %v5943 = vrot.slane %v5941, 2
        %v5944 = vor.u32 %v5940, %v5943
        %v5945 = vsel %vm1540, %v5922, %v5944
        %v5947 = vshrl.u32 %v5548, 16
        %v5949 = vrot.slane %v5947, 1
        %v5950 = vshll.u32 %v5548, 16
        %v5952 = vrot.slane %v5950, 2
        %v5953 = vor.u32 %v5949, %v5952
        %v5954 = vsel %vm1540, %v5931, %v5953
        %v5955 = vrot.slane %v5471, 1
        %v5956 = vrot.slane %v5467, 2
        %v5957 = vor.u32 %v5955, %v5956
        %v5958 = vsel %vm1540, %v5935, %v5957
        %v5960 = vshrl.u32 %v5478, 16
        %v5962 = vrot.slane %v5960, 1
        %v5963 = vshll.u32 %v5478, 16
        %v5965 = vrot.slane %v5963, 2
        %v5966 = vor.u32 %v5962, %v5965
        %v5967 = vsel %vm1540, %v5944, %v5966
        %v5969 = vshrl.u32 %v5550, 16
        %v5971 = vrot.slane %v5969, 1
        %v5972 = vshll.u32 %v5550, 16
        %v5974 = vrot.slane %v5972, 2
        %v5975 = vor.u32 %v5971, %v5974
        %v5976 = vsel %vm1540, %v5953, %v5975
        %v5977 = vrot.slane %v5479, 1
        %v5978 = vrot.slane %v5475, 2
        %v5979 = vor.u32 %v5977, %v5978
        %v5980 = vsel %vm1540, %v5957, %v5979
        %v5982 = vshrl.u32 %v5486, 16
        %v5984 = vrot.slane %v5982, 1
        %v5985 = vshll.u32 %v5486, 16
        %v5987 = vrot.slane %v5985, 2
        %v5988 = vor.u32 %v5984, %v5987
        %v5989 = vsel %vm1540, %v5966, %v5988
        %v5991 = vshrl.u32 %v5552, 16
        %v5993 = vrot.slane %v5991, 1
        %v5994 = vshll.u32 %v5552, 16
        %v5996 = vrot.slane %v5994, 2
        %v5997 = vor.u32 %v5993, %v5996
        %v5998 = vsel %vm1540, %v5975, %v5997
        %v5999 = vrot.slane %v5487, 1
        %v6000 = vrot.slane %v5483, 2
        %v6001 = vor.u32 %v5999, %v6000
        %v6002 = vsel %vm1540, %v5979, %v6001
        %v6004 = vshrl.u32 %v5494, 16
        %v6006 = vrot.slane %v6004, 1
        %v6007 = vshll.u32 %v5494, 16
        %v6009 = vrot.slane %v6007, 2
        %v6010 = vor.u32 %v6006, %v6009
        %v6011 = vsel %vm1540, %v5988, %v6010
        %v6013 = vshrl.u32 %v5554, 16
        %v6015 = vrot.slane %v6013, 1
        %v6016 = vshll.u32 %v5554, 16
        %v6018 = vrot.slane %v6016, 2
        %v6019 = vor.u32 %v6015, %v6018
        %v6020 = vsel %vm1540, %v5997, %v6019
        %v6021 = vrot.slane %v5495, 1
        %v6022 = vrot.slane %v5491, 2
        %v6023 = vor.u32 %v6021, %v6022
        %v6024 = vsel %vm1540, %v6001, %v6023
        %v6026 = vshrl.u32 %v5502, 16
        %v6028 = vrot.slane %v6026, 1
        %v6029 = vshll.u32 %v5502, 16
        %v6031 = vrot.slane %v6029, 2
        %v6032 = vor.u32 %v6028, %v6031
        %v6033 = vsel %vm1540, %v6010, %v6032
        %v6035 = vshrl.u32 %v5556, 16
        %v6037 = vrot.slane %v6035, 1
        %v6038 = vshll.u32 %v5556, 16
        %v6040 = vrot.slane %v6038, 2
        %v6041 = vor.u32 %v6037, %v6040
        %v6042 = vsel %vm1540, %v6019, %v6041
        %v6043 = vrot.slane %v5503, 1
        %v6044 = vrot.slane %v5499, 2
        %v6045 = vor.u32 %v6043, %v6044
        %v6046 = vsel %vm1540, %v6023, %v6045
        %v6048 = vshrl.u32 %v5510, 16
        %v6050 = vrot.slane %v6048, 1
        %v6051 = vshll.u32 %v5510, 16
        %v6053 = vrot.slane %v6051, 2
        %v6054 = vor.u32 %v6050, %v6053
        %v6055 = vsel %vm1540, %v6032, %v6054
        %v6057 = vshrl.u32 %v5558, 16
        %v6059 = vrot.slane %v6057, 1
        %v6060 = vshll.u32 %v5558, 16
        %v6062 = vrot.slane %v6060, 2
        %v6063 = vor.u32 %v6059, %v6062
        %v6064 = vsel %vm1540, %v6041, %v6063
        %v6065 = vrot.slane %v5511, 1
        %v6066 = vrot.slane %v5507, 2
        %v6067 = vor.u32 %v6065, %v6066
        %v6068 = vsel %vm1540, %v6045, %v6067
        %v6070 = vshrl.u32 %v5641, 16
        %v6072 = vrot.slane %v6070, 1
        %v6073 = vshll.u32 %v5641, 16
        %v6075 = vrot.slane %v6073, 2
        %v6076 = vor.u32 %v6072, %v6075
        %v6077 = vsel %vm1540, %v6054, %v6076
        %v6079 = vshrl.u32 %v5659, 16
        %v6081 = vrot.slane %v6079, 1
        %v6082 = vshll.u32 %v5659, 16
        %v6084 = vrot.slane %v6082, 2
        %v6085 = vor.u32 %v6081, %v6084
        %v6086 = vsel %vm1540, %v6063, %v6085
        %v6087 = vrot.slane %v5642, 1
        %v6088 = vrot.slane %v5638, 2
        %v6089 = vor.u32 %v6087, %v6088
        %v6090 = vsel %vm1540, %v6067, %v6089
        %v6092 = vshrl.u32 %v5649, 16
        %v6094 = vrot.slane %v6092, 1
        %v6095 = vshll.u32 %v5649, 16
        %v6097 = vrot.slane %v6095, 2
        %v6098 = vor.u32 %v6094, %v6097
        %v6099 = vsel %vm1540, %v6076, %v6098
        %v6101 = vshrl.u32 %v5661, 16
        %v6103 = vrot.slane %v6101, 1
        %v6104 = vshll.u32 %v5661, 16
        %v6106 = vrot.slane %v6104, 2
        %v6107 = vor.u32 %v6103, %v6106
        %v6108 = vsel %vm1540, %v6085, %v6107
        %v6109 = vrot.slane %v5650, 1
        %v6110 = vrot.slane %v5646, 2
        %v6111 = vor.u32 %v6109, %v6110
        %v6112 = vsel %vm1540, %v6089, %v6111
        %v6114 = vshrl.u32 %v5652, 16
        %v6116 = vrot.slane %v6114, 1
        %v6117 = vshll.u32 %v5652, 16
        %v6119 = vrot.slane %v6117, 2
        %v6120 = vor.u32 %v6116, %v6119
        %v6121 = vsel %vm1540, %v6098, %v6120
        %v6123 = vshrl.u32 %v5660, 16
        %v6125 = vrot.slane %v6123, 1
        %v6126 = vshll.u32 %v5660, 16
        %v6128 = vrot.slane %v6126, 2
        %v6129 = vor.u32 %v6125, %v6128
        %v6130 = vsel %vm1540, %v6107, %v6129
        %v6233 = vunpack.c.l.b16 %v5663
        %v6234 = vunpack.c.l.b16 %v5664
        %v6235 = vunpack.c.l.b16 %v5665
        %v6236 = vunpack.c.l.b16 %v5666
        %v6237 = vunpack.c.l.b16 %v5667
        %v6238 = vunpack.c.l.b16 %v5668
        %v6239 = vunpack.c.l.b16 %v5669
        %v6240 = vunpack.c.l.b16 %v5670
        %v6241 = vunpack.c.l.b16 %v5671
        %v6242 = vunpack.c.l.b16 %v5672
        %v6243 = vunpack.c.l.b16 %v5673
        %v6244 = vunpack.c.l.b16 %v5674
        %v6245 = vunpack.c.l.b16 %v5675
        %v6246 = vunpack.c.l.b16 %v5676
        %v6247 = vunpack.c.l.b16 %v5677
        %v6248 = vunpack.c.l.b16 %v5678
        %v6249 = vunpack.c.l.b16 %v5679
        %v6250 = vunpack.c.l.b16 %v5680
        %v6251 = vunpack.c.l.b16 %v5681
        %v6252 = vunpack.c.l.b16 %v5682
        %v6253 = vunpack.c.l.b16 %v5683
        %v6254 = vunpack.c.l.b16 %v5684
        %v6255 = vunpack.c.l.b16 %v5685
        %v6256 = vunpack.c.l.b16 %v5686
        %v6257 = vunpack.c.l.b16 %v5687
        %v6258 = vunpack.c.l.b16 %v5688
        %v6259 = vunpack.c.l.b16 %v5689
        %v6260 = vunpack.c.l.b16 %v5690
        %v6261 = vunpack.c.l.b16 %v5691
        %v6262 = vunpack.c.l.b16 %v5692
        %v6263 = vunpack.c.l.b16 %v5693
        %v6264 = vunpack.c.l.b16 %v5694
        %v6265 = vunpack.c.l.b16 %v5695
        %v6266 = vunpack.c.l.b16 %v5696
        %v6267 = vunpack.c.l.b16 %v5697
        %v6268 = vunpack.c.l.b16 %v5698
        %v6269 = vunpack.c.l.b16 %v5699
        %v6270 = vunpack.c.l.b16 %v5700
        %v6271 = vunpack.c.l.b16 %v5701
        %v6272 = vunpack.c.l.b16 %v5702
        %v6273 = vunpack.c.l.b16 %v5703
        %v6274 = vunpack.c.l.b16 %v5704
        %v6275 = vunpack.c.l.b16 %v5705
        %v6276 = vunpack.c.l.b16 %v5706
        %v6277 = vunpack.c.l.b16 %v5707
        %v6278 = vunpack.c.l.b16 %v5708
        %v6279 = vunpack.c.l.b16 %v5709
        %v6280 = vunpack.c.l.b16 %v5710
        %v6281 = vpack.c.b16 %v6234, %v6233
        %v6282 = vpack.c.b16 %v6236, %v6235
        %v6283 = vpack.c.b16 %v6238, %v6237
        %v6284 = vpack.c.b16 %v6240, %v6239
        %v6285 = vpack.c.b16 %v6242, %v6241
        %v6286 = vpack.c.b16 %v6244, %v6243
        %v6287 = vpack.c.b16 %v6246, %v6245
        %v6288 = vpack.c.b16 %v6248, %v6247
        %v6289 = vpack.c.b16 %v6250, %v6249
        %v6290 = vpack.c.b16 %v6252, %v6251
        %v6291 = vpack.c.b16 %v6254, %v6253
        %v6292 = vpack.c.b16 %v6256, %v6255
        %v6293 = vpack.c.b16 %v6258, %v6257
        %v6294 = vpack.c.b16 %v6260, %v6259
        %v6295 = vpack.c.b16 %v6262, %v6261
        %v6296 = vpack.c.b16 %v6264, %v6263
        %v6297 = vpack.c.b16 %v6266, %v6265
        %v6298 = vpack.c.b16 %v6268, %v6267
        %v6299 = vpack.c.b16 %v6270, %v6269
        %v6300 = vpack.c.b16 %v6272, %v6271
        %v6301 = vpack.c.b16 %v6274, %v6273
        %v6302 = vpack.c.b16 %v6276, %v6275
        %v6303 = vpack.c.b16 %v6278, %v6277
        %v6304 = vpack.c.b16 %v6280, %v6279
        %6329 = vmatprep.subr.bf16.mxu0 0
        %6330 = vmatpush1.bf16.msra.mxu0 %v6288
        %6331 = vmatprep.subr.bf16.mxu0 0
        %6332 = vmatpush1.bf16.msra.mxu0 %v6287
        %6333 = vmatprep.subr.bf16.mxu0 0
        %6334 = vmatpush1.bf16.msra.mxu0 %v6286
        %6335 = vmatprep.subr.bf16.mxu0 0
        %6336 = vmatpush1.bf16.msra.mxu0 %v6285
        %6337 = vmatprep.subr.bf16.mxu0 0
        %6338 = vmatpush1.bf16.msra.mxu0 %v6284
        %6339 = vmatprep.subr.bf16.mxu0 0
        %6340 = vmatpush1.bf16.msra.mxu0 %v6283
        %6341 = vmatprep.subr.bf16.mxu0 0
        %6342 = vmatpush1.bf16.msra.mxu0 %v6282
        %6343 = vmatprep.subr.bf16.mxu0 0
        %6344 = vmatpush1.bf16.msra.mxu0 %v6281
        %6345 = vmatprep.subr.bf16.mxu0 0
        %6346 = vmatpush2.bf16.msra.mxu0 %v6296
        %6347 = vmatprep.subr.bf16.mxu0 0
        %6348 = vmatpush2.bf16.msra.mxu0 %v6295
        %6349 = vmatprep.subr.bf16.mxu0 0
        %6350 = vmatpush2.bf16.msra.mxu0 %v6294
        %6351 = vmatprep.subr.bf16.mxu0 0
        %6352 = vmatpush2.bf16.msra.mxu0 %v6293
        %6353 = vmatprep.subr.bf16.mxu0 0
        %6354 = vmatpush2.bf16.msra.mxu0 %v6292
        %6355 = vmatprep.subr.bf16.mxu0 0
        %6356 = vmatpush2.bf16.msra.mxu0 %v6291
        %6357 = vmatprep.subr.bf16.mxu0 0
        %6358 = vmatpush2.bf16.msra.mxu0 %v6290
        %6359 = vmatprep.subr.bf16.mxu0 0
        %6360 = vmatpush2.bf16.msra.mxu0 %v6289
        %6361 = vmatprep.mubr.bf16.mxu0 %v5739
        %6362 = vmatmul.mubr.bf16.gmra.mxu0 %v5722
        %v6363 = vpop.f32.mrf.mxu0
        %v6364 = vadd.f32 0.0, %v6363
        %v6365 = vpop.f32.mrf.mxu0
        %v6366 = vpop.f32.mrf.mxu0
        %v6367 = vadd.f32 0.0, %v6366
        %v6368 = vpop.f32.mrf.mxu0
        %6369 = vmatprep.mubr.bf16.mxu0 %v5769
        %6370 = vmatmul.mubr.bf16.gmra.mxu0 %v5760
        %v6371 = vpop.f32.mrf.mxu0
        %v6372 = vadd.f32 0.0, %v6371
        %v6373 = vpop.f32.mrf.mxu0
        %v6374 = vpop.f32.mrf.mxu0
        %v6375 = vadd.f32 0.0, %v6374
        %v6376 = vpop.f32.mrf.mxu0
        %6377 = vmatprep.mubr.bf16.mxu0 %v5791
        %6378 = vmatmul.mubr.bf16.gmra.mxu0 %v5782
        %v6379 = vpop.f32.mrf.mxu0
        %v6380 = vadd.f32 0.0, %v6379
        %v6381 = vpop.f32.mrf.mxu0
        %v6382 = vpop.f32.mrf.mxu0
        %v6383 = vadd.f32 0.0, %v6382
        %v6384 = vpop.f32.mrf.mxu0
        %6385 = vmatprep.mubr.bf16.mxu0 %v5813
        %6386 = vmatmul.mubr.bf16.gmra.mxu0 %v5804
        %v6387 = vpop.f32.mrf.mxu0
        %v6388 = vadd.f32 0.0, %v6387
        %v6389 = vpop.f32.mrf.mxu0
        %v6390 = vpop.f32.mrf.mxu0
        %v6391 = vadd.f32 0.0, %v6390
        %v6392 = vpop.f32.mrf.mxu0
        %6393 = vmatprep.mubr.bf16.mxu0 %v5835
        %6394 = vmatmul.mubr.bf16.gmra.mxu0 %v5826
        %v6395 = vpop.f32.mrf.mxu0
        %v6396 = vadd.f32 0.0, %v6395
        %v6397 = vpop.f32.mrf.mxu0
        %v6398 = vpop.f32.mrf.mxu0
        %v6399 = vadd.f32 0.0, %v6398
        %v6400 = vpop.f32.mrf.mxu0
        %6401 = vmatprep.mubr.bf16.mxu0 %v5857
        %6402 = vmatmul.mubr.bf16.gmra.mxu0 %v5848
        %v6403 = vpop.f32.mrf.mxu0
        %v6404 = vadd.f32 0.0, %v6403
        %v6405 = vpop.f32.mrf.mxu0
        %v6406 = vpop.f32.mrf.mxu0
        %v6407 = vadd.f32 0.0, %v6406
        %v6408 = vpop.f32.mrf.mxu0
        %6409 = vmatprep.mubr.bf16.mxu0 %v5879
        %6410 = vmatmul.mubr.bf16.gmra.mxu0 %v5870
        %v6411 = vpop.f32.mrf.mxu0
        %v6412 = vadd.f32 0.0, %v6411
        %v6413 = vpop.f32.mrf.mxu0
        %v6414 = vpop.f32.mrf.mxu0
        %v6415 = vadd.f32 0.0, %v6414
        %v6416 = vpop.f32.mrf.mxu0
        %6417 = vmatprep.mubr.bf16.mxu0 %v5901
        %6418 = vmatmul.mubr.bf16.gmra.mxu0 %v5892
        %v6419 = vpop.f32.mrf.mxu0
        %v6420 = vadd.f32 0.0, %v6419
        %v6421 = vpop.f32.mrf.mxu0
        %v6422 = vpop.f32.mrf.mxu0
        %v6423 = vadd.f32 0.0, %v6422
        %v6424 = vpop.f32.mrf.mxu0
        %6425 = vmatprep.mubr.bf16.mxu0 %v5923
        %6426 = vmatmul.mubr.bf16.gmra.mxu0 %v5914
        %v6427 = vpop.f32.mrf.mxu0
        %v6428 = vadd.f32 0.0, %v6427
        %v6429 = vpop.f32.mrf.mxu0
        %v6430 = vpop.f32.mrf.mxu0
        %v6431 = vadd.f32 0.0, %v6430
        %v6432 = vpop.f32.mrf.mxu0
        %6433 = vmatprep.mubr.bf16.mxu0 %v5945
        %6434 = vmatmul.mubr.bf16.gmra.mxu0 %v5936
        %v6435 = vpop.f32.mrf.mxu0
        %v6436 = vadd.f32 0.0, %v6435
        %v6437 = vpop.f32.mrf.mxu0
        %v6438 = vpop.f32.mrf.mxu0
        %v6439 = vadd.f32 0.0, %v6438
        %v6440 = vpop.f32.mrf.mxu0
        %6441 = vmatprep.mubr.bf16.mxu0 %v5967
        %6442 = vmatmul.mubr.bf16.gmra.mxu0 %v5958
        %v6443 = vpop.f32.mrf.mxu0
        %v6444 = vadd.f32 0.0, %v6443
        %v6445 = vpop.f32.mrf.mxu0
        %v6446 = vpop.f32.mrf.mxu0
        %v6447 = vadd.f32 0.0, %v6446
        %v6448 = vpop.f32.mrf.mxu0
        %6449 = vmatprep.mubr.bf16.mxu0 %v5989
        %6450 = vmatmul.mubr.bf16.gmra.mxu0 %v5980
        %v6451 = vpop.f32.mrf.mxu0
        %v6452 = vadd.f32 0.0, %v6451
        %v6453 = vpop.f32.mrf.mxu0
        %v6454 = vpop.f32.mrf.mxu0
        %v6455 = vadd.f32 0.0, %v6454
        %v6456 = vpop.f32.mrf.mxu0
        %6457 = vmatprep.mubr.bf16.mxu0 %v6011
        %6458 = vmatmul.mubr.bf16.gmra.mxu0 %v6002
        %v6459 = vpop.f32.mrf.mxu0
        %v6460 = vadd.f32 0.0, %v6459
        %v6461 = vpop.f32.mrf.mxu0
        %v6462 = vpop.f32.mrf.mxu0
        %v6463 = vadd.f32 0.0, %v6462
        %v6464 = vpop.f32.mrf.mxu0
        %6465 = vmatprep.mubr.bf16.mxu0 %v6033
        %6466 = vmatmul.mubr.bf16.gmra.mxu0 %v6024
        %v6467 = vpop.f32.mrf.mxu0
        %v6468 = vadd.f32 0.0, %v6467
        %v6469 = vpop.f32.mrf.mxu0
        %v6470 = vpop.f32.mrf.mxu0
        %v6471 = vadd.f32 0.0, %v6470
        %v6472 = vpop.f32.mrf.mxu0
        %6473 = vmatprep.mubr.bf16.mxu0 %v6055
        %6474 = vmatmul.mubr.bf16.gmra.mxu0 %v6046
        %v6475 = vpop.f32.mrf.mxu0
        %v6476 = vadd.f32 0.0, %v6475
        %v6477 = vpop.f32.mrf.mxu0
        %v6478 = vpop.f32.mrf.mxu0
        %v6479 = vadd.f32 0.0, %v6478
        %v6480 = vpop.f32.mrf.mxu0
        %6481 = vmatprep.mubr.bf16.mxu0 %v6077
        %6482 = vmatmul.mubr.bf16.gmra.mxu0 %v6068
        %v6483 = vpop.f32.mrf.mxu0
        %v6484 = vadd.f32 0.0, %v6483
        %v6485 = vpop.f32.mrf.mxu0
        %v6486 = vpop.f32.mrf.mxu0
        %v6487 = vadd.f32 0.0, %v6486
        %v6488 = vpop.f32.mrf.mxu0
        %6489 = vmatprep.mubr.bf16.mxu0 %v6099
        %6490 = vmatmul.mubr.bf16.gmra.mxu0 %v6090
        %v6491 = vpop.f32.mrf.mxu0
        %v6492 = vadd.f32 0.0, %v6491
        %v6493 = vpop.f32.mrf.mxu0
        %v6494 = vpop.f32.mrf.mxu0
        %v6495 = vadd.f32 0.0, %v6494
        %v6496 = vpop.f32.mrf.mxu0
        %6497 = vmatprep.mubr.bf16.mxu0 %v6121
        %6498 = vmatmul.mubr.bf16.gmra.mxu0 %v6112
        %v6499 = vpop.f32.mrf.mxu0
        %v6500 = vadd.f32 0.0, %v6499
        %v6501 = vpop.f32.mrf.mxu0
        %v6502 = vpop.f32.mrf.mxu0
        %v6503 = vadd.f32 0.0, %v6502
        %v6504 = vpop.f32.mrf.mxu0
        %6505 = vdwg.mxu0
        %6506 = vmatprep.subr.bf16.mxu0 0
        %6507 = vmatpush1.bf16.msra.mxu0 %v6304
        %6508 = vmatprep.subr.bf16.mxu0 0
        %6509 = vmatpush1.bf16.msra.mxu0 %v6303
        %6510 = vmatprep.subr.bf16.mxu0 0
        %6511 = vmatpush1.bf16.msra.mxu0 %v6302
        %6512 = vmatprep.subr.bf16.mxu0 0
        %6513 = vmatpush1.bf16.msra.mxu0 %v6301
        %6514 = vmatprep.subr.bf16.mxu0 0
        %6515 = vmatpush1.bf16.msra.mxu0 %v6300
        %6516 = vmatprep.subr.bf16.mxu0 0
        %6517 = vmatpush1.bf16.msra.mxu0 %v6299
        %6518 = vmatprep.subr.bf16.mxu0 0
        %6519 = vmatpush1.bf16.msra.mxu0 %v6298
        %6520 = vmatprep.subr.bf16.mxu0 0
        %6521 = vmatpush1.bf16.msra.mxu0 %v6297
        %6522 = vmatprep.subr.bf16.mxu0 0
        %6523 = vmatpush2.bf16.msra.mxu0 0
        %6524 = vmatprep.subr.bf16.mxu0 0
        %6525 = vmatpush2.bf16.msra.mxu0 0
        %6526 = vmatprep.subr.bf16.mxu0 0
        %6527 = vmatpush2.bf16.msra.mxu0 0
        %6528 = vmatprep.subr.bf16.mxu0 0
        %6529 = vmatpush2.bf16.msra.mxu0 0
        %6530 = vmatprep.subr.bf16.mxu0 0
        %6531 = vmatpush2.bf16.msra.mxu0 0
        %6532 = vmatprep.subr.bf16.mxu0 0
        %6533 = vmatpush2.bf16.msra.mxu0 0
        %6534 = vmatprep.subr.bf16.mxu0 0
        %6535 = vmatpush2.bf16.msra.mxu0 0
        %6536 = vmatprep.subr.bf16.mxu0 0
        %6537 = vmatpush2.bf16.msra.mxu0 0
        %6538 = vmatprep.mubr.bf16.mxu0 0
        %6539 = vmatmul.mubr.bf16.gmra.mxu0 %v5756
        %v6540 = vpop.f32.mrf.mxu0
        %v6541 = vadd.f32 %v6364, %v6540
        %v6542 = vpop.f32.mrf.mxu0
        %v6543 = vpop.f32.mrf.mxu0
        %v6544 = vadd.f32 %v6367, %v6543
        %v6545 = vpop.f32.mrf.mxu0
        %6546 = vmatprep.mubr.bf16.mxu0 0
        %6547 = vmatmul.mubr.bf16.gmra.mxu0 %v5778
        %v6548 = vpop.f32.mrf.mxu0
        %v6549 = vadd.f32 %v6372, %v6548
        %v6550 = vpop.f32.mrf.mxu0
        %v6551 = vpop.f32.mrf.mxu0
        %v6552 = vadd.f32 %v6375, %v6551
        %v6553 = vpop.f32.mrf.mxu0
        %6554 = vmatprep.mubr.bf16.mxu0 0
        %6555 = vmatmul.mubr.bf16.gmra.mxu0 %v5800
        %v6556 = vpop.f32.mrf.mxu0
        %v6557 = vadd.f32 %v6380, %v6556
        %v6558 = vpop.f32.mrf.mxu0
        %v6559 = vpop.f32.mrf.mxu0
        %v6560 = vadd.f32 %v6383, %v6559
        %v6561 = vpop.f32.mrf.mxu0
        %6562 = vmatprep.mubr.bf16.mxu0 0
        %6563 = vmatmul.mubr.bf16.gmra.mxu0 %v5822
        %v6564 = vpop.f32.mrf.mxu0
        %v6565 = vadd.f32 %v6388, %v6564
        %v6566 = vpop.f32.mrf.mxu0
        %v6567 = vpop.f32.mrf.mxu0
        %v6568 = vadd.f32 %v6391, %v6567
        %v6569 = vpop.f32.mrf.mxu0
        %6570 = vmatprep.mubr.bf16.mxu0 0
        %6571 = vmatmul.mubr.bf16.gmra.mxu0 %v5844
        %v6572 = vpop.f32.mrf.mxu0
        %v6573 = vadd.f32 %v6396, %v6572
        %v6574 = vpop.f32.mrf.mxu0
        %v6575 = vpop.f32.mrf.mxu0
        %v6576 = vadd.f32 %v6399, %v6575
        %v6577 = vpop.f32.mrf.mxu0
        %6578 = vmatprep.mubr.bf16.mxu0 0
        %6579 = vmatmul.mubr.bf16.gmra.mxu0 %v5866
        %v6580 = vpop.f32.mrf.mxu0
        %v6581 = vadd.f32 %v6404, %v6580
        %v6582 = vpop.f32.mrf.mxu0
        %v6583 = vpop.f32.mrf.mxu0
        %v6584 = vadd.f32 %v6407, %v6583
        %v6585 = vpop.f32.mrf.mxu0
        %6586 = vmatprep.mubr.bf16.mxu0 0
        %6587 = vmatmul.mubr.bf16.gmra.mxu0 %v5888
        %v6588 = vpop.f32.mrf.mxu0
        %v6589 = vadd.f32 %v6412, %v6588
        %v6590 = vpop.f32.mrf.mxu0
        %v6591 = vpop.f32.mrf.mxu0
        %v6592 = vadd.f32 %v6415, %v6591
        %v6593 = vpop.f32.mrf.mxu0
        %6594 = vmatprep.mubr.bf16.mxu0 0
        %6595 = vmatmul.mubr.bf16.gmra.mxu0 %v5910
        %v6596 = vpop.f32.mrf.mxu0
        %v6597 = vadd.f32 %v6420, %v6596
        %v6598 = vpop.f32.mrf.mxu0
        %v6599 = vpop.f32.mrf.mxu0
        %v6600 = vadd.f32 %v6423, %v6599
        %v6601 = vpop.f32.mrf.mxu0
        %6602 = vmatprep.mubr.bf16.mxu0 0
        %6603 = vmatmul.mubr.bf16.gmra.mxu0 %v5932
        %v6604 = vpop.f32.mrf.mxu0
        %v6605 = vadd.f32 %v6428, %v6604
        %v6606 = vpop.f32.mrf.mxu0
        %v6607 = vpop.f32.mrf.mxu0
        %v6608 = vadd.f32 %v6431, %v6607
        %v6609 = vpop.f32.mrf.mxu0
        %6610 = vmatprep.mubr.bf16.mxu0 0
        %6611 = vmatmul.mubr.bf16.gmra.mxu0 %v5954
        %v6612 = vpop.f32.mrf.mxu0
        %v6613 = vadd.f32 %v6436, %v6612
        %v6614 = vpop.f32.mrf.mxu0
        %v6615 = vpop.f32.mrf.mxu0
        %v6616 = vadd.f32 %v6439, %v6615
        %v6617 = vpop.f32.mrf.mxu0
        %6618 = vmatprep.mubr.bf16.mxu0 0
        %6619 = vmatmul.mubr.bf16.gmra.mxu0 %v5976
        %v6620 = vpop.f32.mrf.mxu0
        %v6621 = vadd.f32 %v6444, %v6620
        %v6622 = vpop.f32.mrf.mxu0
        %v6623 = vpop.f32.mrf.mxu0
        %v6624 = vadd.f32 %v6447, %v6623
        %v6625 = vpop.f32.mrf.mxu0
        %6626 = vmatprep.mubr.bf16.mxu0 0
        %6627 = vmatmul.mubr.bf16.gmra.mxu0 %v5998
        %v6628 = vpop.f32.mrf.mxu0
        %v6629 = vadd.f32 %v6452, %v6628
        %v6630 = vpop.f32.mrf.mxu0
        %v6631 = vpop.f32.mrf.mxu0
        %v6632 = vadd.f32 %v6455, %v6631
        %v6633 = vpop.f32.mrf.mxu0
        %6634 = vmatprep.mubr.bf16.mxu0 0
        %6635 = vmatmul.mubr.bf16.gmra.mxu0 %v6020
        %v6636 = vpop.f32.mrf.mxu0
        %v6637 = vadd.f32 %v6460, %v6636
        %v6638 = vpop.f32.mrf.mxu0
        %v6639 = vpop.f32.mrf.mxu0
        %v6640 = vadd.f32 %v6463, %v6639
        %v6641 = vpop.f32.mrf.mxu0
        %6642 = vmatprep.mubr.bf16.mxu0 0
        %6643 = vmatmul.mubr.bf16.gmra.mxu0 %v6042
        %v6644 = vpop.f32.mrf.mxu0
        %v6645 = vadd.f32 %v6468, %v6644
        %v6646 = vpop.f32.mrf.mxu0
        %v6647 = vpop.f32.mrf.mxu0
        %v6648 = vadd.f32 %v6471, %v6647
        %v6649 = vpop.f32.mrf.mxu0
        %6650 = vmatprep.mubr.bf16.mxu0 0
        %6651 = vmatmul.mubr.bf16.gmra.mxu0 %v6064
        %v6652 = vpop.f32.mrf.mxu0
        %v6653 = vadd.f32 %v6476, %v6652
        %v6654 = vpop.f32.mrf.mxu0
        %v6655 = vpop.f32.mrf.mxu0
        %v6656 = vadd.f32 %v6479, %v6655
        %v6657 = vpop.f32.mrf.mxu0
        %6658 = vmatprep.mubr.bf16.mxu0 0
        %6659 = vmatmul.mubr.bf16.gmra.mxu0 %v6086
        %v6660 = vpop.f32.mrf.mxu0
        %v6661 = vadd.f32 %v6484, %v6660
        %v6662 = vpop.f32.mrf.mxu0
        %v6663 = vpop.f32.mrf.mxu0
        %v6664 = vadd.f32 %v6487, %v6663
        %v6665 = vpop.f32.mrf.mxu0
        %6666 = vmatprep.mubr.bf16.mxu0 0
        %6667 = vmatmul.mubr.bf16.gmra.mxu0 %v6108
        %v6668 = vpop.f32.mrf.mxu0
        %v6669 = vadd.f32 %v6492, %v6668
        %v6670 = vpop.f32.mrf.mxu0
        %v6671 = vpop.f32.mrf.mxu0
        %v6672 = vadd.f32 %v6495, %v6671
        %v6673 = vpop.f32.mrf.mxu0
        %6674 = vmatprep.mubr.bf16.mxu0 0
        %6675 = vmatmul.mubr.bf16.gmra.mxu0 %v6130
        %v6676 = vpop.f32.mrf.mxu0
        %v6677 = vadd.f32 %v6500, %v6676
        %v6678 = vpop.f32.mrf.mxu0
        %v6679 = vpop.f32.mrf.mxu0
        %v6680 = vadd.f32 %v6503, %v6679
        %v6681 = vpop.f32.mrf.mxu0
        %6682 = vdwg.mxu0
        %v6684 = vshrl.u32 %v5349, 16
        %v6686 = vshll.u32 %v5349, 16
        %v6688 = vrot.slane %v6686, 1
        %v6689 = vor.u32 %v6684, %v6688
        %v6690 = vsel %vm1198, %v6689, %v5381
        %v6692 = vshrl.u32 %v5382, 16
        %v6694 = vshll.u32 %v5382, 16
        %v6696 = vrot.slane %v6694, 1
        %v6697 = vor.u32 %v6692, %v6696
        %v6699 = vshll.u32 %v5390, 16
        %v6701 = vrot.slane %v6699, 1
        %v6702 = vsel %vm1198, %v6697, %v6701
        %v6704 = vshrl.u32 %v5526, 16
        %v6706 = vshll.u32 %v5526, 16
        %v6708 = vrot.slane %v6706, 1
        %v6709 = vor.u32 %v6704, %v6708
        %v6711 = vshll.u32 %v5528, 16
        %v6713 = vrot.slane %v6711, 1
        %v6714 = vsel %vm1198, %v6709, %v6713
        %v6715 = vshrl.u32 %v5390, 16
        %v6717 = vor.u32 %v6715, %v6701
        %v6718 = vrot.slane %v5735, 1
        %v6719 = vsel %vm1198, %v6717, %v6718
        %v6720 = vshrl.u32 %v5528, 16
        %v6722 = vor.u32 %v6720, %v6713
        %v6723 = vrot.slane %v5752, 1
        %v6724 = vsel %vm1198, %v6722, %v6723
        %v6725 = vor.u32 %v5732, %v6718
        %v6726 = vrot.slane %v5765, 1
        %v6727 = vsel %vm1198, %v6725, %v6726
        %v6728 = vor.u32 %v5749, %v6723
        %v6729 = vrot.slane %v5774, 1
        %v6730 = vsel %vm1198, %v6728, %v6729
        %v6731 = vor.u32 %v5762, %v6726
        %v6732 = vrot.slane %v5787, 1
        %v6733 = vsel %vm1198, %v6731, %v6732
        %v6734 = vor.u32 %v5771, %v6729
        %v6735 = vrot.slane %v5796, 1
        %v6736 = vsel %vm1198, %v6734, %v6735
        %v6737 = vor.u32 %v5784, %v6732
        %v6738 = vrot.slane %v5809, 1
        %v6739 = vsel %vm1198, %v6737, %v6738
        %v6740 = vor.u32 %v5793, %v6735
        %v6741 = vrot.slane %v5818, 1
        %v6742 = vsel %vm1198, %v6740, %v6741
        %v6743 = vor.u32 %v5806, %v6738
        %v6744 = vrot.slane %v5831, 1
        %v6745 = vsel %vm1198, %v6743, %v6744
        %v6746 = vor.u32 %v5815, %v6741
        %v6747 = vrot.slane %v5840, 1
        %v6748 = vsel %vm1198, %v6746, %v6747
        %v6749 = vor.u32 %v5828, %v6744
        %v6750 = vrot.slane %v5853, 1
        %v6751 = vsel %vm1198, %v6749, %v6750
        %v6752 = vor.u32 %v5837, %v6747
        %v6753 = vrot.slane %v5862, 1
        %v6754 = vsel %vm1198, %v6752, %v6753
        %v6755 = vor.u32 %v5850, %v6750
        %v6756 = vrot.slane %v5875, 1
        %v6757 = vsel %vm1198, %v6755, %v6756
        %v6758 = vor.u32 %v5859, %v6753
        %v6759 = vrot.slane %v5884, 1
        %v6760 = vsel %vm1198, %v6758, %v6759
        %v6761 = vor.u32 %v5872, %v6756
        %v6762 = vrot.slane %v5897, 1
        %v6763 = vsel %vm1198, %v6761, %v6762
        %v6764 = vor.u32 %v5881, %v6759
        %v6765 = vrot.slane %v5906, 1
        %v6766 = vsel %vm1198, %v6764, %v6765
        %v6767 = vor.u32 %v5894, %v6762
        %v6768 = vrot.slane %v5919, 1
        %v6769 = vsel %vm1198, %v6767, %v6768
        %v6770 = vor.u32 %v5903, %v6765
        %v6771 = vrot.slane %v5928, 1
        %v6772 = vsel %vm1198, %v6770, %v6771
        %v6773 = vor.u32 %v5916, %v6768
        %v6774 = vrot.slane %v5941, 1
        %v6775 = vsel %vm1198, %v6773, %v6774
        %v6776 = vor.u32 %v5925, %v6771
        %v6777 = vrot.slane %v5950, 1
        %v6778 = vsel %vm1198, %v6776, %v6777
        %v6779 = vor.u32 %v5938, %v6774
        %v6780 = vrot.slane %v5963, 1
        %v6781 = vsel %vm1198, %v6779, %v6780
        %v6782 = vor.u32 %v5947, %v6777
        %v6783 = vrot.slane %v5972, 1
        %v6784 = vsel %vm1198, %v6782, %v6783
        %v6785 = vor.u32 %v5960, %v6780
        %v6786 = vrot.slane %v5985, 1
        %v6787 = vsel %vm1198, %v6785, %v6786
        %v6788 = vor.u32 %v5969, %v6783
        %v6789 = vrot.slane %v5994, 1
        %v6790 = vsel %vm1198, %v6788, %v6789
        %v6791 = vor.u32 %v5982, %v6786
        %v6792 = vrot.slane %v6007, 1
        %v6793 = vsel %vm1198, %v6791, %v6792
        %v6794 = vor.u32 %v5991, %v6789
        %v6795 = vrot.slane %v6016, 1
        %v6796 = vsel %vm1198, %v6794, %v6795
        %v6797 = vor.u32 %v6004, %v6792
        %v6798 = vrot.slane %v6029, 1
        %v6799 = vsel %vm1198, %v6797, %v6798
        %v6800 = vor.u32 %v6013, %v6795
        %v6801 = vrot.slane %v6038, 1
        %v6802 = vsel %vm1198, %v6800, %v6801
        %v6803 = vor.u32 %v6026, %v6798
        %v6804 = vrot.slane %v6051, 1
        %v6805 = vsel %vm1198, %v6803, %v6804
        %v6806 = vor.u32 %v6035, %v6801
        %v6807 = vrot.slane %v6060, 1
        %v6808 = vsel %vm1198, %v6806, %v6807
        %v6809 = vor.u32 %v6048, %v6804
        %v6811 = vshll.u32 %v5518, 16
        %v6813 = vrot.slane %v6811, 1
        %v6814 = vsel %vm1198, %v6809, %v6813
        %v6815 = vor.u32 %v6057, %v6807
        %v6817 = vshll.u32 %v5560, 16
        %v6819 = vrot.slane %v6817, 1
        %v6820 = vsel %vm1198, %v6815, %v6819
        %v6821 = vshrl.u32 %v5518, 16
        %v6823 = vor.u32 %v6821, %v6813
        %v6825 = vshll.u32 %v5519, 16
        %v6827 = vrot.slane %v6825, 1
        %v6828 = vsel %vm1198, %v6823, %v6827
        %v6829 = vshrl.u32 %v5560, 16
        %v6831 = vor.u32 %v6829, %v6819
        %v6833 = vshll.u32 %v5559, 16
        %v6835 = vrot.slane %v6833, 1
        %v6836 = vsel %vm1198, %v6831, %v6835
        %v6939 = vunpack.c.l.b16 %v5561
        %v6940 = vunpack.c.l.b16 %v5562
        %v6941 = vunpack.c.l.b16 %v5563
        %v6942 = vunpack.c.l.b16 %v5564
        %v6943 = vunpack.c.l.b16 %v5565
        %v6944 = vunpack.c.l.b16 %v5566
        %v6945 = vunpack.c.l.b16 %v5567
        %v6946 = vunpack.c.l.b16 %v5568
        %v6947 = vunpack.c.l.b16 %v5569
        %v6948 = vunpack.c.l.b16 %v5570
        %v6949 = vunpack.c.l.b16 %v5571
        %v6950 = vunpack.c.l.b16 %v5572
        %v6951 = vunpack.c.l.b16 %v5573
        %v6952 = vunpack.c.l.b16 %v5574
        %v6953 = vunpack.c.l.b16 %v5575
        %v6954 = vunpack.c.l.b16 %v5576
        %v6955 = vunpack.c.l.b16 %v5577
        %v6956 = vunpack.c.l.b16 %v5578
        %v6957 = vunpack.c.l.b16 %v5579
        %v6958 = vunpack.c.l.b16 %v5580
        %v6959 = vunpack.c.l.b16 %v5581
        %v6960 = vunpack.c.l.b16 %v5582
        %v6961 = vunpack.c.l.b16 %v5583
        %v6962 = vunpack.c.l.b16 %v5584
        %v6963 = vunpack.c.l.b16 %v5585
        %v6964 = vunpack.c.l.b16 %v5586
        %v6965 = vunpack.c.l.b16 %v5587
        %v6966 = vunpack.c.l.b16 %v5588
        %v6967 = vunpack.c.l.b16 %v5589
        %v6968 = vunpack.c.l.b16 %v5590
        %v6969 = vunpack.c.l.b16 %v5591
        %v6970 = vunpack.c.l.b16 %v5592
        %v6971 = vunpack.c.l.b16 %v5593
        %v6972 = vunpack.c.l.b16 %v5594
        %v6973 = vunpack.c.l.b16 %v5595
        %v6974 = vunpack.c.l.b16 %v5596
        %v6975 = vunpack.c.l.b16 %v5597
        %v6976 = vunpack.c.l.b16 %v5598
        %v6977 = vunpack.c.l.b16 %v5599
        %v6978 = vunpack.c.l.b16 %v5600
        %v6979 = vunpack.c.l.b16 %v5601
        %v6980 = vunpack.c.l.b16 %v5602
        %v6981 = vunpack.c.l.b16 %v5603
        %v6982 = vunpack.c.l.b16 %v5604
        %v6983 = vunpack.c.l.b16 %v5605
        %v6984 = vunpack.c.l.b16 %v5606
        %v6985 = vunpack.c.l.b16 %v5607
        %v6986 = vunpack.c.l.b16 %v5608
        %v6987 = vpack.c.b16 %v6940, %v6939
        %v6988 = vpack.c.b16 %v6942, %v6941
        %v6989 = vpack.c.b16 %v6944, %v6943
        %v6990 = vpack.c.b16 %v6946, %v6945
        %v6991 = vpack.c.b16 %v6948, %v6947
        %v6992 = vpack.c.b16 %v6950, %v6949
        %v6993 = vpack.c.b16 %v6952, %v6951
        %v6994 = vpack.c.b16 %v6954, %v6953
        %v6995 = vpack.c.b16 %v6956, %v6955
        %v6996 = vpack.c.b16 %v6958, %v6957
        %v6997 = vpack.c.b16 %v6960, %v6959
        %v6998 = vpack.c.b16 %v6962, %v6961
        %v6999 = vpack.c.b16 %v6964, %v6963
        %v7000 = vpack.c.b16 %v6966, %v6965
        %v7001 = vpack.c.b16 %v6968, %v6967
        %v7002 = vpack.c.b16 %v6970, %v6969
        %v7003 = vpack.c.b16 %v6972, %v6971
        %v7004 = vpack.c.b16 %v6974, %v6973
        %v7005 = vpack.c.b16 %v6976, %v6975
        %v7006 = vpack.c.b16 %v6978, %v6977
        %v7007 = vpack.c.b16 %v6980, %v6979
        %v7008 = vpack.c.b16 %v6982, %v6981
        %v7009 = vpack.c.b16 %v6984, %v6983
        %v7010 = vpack.c.b16 %v6986, %v6985
        %7035 = vmatprep.subr.bf16.mxu0 0
        %7036 = vmatpush1.bf16.msra.mxu0 %v6994
        %7037 = vmatprep.subr.bf16.mxu0 0
        %7038 = vmatpush1.bf16.msra.mxu0 %v6993
        %7039 = vmatprep.subr.bf16.mxu0 0
        %7040 = vmatpush1.bf16.msra.mxu0 %v6992
        %7041 = vmatprep.subr.bf16.mxu0 0
        %7042 = vmatpush1.bf16.msra.mxu0 %v6991
        %7043 = vmatprep.subr.bf16.mxu0 0
        %7044 = vmatpush1.bf16.msra.mxu0 %v6990
        %7045 = vmatprep.subr.bf16.mxu0 0
        %7046 = vmatpush1.bf16.msra.mxu0 %v6989
        %7047 = vmatprep.subr.bf16.mxu0 0
        %7048 = vmatpush1.bf16.msra.mxu0 %v6988
        %7049 = vmatprep.subr.bf16.mxu0 0
        %7050 = vmatpush1.bf16.msra.mxu0 %v6987
        %7051 = vmatprep.subr.bf16.mxu0 0
        %7052 = vmatpush2.bf16.msra.mxu0 %v7002
        %7053 = vmatprep.subr.bf16.mxu0 0
        %7054 = vmatpush2.bf16.msra.mxu0 %v7001
        %7055 = vmatprep.subr.bf16.mxu0 0
        %7056 = vmatpush2.bf16.msra.mxu0 %v7000
        %7057 = vmatprep.subr.bf16.mxu0 0
        %7058 = vmatpush2.bf16.msra.mxu0 %v6999
        %7059 = vmatprep.subr.bf16.mxu0 0
        %7060 = vmatpush2.bf16.msra.mxu0 %v6998
        %7061 = vmatprep.subr.bf16.mxu0 0
        %7062 = vmatpush2.bf16.msra.mxu0 %v6997
        %7063 = vmatprep.subr.bf16.mxu0 0
        %7064 = vmatpush2.bf16.msra.mxu0 %v6996
        %7065 = vmatprep.subr.bf16.mxu0 0
        %7066 = vmatpush2.bf16.msra.mxu0 %v6995
        %7067 = vmatprep.mubr.bf16.mxu0 %v6702
        %7068 = vmatmul.mubr.bf16.gmra.mxu0 %v6690
        %v7069 = vpop.f32.mrf.mxu0
        %v7070 = vadd.f32 %v6541, %v7069
        %v7071 = vpop.f32.mrf.mxu0
        %v7072 = vpop.f32.mrf.mxu0
        %v7073 = vadd.f32 %v6544, %v7072
        %v7074 = vpop.f32.mrf.mxu0
        %7075 = vmatprep.mubr.bf16.mxu0 %v6719
        %7076 = vmatmul.mubr.bf16.gmra.mxu0 %v5390
        %v7077 = vpop.f32.mrf.mxu0
        %v7078 = vadd.f32 %v6549, %v7077
        %v7079 = vpop.f32.mrf.mxu0
        %v7080 = vpop.f32.mrf.mxu0
        %v7081 = vadd.f32 %v6552, %v7080
        %v7082 = vpop.f32.mrf.mxu0
        %7083 = vmatprep.mubr.bf16.mxu0 %v6727
        %7084 = vmatmul.mubr.bf16.gmra.mxu0 %v5398
        %v7085 = vpop.f32.mrf.mxu0
        %v7086 = vadd.f32 %v6557, %v7085
        %v7087 = vpop.f32.mrf.mxu0
        %v7088 = vpop.f32.mrf.mxu0
        %v7089 = vadd.f32 %v6560, %v7088
        %v7090 = vpop.f32.mrf.mxu0
        %7091 = vmatprep.mubr.bf16.mxu0 %v6733
        %7092 = vmatmul.mubr.bf16.gmra.mxu0 %v5406
        %v7093 = vpop.f32.mrf.mxu0
        %v7094 = vadd.f32 %v6565, %v7093
        %v7095 = vpop.f32.mrf.mxu0
        %v7096 = vpop.f32.mrf.mxu0
        %v7097 = vadd.f32 %v6568, %v7096
        %v7098 = vpop.f32.mrf.mxu0
        %7099 = vmatprep.mubr.bf16.mxu0 %v6739
        %7100 = vmatmul.mubr.bf16.gmra.mxu0 %v5414
        %v7101 = vpop.f32.mrf.mxu0
        %v7102 = vadd.f32 %v6573, %v7101
        %v7103 = vpop.f32.mrf.mxu0
        %v7104 = vpop.f32.mrf.mxu0
        %v7105 = vadd.f32 %v6576, %v7104
        %v7106 = vpop.f32.mrf.mxu0
        %7107 = vmatprep.mubr.bf16.mxu0 %v6745
        %7108 = vmatmul.mubr.bf16.gmra.mxu0 %v5422
        %v7109 = vpop.f32.mrf.mxu0
        %v7110 = vadd.f32 %v6581, %v7109
        %v7111 = vpop.f32.mrf.mxu0
        %v7112 = vpop.f32.mrf.mxu0
        %v7113 = vadd.f32 %v6584, %v7112
        %v7114 = vpop.f32.mrf.mxu0
        %7115 = vmatprep.mubr.bf16.mxu0 %v6751
        %7116 = vmatmul.mubr.bf16.gmra.mxu0 %v5430
        %v7117 = vpop.f32.mrf.mxu0
        %v7118 = vadd.f32 %v6589, %v7117
        %v7119 = vpop.f32.mrf.mxu0
        %v7120 = vpop.f32.mrf.mxu0
        %v7121 = vadd.f32 %v6592, %v7120
        %v7122 = vpop.f32.mrf.mxu0
        %7123 = vmatprep.mubr.bf16.mxu0 %v6757
        %7124 = vmatmul.mubr.bf16.gmra.mxu0 %v5438
        %v7125 = vpop.f32.mrf.mxu0
        %v7126 = vadd.f32 %v6597, %v7125
        %v7127 = vpop.f32.mrf.mxu0
        %v7128 = vpop.f32.mrf.mxu0
        %v7129 = vadd.f32 %v6600, %v7128
        %v7130 = vpop.f32.mrf.mxu0
        %7131 = vmatprep.mubr.bf16.mxu0 %v6763
        %7132 = vmatmul.mubr.bf16.gmra.mxu0 %v5446
        %v7133 = vpop.f32.mrf.mxu0
        %v7134 = vadd.f32 %v6605, %v7133
        %v7135 = vpop.f32.mrf.mxu0
        %v7136 = vpop.f32.mrf.mxu0
        %v7137 = vadd.f32 %v6608, %v7136
        %v7138 = vpop.f32.mrf.mxu0
        %7139 = vmatprep.mubr.bf16.mxu0 %v6769
        %7140 = vmatmul.mubr.bf16.gmra.mxu0 %v5454
        %v7141 = vpop.f32.mrf.mxu0
        %v7142 = vadd.f32 %v6613, %v7141
        %v7143 = vpop.f32.mrf.mxu0
        %v7144 = vpop.f32.mrf.mxu0
        %v7145 = vadd.f32 %v6616, %v7144
        %v7146 = vpop.f32.mrf.mxu0
        %7147 = vmatprep.mubr.bf16.mxu0 %v6775
        %7148 = vmatmul.mubr.bf16.gmra.mxu0 %v5462
        %v7149 = vpop.f32.mrf.mxu0
        %v7150 = vadd.f32 %v6621, %v7149
        %v7151 = vpop.f32.mrf.mxu0
        %v7152 = vpop.f32.mrf.mxu0
        %v7153 = vadd.f32 %v6624, %v7152
        %v7154 = vpop.f32.mrf.mxu0
        %7155 = vmatprep.mubr.bf16.mxu0 %v6781
        %7156 = vmatmul.mubr.bf16.gmra.mxu0 %v5470
        %v7157 = vpop.f32.mrf.mxu0
        %v7158 = vadd.f32 %v6629, %v7157
        %v7159 = vpop.f32.mrf.mxu0
        %v7160 = vpop.f32.mrf.mxu0
        %v7161 = vadd.f32 %v6632, %v7160
        %v7162 = vpop.f32.mrf.mxu0
        %7163 = vmatprep.mubr.bf16.mxu0 %v6787
        %7164 = vmatmul.mubr.bf16.gmra.mxu0 %v5478
        %v7165 = vpop.f32.mrf.mxu0
        %v7166 = vadd.f32 %v6637, %v7165
        %v7167 = vpop.f32.mrf.mxu0
        %v7168 = vpop.f32.mrf.mxu0
        %v7169 = vadd.f32 %v6640, %v7168
        %v7170 = vpop.f32.mrf.mxu0
        %7171 = vmatprep.mubr.bf16.mxu0 %v6793
        %7172 = vmatmul.mubr.bf16.gmra.mxu0 %v5486
        %v7173 = vpop.f32.mrf.mxu0
        %v7174 = vadd.f32 %v6645, %v7173
        %v7175 = vpop.f32.mrf.mxu0
        %v7176 = vpop.f32.mrf.mxu0
        %v7177 = vadd.f32 %v6648, %v7176
        %v7178 = vpop.f32.mrf.mxu0
        %7179 = vmatprep.mubr.bf16.mxu0 %v6799
        %7180 = vmatmul.mubr.bf16.gmra.mxu0 %v5494
        %v7181 = vpop.f32.mrf.mxu0
        %v7182 = vadd.f32 %v6653, %v7181
        %v7183 = vpop.f32.mrf.mxu0
        %v7184 = vpop.f32.mrf.mxu0
        %v7185 = vadd.f32 %v6656, %v7184
        %v7186 = vpop.f32.mrf.mxu0
        %7187 = vmatprep.mubr.bf16.mxu0 %v6805
        %7188 = vmatmul.mubr.bf16.gmra.mxu0 %v5502
        %v7189 = vpop.f32.mrf.mxu0
        %v7190 = vadd.f32 %v6661, %v7189
        %v7191 = vpop.f32.mrf.mxu0
        %v7192 = vpop.f32.mrf.mxu0
        %v7193 = vadd.f32 %v6664, %v7192
        %v7194 = vpop.f32.mrf.mxu0
        %7195 = vmatprep.mubr.bf16.mxu0 %v6814
        %7196 = vmatmul.mubr.bf16.gmra.mxu0 %v5510
        %v7197 = vpop.f32.mrf.mxu0
        %v7198 = vadd.f32 %v6669, %v7197
        %v7199 = vpop.f32.mrf.mxu0
        %v7200 = vpop.f32.mrf.mxu0
        %v7201 = vadd.f32 %v6672, %v7200
        %v7202 = vpop.f32.mrf.mxu0
        %7203 = vmatprep.mubr.bf16.mxu0 %v6828
        %7204 = vmatmul.mubr.bf16.gmra.mxu0 %v5518
        %v7205 = vpop.f32.mrf.mxu0
        %v7206 = vadd.f32 %v6677, %v7205
        %v7207 = vpop.f32.mrf.mxu0
        %v7208 = vpop.f32.mrf.mxu0
        %v7209 = vadd.f32 %v6680, %v7208
        %v7210 = vpop.f32.mrf.mxu0
        %7211 = vdwg.mxu0
        %7212 = vmatprep.subr.bf16.mxu0 0
        %7213 = vmatpush1.bf16.msra.mxu0 %v7010
        %7214 = vmatprep.subr.bf16.mxu0 0
        %7215 = vmatpush1.bf16.msra.mxu0 %v7009
        %7216 = vmatprep.subr.bf16.mxu0 0
        %7217 = vmatpush1.bf16.msra.mxu0 %v7008
        %7218 = vmatprep.subr.bf16.mxu0 0
        %7219 = vmatpush1.bf16.msra.mxu0 %v7007
        %7220 = vmatprep.subr.bf16.mxu0 0
        %7221 = vmatpush1.bf16.msra.mxu0 %v7006
        %7222 = vmatprep.subr.bf16.mxu0 0
        %7223 = vmatpush1.bf16.msra.mxu0 %v7005
        %7224 = vmatprep.subr.bf16.mxu0 0
        %7225 = vmatpush1.bf16.msra.mxu0 %v7004
        %7226 = vmatprep.subr.bf16.mxu0 0
        %7227 = vmatpush1.bf16.msra.mxu0 %v7003
        %7228 = vmatprep.subr.bf16.mxu0 0
        %7229 = vmatpush2.bf16.msra.mxu0 0
        %7230 = vmatprep.subr.bf16.mxu0 0
        %7231 = vmatpush2.bf16.msra.mxu0 0
        %7232 = vmatprep.subr.bf16.mxu0 0
        %7233 = vmatpush2.bf16.msra.mxu0 0
        %7234 = vmatprep.subr.bf16.mxu0 0
        %7235 = vmatpush2.bf16.msra.mxu0 0
        %7236 = vmatprep.subr.bf16.mxu0 0
        %7237 = vmatpush2.bf16.msra.mxu0 0
        %7238 = vmatprep.subr.bf16.mxu0 0
        %7239 = vmatpush2.bf16.msra.mxu0 0
        %7240 = vmatprep.subr.bf16.mxu0 0
        %7241 = vmatpush2.bf16.msra.mxu0 0
        %7242 = vmatprep.subr.bf16.mxu0 0
        %7243 = vmatpush2.bf16.msra.mxu0 0
        %7244 = vmatprep.mubr.bf16.mxu0 0
        %7245 = vmatmul.mubr.bf16.gmra.mxu0 %v6714
        %v7246 = vpop.f32.mrf.mxu0
        %v7247 = vadd.f32 %v7070, %v7246
        %v7248 = vpop.f32.mrf.mxu0
        %v7249 = vpop.f32.mrf.mxu0
        %v7250 = vadd.f32 %v7073, %v7249
        %v7251 = vpop.f32.mrf.mxu0
        %7252 = vmatprep.mubr.bf16.mxu0 0
        %7253 = vmatmul.mubr.bf16.gmra.mxu0 %v6724
        %v7254 = vpop.f32.mrf.mxu0
        %v7255 = vadd.f32 %v7078, %v7254
        %v7256 = vpop.f32.mrf.mxu0
        %v7257 = vpop.f32.mrf.mxu0
        %v7258 = vadd.f32 %v7081, %v7257
        %v7259 = vpop.f32.mrf.mxu0
        %7260 = vmatprep.mubr.bf16.mxu0 0
        %7261 = vmatmul.mubr.bf16.gmra.mxu0 %v6730
        %v7262 = vpop.f32.mrf.mxu0
        %v7263 = vadd.f32 %v7086, %v7262
        %v7264 = vpop.f32.mrf.mxu0
        %v7265 = vpop.f32.mrf.mxu0
        %v7266 = vadd.f32 %v7089, %v7265
        %v7267 = vpop.f32.mrf.mxu0
        %7268 = vmatprep.mubr.bf16.mxu0 0
        %7269 = vmatmul.mubr.bf16.gmra.mxu0 %v6736
        %v7270 = vpop.f32.mrf.mxu0
        %v7271 = vadd.f32 %v7094, %v7270
        %v7272 = vpop.f32.mrf.mxu0
        %v7273 = vpop.f32.mrf.mxu0
        %v7274 = vadd.f32 %v7097, %v7273
        %v7275 = vpop.f32.mrf.mxu0
        %7276 = vmatprep.mubr.bf16.mxu0 0
        %7277 = vmatmul.mubr.bf16.gmra.mxu0 %v6742
        %v7278 = vpop.f32.mrf.mxu0
        %v7279 = vadd.f32 %v7102, %v7278
        %v7280 = vpop.f32.mrf.mxu0
        %v7281 = vpop.f32.mrf.mxu0
        %v7282 = vadd.f32 %v7105, %v7281
        %v7283 = vpop.f32.mrf.mxu0
        %7284 = vmatprep.mubr.bf16.mxu0 0
        %7285 = vmatmul.mubr.bf16.gmra.mxu0 %v6748
        %v7286 = vpop.f32.mrf.mxu0
        %v7287 = vadd.f32 %v7110, %v7286
        %v7288 = vpop.f32.mrf.mxu0
        %v7289 = vpop.f32.mrf.mxu0
        %v7290 = vadd.f32 %v7113, %v7289
        %v7291 = vpop.f32.mrf.mxu0
        %7292 = vmatprep.mubr.bf16.mxu0 0
        %7293 = vmatmul.mubr.bf16.gmra.mxu0 %v6754
        %v7294 = vpop.f32.mrf.mxu0
        %v7295 = vadd.f32 %v7118, %v7294
        %v7296 = vpop.f32.mrf.mxu0
        %v7297 = vpop.f32.mrf.mxu0
        %v7298 = vadd.f32 %v7121, %v7297
        %v7299 = vpop.f32.mrf.mxu0
        %7300 = vmatprep.mubr.bf16.mxu0 0
        %7301 = vmatmul.mubr.bf16.gmra.mxu0 %v6760
        %v7302 = vpop.f32.mrf.mxu0
        %v7303 = vadd.f32 %v7126, %v7302
        %v7304 = vpop.f32.mrf.mxu0
        %v7305 = vpop.f32.mrf.mxu0
        %v7306 = vadd.f32 %v7129, %v7305
        %v7307 = vpop.f32.mrf.mxu0
        %7308 = vmatprep.mubr.bf16.mxu0 0
        %7309 = vmatmul.mubr.bf16.gmra.mxu0 %v6766
        %v7310 = vpop.f32.mrf.mxu0
        %v7311 = vadd.f32 %v7134, %v7310
        %v7312 = vpop.f32.mrf.mxu0
        %v7313 = vpop.f32.mrf.mxu0
        %v7314 = vadd.f32 %v7137, %v7313
        %v7315 = vpop.f32.mrf.mxu0
        %7316 = vmatprep.mubr.bf16.mxu0 0
        %7317 = vmatmul.mubr.bf16.gmra.mxu0 %v6772
        %v7318 = vpop.f32.mrf.mxu0
        %v7319 = vadd.f32 %v7142, %v7318
        %v7320 = vpop.f32.mrf.mxu0
        %v7321 = vpop.f32.mrf.mxu0
        %v7322 = vadd.f32 %v7145, %v7321
        %v7323 = vpop.f32.mrf.mxu0
        %7324 = vmatprep.mubr.bf16.mxu0 0
        %7325 = vmatmul.mubr.bf16.gmra.mxu0 %v6778
        %v7326 = vpop.f32.mrf.mxu0
        %v7327 = vadd.f32 %v7150, %v7326
        %v7328 = vpop.f32.mrf.mxu0
        %v7329 = vpop.f32.mrf.mxu0
        %v7330 = vadd.f32 %v7153, %v7329
        %v7331 = vpop.f32.mrf.mxu0
        %7332 = vmatprep.mubr.bf16.mxu0 0
        %7333 = vmatmul.mubr.bf16.gmra.mxu0 %v6784
        %v7334 = vpop.f32.mrf.mxu0
        %v7335 = vadd.f32 %v7158, %v7334
        %v7336 = vpop.f32.mrf.mxu0
        %v7337 = vpop.f32.mrf.mxu0
        %v7338 = vadd.f32 %v7161, %v7337
        %v7339 = vpop.f32.mrf.mxu0
        %7340 = vmatprep.mubr.bf16.mxu0 0
        %7341 = vmatmul.mubr.bf16.gmra.mxu0 %v6790
        %v7342 = vpop.f32.mrf.mxu0
        %v7343 = vadd.f32 %v7166, %v7342
        %v7344 = vpop.f32.mrf.mxu0
        %v7345 = vpop.f32.mrf.mxu0
        %v7346 = vadd.f32 %v7169, %v7345
        %v7347 = vpop.f32.mrf.mxu0
        %7348 = vmatprep.mubr.bf16.mxu0 0
        %7349 = vmatmul.mubr.bf16.gmra.mxu0 %v6796
        %v7350 = vpop.f32.mrf.mxu0
        %v7351 = vadd.f32 %v7174, %v7350
        %v7352 = vpop.f32.mrf.mxu0
        %v7353 = vpop.f32.mrf.mxu0
        %v7354 = vadd.f32 %v7177, %v7353
        %v7355 = vpop.f32.mrf.mxu0
        %7356 = vmatprep.mubr.bf16.mxu0 0
        %7357 = vmatmul.mubr.bf16.gmra.mxu0 %v6802
        %v7358 = vpop.f32.mrf.mxu0
        %v7359 = vadd.f32 %v7182, %v7358
        %v7360 = vpop.f32.mrf.mxu0
        %v7361 = vpop.f32.mrf.mxu0
        %v7362 = vadd.f32 %v7185, %v7361
        %v7363 = vpop.f32.mrf.mxu0
        %7364 = vmatprep.mubr.bf16.mxu0 0
        %7365 = vmatmul.mubr.bf16.gmra.mxu0 %v6808
        %v7366 = vpop.f32.mrf.mxu0
        %v7367 = vadd.f32 %v7190, %v7366
        %v7368 = vpop.f32.mrf.mxu0
        %v7369 = vpop.f32.mrf.mxu0
        %v7370 = vadd.f32 %v7193, %v7369
        %v7371 = vpop.f32.mrf.mxu0
        %7372 = vmatprep.mubr.bf16.mxu0 0
        %7373 = vmatmul.mubr.bf16.gmra.mxu0 %v6820
        %v7374 = vpop.f32.mrf.mxu0
        %v7375 = vadd.f32 %v7198, %v7374
        %v7376 = vpop.f32.mrf.mxu0
        %v7377 = vpop.f32.mrf.mxu0
        %v7378 = vadd.f32 %v7201, %v7377
        %v7379 = vpop.f32.mrf.mxu0
        %7380 = vmatprep.mubr.bf16.mxu0 0
        %7381 = vmatmul.mubr.bf16.gmra.mxu0 %v6836
        %v7382 = vpop.f32.mrf.mxu0
        %v7383 = vadd.f32 %v7206, %v7382
        %v7384 = vpop.f32.mrf.mxu0
        %v7385 = vpop.f32.mrf.mxu0
        %v7386 = vadd.f32 %v7209, %v7385
        %v7387 = vpop.f32.mrf.mxu0
        %7388 = vdwg.mxu0
        %v7389 = vld [vmem:[#allocation2 + $0x18] sm:$0xc]
        %v7390 = vld [vmem:[#allocation2 + $0x1c] sm:$0xf]
        %v7391 = vld [vmem:[#allocation2 + $0x20] sm:$0xf]
        %v7392 = vld [vmem:[#allocation2 + $0x24] sm:$0xf]
        %v7393 = vld [vmem:[#allocation2 + $0x28] sm:$0xf]
        %v7394 = vld [vmem:[#allocation2 + $0x2c] sm:$0xf]
        %v7395 = vld [vmem:[#allocation2 + $0x30] sm:$0xf]
        %v7396 = vld [vmem:[#allocation2 + $0x34] sm:$0xf]
        %v7397 = vld [vmem:[#allocation2 + $0x38] sm:$0xf]
        %v7398 = vld [vmem:[#allocation2 + $0x3c] sm:$0xf]
        %v7399 = vld [vmem:[#allocation2 + $0x40] sm:$0xf]
        %v7400 = vld [vmem:[#allocation2 + $0x44] sm:$0xf]
        %v7401 = vld [vmem:[#allocation2 + $0x48] sm:$0xf]
        %v7402 = vld [vmem:[#allocation2 + $0x4c] sm:$0xf]
        %v7403 = vld [vmem:[#allocation2 + $0x50] sm:$0xf]
        %v7404 = vld [vmem:[#allocation2 + $0x54] sm:$0xf]
        %v7405 = vld [vmem:[#allocation2 + $0x58] sm:$0xf]
        %v7406 = vld [vmem:[#allocation2 + $0x5c] sm:$0xf]
        %v7407 = vld [vmem:[#allocation2 + $0x60] sm:$0xf]
        %v7408 = vld [vmem:[#allocation2 + $0x64] sm:$0xf]
        %v7409 = vld [vmem:[#allocation2 + $0x68] sm:$0xf]
        %v7410 = vld [vmem:[#allocation2 + $0x6c] sm:$0xf]
        %v7411 = vld [vmem:[#allocation2 + $0x70] sm:$0xf]
        %v7412 = vld [vmem:[#allocation2 + $0x74] sm:$0xf]
        %v7413 = vld [vmem:[#allocation2 + $0x78] sm:$0xf]
        %v7414 = vld [vmem:[#allocation2 + $0x7c] sm:$0xf]
        %v7415 = vld [vmem:[#allocation2 + $0x80] sm:$0xf]
        %v7416 = vld [vmem:[#allocation2 + $0x84] sm:$0xf]
        %v7417 = vld [vmem:[#allocation2 + $0x88] sm:$0xf]
        %v7418 = vld [vmem:[#allocation2 + $0x8c] sm:$0xf]
        %v7419 = vld [vmem:[#allocation2 + $0x90] sm:$0xf]
        %v7420 = vld [vmem:[#allocation2 + $0x94] sm:$0xf]
        %v7421 = vld [vmem:[#allocation2 + $0x98] sm:$0xf]
        %v7422 = vld [vmem:[#allocation2 + $0x9c] sm:$0xf]
        %v7423 = vld [vmem:[#allocation2 + $0xa0] sm:$0xf]
        %v7424 = vld [vmem:[#allocation2 + $0xa4] sm:$0xf]
        %v7425 = vld [vmem:[#allocation2 + $0xa8] sm:$0x7]
        %v7426 = vld [vmem:[#allocation2 + $0x18] sm:$0x8]
        %v7427 = vld [vmem:[#allocation2 + $0xa8] sm:$0xf]
        %v7465 = vunpack.c.l.b16 %v7389
        %v7466 = vunpack.c.l.b16 %v7390
        %v7467 = vunpack.c.l.b16 %v7391
        %v7468 = vunpack.c.l.b16 %v7392
        %v7469 = vunpack.c.l.b16 %v7393
        %v7470 = vunpack.c.l.b16 %v7394
        %v7471 = vunpack.c.l.b16 %v7395
        %v7472 = vunpack.c.l.b16 %v7396
        %v7473 = vunpack.c.l.b16 %v7397
        %v7474 = vunpack.c.l.b16 %v7398
        %v7475 = vunpack.c.l.b16 %v7399
        %v7476 = vunpack.c.l.b16 %v7400
        %v7477 = vunpack.c.l.b16 %v7401
        %v7478 = vunpack.c.l.b16 %v7402
        %v7479 = vunpack.c.l.b16 %v7403
        %v7480 = vunpack.c.l.b16 %v7404
        %v7481 = vunpack.c.l.b16 %v7405
        %v7482 = vunpack.c.l.b16 %v7406
        %v7483 = vunpack.c.l.b16 %v7407
        %v7484 = vunpack.c.l.b16 %v7408
        %v7485 = vunpack.c.l.b16 %v7409
        %v7486 = vunpack.c.l.b16 %v7410
        %v7487 = vunpack.c.l.b16 %v7411
        %v7488 = vunpack.c.l.b16 %v7412
        %v7489 = vunpack.c.l.b16 %v7413
        %v7490 = vunpack.c.l.b16 %v7414
        %v7491 = vunpack.c.l.b16 %v7415
        %v7492 = vunpack.c.l.b16 %v7416
        %v7493 = vunpack.c.l.b16 %v7417
        %v7494 = vunpack.c.l.b16 %v7418
        %v7495 = vunpack.c.l.b16 %v7419
        %v7496 = vunpack.c.l.b16 %v7420
        %v7497 = vunpack.c.l.b16 %v7421
        %v7498 = vunpack.c.l.b16 %v7422
        %v7499 = vunpack.c.l.b16 %v7423
        %v7500 = vunpack.c.l.b16 %v7424
        %v7501 = vunpack.c.l.b16 %v7425
        %v7502 = vpack.c.b16 %v7466, %v7465
        %v7503 = vpack.c.b16 %v7468, %v7467
        %v7504 = vpack.c.b16 %v7470, %v7469
        %v7505 = vpack.c.b16 %v7472, %v7471
        %v7506 = vpack.c.b16 %v7474, %v7473
        %v7507 = vpack.c.b16 %v7476, %v7475
        %v7508 = vpack.c.b16 %v7478, %v7477
        %v7509 = vpack.c.b16 %v7480, %v7479
        %v7510 = vpack.c.b16 %v7482, %v7481
        %v7511 = vpack.c.b16 %v7484, %v7483
        %v7512 = vpack.c.b16 %v7486, %v7485
        %v7513 = vpack.c.b16 %v7488, %v7487
        %v7514 = vpack.c.b16 %v7490, %v7489
        %v7515 = vpack.c.b16 %v7492, %v7491
        %v7516 = vpack.c.b16 %v7494, %v7493
        %v7517 = vpack.c.b16 %v7496, %v7495
        %v7518 = vpack.c.b16 %v7498, %v7497
        %v7519 = vpack.c.b16 %v7500, %v7499
        %v7520 = vpack.c.b16 %v7501, %v7501
        %v7522 = vunpack.c.l.b16 %v7426
        %v7523 = vpack.c.b16 %v7466, %v7522
        %v7525 = vshrl.u32 %v7523, 16
        %v7527 = vshll.u32 %v7523, 16
        %v7529 = vrot.slane %v7527, 1
        %v7530 = vor.u32 %v7525, %v7529
        %v7532 = vshll.u32 %v7503, 16
        %v7534 = vrot.slane %v7532, 1
        %v7535 = vsel %vm1198, %v7530, %v7534
        %v7536 = vshrl.u32 %v7503, 16
        %v7538 = vor.u32 %v7536, %v7534
        %v7540 = vshll.u32 %v7504, 16
        %v7542 = vrot.slane %v7540, 1
        %v7543 = vsel %vm1198, %v7538, %v7542
        %v7544 = vshrl.u32 %v7504, 16
        %v7546 = vor.u32 %v7544, %v7542
        %v7548 = vshll.u32 %v7505, 16
        %v7550 = vrot.slane %v7548, 1
        %v7551 = vsel %vm1198, %v7546, %v7550
        %v7552 = vshrl.u32 %v7505, 16
        %v7554 = vor.u32 %v7552, %v7550
        %v7556 = vshll.u32 %v7506, 16
        %v7558 = vrot.slane %v7556, 1
        %v7559 = vsel %vm1198, %v7554, %v7558
        %v7560 = vshrl.u32 %v7506, 16
        %v7562 = vor.u32 %v7560, %v7558
        %v7564 = vshll.u32 %v7507, 16
        %v7566 = vrot.slane %v7564, 1
        %v7567 = vsel %vm1198, %v7562, %v7566
        %v7568 = vshrl.u32 %v7507, 16
        %v7570 = vor.u32 %v7568, %v7566
        %v7572 = vshll.u32 %v7508, 16
        %v7574 = vrot.slane %v7572, 1
        %v7575 = vsel %vm1198, %v7570, %v7574
        %v7576 = vshrl.u32 %v7508, 16
        %v7578 = vor.u32 %v7576, %v7574
        %v7580 = vshll.u32 %v7509, 16
        %v7582 = vrot.slane %v7580, 1
        %v7583 = vsel %vm1198, %v7578, %v7582
        %v7584 = vshrl.u32 %v7509, 16
        %v7586 = vor.u32 %v7584, %v7582
        %v7588 = vshll.u32 %v7510, 16
        %v7590 = vrot.slane %v7588, 1
        %v7591 = vsel %vm1198, %v7586, %v7590
        %v7592 = vshrl.u32 %v7510, 16
        %v7594 = vor.u32 %v7592, %v7590
        %v7596 = vshll.u32 %v7511, 16
        %v7598 = vrot.slane %v7596, 1
        %v7599 = vsel %vm1198, %v7594, %v7598
        %v7600 = vshrl.u32 %v7511, 16
        %v7602 = vor.u32 %v7600, %v7598
        %v7604 = vshll.u32 %v7512, 16
        %v7606 = vrot.slane %v7604, 1
        %v7607 = vsel %vm1198, %v7602, %v7606
        %v7608 = vshrl.u32 %v7512, 16
        %v7610 = vor.u32 %v7608, %v7606
        %v7612 = vshll.u32 %v7513, 16
        %v7614 = vrot.slane %v7612, 1
        %v7615 = vsel %vm1198, %v7610, %v7614
        %v7616 = vshrl.u32 %v7513, 16
        %v7618 = vor.u32 %v7616, %v7614
        %v7620 = vshll.u32 %v7514, 16
        %v7622 = vrot.slane %v7620, 1
        %v7623 = vsel %vm1198, %v7618, %v7622
        %v7624 = vshrl.u32 %v7514, 16
        %v7626 = vor.u32 %v7624, %v7622
        %v7628 = vshll.u32 %v7515, 16
        %v7630 = vrot.slane %v7628, 1
        %v7631 = vsel %vm1198, %v7626, %v7630
        %v7632 = vshrl.u32 %v7515, 16
        %v7634 = vor.u32 %v7632, %v7630
        %v7636 = vshll.u32 %v7516, 16
        %v7638 = vrot.slane %v7636, 1
        %v7639 = vsel %vm1198, %v7634, %v7638
        %v7640 = vshrl.u32 %v7516, 16
        %v7642 = vor.u32 %v7640, %v7638
        %v7644 = vshll.u32 %v7517, 16
        %v7646 = vrot.slane %v7644, 1
        %v7647 = vsel %vm1198, %v7642, %v7646
        %v7648 = vshrl.u32 %v7517, 16
        %v7650 = vor.u32 %v7648, %v7646
        %v7652 = vshll.u32 %v7518, 16
        %v7654 = vrot.slane %v7652, 1
        %v7655 = vsel %vm1198, %v7650, %v7654
        %v7656 = vshrl.u32 %v7518, 16
        %v7658 = vor.u32 %v7656, %v7654
        %v7660 = vshll.u32 %v7519, 16
        %v7662 = vrot.slane %v7660, 1
        %v7663 = vsel %vm1198, %v7658, %v7662
        %v7664 = vshrl.u32 %v7519, 16
        %v7666 = vor.u32 %v7664, %v7662
        %v7668 = vshll.u32 %v7520, 16
        %v7670 = vrot.slane %v7668, 1
        %v7671 = vsel %vm1198, %v7666, %v7670
        %v7672 = vshrl.u32 %v7520, 16
        %v7674 = vor.u32 %v7672, %v7670
        %v7676 = vunpack.c.l.b16 %v7427
        %v7677 = vpack.c.b16 %v7676, %v7676
        %v7678 = vrot.slane %v7523, 1
        %v7679 = vrot.slane %v7503, 1
        %v7680 = vsel %vm1352, %v7678, %v7679
        %v7681 = vrot.slane %v7504, 1
        %v7682 = vsel %vm1352, %v7679, %v7681
        %v7683 = vrot.slane %v7505, 1
        %v7684 = vsel %vm1352, %v7681, %v7683
        %v7685 = vrot.slane %v7506, 1
        %v7686 = vsel %vm1352, %v7683, %v7685
        %v7687 = vrot.slane %v7507, 1
        %v7688 = vsel %vm1352, %v7685, %v7687
        %v7689 = vrot.slane %v7508, 1
        %v7690 = vsel %vm1352, %v7687, %v7689
        %v7691 = vrot.slane %v7509, 1
        %v7692 = vsel %vm1352, %v7689, %v7691
        %v7693 = vrot.slane %v7510, 1
        %v7694 = vsel %vm1352, %v7691, %v7693
        %v7695 = vrot.slane %v7511, 1
        %v7696 = vsel %vm1352, %v7693, %v7695
        %v7697 = vrot.slane %v7512, 1
        %v7698 = vsel %vm1352, %v7695, %v7697
        %v7699 = vrot.slane %v7513, 1
        %v7700 = vsel %vm1352, %v7697, %v7699
        %v7701 = vrot.slane %v7514, 1
        %v7702 = vsel %vm1352, %v7699, %v7701
        %v7703 = vrot.slane %v7515, 1
        %v7704 = vsel %vm1352, %v7701, %v7703
        %v7705 = vrot.slane %v7516, 1
        %v7706 = vsel %vm1352, %v7703, %v7705
        %v7707 = vrot.slane %v7517, 1
        %v7708 = vsel %vm1352, %v7705, %v7707
        %v7709 = vrot.slane %v7518, 1
        %v7710 = vsel %vm1352, %v7707, %v7709
        %v7711 = vrot.slane %v7519, 1
        %v7712 = vsel %vm1352, %v7709, %v7711
        %v7713 = vrot.slane %v7677, 1
        %v7714 = vsel %vm1352, %v7711, %v7713
        %s7715 = scalar_lea.vmem [#allocation8], 384
        %v7716 = vld [vmem:[%s7715] sm:$0xf]
        %v7717 = vld [vmem:[%s7715 + $0x4] sm:$0xf]
        %v7718 = vld [vmem:[%s7715 + $0x8] sm:$0xf]
        %v7719 = vld [vmem:[%s7715 + $0xc] sm:$0xf]
        %v7720 = vld [vmem:[%s7715 + $0x10] sm:$0xf]
        %v7721 = vld [vmem:[%s7715 + $0x14] sm:$0xf]
        %v7722 = vld [vmem:[%s7715 + $0x18] sm:$0xf]
        %v7723 = vld [vmem:[%s7715 + $0x1c] sm:$0xf]
        %v7724 = vld [vmem:[%s7715 + $0x20] sm:$0xf]
        %v7725 = vld [vmem:[%s7715 + $0x24] sm:$0xf]
        %v7726 = vld [vmem:[%s7715 + $0x28] sm:$0xf]
        %v7727 = vld [vmem:[%s7715 + $0x2c] sm:$0xf]
        %v7728 = vld [vmem:[%s7715 + $0x30] sm:$0xf]
        %v7729 = vld [vmem:[%s7715 + $0x34] sm:$0xf]
        %v7730 = vld [vmem:[%s7715 + $0x38] sm:$0xf]
        %v7731 = vld [vmem:[%s7715 + $0x3c] sm:$0xf]
        %v7732 = vld [vmem:[%s7715 + $0x40] sm:$0xf]
        %v7733 = vld [vmem:[%s7715 + $0x44] sm:$0xf]
        %v7734 = vld [vmem:[%s7715 + $0x48] sm:$0xf]
        %v7735 = vld [vmem:[%s7715 + $0x4c] sm:$0xf]
        %v7736 = vld [vmem:[%s7715 + $0x50] sm:$0xf]
        %v7737 = vld [vmem:[%s7715 + $0x54] sm:$0xf]
        %v7738 = vld [vmem:[%s7715 + $0x58] sm:$0xf]
        %v7739 = vld [vmem:[%s7715 + $0x5c] sm:$0xf]
        %v7740 = vld [vmem:[%s7715 + $0x60] sm:$0xf]
        %v7741 = vld [vmem:[%s7715 + $0x64] sm:$0xf]
        %v7742 = vld [vmem:[%s7715 + $0x68] sm:$0xf]
        %v7743 = vld [vmem:[%s7715 + $0x6c] sm:$0xf]
        %v7744 = vld [vmem:[%s7715 + $0x70] sm:$0xf]
        %v7745 = vld [vmem:[%s7715 + $0x74] sm:$0xf]
        %v7746 = vld [vmem:[%s7715 + $0x78] sm:$0xf]
        %v7747 = vld [vmem:[%s7715 + $0x7c] sm:$0xf]
        %v7748 = vld [vmem:[%s7715 + $0x80] sm:$0xf]
        %v7749 = vld [vmem:[%s7715 + $0x84] sm:$0xf]
        %v7750 = vld [vmem:[%s7715 + $0x88] sm:$0xf]
        %v7751 = vld [vmem:[%s7715 + $0x8c] sm:$0xf]
        %v7752 = vld [vmem:[%s7715 + $0x90] sm:$0xf]
        %v7753 = vld [vmem:[%s7715 + $0x94] sm:$0xf]
        %v7754 = vld [vmem:[%s7715 + $0x98] sm:$0xf]
        %v7755 = vld [vmem:[%s7715 + $0x9c] sm:$0xf]
        %v7756 = vld [vmem:[%s7715 + $0xa0] sm:$0xf]
        %v7757 = vld [vmem:[%s7715 + $0xa4] sm:$0xf]
        %v7758 = vld [vmem:[%s7715 + $0xa8] sm:$0xf]
        %v7759 = vld [vmem:[%s7715 + $0xac] sm:$0xf]
        %v7760 = vld [vmem:[%s7715 + $0xb0] sm:$0xf]
        %v7761 = vld [vmem:[%s7715 + $0xb4] sm:$0xf]
        %v7762 = vld [vmem:[%s7715 + $0xb8] sm:$0xf]
        %v7763 = vld [vmem:[%s7715 + $0xbc] sm:$0xf]
        %v7765 = vshrl.u32 %v7502, 16
        %v7767 = vrot.slane %v7765, 2
        %v7768 = vshll.u32 %v7502, 16
        %v7770 = vrot.slane %v7768, 3
        %v7771 = vor.u32 %v7767, %v7770
        %v7772 = vrot.slane %v7536, 2
        %v7773 = vrot.slane %v7532, 3
        %v7774 = vor.u32 %v7772, %v7773
        %v7775 = vsel %vm3594, %v7771, %v7774
        %v7777 = vshrl.u32 %v7535, 16
        %v7779 = vrot.slane %v7777, 2
        %v7780 = vshll.u32 %v7535, 16
        %v7782 = vrot.slane %v7780, 3
        %v7783 = vor.u32 %v7779, %v7782
        %v7785 = vshrl.u32 %v7543, 16
        %v7787 = vrot.slane %v7785, 2
        %v7788 = vshll.u32 %v7543, 16
        %v7790 = vrot.slane %v7788, 3
        %v7791 = vor.u32 %v7787, %v7790
        %v7792 = vsel %vm3594, %v7783, %v7791
        %v7794 = vshrl.u32 %v7680, 16
        %v7796 = vrot.slane %v7794, 2
        %v7797 = vshll.u32 %v7680, 16
        %v7799 = vrot.slane %v7797, 3
        %v7800 = vor.u32 %v7796, %v7799
        %v7802 = vshrl.u32 %v7682, 16
        %v7804 = vrot.slane %v7802, 2
        %v7805 = vshll.u32 %v7682, 16
        %v7807 = vrot.slane %v7805, 3
        %v7808 = vor.u32 %v7804, %v7807
        %v7809 = vsel %vm3594, %v7800, %v7808
        %v7810 = vrot.slane %v7544, 2
        %v7811 = vrot.slane %v7540, 3
        %v7812 = vor.u32 %v7810, %v7811
        %v7813 = vsel %vm3594, %v7774, %v7812
        %v7815 = vshrl.u32 %v7551, 16
        %v7817 = vrot.slane %v7815, 2
        %v7818 = vshll.u32 %v7551, 16
        %v7820 = vrot.slane %v7818, 3
        %v7821 = vor.u32 %v7817, %v7820
        %v7822 = vsel %vm3594, %v7791, %v7821
        %v7824 = vshrl.u32 %v7684, 16
        %v7826 = vrot.slane %v7824, 2
        %v7827 = vshll.u32 %v7684, 16
        %v7829 = vrot.slane %v7827, 3
        %v7830 = vor.u32 %v7826, %v7829
        %v7831 = vsel %vm3594, %v7808, %v7830
        %v7832 = vrot.slane %v7552, 2
        %v7833 = vrot.slane %v7548, 3
        %v7834 = vor.u32 %v7832, %v7833
        %v7835 = vsel %vm3594, %v7812, %v7834
        %v7837 = vshrl.u32 %v7559, 16
        %v7839 = vrot.slane %v7837, 2
        %v7840 = vshll.u32 %v7559, 16
        %v7842 = vrot.slane %v7840, 3
        %v7843 = vor.u32 %v7839, %v7842
        %v7844 = vsel %vm3594, %v7821, %v7843
        %v7846 = vshrl.u32 %v7686, 16
        %v7848 = vrot.slane %v7846, 2
        %v7849 = vshll.u32 %v7686, 16
        %v7851 = vrot.slane %v7849, 3
        %v7852 = vor.u32 %v7848, %v7851
        %v7853 = vsel %vm3594, %v7830, %v7852
        %v7854 = vrot.slane %v7560, 2
        %v7855 = vrot.slane %v7556, 3
        %v7856 = vor.u32 %v7854, %v7855
        %v7857 = vsel %vm3594, %v7834, %v7856
        %v7859 = vshrl.u32 %v7567, 16
        %v7861 = vrot.slane %v7859, 2
        %v7862 = vshll.u32 %v7567, 16
        %v7864 = vrot.slane %v7862, 3
        %v7865 = vor.u32 %v7861, %v7864
        %v7866 = vsel %vm3594, %v7843, %v7865
        %v7868 = vshrl.u32 %v7688, 16
        %v7870 = vrot.slane %v7868, 2
        %v7871 = vshll.u32 %v7688, 16
        %v7873 = vrot.slane %v7871, 3
        %v7874 = vor.u32 %v7870, %v7873
        %v7875 = vsel %vm3594, %v7852, %v7874
        %v7876 = vrot.slane %v7568, 2
        %v7877 = vrot.slane %v7564, 3
        %v7878 = vor.u32 %v7876, %v7877
        %v7879 = vsel %vm3594, %v7856, %v7878
        %v7881 = vshrl.u32 %v7575, 16
        %v7883 = vrot.slane %v7881, 2
        %v7884 = vshll.u32 %v7575, 16
        %v7886 = vrot.slane %v7884, 3
        %v7887 = vor.u32 %v7883, %v7886
        %v7888 = vsel %vm3594, %v7865, %v7887
        %v7890 = vshrl.u32 %v7690, 16
        %v7892 = vrot.slane %v7890, 2
        %v7893 = vshll.u32 %v7690, 16
        %v7895 = vrot.slane %v7893, 3
        %v7896 = vor.u32 %v7892, %v7895
        %v7897 = vsel %vm3594, %v7874, %v7896
        %v7898 = vrot.slane %v7576, 2
        %v7899 = vrot.slane %v7572, 3
        %v7900 = vor.u32 %v7898, %v7899
        %v7901 = vsel %vm3594, %v7878, %v7900
        %v7903 = vshrl.u32 %v7583, 16
        %v7905 = vrot.slane %v7903, 2
        %v7906 = vshll.u32 %v7583, 16
        %v7908 = vrot.slane %v7906, 3
        %v7909 = vor.u32 %v7905, %v7908
        %v7910 = vsel %vm3594, %v7887, %v7909
        %v7912 = vshrl.u32 %v7692, 16
        %v7914 = vrot.slane %v7912, 2
        %v7915 = vshll.u32 %v7692, 16
        %v7917 = vrot.slane %v7915, 3
        %v7918 = vor.u32 %v7914, %v7917
        %v7919 = vsel %vm3594, %v7896, %v7918
        %v7920 = vrot.slane %v7584, 2
        %v7921 = vrot.slane %v7580, 3
        %v7922 = vor.u32 %v7920, %v7921
        %v7923 = vsel %vm3594, %v7900, %v7922
        %v7925 = vshrl.u32 %v7591, 16
        %v7927 = vrot.slane %v7925, 2
        %v7928 = vshll.u32 %v7591, 16
        %v7930 = vrot.slane %v7928, 3
        %v7931 = vor.u32 %v7927, %v7930
        %v7932 = vsel %vm3594, %v7909, %v7931
        %v7934 = vshrl.u32 %v7694, 16
        %v7936 = vrot.slane %v7934, 2
        %v7937 = vshll.u32 %v7694, 16
        %v7939 = vrot.slane %v7937, 3
        %v7940 = vor.u32 %v7936, %v7939
        %v7941 = vsel %vm3594, %v7918, %v7940
        %v7942 = vrot.slane %v7592, 2
        %v7943 = vrot.slane %v7588, 3
        %v7944 = vor.u32 %v7942, %v7943
        %v7945 = vsel %vm3594, %v7922, %v7944
        %v7947 = vshrl.u32 %v7599, 16
        %v7949 = vrot.slane %v7947, 2
        %v7950 = vshll.u32 %v7599, 16
        %v7952 = vrot.slane %v7950, 3
        %v7953 = vor.u32 %v7949, %v7952
        %v7954 = vsel %vm3594, %v7931, %v7953
        %v7956 = vshrl.u32 %v7696, 16
        %v7958 = vrot.slane %v7956, 2
        %v7959 = vshll.u32 %v7696, 16
        %v7961 = vrot.slane %v7959, 3
        %v7962 = vor.u32 %v7958, %v7961
        %v7963 = vsel %vm3594, %v7940, %v7962
        %v7964 = vrot.slane %v7600, 2
        %v7965 = vrot.slane %v7596, 3
        %v7966 = vor.u32 %v7964, %v7965
        %v7967 = vsel %vm3594, %v7944, %v7966
        %v7969 = vshrl.u32 %v7607, 16
        %v7971 = vrot.slane %v7969, 2
        %v7972 = vshll.u32 %v7607, 16
        %v7974 = vrot.slane %v7972, 3
        %v7975 = vor.u32 %v7971, %v7974
        %v7976 = vsel %vm3594, %v7953, %v7975
        %v7978 = vshrl.u32 %v7698, 16
        %v7980 = vrot.slane %v7978, 2
        %v7981 = vshll.u32 %v7698, 16
        %v7983 = vrot.slane %v7981, 3
        %v7984 = vor.u32 %v7980, %v7983
        %v7985 = vsel %vm3594, %v7962, %v7984
        %v7986 = vrot.slane %v7608, 2
        %v7987 = vrot.slane %v7604, 3
        %v7988 = vor.u32 %v7986, %v7987
        %v7989 = vsel %vm3594, %v7966, %v7988
        %v7991 = vshrl.u32 %v7615, 16
        %v7993 = vrot.slane %v7991, 2
        %v7994 = vshll.u32 %v7615, 16
        %v7996 = vrot.slane %v7994, 3
        %v7997 = vor.u32 %v7993, %v7996
        %v7998 = vsel %vm3594, %v7975, %v7997
        %v8000 = vshrl.u32 %v7700, 16
        %v8002 = vrot.slane %v8000, 2
        %v8003 = vshll.u32 %v7700, 16
        %v8005 = vrot.slane %v8003, 3
        %v8006 = vor.u32 %v8002, %v8005
        %v8007 = vsel %vm3594, %v7984, %v8006
        %v8008 = vrot.slane %v7616, 2
        %v8009 = vrot.slane %v7612, 3
        %v8010 = vor.u32 %v8008, %v8009
        %v8011 = vsel %vm3594, %v7988, %v8010
        %v8013 = vshrl.u32 %v7623, 16
        %v8015 = vrot.slane %v8013, 2
        %v8016 = vshll.u32 %v7623, 16
        %v8018 = vrot.slane %v8016, 3
        %v8019 = vor.u32 %v8015, %v8018
        %v8020 = vsel %vm3594, %v7997, %v8019
        %v8022 = vshrl.u32 %v7702, 16
        %v8024 = vrot.slane %v8022, 2
        %v8025 = vshll.u32 %v7702, 16
        %v8027 = vrot.slane %v8025, 3
        %v8028 = vor.u32 %v8024, %v8027
        %v8029 = vsel %vm3594, %v8006, %v8028
        %v8030 = vrot.slane %v7624, 2
        %v8031 = vrot.slane %v7620, 3
        %v8032 = vor.u32 %v8030, %v8031
        %v8033 = vsel %vm3594, %v8010, %v8032
        %v8035 = vshrl.u32 %v7631, 16
        %v8037 = vrot.slane %v8035, 2
        %v8038 = vshll.u32 %v7631, 16
        %v8040 = vrot.slane %v8038, 3
        %v8041 = vor.u32 %v8037, %v8040
        %v8042 = vsel %vm3594, %v8019, %v8041
        %v8044 = vshrl.u32 %v7704, 16
        %v8046 = vrot.slane %v8044, 2
        %v8047 = vshll.u32 %v7704, 16
        %v8049 = vrot.slane %v8047, 3
        %v8050 = vor.u32 %v8046, %v8049
        %v8051 = vsel %vm3594, %v8028, %v8050
        %v8052 = vrot.slane %v7632, 2
        %v8053 = vrot.slane %v7628, 3
        %v8054 = vor.u32 %v8052, %v8053
        %v8055 = vsel %vm3594, %v8032, %v8054
        %v8057 = vshrl.u32 %v7639, 16
        %v8059 = vrot.slane %v8057, 2
        %v8060 = vshll.u32 %v7639, 16
        %v8062 = vrot.slane %v8060, 3
        %v8063 = vor.u32 %v8059, %v8062
        %v8064 = vsel %vm3594, %v8041, %v8063
        %v8066 = vshrl.u32 %v7706, 16
        %v8068 = vrot.slane %v8066, 2
        %v8069 = vshll.u32 %v7706, 16
        %v8071 = vrot.slane %v8069, 3
        %v8072 = vor.u32 %v8068, %v8071
        %v8073 = vsel %vm3594, %v8050, %v8072
        %v8074 = vrot.slane %v7640, 2
        %v8075 = vrot.slane %v7636, 3
        %v8076 = vor.u32 %v8074, %v8075
        %v8077 = vsel %vm3594, %v8054, %v8076
        %v8079 = vshrl.u32 %v7647, 16
        %v8081 = vrot.slane %v8079, 2
        %v8082 = vshll.u32 %v7647, 16
        %v8084 = vrot.slane %v8082, 3
        %v8085 = vor.u32 %v8081, %v8084
        %v8086 = vsel %vm3594, %v8063, %v8085
        %v8088 = vshrl.u32 %v7708, 16
        %v8090 = vrot.slane %v8088, 2
        %v8091 = vshll.u32 %v7708, 16
        %v8093 = vrot.slane %v8091, 3
        %v8094 = vor.u32 %v8090, %v8093
        %v8095 = vsel %vm3594, %v8072, %v8094
        %v8096 = vrot.slane %v7648, 2
        %v8097 = vrot.slane %v7644, 3
        %v8098 = vor.u32 %v8096, %v8097
        %v8099 = vsel %vm3594, %v8076, %v8098
        %v8101 = vshrl.u32 %v7655, 16
        %v8103 = vrot.slane %v8101, 2
        %v8104 = vshll.u32 %v7655, 16
        %v8106 = vrot.slane %v8104, 3
        %v8107 = vor.u32 %v8103, %v8106
        %v8108 = vsel %vm3594, %v8085, %v8107
        %v8110 = vshrl.u32 %v7710, 16
        %v8112 = vrot.slane %v8110, 2
        %v8113 = vshll.u32 %v7710, 16
        %v8115 = vrot.slane %v8113, 3
        %v8116 = vor.u32 %v8112, %v8115
        %v8117 = vsel %vm3594, %v8094, %v8116
        %v8118 = vrot.slane %v7656, 2
        %v8119 = vrot.slane %v7652, 3
        %v8120 = vor.u32 %v8118, %v8119
        %v8121 = vsel %vm3594, %v8098, %v8120
        %v8123 = vshrl.u32 %v7663, 16
        %v8125 = vrot.slane %v8123, 2
        %v8126 = vshll.u32 %v7663, 16
        %v8128 = vrot.slane %v8126, 3
        %v8129 = vor.u32 %v8125, %v8128
        %v8130 = vsel %vm3594, %v8107, %v8129
        %v8132 = vshrl.u32 %v7712, 16
        %v8134 = vrot.slane %v8132, 2
        %v8135 = vshll.u32 %v7712, 16
        %v8137 = vrot.slane %v8135, 3
        %v8138 = vor.u32 %v8134, %v8137
        %v8139 = vsel %vm3594, %v8116, %v8138
        %v8140 = vrot.slane %v7664, 2
        %v8141 = vrot.slane %v7660, 3
        %v8142 = vor.u32 %v8140, %v8141
        %v8143 = vsel %vm3594, %v8120, %v8142
        %v8145 = vshrl.u32 %v7671, 16
        %v8147 = vrot.slane %v8145, 2
        %v8148 = vshll.u32 %v7671, 16
        %v8150 = vrot.slane %v8148, 3
        %v8151 = vor.u32 %v8147, %v8150
        %v8152 = vsel %vm3594, %v8129, %v8151
        %v8154 = vshrl.u32 %v7714, 16
        %v8156 = vrot.slane %v8154, 2
        %v8157 = vshll.u32 %v7714, 16
        %v8159 = vrot.slane %v8157, 3
        %v8160 = vor.u32 %v8156, %v8159
        %v8161 = vsel %vm3594, %v8138, %v8160
        %v8162 = vrot.slane %v7672, 2
        %v8163 = vrot.slane %v7668, 3
        %v8164 = vor.u32 %v8162, %v8163
        %v8165 = vsel %vm3594, %v8142, %v8164
        %v8167 = vshrl.u32 %v7674, 16
        %v8169 = vrot.slane %v8167, 2
        %v8170 = vshll.u32 %v7674, 16
        %v8172 = vrot.slane %v8170, 3
        %v8173 = vor.u32 %v8169, %v8172
        %v8174 = vsel %vm3594, %v8151, %v8173
        %v8176 = vshrl.u32 %v7713, 16
        %v8178 = vrot.slane %v8176, 2
        %v8179 = vshll.u32 %v7713, 16
        %v8181 = vrot.slane %v8179, 3
        %v8182 = vor.u32 %v8178, %v8181
        %v8183 = vsel %vm3594, %v8160, %v8182
        %v8286 = vunpack.c.l.b16 %v7716
        %v8287 = vunpack.c.l.b16 %v7717
        %v8288 = vunpack.c.l.b16 %v7718
        %v8289 = vunpack.c.l.b16 %v7719
        %v8290 = vunpack.c.l.b16 %v7720
        %v8291 = vunpack.c.l.b16 %v7721
        %v8292 = vunpack.c.l.b16 %v7722
        %v8293 = vunpack.c.l.b16 %v7723
        %v8294 = vunpack.c.l.b16 %v7724
        %v8295 = vunpack.c.l.b16 %v7725
        %v8296 = vunpack.c.l.b16 %v7726
        %v8297 = vunpack.c.l.b16 %v7727
        %v8298 = vunpack.c.l.b16 %v7728
        %v8299 = vunpack.c.l.b16 %v7729
        %v8300 = vunpack.c.l.b16 %v7730
        %v8301 = vunpack.c.l.b16 %v7731
        %v8302 = vunpack.c.l.b16 %v7732
        %v8303 = vunpack.c.l.b16 %v7733
        %v8304 = vunpack.c.l.b16 %v7734
        %v8305 = vunpack.c.l.b16 %v7735
        %v8306 = vunpack.c.l.b16 %v7736
        %v8307 = vunpack.c.l.b16 %v7737
        %v8308 = vunpack.c.l.b16 %v7738
        %v8309 = vunpack.c.l.b16 %v7739
        %v8310 = vunpack.c.l.b16 %v7740
        %v8311 = vunpack.c.l.b16 %v7741
        %v8312 = vunpack.c.l.b16 %v7742
        %v8313 = vunpack.c.l.b16 %v7743
        %v8314 = vunpack.c.l.b16 %v7744
        %v8315 = vunpack.c.l.b16 %v7745
        %v8316 = vunpack.c.l.b16 %v7746
        %v8317 = vunpack.c.l.b16 %v7747
        %v8318 = vunpack.c.l.b16 %v7748
        %v8319 = vunpack.c.l.b16 %v7749
        %v8320 = vunpack.c.l.b16 %v7750
        %v8321 = vunpack.c.l.b16 %v7751
        %v8322 = vunpack.c.l.b16 %v7752
        %v8323 = vunpack.c.l.b16 %v7753
        %v8324 = vunpack.c.l.b16 %v7754
        %v8325 = vunpack.c.l.b16 %v7755
        %v8326 = vunpack.c.l.b16 %v7756
        %v8327 = vunpack.c.l.b16 %v7757
        %v8328 = vunpack.c.l.b16 %v7758
        %v8329 = vunpack.c.l.b16 %v7759
        %v8330 = vunpack.c.l.b16 %v7760
        %v8331 = vunpack.c.l.b16 %v7761
        %v8332 = vunpack.c.l.b16 %v7762
        %v8333 = vunpack.c.l.b16 %v7763
        %v8334 = vpack.c.b16 %v8287, %v8286
        %v8335 = vpack.c.b16 %v8289, %v8288
        %v8336 = vpack.c.b16 %v8291, %v8290
        %v8337 = vpack.c.b16 %v8293, %v8292
        %v8338 = vpack.c.b16 %v8295, %v8294
        %v8339 = vpack.c.b16 %v8297, %v8296
        %v8340 = vpack.c.b16 %v8299, %v8298
        %v8341 = vpack.c.b16 %v8301, %v8300
        %v8342 = vpack.c.b16 %v8303, %v8302
        %v8343 = vpack.c.b16 %v8305, %v8304
        %v8344 = vpack.c.b16 %v8307, %v8306
        %v8345 = vpack.c.b16 %v8309, %v8308
        %v8346 = vpack.c.b16 %v8311, %v8310
        %v8347 = vpack.c.b16 %v8313, %v8312
        %v8348 = vpack.c.b16 %v8315, %v8314
        %v8349 = vpack.c.b16 %v8317, %v8316
        %v8350 = vpack.c.b16 %v8319, %v8318
        %v8351 = vpack.c.b16 %v8321, %v8320
        %v8352 = vpack.c.b16 %v8323, %v8322
        %v8353 = vpack.c.b16 %v8325, %v8324
        %v8354 = vpack.c.b16 %v8327, %v8326
        %v8355 = vpack.c.b16 %v8329, %v8328
        %v8356 = vpack.c.b16 %v8331, %v8330
        %v8357 = vpack.c.b16 %v8333, %v8332
        %8382 = vmatprep.subr.bf16.mxu0 0
        %8383 = vmatpush1.bf16.msra.mxu0 %v8341
        %8384 = vmatprep.subr.bf16.mxu0 0
        %8385 = vmatpush1.bf16.msra.mxu0 %v8340
        %8386 = vmatprep.subr.bf16.mxu0 0
        %8387 = vmatpush1.bf16.msra.mxu0 %v8339
        %8388 = vmatprep.subr.bf16.mxu0 0
        %8389 = vmatpush1.bf16.msra.mxu0 %v8338
        %8390 = vmatprep.subr.bf16.mxu0 0
        %8391 = vmatpush1.bf16.msra.mxu0 %v8337
        %8392 = vmatprep.subr.bf16.mxu0 0
        %8393 = vmatpush1.bf16.msra.mxu0 %v8336
        %8394 = vmatprep.subr.bf16.mxu0 0
        %8395 = vmatpush1.bf16.msra.mxu0 %v8335
        %8396 = vmatprep.subr.bf16.mxu0 0
        %8397 = vmatpush1.bf16.msra.mxu0 %v8334
        %8398 = vmatprep.subr.bf16.mxu0 0
        %8399 = vmatpush2.bf16.msra.mxu0 %v8349
        %8400 = vmatprep.subr.bf16.mxu0 0
        %8401 = vmatpush2.bf16.msra.mxu0 %v8348
        %8402 = vmatprep.subr.bf16.mxu0 0
        %8403 = vmatpush2.bf16.msra.mxu0 %v8347
        %8404 = vmatprep.subr.bf16.mxu0 0
        %8405 = vmatpush2.bf16.msra.mxu0 %v8346
        %8406 = vmatprep.subr.bf16.mxu0 0
        %8407 = vmatpush2.bf16.msra.mxu0 %v8345
        %8408 = vmatprep.subr.bf16.mxu0 0
        %8409 = vmatpush2.bf16.msra.mxu0 %v8344
        %8410 = vmatprep.subr.bf16.mxu0 0
        %8411 = vmatpush2.bf16.msra.mxu0 %v8343
        %8412 = vmatprep.subr.bf16.mxu0 0
        %8413 = vmatpush2.bf16.msra.mxu0 %v8342
        %8414 = vmatprep.mubr.bf16.mxu0 %v7792
        %8415 = vmatmul.mubr.bf16.gmra.mxu0 %v7775
        %v8416 = vpop.f32.mrf.mxu0
        %v8417 = vadd.f32 0.0, %v8416
        %v8418 = vpop.f32.mrf.mxu0
        %v8419 = vpop.f32.mrf.mxu0
        %v8420 = vadd.f32 0.0, %v8419
        %v8421 = vpop.f32.mrf.mxu0
        %8422 = vmatprep.mubr.bf16.mxu0 %v7822
        %8423 = vmatmul.mubr.bf16.gmra.mxu0 %v7813
        %v8424 = vpop.f32.mrf.mxu0
        %v8425 = vadd.f32 0.0, %v8424
        %v8426 = vpop.f32.mrf.mxu0
        %v8427 = vpop.f32.mrf.mxu0
        %v8428 = vadd.f32 0.0, %v8427
        %v8429 = vpop.f32.mrf.mxu0
        %8430 = vmatprep.mubr.bf16.mxu0 %v7844
        %8431 = vmatmul.mubr.bf16.gmra.mxu0 %v7835
        %v8432 = vpop.f32.mrf.mxu0
        %v8433 = vadd.f32 0.0, %v8432
        %v8434 = vpop.f32.mrf.mxu0
        %v8435 = vpop.f32.mrf.mxu0
        %v8436 = vadd.f32 0.0, %v8435
        %v8437 = vpop.f32.mrf.mxu0
        %8438 = vmatprep.mubr.bf16.mxu0 %v7866
        %8439 = vmatmul.mubr.bf16.gmra.mxu0 %v7857
        %v8440 = vpop.f32.mrf.mxu0
        %v8441 = vadd.f32 0.0, %v8440
        %v8442 = vpop.f32.mrf.mxu0
        %v8443 = vpop.f32.mrf.mxu0
        %v8444 = vadd.f32 0.0, %v8443
        %v8445 = vpop.f32.mrf.mxu0
        %8446 = vmatprep.mubr.bf16.mxu0 %v7888
        %8447 = vmatmul.mubr.bf16.gmra.mxu0 %v7879
        %v8448 = vpop.f32.mrf.mxu0
        %v8449 = vadd.f32 0.0, %v8448
        %v8450 = vpop.f32.mrf.mxu0
        %v8451 = vpop.f32.mrf.mxu0
        %v8452 = vadd.f32 0.0, %v8451
        %v8453 = vpop.f32.mrf.mxu0
        %8454 = vmatprep.mubr.bf16.mxu0 %v7910
        %8455 = vmatmul.mubr.bf16.gmra.mxu0 %v7901
        %v8456 = vpop.f32.mrf.mxu0
        %v8457 = vadd.f32 0.0, %v8456
        %v8458 = vpop.f32.mrf.mxu0
        %v8459 = vpop.f32.mrf.mxu0
        %v8460 = vadd.f32 0.0, %v8459
        %v8461 = vpop.f32.mrf.mxu0
        %8462 = vmatprep.mubr.bf16.mxu0 %v7932
        %8463 = vmatmul.mubr.bf16.gmra.mxu0 %v7923
        %v8464 = vpop.f32.mrf.mxu0
        %v8465 = vadd.f32 0.0, %v8464
        %v8466 = vpop.f32.mrf.mxu0
        %v8467 = vpop.f32.mrf.mxu0
        %v8468 = vadd.f32 0.0, %v8467
        %v8469 = vpop.f32.mrf.mxu0
        %8470 = vmatprep.mubr.bf16.mxu0 %v7954
        %8471 = vmatmul.mubr.bf16.gmra.mxu0 %v7945
        %v8472 = vpop.f32.mrf.mxu0
        %v8473 = vadd.f32 0.0, %v8472
        %v8474 = vpop.f32.mrf.mxu0
        %v8475 = vpop.f32.mrf.mxu0
        %v8476 = vadd.f32 0.0, %v8475
        %v8477 = vpop.f32.mrf.mxu0
        %8478 = vmatprep.mubr.bf16.mxu0 %v7976
        %8479 = vmatmul.mubr.bf16.gmra.mxu0 %v7967
        %v8480 = vpop.f32.mrf.mxu0
        %v8481 = vadd.f32 0.0, %v8480
        %v8482 = vpop.f32.mrf.mxu0
        %v8483 = vpop.f32.mrf.mxu0
        %v8484 = vadd.f32 0.0, %v8483
        %v8485 = vpop.f32.mrf.mxu0
        %8486 = vmatprep.mubr.bf16.mxu0 %v7998
        %8487 = vmatmul.mubr.bf16.gmra.mxu0 %v7989
        %v8488 = vpop.f32.mrf.mxu0
        %v8489 = vadd.f32 0.0, %v8488
        %v8490 = vpop.f32.mrf.mxu0
        %v8491 = vpop.f32.mrf.mxu0
        %v8492 = vadd.f32 0.0, %v8491
        %v8493 = vpop.f32.mrf.mxu0
        %8494 = vmatprep.mubr.bf16.mxu0 %v8020
        %8495 = vmatmul.mubr.bf16.gmra.mxu0 %v8011
        %v8496 = vpop.f32.mrf.mxu0
        %v8497 = vadd.f32 0.0, %v8496
        %v8498 = vpop.f32.mrf.mxu0
        %v8499 = vpop.f32.mrf.mxu0
        %v8500 = vadd.f32 0.0, %v8499
        %v8501 = vpop.f32.mrf.mxu0
        %8502 = vmatprep.mubr.bf16.mxu0 %v8042
        %8503 = vmatmul.mubr.bf16.gmra.mxu0 %v8033
        %v8504 = vpop.f32.mrf.mxu0
        %v8505 = vadd.f32 0.0, %v8504
        %v8506 = vpop.f32.mrf.mxu0
        %v8507 = vpop.f32.mrf.mxu0
        %v8508 = vadd.f32 0.0, %v8507
        %v8509 = vpop.f32.mrf.mxu0
        %8510 = vmatprep.mubr.bf16.mxu0 %v8064
        %8511 = vmatmul.mubr.bf16.gmra.mxu0 %v8055
        %v8512 = vpop.f32.mrf.mxu0
        %v8513 = vadd.f32 0.0, %v8512
        %v8514 = vpop.f32.mrf.mxu0
        %v8515 = vpop.f32.mrf.mxu0
        %v8516 = vadd.f32 0.0, %v8515
        %v8517 = vpop.f32.mrf.mxu0
        %8518 = vmatprep.mubr.bf16.mxu0 %v8086
        %8519 = vmatmul.mubr.bf16.gmra.mxu0 %v8077
        %v8520 = vpop.f32.mrf.mxu0
        %v8521 = vadd.f32 0.0, %v8520
        %v8522 = vpop.f32.mrf.mxu0
        %v8523 = vpop.f32.mrf.mxu0
        %v8524 = vadd.f32 0.0, %v8523
        %v8525 = vpop.f32.mrf.mxu0
        %8526 = vmatprep.mubr.bf16.mxu0 %v8108
        %8527 = vmatmul.mubr.bf16.gmra.mxu0 %v8099
        %v8528 = vpop.f32.mrf.mxu0
        %v8529 = vadd.f32 0.0, %v8528
        %v8530 = vpop.f32.mrf.mxu0
        %v8531 = vpop.f32.mrf.mxu0
        %v8532 = vadd.f32 0.0, %v8531
        %v8533 = vpop.f32.mrf.mxu0
        %8534 = vmatprep.mubr.bf16.mxu0 %v8130
        %8535 = vmatmul.mubr.bf16.gmra.mxu0 %v8121
        %v8536 = vpop.f32.mrf.mxu0
        %v8537 = vadd.f32 0.0, %v8536
        %v8538 = vpop.f32.mrf.mxu0
        %v8539 = vpop.f32.mrf.mxu0
        %v8540 = vadd.f32 0.0, %v8539
        %v8541 = vpop.f32.mrf.mxu0
        %8542 = vmatprep.mubr.bf16.mxu0 %v8152
        %8543 = vmatmul.mubr.bf16.gmra.mxu0 %v8143
        %v8544 = vpop.f32.mrf.mxu0
        %v8545 = vadd.f32 0.0, %v8544
        %v8546 = vpop.f32.mrf.mxu0
        %v8547 = vpop.f32.mrf.mxu0
        %v8548 = vadd.f32 0.0, %v8547
        %v8549 = vpop.f32.mrf.mxu0
        %8550 = vmatprep.mubr.bf16.mxu0 %v8174
        %8551 = vmatmul.mubr.bf16.gmra.mxu0 %v8165
        %v8552 = vpop.f32.mrf.mxu0
        %v8553 = vadd.f32 0.0, %v8552
        %v8554 = vpop.f32.mrf.mxu0
        %v8555 = vpop.f32.mrf.mxu0
        %v8556 = vadd.f32 0.0, %v8555
        %v8557 = vpop.f32.mrf.mxu0
        %8558 = vdwg.mxu0
        %8559 = vmatprep.subr.bf16.mxu0 0
        %8560 = vmatpush1.bf16.msra.mxu0 %v8357
        %8561 = vmatprep.subr.bf16.mxu0 0
        %8562 = vmatpush1.bf16.msra.mxu0 %v8356
        %8563 = vmatprep.subr.bf16.mxu0 0
        %8564 = vmatpush1.bf16.msra.mxu0 %v8355
        %8565 = vmatprep.subr.bf16.mxu0 0
        %8566 = vmatpush1.bf16.msra.mxu0 %v8354
        %8567 = vmatprep.subr.bf16.mxu0 0
        %8568 = vmatpush1.bf16.msra.mxu0 %v8353
        %8569 = vmatprep.subr.bf16.mxu0 0
        %8570 = vmatpush1.bf16.msra.mxu0 %v8352
        %8571 = vmatprep.subr.bf16.mxu0 0
        %8572 = vmatpush1.bf16.msra.mxu0 %v8351
        %8573 = vmatprep.subr.bf16.mxu0 0
        %8574 = vmatpush1.bf16.msra.mxu0 %v8350
        %8575 = vmatprep.subr.bf16.mxu0 0
        %8576 = vmatpush2.bf16.msra.mxu0 0
        %8577 = vmatprep.subr.bf16.mxu0 0
        %8578 = vmatpush2.bf16.msra.mxu0 0
        %8579 = vmatprep.subr.bf16.mxu0 0
        %8580 = vmatpush2.bf16.msra.mxu0 0
        %8581 = vmatprep.subr.bf16.mxu0 0
        %8582 = vmatpush2.bf16.msra.mxu0 0
        %8583 = vmatprep.subr.bf16.mxu0 0
        %8584 = vmatpush2.bf16.msra.mxu0 0
        %8585 = vmatprep.subr.bf16.mxu0 0
        %8586 = vmatpush2.bf16.msra.mxu0 0
        %8587 = vmatprep.subr.bf16.mxu0 0
        %8588 = vmatpush2.bf16.msra.mxu0 0
        %8589 = vmatprep.subr.bf16.mxu0 0
        %8590 = vmatpush2.bf16.msra.mxu0 0
        %8591 = vmatprep.mubr.bf16.mxu0 0
        %8592 = vmatmul.mubr.bf16.gmra.mxu0 %v7809
        %v8593 = vpop.f32.mrf.mxu0
        %v8594 = vadd.f32 %v8417, %v8593
        %v8595 = vpop.f32.mrf.mxu0
        %v8596 = vpop.f32.mrf.mxu0
        %v8597 = vadd.f32 %v8420, %v8596
        %v8598 = vpop.f32.mrf.mxu0
        %8599 = vmatprep.mubr.bf16.mxu0 0
        %8600 = vmatmul.mubr.bf16.gmra.mxu0 %v7831
        %v8601 = vpop.f32.mrf.mxu0
        %v8602 = vadd.f32 %v8425, %v8601
        %v8603 = vpop.f32.mrf.mxu0
        %v8604 = vpop.f32.mrf.mxu0
        %v8605 = vadd.f32 %v8428, %v8604
        %v8606 = vpop.f32.mrf.mxu0
        %8607 = vmatprep.mubr.bf16.mxu0 0
        %8608 = vmatmul.mubr.bf16.gmra.mxu0 %v7853
        %v8609 = vpop.f32.mrf.mxu0
        %v8610 = vadd.f32 %v8433, %v8609
        %v8611 = vpop.f32.mrf.mxu0
        %v8612 = vpop.f32.mrf.mxu0
        %v8613 = vadd.f32 %v8436, %v8612
        %v8614 = vpop.f32.mrf.mxu0
        %8615 = vmatprep.mubr.bf16.mxu0 0
        %8616 = vmatmul.mubr.bf16.gmra.mxu0 %v7875
        %v8617 = vpop.f32.mrf.mxu0
        %v8618 = vadd.f32 %v8441, %v8617
        %v8619 = vpop.f32.mrf.mxu0
        %v8620 = vpop.f32.mrf.mxu0
        %v8621 = vadd.f32 %v8444, %v8620
        %v8622 = vpop.f32.mrf.mxu0
        %8623 = vmatprep.mubr.bf16.mxu0 0
        %8624 = vmatmul.mubr.bf16.gmra.mxu0 %v7897
        %v8625 = vpop.f32.mrf.mxu0
        %v8626 = vadd.f32 %v8449, %v8625
        %v8627 = vpop.f32.mrf.mxu0
        %v8628 = vpop.f32.mrf.mxu0
        %v8629 = vadd.f32 %v8452, %v8628
        %v8630 = vpop.f32.mrf.mxu0
        %8631 = vmatprep.mubr.bf16.mxu0 0
        %8632 = vmatmul.mubr.bf16.gmra.mxu0 %v7919
        %v8633 = vpop.f32.mrf.mxu0
        %v8634 = vadd.f32 %v8457, %v8633
        %v8635 = vpop.f32.mrf.mxu0
        %v8636 = vpop.f32.mrf.mxu0
        %v8637 = vadd.f32 %v8460, %v8636
        %v8638 = vpop.f32.mrf.mxu0
        %8639 = vmatprep.mubr.bf16.mxu0 0
        %8640 = vmatmul.mubr.bf16.gmra.mxu0 %v7941
        %v8641 = vpop.f32.mrf.mxu0
        %v8642 = vadd.f32 %v8465, %v8641
        %v8643 = vpop.f32.mrf.mxu0
        %v8644 = vpop.f32.mrf.mxu0
        %v8645 = vadd.f32 %v8468, %v8644
        %v8646 = vpop.f32.mrf.mxu0
        %8647 = vmatprep.mubr.bf16.mxu0 0
        %8648 = vmatmul.mubr.bf16.gmra.mxu0 %v7963
        %v8649 = vpop.f32.mrf.mxu0
        %v8650 = vadd.f32 %v8473, %v8649
        %v8651 = vpop.f32.mrf.mxu0
        %v8652 = vpop.f32.mrf.mxu0
        %v8653 = vadd.f32 %v8476, %v8652
        %v8654 = vpop.f32.mrf.mxu0
        %8655 = vmatprep.mubr.bf16.mxu0 0
        %8656 = vmatmul.mubr.bf16.gmra.mxu0 %v7985
        %v8657 = vpop.f32.mrf.mxu0
        %v8658 = vadd.f32 %v8481, %v8657
        %v8659 = vpop.f32.mrf.mxu0
        %v8660 = vpop.f32.mrf.mxu0
        %v8661 = vadd.f32 %v8484, %v8660
        %v8662 = vpop.f32.mrf.mxu0
        %8663 = vmatprep.mubr.bf16.mxu0 0
        %8664 = vmatmul.mubr.bf16.gmra.mxu0 %v8007
        %v8665 = vpop.f32.mrf.mxu0
        %v8666 = vadd.f32 %v8489, %v8665
        %v8667 = vpop.f32.mrf.mxu0
        %v8668 = vpop.f32.mrf.mxu0
        %v8669 = vadd.f32 %v8492, %v8668
        %v8670 = vpop.f32.mrf.mxu0
        %8671 = vmatprep.mubr.bf16.mxu0 0
        %8672 = vmatmul.mubr.bf16.gmra.mxu0 %v8029
        %v8673 = vpop.f32.mrf.mxu0
        %v8674 = vadd.f32 %v8497, %v8673
        %v8675 = vpop.f32.mrf.mxu0
        %v8676 = vpop.f32.mrf.mxu0
        %v8677 = vadd.f32 %v8500, %v8676
        %v8678 = vpop.f32.mrf.mxu0
        %8679 = vmatprep.mubr.bf16.mxu0 0
        %8680 = vmatmul.mubr.bf16.gmra.mxu0 %v8051
        %v8681 = vpop.f32.mrf.mxu0
        %v8682 = vadd.f32 %v8505, %v8681
        %v8683 = vpop.f32.mrf.mxu0
        %v8684 = vpop.f32.mrf.mxu0
        %v8685 = vadd.f32 %v8508, %v8684
        %v8686 = vpop.f32.mrf.mxu0
        %8687 = vmatprep.mubr.bf16.mxu0 0
        %8688 = vmatmul.mubr.bf16.gmra.mxu0 %v8073
        %v8689 = vpop.f32.mrf.mxu0
        %v8690 = vadd.f32 %v8513, %v8689
        %v8691 = vpop.f32.mrf.mxu0
        %v8692 = vpop.f32.mrf.mxu0
        %v8693 = vadd.f32 %v8516, %v8692
        %v8694 = vpop.f32.mrf.mxu0
        %8695 = vmatprep.mubr.bf16.mxu0 0
        %8696 = vmatmul.mubr.bf16.gmra.mxu0 %v8095
        %v8697 = vpop.f32.mrf.mxu0
        %v8698 = vadd.f32 %v8521, %v8697
        %v8699 = vpop.f32.mrf.mxu0
        %v8700 = vpop.f32.mrf.mxu0
        %v8701 = vadd.f32 %v8524, %v8700
        %v8702 = vpop.f32.mrf.mxu0
        %8703 = vmatprep.mubr.bf16.mxu0 0
        %8704 = vmatmul.mubr.bf16.gmra.mxu0 %v8117
        %v8705 = vpop.f32.mrf.mxu0
        %v8706 = vadd.f32 %v8529, %v8705
        %v8707 = vpop.f32.mrf.mxu0
        %v8708 = vpop.f32.mrf.mxu0
        %v8709 = vadd.f32 %v8532, %v8708
        %v8710 = vpop.f32.mrf.mxu0
        %8711 = vmatprep.mubr.bf16.mxu0 0
        %8712 = vmatmul.mubr.bf16.gmra.mxu0 %v8139
        %v8713 = vpop.f32.mrf.mxu0
        %v8714 = vadd.f32 %v8537, %v8713
        %v8715 = vpop.f32.mrf.mxu0
        %v8716 = vpop.f32.mrf.mxu0
        %v8717 = vadd.f32 %v8540, %v8716
        %v8718 = vpop.f32.mrf.mxu0
        %8719 = vmatprep.mubr.bf16.mxu0 0
        %8720 = vmatmul.mubr.bf16.gmra.mxu0 %v8161
        %v8721 = vpop.f32.mrf.mxu0
        %v8722 = vadd.f32 %v8545, %v8721
        %v8723 = vpop.f32.mrf.mxu0
        %v8724 = vpop.f32.mrf.mxu0
        %v8725 = vadd.f32 %v8548, %v8724
        %v8726 = vpop.f32.mrf.mxu0
        %8727 = vmatprep.mubr.bf16.mxu0 0
        %8728 = vmatmul.mubr.bf16.gmra.mxu0 %v8183
        %v8729 = vpop.f32.mrf.mxu0
        %v8730 = vadd.f32 %v8553, %v8729
        %v8731 = vpop.f32.mrf.mxu0
        %v8732 = vpop.f32.mrf.mxu0
        %v8733 = vadd.f32 %v8556, %v8732
        %v8734 = vpop.f32.mrf.mxu0
        %8735 = vdwg.mxu0
        %v8736 = vadd.f32 %v7247, %v8594
        %v8737 = vadd.f32 %v7250, %v8597
        %v8738 = vadd.f32 %v7255, %v8602
        %v8739 = vadd.f32 %v7258, %v8605
        %v8740 = vadd.f32 %v7263, %v8610
        %v8741 = vadd.f32 %v7266, %v8613
        %v8742 = vadd.f32 %v7271, %v8618
        %v8743 = vadd.f32 %v7274, %v8621
        %v8744 = vadd.f32 %v7279, %v8626
        %v8745 = vadd.f32 %v7282, %v8629
        %v8746 = vadd.f32 %v7287, %v8634
        %v8747 = vadd.f32 %v7290, %v8637
        %v8748 = vadd.f32 %v7295, %v8642
        %v8749 = vadd.f32 %v7298, %v8645
        %v8750 = vadd.f32 %v7303, %v8650
        %v8751 = vadd.f32 %v7306, %v8653
        %v8752 = vadd.f32 %v7311, %v8658
        %v8753 = vadd.f32 %v7314, %v8661
        %v8754 = vadd.f32 %v7319, %v8666
        %v8755 = vadd.f32 %v7322, %v8669
        %v8756 = vadd.f32 %v7327, %v8674
        %v8757 = vadd.f32 %v7330, %v8677
        %v8758 = vadd.f32 %v7335, %v8682
        %v8759 = vadd.f32 %v7338, %v8685
        %v8760 = vadd.f32 %v7343, %v8690
        %v8761 = vadd.f32 %v7346, %v8693
        %v8762 = vadd.f32 %v7351, %v8698
        %v8763 = vadd.f32 %v7354, %v8701
        %v8764 = vadd.f32 %v7359, %v8706
        %v8765 = vadd.f32 %v7362, %v8709
        %v8766 = vadd.f32 %v7367, %v8714
        %v8767 = vadd.f32 %v7370, %v8717
        %v8768 = vadd.f32 %v7375, %v8722
        %v8769 = vadd.f32 %v7378, %v8725
        %v8770 = vadd.f32 %v7383, %v8730
        %v8771 = vadd.f32 %v7386, %v8733
        %v8772 = vld [vmem:[%s4] sm:$0x1]
        %v8774 = vlaneseq
        %v8775 = vshrl.u32 %v8774, 7
        %v8776 = vsub.s32 0, %v8775
        %v8777 = vrot.slane %v8772, %v8776
        %v8779 = vadd.f32 %v8736, %v8777
        %v8780 = vadd.f32 %v8737, %v8777
        %v8781 = vadd.f32 %v8738, %v8777
        %v8782 = vadd.f32 %v8739, %v8777
        %v8783 = vadd.f32 %v8740, %v8777
        %v8784 = vadd.f32 %v8741, %v8777
        %v8785 = vadd.f32 %v8742, %v8777
        %v8786 = vadd.f32 %v8743, %v8777
        %v8787 = vadd.f32 %v8744, %v8777
        %v8788 = vadd.f32 %v8745, %v8777
        %v8789 = vadd.f32 %v8746, %v8777
        %v8790 = vadd.f32 %v8747, %v8777
        %v8791 = vadd.f32 %v8748, %v8777
        %v8792 = vadd.f32 %v8749, %v8777
        %v8793 = vadd.f32 %v8750, %v8777
        %v8794 = vadd.f32 %v8751, %v8777
        %v8795 = vadd.f32 %v8752, %v8777
        %v8796 = vadd.f32 %v8753, %v8777
        %v8797 = vadd.f32 %v8754, %v8777
        %v8798 = vadd.f32 %v8755, %v8777
        %v8799 = vadd.f32 %v8756, %v8777
        %v8800 = vadd.f32 %v8757, %v8777
        %v8801 = vadd.f32 %v8758, %v8777
        %v8802 = vadd.f32 %v8759, %v8777
        %v8803 = vadd.f32 %v8760, %v8777
        %v8804 = vadd.f32 %v8761, %v8777
        %v8805 = vadd.f32 %v8762, %v8777
        %v8806 = vadd.f32 %v8763, %v8777
        %v8807 = vadd.f32 %v8764, %v8777
        %v8808 = vadd.f32 %v8765, %v8777
        %v8809 = vadd.f32 %v8766, %v8777
        %v8810 = vadd.f32 %v8767, %v8777
        %v8811 = vadd.f32 %v8768, %v8777
        %v8812 = vadd.f32 %v8769, %v8777
        %v8813 = vadd.f32 %v8770, %v8777
        %v8814 = vadd.f32 %v8771, %v8777
        %v8815 = vld [vmem:[%s298 + $0x10] sm:$0xc]
        %v8816 = vld [vmem:[%s298 + $0x14] sm:$0xf]
        %v8817 = vld [vmem:[%s298 + $0x18] sm:$0xf]
        %v8818 = vld [vmem:[%s298 + $0x1c] sm:$0xf]
        %v8819 = vld [vmem:[%s298 + $0x20] sm:$0xf]
        %v8820 = vld [vmem:[%s298 + $0x24] sm:$0xf]
        %v8821 = vld [vmem:[%s298 + $0x28] sm:$0xf]
        %v8822 = vld [vmem:[%s298 + $0x2c] sm:$0xf]
        %v8823 = vld [vmem:[%s298 + $0x30] sm:$0xf]
        %v8824 = vld [vmem:[%s298 + $0x34] sm:$0xf]
        %v8825 = vld [vmem:[%s298 + $0x38] sm:$0xf]
        %v8826 = vld [vmem:[%s298 + $0x3c] sm:$0xf]
        %v8827 = vld [vmem:[%s298 + $0x40] sm:$0xf]
        %v8828 = vld [vmem:[%s298 + $0x44] sm:$0xf]
        %v8829 = vld [vmem:[%s298 + $0x48] sm:$0xf]
        %v8830 = vld [vmem:[%s298 + $0x4c] sm:$0xf]
        %v8831 = vld [vmem:[%s298 + $0x50] sm:$0xf]
        %v8832 = vld [vmem:[%s298 + $0x54] sm:$0xf]
        %v8833 = vld [vmem:[%s298 + $0x58] sm:$0xf]
        %v8834 = vld [vmem:[%s298 + $0x5c] sm:$0xf]
        %v8835 = vld [vmem:[%s298 + $0x60] sm:$0xf]
        %v8836 = vld [vmem:[%s298 + $0x64] sm:$0xf]
        %v8837 = vld [vmem:[%s298 + $0x68] sm:$0xf]
        %v8838 = vld [vmem:[%s298 + $0x6c] sm:$0xf]
        %v8839 = vld [vmem:[%s298 + $0x70] sm:$0xf]
        %v8840 = vld [vmem:[%s298 + $0x74] sm:$0xf]
        %v8841 = vld [vmem:[%s298 + $0x78] sm:$0xf]
        %v8842 = vld [vmem:[%s298 + $0x7c] sm:$0xf]
        %v8843 = vld [vmem:[%s298 + $0x80] sm:$0xf]
        %v8844 = vld [vmem:[%s298 + $0x84] sm:$0xf]
        %v8845 = vld [vmem:[%s298 + $0x88] sm:$0xf]
        %v8846 = vld [vmem:[%s298 + $0x8c] sm:$0xf]
        %v8847 = vld [vmem:[%s298 + $0x90] sm:$0xf]
        %v8848 = vld [vmem:[%s298 + $0x94] sm:$0xf]
        %v8849 = vld [vmem:[%s298 + $0x98] sm:$0xf]
        %v8850 = vld [vmem:[%s298 + $0x9c] sm:$0xf]
        %v8851 = vld [vmem:[%s298 + $0xa0] sm:$0x3]
        %v8852 = vld [vmem:[#allocation9] sm:$0xf]
        %v8853 = vld [vmem:[#allocation9 + $0x4] sm:$0xf]
        %v8854 = vld [vmem:[#allocation9 + $0x8] sm:$0xf]
        %v8855 = vld [vmem:[#allocation9 + $0xc] sm:$0xf]
        %v8856 = vld [vmem:[#allocation9 + $0x10] sm:$0xf]
        %v8857 = vld [vmem:[#allocation9 + $0x14] sm:$0xf]
        %v8858 = vld [vmem:[#allocation9 + $0x18] sm:$0xf]
        %v8859 = vld [vmem:[#allocation9 + $0x1c] sm:$0xf]
        %v8860 = vld [vmem:[#allocation9 + $0x20] sm:$0xf]
        %v8861 = vld [vmem:[#allocation9 + $0x24] sm:$0xf]
        %v8862 = vld [vmem:[#allocation9 + $0x28] sm:$0xf]
        %v8863 = vld [vmem:[#allocation9 + $0x2c] sm:$0xf]
        %v8864 = vld [vmem:[#allocation9 + $0x30] sm:$0xf]
        %v8865 = vld [vmem:[#allocation9 + $0x34] sm:$0xf]
        %v8866 = vld [vmem:[#allocation9 + $0x38] sm:$0xf]
        %v8867 = vld [vmem:[#allocation9 + $0x3c] sm:$0xf]
        %v8868 = vld [vmem:[%s6] sm:$0x1]
        %v8870 = vlaneseq
        %v8871 = vshrl.u32 %v8870, 7
        %v8872 = vsub.s32 0, %v8871
        %v8873 = vrot.slane %v8868, %v8872
        %v8912 = vunpack.c.l.b16 %v8815
        %v8913 = vunpack.c.l.b16 %v8816
        %v8914 = vunpack.c.l.b16 %v8817
        %v8915 = vunpack.c.l.b16 %v8818
        %v8916 = vunpack.c.l.b16 %v8819
        %v8917 = vunpack.c.l.b16 %v8820
        %v8918 = vunpack.c.l.b16 %v8821
        %v8919 = vunpack.c.l.b16 %v8822
        %v8920 = vunpack.c.l.b16 %v8823
        %v8921 = vunpack.c.l.b16 %v8824
        %v8922 = vunpack.c.l.b16 %v8825
        %v8923 = vunpack.c.l.b16 %v8826
        %v8924 = vunpack.c.l.b16 %v8827
        %v8925 = vunpack.c.l.b16 %v8828
        %v8926 = vunpack.c.l.b16 %v8829
        %v8927 = vunpack.c.l.b16 %v8830
        %v8928 = vunpack.c.l.b16 %v8831
        %v8929 = vunpack.c.l.b16 %v8832
        %v8930 = vunpack.c.l.b16 %v8833
        %v8931 = vunpack.c.l.b16 %v8834
        %v8932 = vunpack.c.l.b16 %v8835
        %v8933 = vunpack.c.l.b16 %v8836
        %v8934 = vunpack.c.l.b16 %v8837
        %v8935 = vunpack.c.l.b16 %v8838
        %v8936 = vunpack.c.l.b16 %v8839
        %v8937 = vunpack.c.l.b16 %v8840
        %v8938 = vunpack.c.l.b16 %v8841
        %v8939 = vunpack.c.l.b16 %v8842
        %v8940 = vunpack.c.l.b16 %v8843
        %v8941 = vunpack.c.l.b16 %v8844
        %v8942 = vunpack.c.l.b16 %v8845
        %v8943 = vunpack.c.l.b16 %v8846
        %v8944 = vunpack.c.l.b16 %v8847
        %v8945 = vunpack.c.l.b16 %v8848
        %v8946 = vunpack.c.l.b16 %v8849
        %v8947 = vunpack.c.l.b16 %v8850
        %v8948 = vunpack.c.l.b16 %v8851
        %v8949 = vpack.c.b16 %v8913, %v8912
        %v8950 = vpack.c.b16 %v8915, %v8914
        %v8951 = vpack.c.b16 %v8917, %v8916
        %v8952 = vpack.c.b16 %v8919, %v8918
        %v8953 = vpack.c.b16 %v8921, %v8920
        %v8954 = vpack.c.b16 %v8923, %v8922
        %v8955 = vpack.c.b16 %v8925, %v8924
        %v8956 = vpack.c.b16 %v8927, %v8926
        %v8957 = vpack.c.b16 %v8929, %v8928
        %v8958 = vpack.c.b16 %v8931, %v8930
        %v8959 = vpack.c.b16 %v8933, %v8932
        %v8960 = vpack.c.b16 %v8935, %v8934
        %v8961 = vpack.c.b16 %v8937, %v8936
        %v8962 = vpack.c.b16 %v8939, %v8938
        %v8963 = vpack.c.b16 %v8941, %v8940
        %v8964 = vpack.c.b16 %v8943, %v8942
        %v8965 = vpack.c.b16 %v8945, %v8944
        %v8966 = vpack.c.b16 %v8947, %v8946
        %v8967 = vpack.c.b16 %v8948, %v8948
        %vm8968 = vcmask 1045504
        %v8969 = vrot.slane %v8949, 2
        %v8970 = vrot.slane %v8950, 2
        %v8971 = vsel %vm8968, %v8969, %v8970
        %v8972 = vrot.slane %v8951, 2
        %v8973 = vsel %vm8968, %v8970, %v8972
        %v8974 = vrot.slane %v8952, 2
        %v8975 = vsel %vm8968, %v8972, %v8974
        %v8976 = vrot.slane %v8953, 2
        %v8977 = vsel %vm8968, %v8974, %v8976
        %v8978 = vrot.slane %v8954, 2
        %v8979 = vsel %vm8968, %v8976, %v8978
        %v8980 = vrot.slane %v8955, 2
        %v8981 = vsel %vm8968, %v8978, %v8980
        %v8982 = vrot.slane %v8956, 2
        %v8983 = vsel %vm8968, %v8980, %v8982
        %v8984 = vrot.slane %v8957, 2
        %v8985 = vsel %vm8968, %v8982, %v8984
        %v8986 = vrot.slane %v8958, 2
        %v8987 = vsel %vm8968, %v8984, %v8986
        %v8988 = vrot.slane %v8959, 2
        %v8989 = vsel %vm8968, %v8986, %v8988
        %v8990 = vrot.slane %v8960, 2
        %v8991 = vsel %vm8968, %v8988, %v8990
        %v8992 = vrot.slane %v8961, 2
        %v8993 = vsel %vm8968, %v8990, %v8992
        %v8994 = vrot.slane %v8962, 2
        %v8995 = vsel %vm8968, %v8992, %v8994
        %v8996 = vrot.slane %v8963, 2
        %v8997 = vsel %vm8968, %v8994, %v8996
        %v8998 = vrot.slane %v8964, 2
        %v8999 = vsel %vm8968, %v8996, %v8998
        %v9000 = vrot.slane %v8965, 2
        %v9001 = vsel %vm8968, %v8998, %v9000
        %v9002 = vrot.slane %v8966, 2
        %v9003 = vsel %vm8968, %v9000, %v9002
        %v9004 = vrot.slane %v8967, 2
        %v9005 = vsel %vm8968, %v9002, %v9004
        %v9040 = vunpack.c.l.b16 %v8852
        %v9041 = vunpack.c.l.b16 %v8853
        %v9042 = vunpack.c.l.b16 %v8854
        %v9043 = vunpack.c.l.b16 %v8855
        %v9044 = vunpack.c.l.b16 %v8856
        %v9045 = vunpack.c.l.b16 %v8857
        %v9046 = vunpack.c.l.b16 %v8858
        %v9047 = vunpack.c.l.b16 %v8859
        %v9048 = vunpack.c.l.b16 %v8860
        %v9049 = vunpack.c.l.b16 %v8861
        %v9050 = vunpack.c.l.b16 %v8862
        %v9051 = vunpack.c.l.b16 %v8863
        %v9052 = vunpack.c.l.b16 %v8864
        %v9053 = vunpack.c.l.b16 %v8865
        %v9054 = vunpack.c.l.b16 %v8866
        %v9055 = vunpack.c.l.b16 %v8867
        %v9056 = vpack.c.b16 %v9041, %v9040
        %v9057 = vpack.c.b16 %v9043, %v9042
        %v9058 = vpack.c.b16 %v9045, %v9044
        %v9059 = vpack.c.b16 %v9047, %v9046
        %v9060 = vpack.c.b16 %v9049, %v9048
        %v9061 = vpack.c.b16 %v9051, %v9050
        %v9062 = vpack.c.b16 %v9053, %v9052
        %v9063 = vpack.c.b16 %v9055, %v9054
        %9072 = vmatprep.subr.bf16.mxu0 0
        %9073 = vmatpush1.bf16.msra.mxu0 %v9063
        %9074 = vmatprep.subr.bf16.mxu0 0
        %9075 = vmatpush1.bf16.msra.mxu0 %v9062
        %9076 = vmatprep.subr.bf16.mxu0 0
        %9077 = vmatpush1.bf16.msra.mxu0 %v9061
        %9078 = vmatprep.subr.bf16.mxu0 0
        %9079 = vmatpush1.bf16.msra.mxu0 %v9060
        %9080 = vmatprep.subr.bf16.mxu0 0
        %9081 = vmatpush1.bf16.msra.mxu0 %v9059
        %9082 = vmatprep.subr.bf16.mxu0 0
        %9083 = vmatpush1.bf16.msra.mxu0 %v9058
        %9084 = vmatprep.subr.bf16.mxu0 0
        %9085 = vmatpush1.bf16.msra.mxu0 %v9057
        %9086 = vmatprep.subr.bf16.mxu0 0
        %9087 = vmatpush1.bf16.msra.mxu0 %v9056
        %9088 = vmatprep.subr.bf16.mxu0 0
        %9089 = vmatpush2.bf16.msra.mxu0 0
        %9090 = vmatprep.subr.bf16.mxu0 0
        %9091 = vmatpush2.bf16.msra.mxu0 0
        %9092 = vmatprep.subr.bf16.mxu0 0
        %9093 = vmatpush2.bf16.msra.mxu0 0
        %9094 = vmatprep.subr.bf16.mxu0 0
        %9095 = vmatpush2.bf16.msra.mxu0 0
        %9096 = vmatprep.subr.bf16.mxu0 0
        %9097 = vmatpush2.bf16.msra.mxu0 0
        %9098 = vmatprep.subr.bf16.mxu0 0
        %9099 = vmatpush2.bf16.msra.mxu0 0
        %9100 = vmatprep.subr.bf16.mxu0 0
        %9101 = vmatpush2.bf16.msra.mxu0 0
        %9102 = vmatprep.subr.bf16.mxu0 0
        %9103 = vmatpush2.bf16.msra.mxu0 0
        %9104 = vmatprep.mubr.bf16.mxu0 0
        %9105 = vmatmul.mubr.bf16.gmra.mxu0 %v8971
        %v9106 = vpop.f32.mrf.mxu0
        %v9107 = vadd.f32 %v8873, %v9106
        %v9108 = vpop.f32.mrf.mxu0
        %v9109 = vpop.f32.mrf.mxu0
        %v9110 = vadd.f32 %v8873, %v9109
        %v9111 = vpop.f32.mrf.mxu0
        %9112 = vmatprep.mubr.bf16.mxu0 0
        %9113 = vmatmul.mubr.bf16.gmra.mxu0 %v8973
        %v9114 = vpop.f32.mrf.mxu0
        %v9115 = vadd.f32 %v8873, %v9114
        %v9116 = vpop.f32.mrf.mxu0
        %v9117 = vpop.f32.mrf.mxu0
        %v9118 = vadd.f32 %v8873, %v9117
        %v9119 = vpop.f32.mrf.mxu0
        %9120 = vmatprep.mubr.bf16.mxu0 0
        %9121 = vmatmul.mubr.bf16.gmra.mxu0 %v8975
        %v9122 = vpop.f32.mrf.mxu0
        %v9123 = vadd.f32 %v8873, %v9122
        %v9124 = vpop.f32.mrf.mxu0
        %v9125 = vpop.f32.mrf.mxu0
        %v9126 = vadd.f32 %v8873, %v9125
        %v9127 = vpop.f32.mrf.mxu0
        %9128 = vmatprep.mubr.bf16.mxu0 0
        %9129 = vmatmul.mubr.bf16.gmra.mxu0 %v8977
        %v9130 = vpop.f32.mrf.mxu0
        %v9131 = vadd.f32 %v8873, %v9130
        %v9132 = vpop.f32.mrf.mxu0
        %v9133 = vpop.f32.mrf.mxu0
        %v9134 = vadd.f32 %v8873, %v9133
        %v9135 = vpop.f32.mrf.mxu0
        %9136 = vmatprep.mubr.bf16.mxu0 0
        %9137 = vmatmul.mubr.bf16.gmra.mxu0 %v8979
        %v9138 = vpop.f32.mrf.mxu0
        %v9139 = vadd.f32 %v8873, %v9138
        %v9140 = vpop.f32.mrf.mxu0
        %v9141 = vpop.f32.mrf.mxu0
        %v9142 = vadd.f32 %v8873, %v9141
        %v9143 = vpop.f32.mrf.mxu0
        %9144 = vmatprep.mubr.bf16.mxu0 0
        %9145 = vmatmul.mubr.bf16.gmra.mxu0 %v8981
        %v9146 = vpop.f32.mrf.mxu0
        %v9147 = vadd.f32 %v8873, %v9146
        %v9148 = vpop.f32.mrf.mxu0
        %v9149 = vpop.f32.mrf.mxu0
        %v9150 = vadd.f32 %v8873, %v9149
        %v9151 = vpop.f32.mrf.mxu0
        %9152 = vmatprep.mubr.bf16.mxu0 0
        %9153 = vmatmul.mubr.bf16.gmra.mxu0 %v8983
        %v9154 = vpop.f32.mrf.mxu0
        %v9155 = vadd.f32 %v8873, %v9154
        %v9156 = vpop.f32.mrf.mxu0
        %v9157 = vpop.f32.mrf.mxu0
        %v9158 = vadd.f32 %v8873, %v9157
        %v9159 = vpop.f32.mrf.mxu0
        %9160 = vmatprep.mubr.bf16.mxu0 0
        %9161 = vmatmul.mubr.bf16.gmra.mxu0 %v8985
        %v9162 = vpop.f32.mrf.mxu0
        %v9163 = vadd.f32 %v8873, %v9162
        %v9164 = vpop.f32.mrf.mxu0
        %v9165 = vpop.f32.mrf.mxu0
        %v9166 = vadd.f32 %v8873, %v9165
        %v9167 = vpop.f32.mrf.mxu0
        %9168 = vmatprep.mubr.bf16.mxu0 0
        %9169 = vmatmul.mubr.bf16.gmra.mxu0 %v8987
        %v9170 = vpop.f32.mrf.mxu0
        %v9171 = vadd.f32 %v8873, %v9170
        %v9172 = vpop.f32.mrf.mxu0
        %v9173 = vpop.f32.mrf.mxu0
        %v9174 = vadd.f32 %v8873, %v9173
        %v9175 = vpop.f32.mrf.mxu0
        %9176 = vmatprep.mubr.bf16.mxu0 0
        %9177 = vmatmul.mubr.bf16.gmra.mxu0 %v8989
        %v9178 = vpop.f32.mrf.mxu0
        %v9179 = vadd.f32 %v8873, %v9178
        %v9180 = vpop.f32.mrf.mxu0
        %v9181 = vpop.f32.mrf.mxu0
        %v9182 = vadd.f32 %v8873, %v9181
        %v9183 = vpop.f32.mrf.mxu0
        %9184 = vmatprep.mubr.bf16.mxu0 0
        %9185 = vmatmul.mubr.bf16.gmra.mxu0 %v8991
        %v9186 = vpop.f32.mrf.mxu0
        %v9187 = vadd.f32 %v8873, %v9186
        %v9188 = vpop.f32.mrf.mxu0
        %v9189 = vpop.f32.mrf.mxu0
        %v9190 = vadd.f32 %v8873, %v9189
        %v9191 = vpop.f32.mrf.mxu0
        %9192 = vmatprep.mubr.bf16.mxu0 0
        %9193 = vmatmul.mubr.bf16.gmra.mxu0 %v8993
        %v9194 = vpop.f32.mrf.mxu0
        %v9195 = vadd.f32 %v8873, %v9194
        %v9196 = vpop.f32.mrf.mxu0
        %v9197 = vpop.f32.mrf.mxu0
        %v9198 = vadd.f32 %v8873, %v9197
        %v9199 = vpop.f32.mrf.mxu0
        %9200 = vmatprep.mubr.bf16.mxu0 0
        %9201 = vmatmul.mubr.bf16.gmra.mxu0 %v8995
        %v9202 = vpop.f32.mrf.mxu0
        %v9203 = vadd.f32 %v8873, %v9202
        %v9204 = vpop.f32.mrf.mxu0
        %v9205 = vpop.f32.mrf.mxu0
        %v9206 = vadd.f32 %v8873, %v9205
        %v9207 = vpop.f32.mrf.mxu0
        %9208 = vmatprep.mubr.bf16.mxu0 0
        %9209 = vmatmul.mubr.bf16.gmra.mxu0 %v8997
        %v9210 = vpop.f32.mrf.mxu0
        %v9211 = vadd.f32 %v8873, %v9210
        %v9212 = vpop.f32.mrf.mxu0
        %v9213 = vpop.f32.mrf.mxu0
        %v9214 = vadd.f32 %v8873, %v9213
        %v9215 = vpop.f32.mrf.mxu0
        %9216 = vmatprep.mubr.bf16.mxu0 0
        %9217 = vmatmul.mubr.bf16.gmra.mxu0 %v8999
        %v9218 = vpop.f32.mrf.mxu0
        %v9219 = vadd.f32 %v8873, %v9218
        %v9220 = vpop.f32.mrf.mxu0
        %v9221 = vpop.f32.mrf.mxu0
        %v9222 = vadd.f32 %v8873, %v9221
        %v9223 = vpop.f32.mrf.mxu0
        %9224 = vmatprep.mubr.bf16.mxu0 0
        %9225 = vmatmul.mubr.bf16.gmra.mxu0 %v9001
        %v9226 = vpop.f32.mrf.mxu0
        %v9227 = vadd.f32 %v8873, %v9226
        %v9228 = vpop.f32.mrf.mxu0
        %v9229 = vpop.f32.mrf.mxu0
        %v9230 = vadd.f32 %v8873, %v9229
        %v9231 = vpop.f32.mrf.mxu0
        %9232 = vmatprep.mubr.bf16.mxu0 0
        %9233 = vmatmul.mubr.bf16.gmra.mxu0 %v9003
        %v9234 = vpop.f32.mrf.mxu0
        %v9235 = vadd.f32 %v8873, %v9234
        %v9236 = vpop.f32.mrf.mxu0
        %v9237 = vpop.f32.mrf.mxu0
        %v9238 = vadd.f32 %v8873, %v9237
        %v9239 = vpop.f32.mrf.mxu0
        %9240 = vmatprep.mubr.bf16.mxu0 0
        %9241 = vmatmul.mubr.bf16.gmra.mxu0 %v9005
        %v9242 = vpop.f32.mrf.mxu0
        %v9243 = vadd.f32 %v8873, %v9242
        %v9244 = vpop.f32.mrf.mxu0
        %v9245 = vpop.f32.mrf.mxu0
        %v9246 = vadd.f32 %v8873, %v9245
        %v9247 = vpop.f32.mrf.mxu0
        %9248 = vdwg.mxu0
        %v9249 = vadd.f32 %v8779, %v9107
        %v9250 = vadd.f32 %v8780, %v9110
        %v9251 = vadd.f32 %v8781, %v9115
        %v9252 = vadd.f32 %v8782, %v9118
        %v9253 = vadd.f32 %v8783, %v9123
        %v9254 = vadd.f32 %v8784, %v9126
        %v9255 = vadd.f32 %v8785, %v9131
        %v9256 = vadd.f32 %v8786, %v9134
        %v9257 = vadd.f32 %v8787, %v9139
        %v9258 = vadd.f32 %v8788, %v9142
        %v9259 = vadd.f32 %v8789, %v9147
        %v9260 = vadd.f32 %v8790, %v9150
        %v9261 = vadd.f32 %v8791, %v9155
        %v9262 = vadd.f32 %v8792, %v9158
        %v9263 = vadd.f32 %v8793, %v9163
        %v9264 = vadd.f32 %v8794, %v9166
        %v9265 = vadd.f32 %v8795, %v9171
        %v9266 = vadd.f32 %v8796, %v9174
        %v9267 = vadd.f32 %v8797, %v9179
        %v9268 = vadd.f32 %v8798, %v9182
        %v9269 = vadd.f32 %v8799, %v9187
        %v9270 = vadd.f32 %v8800, %v9190
        %v9271 = vadd.f32 %v8801, %v9195
        %v9272 = vadd.f32 %v8802, %v9198
        %v9273 = vadd.f32 %v8803, %v9203
        %v9274 = vadd.f32 %v8804, %v9206
        %v9275 = vadd.f32 %v8805, %v9211
        %v9276 = vadd.f32 %v8806, %v9214
        %v9277 = vadd.f32 %v8807, %v9219
        %v9278 = vadd.f32 %v8808, %v9222
        %v9279 = vadd.f32 %v8809, %v9227
        %v9280 = vadd.f32 %v8810, %v9230
        %v9281 = vadd.f32 %v8811, %v9235
        %v9282 = vadd.f32 %v8812, %v9238
        %v9283 = vadd.f32 %v8813, %v9243
        %v9284 = vadd.f32 %v8814, %v9246
        %v9285 = vxor.u32 %v9249, 2147483648
        %v9286 = vxor.u32 %v9250, 2147483648
        %v9287 = vxor.u32 %v9251, 2147483648
        %v9288 = vxor.u32 %v9252, 2147483648
        %v9289 = vxor.u32 %v9253, 2147483648
        %v9290 = vxor.u32 %v9254, 2147483648
        %v9291 = vxor.u32 %v9255, 2147483648
        %v9292 = vxor.u32 %v9256, 2147483648
        %v9293 = vxor.u32 %v9257, 2147483648
        %v9294 = vxor.u32 %v9258, 2147483648
        %v9295 = vxor.u32 %v9259, 2147483648
        %v9296 = vxor.u32 %v9260, 2147483648
        %v9297 = vxor.u32 %v9261, 2147483648
        %v9298 = vxor.u32 %v9262, 2147483648
        %v9299 = vxor.u32 %v9263, 2147483648
        %v9300 = vxor.u32 %v9264, 2147483648
        %v9301 = vxor.u32 %v9265, 2147483648
        %v9302 = vxor.u32 %v9266, 2147483648
        %v9303 = vxor.u32 %v9267, 2147483648
        %v9304 = vxor.u32 %v9268, 2147483648
        %v9305 = vxor.u32 %v9269, 2147483648
        %v9306 = vxor.u32 %v9270, 2147483648
        %v9307 = vxor.u32 %v9271, 2147483648
        %v9308 = vxor.u32 %v9272, 2147483648
        %v9309 = vxor.u32 %v9273, 2147483648
        %v9310 = vxor.u32 %v9274, 2147483648
        %v9311 = vxor.u32 %v9275, 2147483648
        %v9312 = vxor.u32 %v9276, 2147483648
        %v9313 = vxor.u32 %v9277, 2147483648
        %v9314 = vxor.u32 %v9278, 2147483648
        %v9315 = vxor.u32 %v9279, 2147483648
        %v9316 = vxor.u32 %v9280, 2147483648
        %v9317 = vxor.u32 %v9281, 2147483648
        %v9318 = vxor.u32 %v9282, 2147483648
        %v9319 = vxor.u32 %v9283, 2147483648
        %v9320 = vxor.u32 %v9284, 2147483648
        %v9321 = vmul.f32 %v9285, 1.442695
        %v9322 = vpow.pop %v9321
        %v9323 = vmul.f32 %v9286, 1.442695
        %v9324 = vpow.pop %v9323
        %v9325 = vmul.f32 %v9287, 1.442695
        %v9326 = vpow.pop %v9325
        %v9327 = vmul.f32 %v9288, 1.442695
        %v9328 = vpow.pop %v9327
        %v9329 = vmul.f32 %v9289, 1.442695
        %v9330 = vpow.pop %v9329
        %v9331 = vmul.f32 %v9290, 1.442695
        %v9332 = vpow.pop %v9331
        %v9333 = vmul.f32 %v9291, 1.442695
        %v9334 = vpow.pop %v9333
        %v9335 = vmul.f32 %v9292, 1.442695
        %v9336 = vpow.pop %v9335
        %v9337 = vmul.f32 %v9293, 1.442695
        %v9338 = vpow.pop %v9337
        %v9339 = vmul.f32 %v9294, 1.442695
        %v9340 = vpow.pop %v9339
        %v9341 = vmul.f32 %v9295, 1.442695
        %v9342 = vpow.pop %v9341
        %v9343 = vmul.f32 %v9296, 1.442695
        %v9344 = vpow.pop %v9343
        %v9345 = vmul.f32 %v9297, 1.442695
        %v9346 = vpow.pop %v9345
        %v9347 = vmul.f32 %v9298, 1.442695
        %v9348 = vpow.pop %v9347
        %v9349 = vmul.f32 %v9299, 1.442695
        %v9350 = vpow.pop %v9349
        %v9351 = vmul.f32 %v9300, 1.442695
        %v9352 = vpow.pop %v9351
        %v9353 = vmul.f32 %v9301, 1.442695
        %v9354 = vpow.pop %v9353
        %v9355 = vmul.f32 %v9302, 1.442695
        %v9356 = vpow.pop %v9355
        %v9357 = vmul.f32 %v9303, 1.442695
        %v9358 = vpow.pop %v9357
        %v9359 = vmul.f32 %v9304, 1.442695
        %v9360 = vpow.pop %v9359
        %v9361 = vmul.f32 %v9305, 1.442695
        %v9362 = vpow.pop %v9361
        %v9363 = vmul.f32 %v9306, 1.442695
        %v9364 = vpow.pop %v9363
        %v9365 = vmul.f32 %v9307, 1.442695
        %v9366 = vpow.pop %v9365
        %v9367 = vmul.f32 %v9308, 1.442695
        %v9368 = vpow.pop %v9367
        %v9369 = vmul.f32 %v9309, 1.442695
        %v9370 = vpow.pop %v9369
        %v9371 = vmul.f32 %v9310, 1.442695
        %v9372 = vpow.pop %v9371
        %v9373 = vmul.f32 %v9311, 1.442695
        %v9374 = vpow.pop %v9373
        %v9375 = vmul.f32 %v9312, 1.442695
        %v9376 = vpow.pop %v9375
        %v9377 = vmul.f32 %v9313, 1.442695
        %v9378 = vpow.pop %v9377
        %v9379 = vmul.f32 %v9314, 1.442695
        %v9380 = vpow.pop %v9379
        %v9381 = vmul.f32 %v9315, 1.442695
        %v9382 = vpow.pop %v9381
        %v9383 = vmul.f32 %v9316, 1.442695
        %v9384 = vpow.pop %v9383
        %v9385 = vmul.f32 %v9317, 1.442695
        %v9386 = vpow.pop %v9385
        %v9387 = vmul.f32 %v9318, 1.442695
        %v9388 = vpow.pop %v9387
        %v9389 = vmul.f32 %v9319, 1.442695
        %v9390 = vpow.pop %v9389
        %v9391 = vmul.f32 %v9320, 1.442695
        %v9392 = vpow.pop %v9391
        %v9393 = vadd.f32 %v9322, 1.0
        %v9394 = vadd.f32 %v9324, 1.0
        %v9395 = vadd.f32 %v9326, 1.0
        %v9396 = vadd.f32 %v9328, 1.0
        %v9397 = vadd.f32 %v9330, 1.0
        %v9398 = vadd.f32 %v9332, 1.0
        %v9399 = vadd.f32 %v9334, 1.0
        %v9400 = vadd.f32 %v9336, 1.0
        %v9401 = vadd.f32 %v9338, 1.0
        %v9402 = vadd.f32 %v9340, 1.0
        %v9403 = vadd.f32 %v9342, 1.0
        %v9404 = vadd.f32 %v9344, 1.0
        %v9405 = vadd.f32 %v9346, 1.0
        %v9406 = vadd.f32 %v9348, 1.0
        %v9407 = vadd.f32 %v9350, 1.0
        %v9408 = vadd.f32 %v9352, 1.0
        %v9409 = vadd.f32 %v9354, 1.0
        %v9410 = vadd.f32 %v9356, 1.0
        %v9411 = vadd.f32 %v9358, 1.0
        %v9412 = vadd.f32 %v9360, 1.0
        %v9413 = vadd.f32 %v9362, 1.0
        %v9414 = vadd.f32 %v9364, 1.0
        %v9415 = vadd.f32 %v9366, 1.0
        %v9416 = vadd.f32 %v9368, 1.0
        %v9417 = vadd.f32 %v9370, 1.0
        %v9418 = vadd.f32 %v9372, 1.0
        %v9419 = vadd.f32 %v9374, 1.0
        %v9420 = vadd.f32 %v9376, 1.0
        %v9421 = vadd.f32 %v9378, 1.0
        %v9422 = vadd.f32 %v9380, 1.0
        %v9423 = vadd.f32 %v9382, 1.0
        %v9424 = vadd.f32 %v9384, 1.0
        %v9425 = vadd.f32 %v9386, 1.0
        %v9426 = vadd.f32 %v9388, 1.0
        %v9427 = vadd.f32 %v9390, 1.0
        %v9428 = vadd.f32 %v9392, 1.0
        %v9429 = vrcp.pop %v9393
        %v9430 = vmul.f32 1.0, %v9429
        %v9431 = vrcp.pop %v9394
        %v9432 = vmul.f32 1.0, %v9431
        %v9433 = vrcp.pop %v9395
        %v9434 = vmul.f32 1.0, %v9433
        %v9435 = vrcp.pop %v9396
        %v9436 = vmul.f32 1.0, %v9435
        %v9437 = vrcp.pop %v9397
        %v9438 = vmul.f32 1.0, %v9437
        %v9439 = vrcp.pop %v9398
        %v9440 = vmul.f32 1.0, %v9439
        %v9441 = vrcp.pop %v9399
        %v9442 = vmul.f32 1.0, %v9441
        %v9443 = vrcp.pop %v9400
        %v9444 = vmul.f32 1.0, %v9443
        %v9445 = vrcp.pop %v9401
        %v9446 = vmul.f32 1.0, %v9445
        %v9447 = vrcp.pop %v9402
        %v9448 = vmul.f32 1.0, %v9447
        %v9449 = vrcp.pop %v9403
        %v9450 = vmul.f32 1.0, %v9449
        %v9451 = vrcp.pop %v9404
        %v9452 = vmul.f32 1.0, %v9451
        %v9453 = vrcp.pop %v9405
        %v9454 = vmul.f32 1.0, %v9453
        %v9455 = vrcp.pop %v9406
        %v9456 = vmul.f32 1.0, %v9455
        %v9457 = vrcp.pop %v9407
        %v9458 = vmul.f32 1.0, %v9457
        %v9459 = vrcp.pop %v9408
        %v9460 = vmul.f32 1.0, %v9459
        %v9461 = vrcp.pop %v9409
        %v9462 = vmul.f32 1.0, %v9461
        %v9463 = vrcp.pop %v9410
        %v9464 = vmul.f32 1.0, %v9463
        %v9465 = vrcp.pop %v9411
        %v9466 = vmul.f32 1.0, %v9465
        %v9467 = vrcp.pop %v9412
        %v9468 = vmul.f32 1.0, %v9467
        %v9469 = vrcp.pop %v9413
        %v9470 = vmul.f32 1.0, %v9469
        %v9471 = vrcp.pop %v9414
        %v9472 = vmul.f32 1.0, %v9471
        %v9473 = vrcp.pop %v9415
        %v9474 = vmul.f32 1.0, %v9473
        %v9475 = vrcp.pop %v9416
        %v9476 = vmul.f32 1.0, %v9475
        %v9477 = vrcp.pop %v9417
        %v9478 = vmul.f32 1.0, %v9477
        %v9479 = vrcp.pop %v9418
        %v9480 = vmul.f32 1.0, %v9479
        %v9481 = vrcp.pop %v9419
        %v9482 = vmul.f32 1.0, %v9481
        %v9483 = vrcp.pop %v9420
        %v9484 = vmul.f32 1.0, %v9483
        %v9485 = vrcp.pop %v9421
        %v9486 = vmul.f32 1.0, %v9485
        %v9487 = vrcp.pop %v9422
        %v9488 = vmul.f32 1.0, %v9487
        %v9489 = vrcp.pop %v9423
        %v9490 = vmul.f32 1.0, %v9489
        %v9491 = vrcp.pop %v9424
        %v9492 = vmul.f32 1.0, %v9491
        %v9493 = vrcp.pop %v9425
        %v9494 = vmul.f32 1.0, %v9493
        %v9495 = vrcp.pop %v9426
        %v9496 = vmul.f32 1.0, %v9495
        %v9497 = vrcp.pop %v9427
        %v9498 = vmul.f32 1.0, %v9497
        %v9499 = vrcp.pop %v9428
        %v9500 = vmul.f32 1.0, %v9499
        %v9501 = vmul.f32 %v9249, %v9430
        %v9502 = vmul.f32 %v9250, %v9432
        %v9503 = vmul.f32 %v9251, %v9434
        %v9504 = vmul.f32 %v9252, %v9436
        %v9505 = vmul.f32 %v9253, %v9438
        %v9506 = vmul.f32 %v9254, %v9440
        %v9507 = vmul.f32 %v9255, %v9442
        %v9508 = vmul.f32 %v9256, %v9444
        %v9509 = vmul.f32 %v9257, %v9446
        %v9510 = vmul.f32 %v9258, %v9448
        %v9511 = vmul.f32 %v9259, %v9450
        %v9512 = vmul.f32 %v9260, %v9452
        %v9513 = vmul.f32 %v9261, %v9454
        %v9514 = vmul.f32 %v9262, %v9456
        %v9515 = vmul.f32 %v9263, %v9458
        %v9516 = vmul.f32 %v9264, %v9460
        %v9517 = vmul.f32 %v9265, %v9462
        %v9518 = vmul.f32 %v9266, %v9464
        %v9519 = vmul.f32 %v9267, %v9466
        %v9520 = vmul.f32 %v9268, %v9468
        %v9521 = vmul.f32 %v9269, %v9470
        %v9522 = vmul.f32 %v9270, %v9472
        %v9523 = vmul.f32 %v9271, %v9474
        %v9524 = vmul.f32 %v9272, %v9476
        %v9525 = vmul.f32 %v9273, %v9478
        %v9526 = vmul.f32 %v9274, %v9480
        %v9527 = vmul.f32 %v9275, %v9482
        %v9528 = vmul.f32 %v9276, %v9484
        %v9529 = vmul.f32 %v9277, %v9486
        %v9530 = vmul.f32 %v9278, %v9488
        %v9531 = vmul.f32 %v9279, %v9490
        %v9532 = vmul.f32 %v9280, %v9492
        %v9533 = vmul.f32 %v9281, %v9494
        %v9534 = vmul.f32 %v9282, %v9496
        %v9535 = vmul.f32 %v9283, %v9498
        %v9536 = vmul.f32 %v9284, %v9500
        %9537 = vst [vmem:[%s340] sm:$0xff] %v9501
        %9538 = vst [vmem:[%s340 + $0x8] sm:$0xff] %v9502
        %9539 = vst [vmem:[%s340 + $0x10] sm:$0xff] %v9503
        %9540 = vst [vmem:[%s340 + $0x18] sm:$0xff] %v9504
        %9541 = vst [vmem:[%s340 + $0x20] sm:$0xff] %v9505
        %9542 = vst [vmem:[%s340 + $0x28] sm:$0xff] %v9506
        %9543 = vst [vmem:[%s340 + $0x30] sm:$0xff] %v9507
        %9544 = vst [vmem:[%s340 + $0x38] sm:$0xff] %v9508
        %9545 = vst [vmem:[%s340 + $0x40] sm:$0xff] %v9509
        %9546 = vst [vmem:[%s340 + $0x48] sm:$0xff] %v9510
        %9547 = vst [vmem:[%s340 + $0x50] sm:$0xff] %v9511
        %9548 = vst [vmem:[%s340 + $0x58] sm:$0xff] %v9512
        %9549 = vst [vmem:[%s340 + $0x60] sm:$0xff] %v9513
        %9550 = vst [vmem:[%s340 + $0x68] sm:$0xff] %v9514
        %9551 = vst [vmem:[%s340 + $0x70] sm:$0xff] %v9515
        %9552 = vst [vmem:[%s340 + $0x78] sm:$0xff] %v9516
        %9553 = vst [vmem:[%s340 + $0x80] sm:$0xff] %v9517
        %9554 = vst [vmem:[%s340 + $0x88] sm:$0xff] %v9518
        %9555 = vst [vmem:[%s340 + $0x90] sm:$0xff] %v9519
        %9556 = vst [vmem:[%s340 + $0x98] sm:$0xff] %v9520
        %9557 = vst [vmem:[%s340 + $0xa0] sm:$0xff] %v9521
        %9558 = vst [vmem:[%s340 + $0xa8] sm:$0xff] %v9522
        %9559 = vst [vmem:[%s340 + $0xb0] sm:$0xff] %v9523
        %9560 = vst [vmem:[%s340 + $0xb8] sm:$0xff] %v9524
        %9561 = vst [vmem:[%s340 + $0xc0] sm:$0xff] %v9525
        %9562 = vst [vmem:[%s340 + $0xc8] sm:$0xff] %v9526
        %9563 = vst [vmem:[%s340 + $0xd0] sm:$0xff] %v9527
        %9564 = vst [vmem:[%s340 + $0xd8] sm:$0xff] %v9528
        %9565 = vst [vmem:[%s340 + $0xe0] sm:$0xff] %v9529
        %9566 = vst [vmem:[%s340 + $0xe8] sm:$0xff] %v9530
        %9567 = vst [vmem:[%s340 + $0xf0] sm:$0xff] %v9531
        %9568 = vst [vmem:[%s340 + $0xf8] sm:$0xff] %v9532
        %9569 = vst [vmem:[%s340 + $0x100] sm:$0xff] %v9533
        %9570 = vst [vmem:[%s340 + $0x108] sm:$0xff] %v9534
        %9571 = vst [vmem:[%s340 + $0x110] sm:$0xff] %v9535
        %9572 = vst [vmem:[%s340 + $0x118] sm:$0xff] %v9536
        %s9573 = sand.u32 %s186, 1
        %s9574 = scalar_lea.sflag [#allocation5], %s9573
        %s9575 = sand.u32 %s186, 1
        %s9576 = smul.addr %s9575, 288
        %s9577 = scalar_lea.vmem [#allocation11], %s9576
        // Predicated region
        $region65: #{tpu_custom_call.1} parent=47 // pred_check
          %p9578 = pneg %p196
        $region66: #{tpu_custom_call.1} parent=47 // pred_check_branch
          %9580 = sbr.rel (%p9578) target = $region68
        $region67: #{tpu_custom_call.1} parent=47 // pred_region
          %s9582 = ssub.s32 4608, 4608
          %9583 = vsyncadd %s9574, %s9582
          %s9584 = smul.addr %s26, 36
          %s9585 = smul.addr %s9584, 128
          %s9586 = scalar_lea.hbm %s7, %s9585
          %s9587 = sshll.u32 %s9577, 4
          %s9588 = int_to_ptr.vmem [resolvable:$true] %s9587
          %9593 = dma.vmem_to_hbm [thread:$0]  %s9588, 4608, %s9586, %s9574, 128, 128, 8
        $region68: #{tpu_custom_call.1} parent=47 // pred_fallthru
          _
      $region48: #{tpu_custom_call.1} parent=5 // pred_fallthru
        _
      %p9594 = scmp.le.s32.totalorder 2, %s21
      // Predicated region
      $region69: #{tpu_custom_call.1} parent=5 // pred_check
        %p9595 = pneg %p9594
      $region70: #{tpu_custom_call.1} parent=5 // pred_check_branch
        %9597 = sbr.rel (%p9595) target = $region72
      $region71: #{tpu_custom_call.1} parent=5 // pred_region
        %s9598 = ssub.s32 %s21, 2
        // Predicated region
        $region73: #{tpu_custom_call.1} parent=71 // pred_check
          %p9599 = pneg %p202
        $region74: #{tpu_custom_call.1} parent=71 // pred_check_branch
          %9601 = sbr.rel (%p9599) target = $region76
        $region75: #{tpu_custom_call.1} parent=71 // pred_region
          %s9602 = sand.u32 %s187, 1
          %s9603 = scalar_lea.sflag [#allocation5], %s9602
          %s9604 = sand.u32 %s187, 1
          %s9605 = smul.addr %s9604, 288
          %s9606 = scalar_lea.vmem [#allocation11], %s9605
          %9607 = dma.done %s9603, 4608
        $region76: #{tpu_custom_call.1} parent=71 // pred_fallthru
          _
      $region72: #{tpu_custom_call.1} parent=5 // pred_fallthru
        _
    $region6: #{tpu_custom_call.1} parent=1 // loop_footer
      %s25 = sadd.s32 1, %s21
    $region7: #{tpu_custom_call.1} parent=1 // loop_footer_branch
      %20 = sbr.rel target = $region3
    $region8: #{tpu_custom_call.1} parent=1 // loop_exit
      _
    %9608 = vsyncpa [#allocation4], 1
    %s9609 = scalar_lea.sflag [#allocation4], 1
    %9610 = vsyncpa %s9609, 1
    %9611 = vsyncpa [#allocation7], 1
    %9612 = vsyncpa [#allocation10], 1
    %9613 = vsyncpa [#allocation5], 1
    %s9614 = scalar_lea.sflag [#allocation5], 1
    %9615 = vsyncpa %s9614, 1

</llo_original>
